<compile_context>
chip_gen: v7x
topology: tpu7x:2x2x1
jax: 0.10.0
libtpu: 0.0.40
codegen_flags: <defaults>
</compile_context>

<pallas_src>
import functools

import jax
import jax.numpy as jnp
import numpy as np
from jax.experimental import pallas as pl
from jax.experimental.pallas import tpu as pltpu

EPS = 1e-5
EXPANSION = 4
LPAD = 16   # left halo width: keeps the packed-bf16 interior store aligned
RPAD = 8    # right halo width: 1 used column + alignment slack


def _fold_bn(bn):
    scale = bn["gamma"] / jnp.sqrt(bn["var"] + EPS)           # (C,)
    bias = bn["beta"] - bn["mean"] * scale                    # (C,)
    return scale.astype(jnp.float32), bias.reshape(1, -1).astype(jnp.float32)


# ----------------------------- fused kernel ----------------------------------

def _bottleneck_kernel(*refs, H, W, Cin, planes, out_planes, stride,
                       has_proj, fuse_k):
    if has_proj:
        (x_ref, w1_ref, w2_ref, w3_ref, wsc_ref,
         b1, b2, b3, bsc, o_ref, xpad_ref) = refs
    else:
        (x_ref, w1_ref, w2_ref, w3_ref, b1, b2, b3, o_ref, xpad_ref) = refs

    f32, bf16 = jnp.float32, jnp.bfloat16
    Ho = (H - 1) // stride + 1
    Wo = (W - 1) // stride + 1
    M, Mo = H * W, Ho * Wo
    PW = LPAD + W + RPAD                                      # scratch width

    x2d = x_ref[0].reshape(M, Cin)                            # (M, Cin) bf16

    # ---- conv1 (1x1, BN scale pre-folded into w1) + bias + ReLU --------- MXU
    a1 = jnp.dot(x2d, w1_ref[...], preferred_element_type=f32)
    h1 = jnp.maximum(a1 + b1[...], 0.0)                       # (M, planes) f32

    # One aligned block store of the interior; zero only the halo frame
    # (2 full-width rows + two 8-wide aligned column strips).
    xpad_ref[1:H + 1, LPAD:LPAD + W, :] = h1.reshape(H, W, planes).astype(bf16)
    xpad_ref[0:1, :, :] = jnp.zeros((1, PW, planes), bf16)
    xpad_ref[H + 1:H + 2, :, :] = jnp.zeros((1, PW, planes), bf16)
    xpad_ref[:, LPAD - 8:LPAD, :] = jnp.zeros((H + 2, 8, planes), bf16)
    xpad_ref[:, LPAD + W:LPAD + W + 8, :] = jnp.zeros((H + 2, 8, planes), bf16)

    # ---- conv2 (3x3, pad=1, stride) -----------------------------------------
    def win(ky, kx):
        c0 = LPAD - 1 + kx
        if stride == 1:
            v = xpad_ref[ky:ky + Ho, c0:c0 + Wo, :]
        else:  # only the strided output positions feed the MXU
            v = xpad_ref[pl.ds(ky, Ho, stride), pl.ds(c0, Wo, stride), :]
        return v.reshape(Mo, planes)                          # bf16

    if fuse_k:
        # tiny planes: one im2col matmul with K = 9*planes
        patches = jnp.concatenate(
            [win(ky, kx) for ky in range(3) for kx in range(3)], axis=1)
        a2 = jnp.dot(patches, w2_ref[...], preferred_element_type=f32)
    else:
        # real channel counts: 9 accumulating matmuls, no (Mo, 9P) temporary
        a2 = jnp.dot(win(0, 0), w2_ref[0], preferred_element_type=f32)
        for k in range(1, 9):
            ky, kx = divmod(k, 3)
            a2 = a2 + jnp.dot(win(ky, kx), w2_ref[k],
                              preferred_element_type=f32)
    h2 = jnp.maximum(a2 + b2[...], 0.0)                       # (Mo, planes) f32

    # ---- conv3 (1x1) + bias --------------------------------------------------
    a3 = jnp.dot(h2.astype(bf16), w3_ref[...], preferred_element_type=f32)
    out = a3 + b3[...]                                        # (Mo, out_planes)

    # ---- shortcut + residual add + final ReLU --------------------------------
    if has_proj:
        if stride == 1:
            xs = x2d
        else:  # strided ref read instead of value-level reshape/strided slice
            xs = x_ref[0, pl.ds(0, Ho, stride), pl.ds(0, Wo, stride), :]
            xs = xs.reshape(Mo, Cin)
        sc = jnp.dot(xs, wsc_ref[...], preferred_element_type=f32) + bsc[...]
    else:
        sc = x2d.astype(f32)   # NOTE: residual carries bf16 rounding of x

    o_ref[0] = jnp.maximum(out + sc, 0.0).astype(o_ref.dtype)


# ----------------------------- wrappers ---------------------------------------

def bottleneck_forward_nhwc(x_nhwc, params, stride=1, out_dtype=jnp.bfloat16):
    """Fused Pallas forward.  NHWC in, NHWC out (bf16 by default)."""
    N, H, W, Cin = x_nhwc.shape
    planes = params["w1"].shape[1]
    out_planes = EXPANSION * planes
    Ho = (H - 1) // stride + 1
    Wo = (W - 1) // stride + 1
    M, Mo = H * W, Ho * Wo
    has_proj = (stride != 1) or (Cin != out_planes)
    fuse_k = planes < 128      # im2col concat only when per-tap K is too small

    x = x_nhwc.astype(jnp.bfloat16)

    # Fold the BN scale into the conv weights (one-time constant fold).
    s1, b1 = _fold_bn(params["bn1"])
    s2, b2 = _fold_bn(params["bn2"])
    s3, b3 = _fold_bn(params["bn3"])
    w1 = (params["w1"] * s1).astype(jnp.bfloat16)                   # (Cin, P)
    w2 = params["w2"] * s2                                          # (9, P, P)
    w2 = (w2.reshape(9 * planes, planes) if fuse_k else w2).astype(jnp.bfloat16)
    w3 = (params["w3"] * s3).astype(jnp.bfloat16)                   # (P, 4P)

    inputs = [x, w1, w2, w3]
    if has_proj:
        ssc, bsc = _fold_bn(params["bn_sc"])
        inputs.append((params["w_sc"] * ssc).astype(jnp.bfloat16))  # (Cin, 4P)
    inputs += [b1, b2, b3]
    if has_proj:
        inputs.append(bsc)

    out_isz = np.dtype(out_dtype).itemsize

    # Advisory cost estimate for the XLA scheduler.
    flops = 2 * N * (M * Cin * planes + Mo * 9 * planes * planes
                     + Mo * planes * out_planes
                     + (Mo * Cin * out_planes if has_proj else 0))
    bytes_accessed = int(sum(int(v.size) * v.dtype.itemsize for v in inputs)
                         + N * Mo * out_planes * out_isz)
    cost = pl.CostEstimate(flops=int(flops), transcendentals=0,
                           bytes_accessed=bytes_accessed)

    # Generation-aware VMEM budget: ~3/4 of physical VMEM (48 MiB on v7x,
    # 96 MiB on v5e/v6e), never below the 32 MiB default.
    try:
        phys = int(pltpu.get_tpu_info().vmem_capacity_bytes)
    except Exception:  # pragma: no cover - conservative fallback (v7x floor)
        phys = 64 * 1024 * 1024
    cap = (phys * 3) // 4
    weight_bytes = sum(int(v.size) * v.dtype.itemsize for v in inputs[1:])
    scratch_bytes = (H + 2) * (LPAD + W + RPAD) * planes * 2
    temp_bytes = ((2 * Mo * 9 * planes * 2 if fuse_k else Mo * planes * 6)
                  + M * planes * 4 + Mo * planes * 4 + 3 * Mo * out_planes * 4)
    blk_bytes = (2 * M * Cin * 2 + 2 * Mo * out_planes * out_isz
                 + 2 * weight_bytes + scratch_bytes + temp_bytes)
    vmem_limit = int(min(cap, max(32 * 1024 * 1024, 2 * blk_bytes)))

    kern = functools.partial(_bottleneck_kernel, H=H, W=W, Cin=Cin,
                             planes=planes, out_planes=out_planes,
                             stride=stride, has_proj=has_proj, fuse_k=fuse_k)

    def _run(single_buffer_consts):
        ckw = ({"pipeline_mode": pl.Buffered(1)} if single_buffer_consts else {})

        def const_spec(shape):  # weights / BN biases stay resident in VMEM
            nd = len(shape)
            return pl.BlockSpec(shape, lambda n, _nd=nd: (0,) * _nd, **ckw)

        in_specs = [pl.BlockSpec((1, H, W, Cin), lambda n: (n, 0, 0, 0))]
        in_specs += [const_spec(tuple(v.shape)) for v in inputs[1:]]
        return pl.pallas_call(
            kern,
            grid=(N,),
            out_shape=jax.ShapeDtypeStruct((N, Mo, out_planes), out_dtype),
            in_specs=in_specs,
            out_specs=pl.BlockSpec((1, Mo, out_planes), lambda n: (n, 0, 0)),
            scratch_shapes=[pltpu.VMEM((H + 2, LPAD + W + RPAD, planes),
                                       jnp.bfloat16)],
            compiler_params=pltpu.CompilerParams(
                dimension_semantics=("parallel",),
                vmem_limit_bytes=vmem_limit),
            cost_estimate=cost,
        )(*inputs)

    single = hasattr(pl, "Buffered")
    try:
        out = _run(single)
    except Exception:
        if not single:
            raise
        out = _run(False)  # jax without per-operand pipeline_mode support

    return out.reshape(N, Ho, Wo, out_planes)


def bottleneck_forward(x_nchw, params, stride=1):
    """NCHW wrapper for parity with the PyTorch module.  In a full network,
    keep activations NHWC/bf16 end-to-end (bottleneck_forward_nhwc) to avoid
    two un-hidden HBM transpose passes per block."""
    x_nhwc = jnp.transpose(x_nchw, (0, 2, 3, 1))
    out = bottleneck_forward_nhwc(x_nhwc, params, stride=stride)
    return jnp.transpose(out, (0, 3, 1, 2))


# ----------------------------- parameter init --------------------------------

def init_params(key, in_planes, planes):
    out_planes = EXPANSION * planes
    ks = jax.random.split(key, 12)

    def bn(kg, kb, km, kv, c):
        return {
            "gamma": 1.0 + 0.1 * jax.random.normal(kg, (c,), jnp.float32),
            "beta": 0.1 * jax.random.normal(kb, (c,), jnp.float32),
            "mean": 0.1 * jax.random.normal(km, (c,), jnp.float32),
            "var": 1.0 + 0.1 * jnp.abs(jax.random.normal(kv, (c,), jnp.float32)),
        }

    params = {
        # channels-last layouts: 1x1 -> (Cin, Cout); 3x3 -> (9, Cin, Cout)
        "w1": 0.1 * jax.random.normal(ks[0], (in_planes, planes), jnp.float32),
        "w2": 0.1 * jax.random.normal(ks[1], (9, planes, planes), jnp.float32),
        "w3": 0.1 * jax.random.normal(ks[2], (planes, out_planes), jnp.float32),
        "bn1": bn(ks[3], ks[4], ks[5], ks[6], planes),
        "bn2": bn(ks[7], ks[8], ks[9], ks[10], planes),
        "bn3": bn(*jax.random.split(ks[11], 4), out_planes),
    }
    ksc = jax.random.split(jax.random.fold_in(key, 99), 5)
    params["w_sc"] = 0.1 * jax.random.normal(ksc[0], (in_planes, out_planes),
                                             jnp.float32)
    params["bn_sc"] = bn(ksc[1], ksc[2], ksc[3], ksc[4], out_planes)
    return params


# ----------------------------- pure-JAX reference ----------------------------

def _ref_forward(x_nchw, params, stride=1):
    x = jnp.transpose(x_nchw, (0, 2, 3, 1)).astype(jnp.float32)
    Cin = x.shape[-1]
    planes = params["w1"].shape[1]
    out_planes = EXPANSION * planes

    def bnorm(h, p):
        return (h - p["mean"]) / jnp.sqrt(p["var"] + EPS) * p["gamma"] + p["beta"]

    def conv(h, w_hwio, s, pad):
        return jax.lax.conv_general_dilated(
            h, w_hwio, (s, s), pad, dimension_numbers=("NHWC", "HWIO", "NHWC"))

    w1 = params["w1"].reshape(1, 1, Cin, planes)
    w2 = params["w2"].reshape(3, 3, planes, planes)
    w3 = params["w3"].reshape(1, 1, planes, out_planes)

    out = jax.nn.relu(bnorm(conv(x, w1, 1, [(0, 0), (0, 0)]), params["bn1"]))
    out = jax.nn.relu(bnorm(conv(out, w2, stride, [(1, 1), (1, 1)]), params["bn2"]))
    out = bnorm(conv(out, w3, 1, [(0, 0), (0, 0)]), params["bn3"])
    if stride != 1 or Cin != out_planes:
        wsc = params["w_sc"].reshape(1, 1, Cin, out_planes)
        sc = bnorm(conv(x, wsc, stride, [(0, 0), (0, 0)]), params["bn_sc"])
    else:
        sc = x
    out = jax.nn.relu(out + sc)
    return jnp.transpose(out, (0, 3, 1, 2))


# ----------------------------------- main -------------------------------------

if __name__ == "__main__":
    key = jax.random.PRNGKey(0)

    # (N, in_planes, planes, H, W, stride)
    configs = [
        (2, 4, 4, 16, 16, 1),     # projection shortcut, fused-im2col path
        (2, 16, 4, 8, 8, 1),      # identity shortcut
        (1, 128, 128, 8, 8, 1),   # real channel count: 9 accumulating matmuls
    ]

    for i, (N, cin, planes, H, W, stride) in enumerate(configs):
        kx, kp = jax.random.split(jax.random.fold_in(key, i))
        x = jax.random.normal(kx, (N, cin, H, W), jnp.float32)   # NCHW input
        params = init_params(kp, cin, planes)

        out = jax.block_until_ready(bottleneck_forward(x, params, stride=stride))
        ref = jax.block_until_ready(_ref_forward(x, params, stride=stride))

        Ho = (H - 1) // stride + 1
        Wo = (W - 1) // stride + 1
        assert out.shape == (N, EXPANSION * planes, Ho, Wo), out.shape

        out_f = np.asarray(out.astype(jnp.float32))
        ref_f = np.asarray(ref)
        # bf16 matmul inputs / activations / bf16 output vs. f32 reference:
        # tolerance scaled by the reference magnitude.
        atol = 3e-2 * (float(np.max(np.abs(ref_f))) + 1e-6)
        np.testing.assert_allclose(out_f, ref_f, rtol=3e-2, atol=atol)

    print("KERNEL_OK")
</pallas_src>

<mosaic_0001>
module attributes {stable_mosaic.version = 11 : i64} {
  func.func @_bottleneck_kernel(%arg0: i32, %arg1: memref<1x16x16x4xbf16, #tpu.memory_space<vmem>>, %arg2: memref<4x4xbf16, #tpu.memory_space<vmem>>, %arg3: memref<36x4xbf16, #tpu.memory_space<vmem>>, %arg4: memref<4x16xbf16, #tpu.memory_space<vmem>>, %arg5: memref<4x16xbf16, #tpu.memory_space<vmem>>, %arg6: memref<1x4xf32, #tpu.memory_space<vmem>>, %arg7: memref<1x4xf32, #tpu.memory_space<vmem>>, %arg8: memref<1x16xf32, #tpu.memory_space<vmem>>, %arg9: memref<1x16xf32, #tpu.memory_space<vmem>>, %arg10: memref<1x256x16xbf16, #tpu.memory_space<vmem>>, %arg11: memref<18x40x4xbf16, #tpu.memory_space<vmem>>) attributes {dimension_semantics = [#tpu.dimension_semantics<parallel>], iteration_bounds = array<i64: 2>, scalar_prefetch = 0 : i64, scratch_operands = 1 : i64, tpu.core_type = #tpu.core_type<tc>, window_params = [{transform_indices = @transform_0, window_bounds = array<i64: 1, 16, 16, 4>}, {pipeline_mode = #tpu.pipeline_mode<synchronous>, transform_indices = @transform_1, window_bounds = array<i64: 4, 4>}, {pipeline_mode = #tpu.pipeline_mode<synchronous>, transform_indices = @transform_2, window_bounds = array<i64: 36, 4>}, {pipeline_mode = #tpu.pipeline_mode<synchronous>, transform_indices = @transform_3, window_bounds = array<i64: 4, 16>}, {pipeline_mode = #tpu.pipeline_mode<synchronous>, transform_indices = @transform_4, window_bounds = array<i64: 4, 16>}, {pipeline_mode = #tpu.pipeline_mode<synchronous>, transform_indices = @transform_5, window_bounds = array<i64: 1, 4>}, {pipeline_mode = #tpu.pipeline_mode<synchronous>, transform_indices = @transform_6, window_bounds = array<i64: 1, 4>}, {pipeline_mode = #tpu.pipeline_mode<synchronous>, transform_indices = @transform_7, window_bounds = array<i64: 1, 16>}, {pipeline_mode = #tpu.pipeline_mode<synchronous>, transform_indices = @transform_8, window_bounds = array<i64: 1, 16>}, {transform_indices = @transform_9, window_bounds = array<i64: 1, 256, 16>}]} {
    %c0 = arith.constant 0 : index
    %c0_0 = arith.constant 0 : index
    %c0_1 = arith.constant 0 : index
    %c0_2 = arith.constant 0 : index
    %0 = vector.load %arg1[%c0, %c0_0, %c0_1, %c0_2] : memref<1x16x16x4xbf16, #tpu.memory_space<vmem>>, vector<1x16x16x4xbf16>
    %1 = vector.shape_cast %0 : vector<1x16x16x4xbf16> to vector<16x16x4xbf16>
    %2 = vector.shape_cast %1 : vector<16x16x4xbf16> to vector<256x4xbf16>
    %c0_3 = arith.constant 0 : index
    %c0_4 = arith.constant 0 : index
    %3 = vector.load %arg2[%c0_3, %c0_4] : memref<4x4xbf16, #tpu.memory_space<vmem>>, vector<4x4xbf16>
    %cst = arith.constant dense<0.000000e+00> : vector<256x4xf32>
    %4 = tpu.matmul %2, %3, %cst {dimension_numbers = #tpu.dot_dimension_numbers<[1], [0], [0], [1], [0, 0, 1, 1], [], []>} : vector<256x4xbf16>, vector<4x4xbf16>, vector<256x4xf32> -> vector<256x4xf32>
    %c0_5 = arith.constant 0 : index
    %c0_6 = arith.constant 0 : index
    %5 = vector.load %arg6[%c0_5, %c0_6] : memref<1x4xf32, #tpu.memory_space<vmem>>, vector<1x4xf32>
    %6 = vector.broadcast %5 : vector<1x4xf32> to vector<256x4xf32>
    %7 = arith.addf %4, %6 : vector<256x4xf32>
    %cst_7 = arith.constant 0.000000e+00 : f32
    %8 = vector.broadcast %cst_7 : f32 to vector<256x4xf32>
    %9 = arith.maximumf %7, %8 : vector<256x4xf32>
    %10 = vector.shape_cast %9 : vector<256x4xf32> to vector<16x16x4xf32>
    %11 = arith.truncf %10 : vector<16x16x4xf32> to vector<16x16x4xbf16>
    %c1 = arith.constant 1 : index
    %c16 = arith.constant 16 : index
    %c0_8 = arith.constant 0 : index
    %12 = vector.load %arg11[%c1, %c16, %c0_8] : memref<18x40x4xbf16, #tpu.memory_space<vmem>>, vector<16x16x4xbf16>
    tpu.vector_store %arg11[%c1, %c16, %c0_8], %11 {strides = array<i32>} : memref<18x40x4xbf16, #tpu.memory_space<vmem>>, vector<16x16x4xbf16>,
    %cst_9 = arith.constant 0.000000e+00 : bf16
    %13 = vector.broadcast %cst_9 : bf16 to vector<1x40x4xbf16>
    %c0_10 = arith.constant 0 : index
    %c0_11 = arith.constant 0 : index
    %c0_12 = arith.constant 0 : index
    %14 = vector.load %arg11[%c0_10, %c0_11, %c0_12] : memref<18x40x4xbf16, #tpu.memory_space<vmem>>, vector<1x40x4xbf16>
    tpu.vector_store %arg11[%c0_10, %c0_11, %c0_12], %13 {strides = array<i32>} : memref<18x40x4xbf16, #tpu.memory_space<vmem>>, vector<1x40x4xbf16>,
    %cst_13 = arith.constant 0.000000e+00 : bf16
    %15 = vector.broadcast %cst_13 : bf16 to vector<1x40x4xbf16>
    %c17 = arith.constant 17 : index
    %c0_14 = arith.constant 0 : index
    %c0_15 = arith.constant 0 : index
    %16 = vector.load %arg11[%c17, %c0_14, %c0_15] : memref<18x40x4xbf16, #tpu.memory_space<vmem>>, vector<1x40x4xbf16>
    tpu.vector_store %arg11[%c17, %c0_14, %c0_15], %15 {strides = array<i32>} : memref<18x40x4xbf16, #tpu.memory_space<vmem>>, vector<1x40x4xbf16>,
    %cst_16 = arith.constant 0.000000e+00 : bf16
    %17 = vector.broadcast %cst_16 : bf16 to vector<18x8x4xbf16>
    %c0_17 = arith.constant 0 : index
    %c8 = arith.constant 8 : index
    %c0_18 = arith.constant 0 : index
    %18 = vector.load %arg11[%c0_17, %c8, %c0_18] : memref<18x40x4xbf16, #tpu.memory_space<vmem>>, vector<18x8x4xbf16>
    tpu.vector_store %arg11[%c0_17, %c8, %c0_18], %17 {strides = array<i32>} : memref<18x40x4xbf16, #tpu.memory_space<vmem>>, vector<18x8x4xbf16>,
    %cst_19 = arith.constant 0.000000e+00 : bf16
    %19 = vector.broadcast %cst_19 : bf16 to vector<18x8x4xbf16>
    %c0_20 = arith.constant 0 : index
    %c32 = arith.constant 32 : index
    %c0_21 = arith.constant 0 : index
    %20 = vector.load %arg11[%c0_20, %c32, %c0_21] : memref<18x40x4xbf16, #tpu.memory_space<vmem>>, vector<18x8x4xbf16>
    tpu.vector_store %arg11[%c0_20, %c32, %c0_21], %19 {strides = array<i32>} : memref<18x40x4xbf16, #tpu.memory_space<vmem>>, vector<18x8x4xbf16>,
    %c0_22 = arith.constant 0 : index
    %c15 = arith.constant 15 : index
    %c0_23 = arith.constant 0 : index
    %21 = vector.load %arg11[%c0_22, %c15, %c0_23] : memref<18x40x4xbf16, #tpu.memory_space<vmem>>, vector<16x16x4xbf16>
    %22 = vector.shape_cast %21 : vector<16x16x4xbf16> to vector<256x4xbf16>
    %c0_24 = arith.constant 0 : index
    %c16_25 = arith.constant 16 : index
    %c0_26 = arith.constant 0 : index
    %23 = vector.load %arg11[%c0_24, %c16_25, %c0_26] : memref<18x40x4xbf16, #tpu.memory_space<vmem>>, vector<16x16x4xbf16>
    %24 = vector.shape_cast %23 : vector<16x16x4xbf16> to vector<256x4xbf16>
    %c0_27 = arith.constant 0 : index
    %c17_28 = arith.constant 17 : index
    %c0_29 = arith.constant 0 : index
    %25 = vector.load %arg11[%c0_27, %c17_28, %c0_29] : memref<18x40x4xbf16, #tpu.memory_space<vmem>>, vector<16x16x4xbf16>
    %26 = vector.shape_cast %25 : vector<16x16x4xbf16> to vector<256x4xbf16>
    %c1_30 = arith.constant 1 : index
    %c15_31 = arith.constant 15 : index
    %c0_32 = arith.constant 0 : index
    %27 = vector.load %arg11[%c1_30, %c15_31, %c0_32] : memref<18x40x4xbf16, #tpu.memory_space<vmem>>, vector<16x16x4xbf16>
    %28 = vector.shape_cast %27 : vector<16x16x4xbf16> to vector<256x4xbf16>
    %c1_33 = arith.constant 1 : index
    %c16_34 = arith.constant 16 : index
    %c0_35 = arith.constant 0 : index
    %29 = vector.load %arg11[%c1_33, %c16_34, %c0_35] : memref<18x40x4xbf16, #tpu.memory_space<vmem>>, vector<16x16x4xbf16>
    %30 = vector.shape_cast %29 : vector<16x16x4xbf16> to vector<256x4xbf16>
    %c1_36 = arith.constant 1 : index
    %c17_37 = arith.constant 17 : index
    %c0_38 = arith.constant 0 : index
    %31 = vector.load %arg11[%c1_36, %c17_37, %c0_38] : memref<18x40x4xbf16, #tpu.memory_space<vmem>>, vector<16x16x4xbf16>
    %32 = vector.shape_cast %31 : vector<16x16x4xbf16> to vector<256x4xbf16>
    %c2 = arith.constant 2 : index
    %c15_39 = arith.constant 15 : index
    %c0_40 = arith.constant 0 : index
    %33 = vector.load %arg11[%c2, %c15_39, %c0_40] : memref<18x40x4xbf16, #tpu.memory_space<vmem>>, vector<16x16x4xbf16>
    %34 = vector.shape_cast %33 : vector<16x16x4xbf16> to vector<256x4xbf16>
    %c2_41 = arith.constant 2 : index
    %c16_42 = arith.constant 16 : index
    %c0_43 = arith.constant 0 : index
    %35 = vector.load %arg11[%c2_41, %c16_42, %c0_43] : memref<18x40x4xbf16, #tpu.memory_space<vmem>>, vector<16x16x4xbf16>
    %36 = vector.shape_cast %35 : vector<16x16x4xbf16> to vector<256x4xbf16>
    %c2_44 = arith.constant 2 : index
    %c17_45 = arith.constant 17 : index
    %c0_46 = arith.constant 0 : index
    %37 = vector.load %arg11[%c2_44, %c17_45, %c0_46] : memref<18x40x4xbf16, #tpu.memory_space<vmem>>, vector<16x16x4xbf16>
    %38 = vector.shape_cast %37 : vector<16x16x4xbf16> to vector<256x4xbf16>
    %39 = tpu.concatenate %22, %24, %26, %28, %30, %32, %34, %36, %38 in 1 : vector<256x4xbf16>, vector<256x4xbf16>, vector<256x4xbf16>, vector<256x4xbf16>, vector<256x4xbf16>, vector<256x4xbf16>, vector<256x4xbf16>, vector<256x4xbf16>, vector<256x4xbf16> -> vector<256x36xbf16>
    %c0_47 = arith.constant 0 : index
    %c0_48 = arith.constant 0 : index
    %40 = vector.load %arg3[%c0_47, %c0_48] : memref<36x4xbf16, #tpu.memory_space<vmem>>, vector<36x4xbf16>
    %cst_49 = arith.constant dense<0.000000e+00> : vector<256x4xf32>
    %41 = tpu.matmul %39, %40, %cst_49 {dimension_numbers = #tpu.dot_dimension_numbers<[1], [0], [0], [1], [0, 0, 1, 1], [], []>} : vector<256x36xbf16>, vector<36x4xbf16>, vector<256x4xf32> -> vector<256x4xf32>
    %c0_50 = arith.constant 0 : index
    %c0_51 = arith.constant 0 : index
    %42 = vector.load %arg7[%c0_50, %c0_51] : memref<1x4xf32, #tpu.memory_space<vmem>>, vector<1x4xf32>
    %43 = vector.broadcast %42 : vector<1x4xf32> to vector<256x4xf32>
    %44 = arith.addf %41, %43 : vector<256x4xf32>
    %cst_52 = arith.constant 0.000000e+00 : f32
    %45 = vector.broadcast %cst_52 : f32 to vector<256x4xf32>
    %46 = arith.maximumf %44, %45 : vector<256x4xf32>
    %47 = arith.truncf %46 : vector<256x4xf32> to vector<256x4xbf16>
    %c0_53 = arith.constant 0 : index
    %c0_54 = arith.constant 0 : index
    %48 = vector.load %arg4[%c0_53, %c0_54] : memref<4x16xbf16, #tpu.memory_space<vmem>>, vector<4x16xbf16>
    %cst_55 = arith.constant dense<0.000000e+00> : vector<256x16xf32>
    %49 = tpu.matmul %47, %48, %cst_55 {dimension_numbers = #tpu.dot_dimension_numbers<[1], [0], [0], [1], [0, 0, 1, 1], [], []>} : vector<256x4xbf16>, vector<4x16xbf16>, vector<256x16xf32> -> vector<256x16xf32>
    %c0_56 = arith.constant 0 : index
    %c0_57 = arith.constant 0 : index
    %50 = vector.load %arg8[%c0_56, %c0_57] : memref<1x16xf32, #tpu.memory_space<vmem>>, vector<1x16xf32>
    %51 = vector.broadcast %50 : vector<1x16xf32> to vector<256x16xf32>
    %52 = arith.addf %49, %51 : vector<256x16xf32>
    %c0_58 = arith.constant 0 : index
    %c0_59 = arith.constant 0 : index
    %53 = vector.load %arg5[%c0_58, %c0_59] : memref<4x16xbf16, #tpu.memory_space<vmem>>, vector<4x16xbf16>
    %cst_60 = arith.constant dense<0.000000e+00> : vector<256x16xf32>
    %54 = tpu.matmul %2, %53, %cst_60 {dimension_numbers = #tpu.dot_dimension_numbers<[1], [0], [0], [1], [0, 0, 1, 1], [], []>} : vector<256x4xbf16>, vector<4x16xbf16>, vector<256x16xf32> -> vector<256x16xf32>
    %c0_61 = arith.constant 0 : index
    %c0_62 = arith.constant 0 : index
    %55 = vector.load %arg9[%c0_61, %c0_62] : memref<1x16xf32, #tpu.memory_space<vmem>>, vector<1x16xf32>
    %56 = vector.broadcast %55 : vector<1x16xf32> to vector<256x16xf32>
    %57 = arith.addf %54, %56 : vector<256x16xf32>
    %58 = arith.addf %52, %57 : vector<256x16xf32>
    %cst_63 = arith.constant 0.000000e+00 : f32
    %59 = vector.broadcast %cst_63 : f32 to vector<256x16xf32>
    %60 = arith.maximumf %58, %59 : vector<256x16xf32>
    %61 = arith.truncf %60 : vector<256x16xf32> to vector<256x16xbf16>
    %c0_64 = arith.constant 0 : index
    %c0_65 = arith.constant 0 : index
    %c0_66 = arith.constant 0 : index
    %62 = vector.load %arg10[%c0_64, %c0_65, %c0_66] : memref<1x256x16xbf16, #tpu.memory_space<vmem>>, vector<1x256x16xbf16>
    %63 = vector.shape_cast %62 : vector<1x256x16xbf16> to vector<256x16xbf16>
    %64 = vector.shape_cast %61 : vector<256x16xbf16> to vector<1x256x16xbf16>
    tpu.vector_store %arg10[%c0_64, %c0_65, %c0_66], %64 {strides = array<i32>} : memref<1x256x16xbf16, #tpu.memory_space<vmem>>, vector<1x256x16xbf16>,
    return
  }
  func.func @transform_0(%arg0: i32) -> (i32, i32, i32, i32) {
    %c0_i32 = arith.constant 0 : i32
    %c0_i32_0 = arith.constant 0 : i32
    %c0_i32_1 = arith.constant 0 : i32
    %c0_i32_2 = arith.constant 0 : i32
    return %arg0, %c0_i32, %c0_i32_0, %c0_i32_1 : i32, i32, i32, i32
  }
  func.func @transform_1(%arg0: i32) -> (i32, i32) {
    %c0_i32 = arith.constant 0 : i32
    %c0_i32_0 = arith.constant 0 : i32
    %c0_i32_1 = arith.constant 0 : i32
    return %c0_i32, %c0_i32_0 : i32, i32
  }
  func.func @transform_2(%arg0: i32) -> (i32, i32) {
    %c0_i32 = arith.constant 0 : i32
    %c0_i32_0 = arith.constant 0 : i32
    %c0_i32_1 = arith.constant 0 : i32
    return %c0_i32, %c0_i32_0 : i32, i32
  }
  func.func @transform_3(%arg0: i32) -> (i32, i32) {
    %c0_i32 = arith.constant 0 : i32
    %c0_i32_0 = arith.constant 0 : i32
    %c0_i32_1 = arith.constant 0 : i32
    return %c0_i32, %c0_i32_0 : i32, i32
  }
  func.func @transform_4(%arg0: i32) -> (i32, i32) {
    %c0_i32 = arith.constant 0 : i32
    %c0_i32_0 = arith.constant 0 : i32
    %c0_i32_1 = arith.constant 0 : i32
    return %c0_i32, %c0_i32_0 : i32, i32
  }
  func.func @transform_5(%arg0: i32) -> (i32, i32) {
    %c0_i32 = arith.constant 0 : i32
    %c0_i32_0 = arith.constant 0 : i32
    %c0_i32_1 = arith.constant 0 : i32
    return %c0_i32, %c0_i32_0 : i32, i32
  }
  func.func @transform_6(%arg0: i32) -> (i32, i32) {
    %c0_i32 = arith.constant 0 : i32
    %c0_i32_0 = arith.constant 0 : i32
    %c0_i32_1 = arith.constant 0 : i32
    return %c0_i32, %c0_i32_0 : i32, i32
  }
  func.func @transform_7(%arg0: i32) -> (i32, i32) {
    %c0_i32 = arith.constant 0 : i32
    %c0_i32_0 = arith.constant 0 : i32
    %c0_i32_1 = arith.constant 0 : i32
    return %c0_i32, %c0_i32_0 : i32, i32
  }
  func.func @transform_8(%arg0: i32) -> (i32, i32) {
    %c0_i32 = arith.constant 0 : i32
    %c0_i32_0 = arith.constant 0 : i32
    %c0_i32_1 = arith.constant 0 : i32
    return %c0_i32, %c0_i32_0 : i32, i32
  }
  func.func @transform_9(%arg0: i32) -> (i32, i32, i32) {
    %c0_i32 = arith.constant 0 : i32
    %c0_i32_0 = arith.constant 0 : i32
    %c0_i32_1 = arith.constant 0 : i32
    return %arg0, %c0_i32, %c0_i32_0 : i32, i32, i32
  }
}

module attributes {stable_mosaic.version = 11 : i64} {
  func.func @_bottleneck_kernel(%arg0: i32, %arg1: memref<1x16x16x4xbf16, #tpu.memory_space<vmem>>, %arg2: memref<4x4xbf16, #tpu.memory_space<vmem>>, %arg3: memref<36x4xbf16, #tpu.memory_space<vmem>>, %arg4: memref<4x16xbf16, #tpu.memory_space<vmem>>, %arg5: memref<4x16xbf16, #tpu.memory_space<vmem>>, %arg6: memref<1x4xf32, #tpu.memory_space<vmem>>, %arg7: memref<1x4xf32, #tpu.memory_space<vmem>>, %arg8: memref<1x16xf32, #tpu.memory_space<vmem>>, %arg9: memref<1x16xf32, #tpu.memory_space<vmem>>, %arg10: memref<1x256x16xbf16, #tpu.memory_space<vmem>>, %arg11: memref<18x40x4xbf16, #tpu.memory_space<vmem>>) attributes {dimension_semantics = [#tpu.dimension_semantics<parallel>], iteration_bounds = array<i64: 2>, scalar_prefetch = 0 : i64, scratch_operands = 1 : i64, tpu.core_type = #tpu.core_type<tc>, window_params = [{transform_indices = @transform_0, window_bounds = array<i64: 1, 16, 16, 4>}, {pipeline_mode = #tpu.pipeline_mode<synchronous>, transform_indices = @transform_1, window_bounds = array<i64: 4, 4>}, {pipeline_mode = #tpu.pipeline_mode<synchronous>, transform_indices = @transform_2, window_bounds = array<i64: 36, 4>}, {pipeline_mode = #tpu.pipeline_mode<synchronous>, transform_indices = @transform_3, window_bounds = array<i64: 4, 16>}, {pipeline_mode = #tpu.pipeline_mode<synchronous>, transform_indices = @transform_4, window_bounds = array<i64: 4, 16>}, {pipeline_mode = #tpu.pipeline_mode<synchronous>, transform_indices = @transform_5, window_bounds = array<i64: 1, 4>}, {pipeline_mode = #tpu.pipeline_mode<synchronous>, transform_indices = @transform_6, window_bounds = array<i64: 1, 4>}, {pipeline_mode = #tpu.pipeline_mode<synchronous>, transform_indices = @transform_7, window_bounds = array<i64: 1, 16>}, {pipeline_mode = #tpu.pipeline_mode<synchronous>, transform_indices = @transform_8, window_bounds = array<i64: 1, 16>}, {transform_indices = @transform_9, window_bounds = array<i64: 1, 256, 16>}]} {
    %c0 = arith.constant 0 : index
    %c0_0 = arith.constant 0 : index
    %c0_1 = arith.constant 0 : index
    %c0_2 = arith.constant 0 : index
    %0 = vector.load %arg1[%c0, %c0_0, %c0_1, %c0_2] : memref<1x16x16x4xbf16, #tpu.memory_space<vmem>>, vector<1x16x16x4xbf16>
    %1 = vector.shape_cast %0 : vector<1x16x16x4xbf16> to vector<16x16x4xbf16>
    %2 = vector.shape_cast %1 : vector<16x16x4xbf16> to vector<256x4xbf16>
    %c0_3 = arith.constant 0 : index
    %c0_4 = arith.constant 0 : index
    %3 = vector.load %arg2[%c0_3, %c0_4] : memref<4x4xbf16, #tpu.memory_space<vmem>>, vector<4x4xbf16>
    %cst = arith.constant dense<0.000000e+00> : vector<256x4xf32>
    %4 = tpu.matmul %2, %3, %cst {dimension_numbers = #tpu.dot_dimension_numbers<[1], [0], [0], [1], [0, 0, 1, 1], [], []>} : vector<256x4xbf16>, vector<4x4xbf16>, vector<256x4xf32> -> vector<256x4xf32>
    %c0_5 = arith.constant 0 : index
    %c0_6 = arith.constant 0 : index
    %5 = vector.load %arg6[%c0_5, %c0_6] : memref<1x4xf32, #tpu.memory_space<vmem>>, vector<1x4xf32>
    %6 = vector.broadcast %5 : vector<1x4xf32> to vector<256x4xf32>
    %7 = arith.addf %4, %6 : vector<256x4xf32>
    %cst_7 = arith.constant 0.000000e+00 : f32
    %8 = vector.broadcast %cst_7 : f32 to vector<256x4xf32>
    %9 = arith.maximumf %7, %8 : vector<256x4xf32>
    %10 = vector.shape_cast %9 : vector<256x4xf32> to vector<16x16x4xf32>
    %11 = arith.truncf %10 : vector<16x16x4xf32> to vector<16x16x4xbf16>
    %c1 = arith.constant 1 : index
    %c16 = arith.constant 16 : index
    %c0_8 = arith.constant 0 : index
    %12 = vector.load %arg11[%c1, %c16, %c0_8] : memref<18x40x4xbf16, #tpu.memory_space<vmem>>, vector<16x16x4xbf16>
    tpu.vector_store %arg11[%c1, %c16, %c0_8], %11 {strides = array<i32>} : memref<18x40x4xbf16, #tpu.memory_space<vmem>>, vector<16x16x4xbf16>,
    %cst_9 = arith.constant 0.000000e+00 : bf16
    %13 = vector.broadcast %cst_9 : bf16 to vector<1x40x4xbf16>
    %c0_10 = arith.constant 0 : index
    %c0_11 = arith.constant 0 : index
    %c0_12 = arith.constant 0 : index
    %14 = vector.load %arg11[%c0_10, %c0_11, %c0_12] : memref<18x40x4xbf16, #tpu.memory_space<vmem>>, vector<1x40x4xbf16>
    tpu.vector_store %arg11[%c0_10, %c0_11, %c0_12], %13 {strides = array<i32>} : memref<18x40x4xbf16, #tpu.memory_space<vmem>>, vector<1x40x4xbf16>,
    %cst_13 = arith.constant 0.000000e+00 : bf16
    %15 = vector.broadcast %cst_13 : bf16 to vector<1x40x4xbf16>
    %c17 = arith.constant 17 : index
    %c0_14 = arith.constant 0 : index
    %c0_15 = arith.constant 0 : index
    %16 = vector.load %arg11[%c17, %c0_14, %c0_15] : memref<18x40x4xbf16, #tpu.memory_space<vmem>>, vector<1x40x4xbf16>
    tpu.vector_store %arg11[%c17, %c0_14, %c0_15], %15 {strides = array<i32>} : memref<18x40x4xbf16, #tpu.memory_space<vmem>>, vector<1x40x4xbf16>,
    %cst_16 = arith.constant 0.000000e+00 : bf16
    %17 = vector.broadcast %cst_16 : bf16 to vector<18x8x4xbf16>
    %c0_17 = arith.constant 0 : index
    %c8 = arith.constant 8 : index
    %c0_18 = arith.constant 0 : index
    %18 = vector.load %arg11[%c0_17, %c8, %c0_18] : memref<18x40x4xbf16, #tpu.memory_space<vmem>>, vector<18x8x4xbf16>
    tpu.vector_store %arg11[%c0_17, %c8, %c0_18], %17 {strides = array<i32>} : memref<18x40x4xbf16, #tpu.memory_space<vmem>>, vector<18x8x4xbf16>,
    %cst_19 = arith.constant 0.000000e+00 : bf16
    %19 = vector.broadcast %cst_19 : bf16 to vector<18x8x4xbf16>
    %c0_20 = arith.constant 0 : index
    %c32 = arith.constant 32 : index
    %c0_21 = arith.constant 0 : index
    %20 = vector.load %arg11[%c0_20, %c32, %c0_21] : memref<18x40x4xbf16, #tpu.memory_space<vmem>>, vector<18x8x4xbf16>
    tpu.vector_store %arg11[%c0_20, %c32, %c0_21], %19 {strides = array<i32>} : memref<18x40x4xbf16, #tpu.memory_space<vmem>>, vector<18x8x4xbf16>,
    %c0_22 = arith.constant 0 : index
    %c15 = arith.constant 15 : index
    %c0_23 = arith.constant 0 : index
    %21 = vector.load %arg11[%c0_22, %c15, %c0_23] : memref<18x40x4xbf16, #tpu.memory_space<vmem>>, vector<16x16x4xbf16>
    %22 = vector.shape_cast %21 : vector<16x16x4xbf16> to vector<256x4xbf16>
    %c0_24 = arith.constant 0 : index
    %c16_25 = arith.constant 16 : index
    %c0_26 = arith.constant 0 : index
    %23 = vector.load %arg11[%c0_24, %c16_25, %c0_26] : memref<18x40x4xbf16, #tpu.memory_space<vmem>>, vector<16x16x4xbf16>
    %24 = vector.shape_cast %23 : vector<16x16x4xbf16> to vector<256x4xbf16>
    %c0_27 = arith.constant 0 : index
    %c17_28 = arith.constant 17 : index
    %c0_29 = arith.constant 0 : index
    %25 = vector.load %arg11[%c0_27, %c17_28, %c0_29] : memref<18x40x4xbf16, #tpu.memory_space<vmem>>, vector<16x16x4xbf16>
    %26 = vector.shape_cast %25 : vector<16x16x4xbf16> to vector<256x4xbf16>
    %c1_30 = arith.constant 1 : index
    %c15_31 = arith.constant 15 : index
    %c0_32 = arith.constant 0 : index
    %27 = vector.load %arg11[%c1_30, %c15_31, %c0_32] : memref<18x40x4xbf16, #tpu.memory_space<vmem>>, vector<16x16x4xbf16>
    %28 = vector.shape_cast %27 : vector<16x16x4xbf16> to vector<256x4xbf16>
    %c1_33 = arith.constant 1 : index
    %c16_34 = arith.constant 16 : index
    %c0_35 = arith.constant 0 : index
    %29 = vector.load %arg11[%c1_33, %c16_34, %c0_35] : memref<18x40x4xbf16, #tpu.memory_space<vmem>>, vector<16x16x4xbf16>
    %30 = vector.shape_cast %29 : vector<16x16x4xbf16> to vector<256x4xbf16>
    %c1_36 = arith.constant 1 : index
    %c17_37 = arith.constant 17 : index
    %c0_38 = arith.constant 0 : index
    %31 = vector.load %arg11[%c1_36, %c17_37, %c0_38] : memref<18x40x4xbf16, #tpu.memory_space<vmem>>, vector<16x16x4xbf16>
    %32 = vector.shape_cast %31 : vector<16x16x4xbf16> to vector<256x4xbf16>
    %c2 = arith.constant 2 : index
    %c15_39 = arith.constant 15 : index
    %c0_40 = arith.constant 0 : index
    %33 = vector.load %arg11[%c2, %c15_39, %c0_40] : memref<18x40x4xbf16, #tpu.memory_space<vmem>>, vector<16x16x4xbf16>
    %34 = vector.shape_cast %33 : vector<16x16x4xbf16> to vector<256x4xbf16>
    %c2_41 = arith.constant 2 : index
    %c16_42 = arith.constant 16 : index
    %c0_43 = arith.constant 0 : index
    %35 = vector.load %arg11[%c2_41, %c16_42, %c0_43] : memref<18x40x4xbf16, #tpu.memory_space<vmem>>, vector<16x16x4xbf16>
    %36 = vector.shape_cast %35 : vector<16x16x4xbf16> to vector<256x4xbf16>
    %c2_44 = arith.constant 2 : index
    %c17_45 = arith.constant 17 : index
    %c0_46 = arith.constant 0 : index
    %37 = vector.load %arg11[%c2_44, %c17_45, %c0_46] : memref<18x40x4xbf16, #tpu.memory_space<vmem>>, vector<16x16x4xbf16>
    %38 = vector.shape_cast %37 : vector<16x16x4xbf16> to vector<256x4xbf16>
    %39 = tpu.concatenate %22, %24, %26, %28, %30, %32, %34, %36, %38 in 1 : vector<256x4xbf16>, vector<256x4xbf16>, vector<256x4xbf16>, vector<256x4xbf16>, vector<256x4xbf16>, vector<256x4xbf16>, vector<256x4xbf16>, vector<256x4xbf16>, vector<256x4xbf16> -> vector<256x36xbf16>
    %c0_47 = arith.constant 0 : index
    %c0_48 = arith.constant 0 : index
    %40 = vector.load %arg3[%c0_47, %c0_48] : memref<36x4xbf16, #tpu.memory_space<vmem>>, vector<36x4xbf16>
    %cst_49 = arith.constant dense<0.000000e+00> : vector<256x4xf32>
    %41 = tpu.matmul %39, %40, %cst_49 {dimension_numbers = #tpu.dot_dimension_numbers<[1], [0], [0], [1], [0, 0, 1, 1], [], []>} : vector<256x36xbf16>, vector<36x4xbf16>, vector<256x4xf32> -> vector<256x4xf32>
    %c0_50 = arith.constant 0 : index
    %c0_51 = arith.constant 0 : index
    %42 = vector.load %arg7[%c0_50, %c0_51] : memref<1x4xf32, #tpu.memory_space<vmem>>, vector<1x4xf32>
    %43 = vector.broadcast %42 : vector<1x4xf32> to vector<256x4xf32>
    %44 = arith.addf %41, %43 : vector<256x4xf32>
    %cst_52 = arith.constant 0.000000e+00 : f32
    %45 = vector.broadcast %cst_52 : f32 to vector<256x4xf32>
    %46 = arith.maximumf %44, %45 : vector<256x4xf32>
    %47 = arith.truncf %46 : vector<256x4xf32> to vector<256x4xbf16>
    %c0_53 = arith.constant 0 : index
    %c0_54 = arith.constant 0 : index
    %48 = vector.load %arg4[%c0_53, %c0_54] : memref<4x16xbf16, #tpu.memory_space<vmem>>, vector<4x16xbf16>
    %cst_55 = arith.constant dense<0.000000e+00> : vector<256x16xf32>
    %49 = tpu.matmul %47, %48, %cst_55 {dimension_numbers = #tpu.dot_dimension_numbers<[1], [0], [0], [1], [0, 0, 1, 1], [], []>} : vector<256x4xbf16>, vector<4x16xbf16>, vector<256x16xf32> -> vector<256x16xf32>
    %c0_56 = arith.constant 0 : index
    %c0_57 = arith.constant 0 : index
    %50 = vector.load %arg8[%c0_56, %c0_57] : memref<1x16xf32, #tpu.memory_space<vmem>>, vector<1x16xf32>
    %51 = vector.broadcast %50 : vector<1x16xf32> to vector<256x16xf32>
    %52 = arith.addf %49, %51 : vector<256x16xf32>
    %c0_58 = arith.constant 0 : index
    %c0_59 = arith.constant 0 : index
    %53 = vector.load %arg5[%c0_58, %c0_59] : memref<4x16xbf16, #tpu.memory_space<vmem>>, vector<4x16xbf16>
    %cst_60 = arith.constant dense<0.000000e+00> : vector<256x16xf32>
    %54 = tpu.matmul %2, %53, %cst_60 {dimension_numbers = #tpu.dot_dimension_numbers<[1], [0], [0], [1], [0, 0, 1, 1], [], []>} : vector<256x4xbf16>, vector<4x16xbf16>, vector<256x16xf32> -> vector<256x16xf32>
    %c0_61 = arith.constant 0 : index
    %c0_62 = arith.constant 0 : index
    %55 = vector.load %arg9[%c0_61, %c0_62] : memref<1x16xf32, #tpu.memory_space<vmem>>, vector<1x16xf32>
    %56 = vector.broadcast %55 : vector<1x16xf32> to vector<256x16xf32>
    %57 = arith.addf %54, %56 : vector<256x16xf32>
    %58 = arith.addf %52, %57 : vector<256x16xf32>
    %cst_63 = arith.constant 0.000000e+00 : f32
    %59 = vector.broadcast %cst_63 : f32 to vector<256x16xf32>
    %60 = arith.maximumf %58, %59 : vector<256x16xf32>
    %61 = arith.truncf %60 : vector<256x16xf32> to vector<256x16xbf16>
    %c0_64 = arith.constant 0 : index
    %c0_65 = arith.constant 0 : index
    %c0_66 = arith.constant 0 : index
    %62 = vector.load %arg10[%c0_64, %c0_65, %c0_66] : memref<1x256x16xbf16, #tpu.memory_space<vmem>>, vector<1x256x16xbf16>
    %63 = vector.shape_cast %62 : vector<1x256x16xbf16> to vector<256x16xbf16>
    %64 = vector.shape_cast %61 : vector<256x16xbf16> to vector<1x256x16xbf16>
    tpu.vector_store %arg10[%c0_64, %c0_65, %c0_66], %64 {strides = array<i32>} : memref<1x256x16xbf16, #tpu.memory_space<vmem>>, vector<1x256x16xbf16>,
    return
  }
  func.func @transform_0(%arg0: i32) -> (i32, i32, i32, i32) {
    %c0_i32 = arith.constant 0 : i32
    %c0_i32_0 = arith.constant 0 : i32
    %c0_i32_1 = arith.constant 0 : i32
    %c0_i32_2 = arith.constant 0 : i32
    return %arg0, %c0_i32, %c0_i32_0, %c0_i32_1 : i32, i32, i32, i32
  }
  func.func @transform_1(%arg0: i32) -> (i32, i32) {
    %c0_i32 = arith.constant 0 : i32
    %c0_i32_0 = arith.constant 0 : i32
    %c0_i32_1 = arith.constant 0 : i32
    return %c0_i32, %c0_i32_0 : i32, i32
  }
  func.func @transform_2(%arg0: i32) -> (i32, i32) {
    %c0_i32 = arith.constant 0 : i32
    %c0_i32_0 = arith.constant 0 : i32
    %c0_i32_1 = arith.constant 0 : i32
    return %c0_i32, %c0_i32_0 : i32, i32
  }
  func.func @transform_3(%arg0: i32) -> (i32, i32) {
    %c0_i32 = arith.constant 0 : i32
    %c0_i32_0 = arith.constant 0 : i32
    %c0_i32_1 = arith.constant 0 : i32
    return %c0_i32, %c0_i32_0 : i32, i32
  }
  func.func @transform_4(%arg0: i32) -> (i32, i32) {
    %c0_i32 = arith.constant 0 : i32
    %c0_i32_0 = arith.constant 0 : i32
    %c0_i32_1 = arith.constant 0 : i32
    return %c0_i32, %c0_i32_0 : i32, i32
  }
  func.func @transform_5(%arg0: i32) -> (i32, i32) {
    %c0_i32 = arith.constant 0 : i32
    %c0_i32_0 = arith.constant 0 : i32
    %c0_i32_1 = arith.constant 0 : i32
    return %c0_i32, %c0_i32_0 : i32, i32
  }
  func.func @transform_6(%arg0: i32) -> (i32, i32) {
    %c0_i32 = arith.constant 0 : i32
    %c0_i32_0 = arith.constant 0 : i32
    %c0_i32_1 = arith.constant 0 : i32
    return %c0_i32, %c0_i32_0 : i32, i32
  }
  func.func @transform_7(%arg0: i32) -> (i32, i32) {
    %c0_i32 = arith.constant 0 : i32
    %c0_i32_0 = arith.constant 0 : i32
    %c0_i32_1 = arith.constant 0 : i32
    return %c0_i32, %c0_i32_0 : i32, i32
  }
  func.func @transform_8(%arg0: i32) -> (i32, i32) {
    %c0_i32 = arith.constant 0 : i32
    %c0_i32_0 = arith.constant 0 : i32
    %c0_i32_1 = arith.constant 0 : i32
    return %c0_i32, %c0_i32_0 : i32, i32
  }
  func.func @transform_9(%arg0: i32) -> (i32, i32, i32) {
    %c0_i32 = arith.constant 0 : i32
    %c0_i32_0 = arith.constant 0 : i32
    %c0_i32_1 = arith.constant 0 : i32
    return %arg0, %c0_i32, %c0_i32_0 : i32, i32, i32
  }
}

</mosaic_0001>

<llo_original>
// kernel: tpu_custom_call.1
$region0: #{tpu_custom_call.1}
  #allocation0 [shape = 'u32[]', space=smem, size = 0x4, offset = 0x4, fixed_abs, tag = 'smem constant byte address 0x4 - core index']
  #allocation1 [shape = 'u32[144,128]{1,0:T(1,128)}', space=vmem, size = 0x12000, scoped, tag = 'internal scratch']
  #allocation2 [shape = 'bf16[18,40,4]{2,1,0:T(8,128)(2,1)}', space=vmem, size = 0x2d000, scoped, tag = 'scratch operand']
  %s0 = inlined_call_operand.vmem [shape: bf16[2,16,16,4], index: 0, kind: input, shape index: {}]
  %s1 = inlined_call_operand.vmem [shape: bf16[4,4], index: 1, kind: input, shape index: {}]
  %s2 = inlined_call_operand.vmem [shape: bf16[36,4], index: 2, kind: input, shape index: {}]
  %s3 = inlined_call_operand.vmem [shape: bf16[4,16], index: 3, kind: input, shape index: {}]
  %s4 = inlined_call_operand.vmem [shape: bf16[4,16], index: 4, kind: input, shape index: {}]
  %s5 = inlined_call_operand.vmem [shape: f32[1,4], index: 5, kind: input, shape index: {}]
  %s6 = inlined_call_operand.vmem [shape: f32[1,4], index: 6, kind: input, shape index: {}]
  %s7 = inlined_call_operand.vmem [shape: f32[1,16], index: 7, kind: input, shape index: {}]
  %s8 = inlined_call_operand.vmem [shape: f32[1,16], index: 8, kind: input, shape index: {}]
  %s9 = inlined_call_operand.vmem [shape: bf16[2,256,16], index: 9, kind: output, shape index: {}]
  %s10 = sld [smem:[#allocation0]]
  $region69: #{tpu_custom_call.1} parent=0
    _
  %s12 = ssub.s32 1, %s10
  %s13 = scalar_select 0, %s12, %s10
  loop: start=0, step=1, limit=4
  $region2: #{tpu_custom_call.1} parent=0 // loop_pre_header
    _
  $region3: #{tpu_custom_call.1} parent=0 // loop_header
    %s15 = sphi 0, %s19
    %p16 = scmp.ge.s32.totalorder %s15, 4
    %s25 = sphi 0, %s27
    %s28 = sphi 0, %s25
    %s29 = sphi 0, %s28
    %s45 = sphi 0, %s29
    %s49 = sphi 0, %s49
    %s51 = sphi 0, %s49
    %s52 = sphi 0, %s51
    %s66 = sphi 0, %s52
    %s70 = sphi 0, %s70
    %s72 = sphi 0, %s70
    %s73 = sphi 0, %s72
    %s87 = sphi 0, %s73
    %s91 = sphi 0, %s91
    %s93 = sphi 0, %s91
    %s94 = sphi 0, %s93
    %s108 = sphi 0, %s94
    %s112 = sphi 0, %s112
    %s114 = sphi 0, %s112
    %s115 = sphi 0, %s114
    %s129 = sphi 0, %s115
    %s133 = sphi 0, %s133
    %s135 = sphi 0, %s133
    %s136 = sphi 0, %s135
    %s150 = sphi 0, %s136
    %s154 = sphi 0, %s154
    %s156 = sphi 0, %s154
    %s157 = sphi 0, %s156
    %s171 = sphi 0, %s157
    %s175 = sphi 0, %s175
    %s177 = sphi 0, %s175
    %s178 = sphi 0, %s177
    %s192 = sphi 0, %s178
    %s196 = sphi 0, %s196
    %s198 = sphi 0, %s196
    %s199 = sphi 0, %s198
    %s213 = sphi 0, %s199
    %s219 = sphi 0, %s221
    %s222 = sphi 0, %s219
    %s223 = sphi 0, %s222
    %s239 = sphi 0, %s223
  $region4: #{tpu_custom_call.1} parent=0 // loop_header_branch
    %18 = sbr.rel (%p16) target = $region8
  $region5: #{tpu_custom_call.1} parent=0 // loop_body
    %s20 = ssub.s32 %s15, 1
    %s21 = ssub.s32 %s15, 2
    %s22 = sadd.s32 %s15, 1
    %s23 = ssub.s32 %s15, %s22
    %p24 = scmp.eq.s32.totalorder %s23, 0
    %s26 = sadd.s32 %s25, 1
    %s27 = scalar_select %p24, %s25, %s26
    %p30 = pneg %p24
    %p31 = scmp.eq.s32.totalorder %s15, 1
    %p32 = por %p30, %p31
    %p33 = scmp.ne.s32.totalorder %s25, %s28
    %p34 = scmp.eq.s32.totalorder %s15, 0
    %p35 = por %p33, %p34
    %p36 = scmp.ne.s32.totalorder %s25, %s28
    %p37 = scmp.eq.s32.totalorder %s20, 1
    %p38 = por %p36, %p37
    %p39 = scmp.ne.s32.totalorder %s28, %s29
    %p40 = scmp.eq.s32.totalorder %s20, 0
    %p41 = por %p39, %p40
    %p42 = scmp.ne.s32.totalorder %s28, %s29
    %p43 = scmp.eq.s32.totalorder %s21, 1
    %p44 = por %p42, %p43
    %p46 = scmp.ne.s32.totalorder %s29, %s45
    %p47 = scmp.eq.s32.totalorder %s21, 0
    %p48 = por %p46, %p47
    %s50 = sadd.s32 %s49, 1
    %p53 = scmp.eq.s32.totalorder %s15, 1
    %p54 = scmp.ne.s32.totalorder %s49, %s51
    %p55 = scmp.eq.s32.totalorder %s15, 0
    %p56 = por %p54, %p55
    %p57 = scmp.ne.s32.totalorder %s49, %s51
    %p58 = scmp.eq.s32.totalorder %s20, 1
    %p59 = por %p57, %p58
    %p60 = scmp.ne.s32.totalorder %s51, %s52
    %p61 = scmp.eq.s32.totalorder %s20, 0
    %p62 = por %p60, %p61
    %p63 = scmp.ne.s32.totalorder %s51, %s52
    %p64 = scmp.eq.s32.totalorder %s21, 1
    %p65 = por %p63, %p64
    %p67 = scmp.ne.s32.totalorder %s52, %s66
    %p68 = scmp.eq.s32.totalorder %s21, 0
    %p69 = por %p67, %p68
    %s71 = sadd.s32 %s70, 1
    %p74 = scmp.eq.s32.totalorder %s15, 1
    %p75 = scmp.ne.s32.totalorder %s70, %s72
    %p76 = scmp.eq.s32.totalorder %s15, 0
    %p77 = por %p75, %p76
    %p78 = scmp.ne.s32.totalorder %s70, %s72
    %p79 = scmp.eq.s32.totalorder %s20, 1
    %p80 = por %p78, %p79
    %p81 = scmp.ne.s32.totalorder %s72, %s73
    %p82 = scmp.eq.s32.totalorder %s20, 0
    %p83 = por %p81, %p82
    %p84 = scmp.ne.s32.totalorder %s72, %s73
    %p85 = scmp.eq.s32.totalorder %s21, 1
    %p86 = por %p84, %p85
    %p88 = scmp.ne.s32.totalorder %s73, %s87
    %p89 = scmp.eq.s32.totalorder %s21, 0
    %p90 = por %p88, %p89
    %s92 = sadd.s32 %s91, 1
    %p95 = scmp.eq.s32.totalorder %s15, 1
    %p96 = scmp.ne.s32.totalorder %s91, %s93
    %p97 = scmp.eq.s32.totalorder %s15, 0
    %p98 = por %p96, %p97
    %p99 = scmp.ne.s32.totalorder %s91, %s93
    %p100 = scmp.eq.s32.totalorder %s20, 1
    %p101 = por %p99, %p100
    %p102 = scmp.ne.s32.totalorder %s93, %s94
    %p103 = scmp.eq.s32.totalorder %s20, 0
    %p104 = por %p102, %p103
    %p105 = scmp.ne.s32.totalorder %s93, %s94
    %p106 = scmp.eq.s32.totalorder %s21, 1
    %p107 = por %p105, %p106
    %p109 = scmp.ne.s32.totalorder %s94, %s108
    %p110 = scmp.eq.s32.totalorder %s21, 0
    %p111 = por %p109, %p110
    %s113 = sadd.s32 %s112, 1
    %p116 = scmp.eq.s32.totalorder %s15, 1
    %p117 = scmp.ne.s32.totalorder %s112, %s114
    %p118 = scmp.eq.s32.totalorder %s15, 0
    %p119 = por %p117, %p118
    %p120 = scmp.ne.s32.totalorder %s112, %s114
    %p121 = scmp.eq.s32.totalorder %s20, 1
    %p122 = por %p120, %p121
    %p123 = scmp.ne.s32.totalorder %s114, %s115
    %p124 = scmp.eq.s32.totalorder %s20, 0
    %p125 = por %p123, %p124
    %p126 = scmp.ne.s32.totalorder %s114, %s115
    %p127 = scmp.eq.s32.totalorder %s21, 1
    %p128 = por %p126, %p127
    %p130 = scmp.ne.s32.totalorder %s115, %s129
    %p131 = scmp.eq.s32.totalorder %s21, 0
    %p132 = por %p130, %p131
    %s134 = sadd.s32 %s133, 1
    %p137 = scmp.eq.s32.totalorder %s15, 1
    %p138 = scmp.ne.s32.totalorder %s133, %s135
    %p139 = scmp.eq.s32.totalorder %s15, 0
    %p140 = por %p138, %p139
    %p141 = scmp.ne.s32.totalorder %s133, %s135
    %p142 = scmp.eq.s32.totalorder %s20, 1
    %p143 = por %p141, %p142
    %p144 = scmp.ne.s32.totalorder %s135, %s136
    %p145 = scmp.eq.s32.totalorder %s20, 0
    %p146 = por %p144, %p145
    %p147 = scmp.ne.s32.totalorder %s135, %s136
    %p148 = scmp.eq.s32.totalorder %s21, 1
    %p149 = por %p147, %p148
    %p151 = scmp.ne.s32.totalorder %s136, %s150
    %p152 = scmp.eq.s32.totalorder %s21, 0
    %p153 = por %p151, %p152
    %s155 = sadd.s32 %s154, 1
    %p158 = scmp.eq.s32.totalorder %s15, 1
    %p159 = scmp.ne.s32.totalorder %s154, %s156
    %p160 = scmp.eq.s32.totalorder %s15, 0
    %p161 = por %p159, %p160
    %p162 = scmp.ne.s32.totalorder %s154, %s156
    %p163 = scmp.eq.s32.totalorder %s20, 1
    %p164 = por %p162, %p163
    %p165 = scmp.ne.s32.totalorder %s156, %s157
    %p166 = scmp.eq.s32.totalorder %s20, 0
    %p167 = por %p165, %p166
    %p168 = scmp.ne.s32.totalorder %s156, %s157
    %p169 = scmp.eq.s32.totalorder %s21, 1
    %p170 = por %p168, %p169
    %p172 = scmp.ne.s32.totalorder %s157, %s171
    %p173 = scmp.eq.s32.totalorder %s21, 0
    %p174 = por %p172, %p173
    %s176 = sadd.s32 %s175, 1
    %p179 = scmp.eq.s32.totalorder %s15, 1
    %p180 = scmp.ne.s32.totalorder %s175, %s177
    %p181 = scmp.eq.s32.totalorder %s15, 0
    %p182 = por %p180, %p181
    %p183 = scmp.ne.s32.totalorder %s175, %s177
    %p184 = scmp.eq.s32.totalorder %s20, 1
    %p185 = por %p183, %p184
    %p186 = scmp.ne.s32.totalorder %s177, %s178
    %p187 = scmp.eq.s32.totalorder %s20, 0
    %p188 = por %p186, %p187
    %p189 = scmp.ne.s32.totalorder %s177, %s178
    %p190 = scmp.eq.s32.totalorder %s21, 1
    %p191 = por %p189, %p190
    %p193 = scmp.ne.s32.totalorder %s178, %s192
    %p194 = scmp.eq.s32.totalorder %s21, 0
    %p195 = por %p193, %p194
    %s197 = sadd.s32 %s196, 1
    %p200 = scmp.eq.s32.totalorder %s15, 1
    %p201 = scmp.ne.s32.totalorder %s196, %s198
    %p202 = scmp.eq.s32.totalorder %s15, 0
    %p203 = por %p201, %p202
    %p204 = scmp.ne.s32.totalorder %s196, %s198
    %p205 = scmp.eq.s32.totalorder %s20, 1
    %p206 = por %p204, %p205
    %p207 = scmp.ne.s32.totalorder %s198, %s199
    %p208 = scmp.eq.s32.totalorder %s20, 0
    %p209 = por %p207, %p208
    %p210 = scmp.ne.s32.totalorder %s198, %s199
    %p211 = scmp.eq.s32.totalorder %s21, 1
    %p212 = por %p210, %p211
    %p214 = scmp.ne.s32.totalorder %s199, %s213
    %p215 = scmp.eq.s32.totalorder %s21, 0
    %p216 = por %p214, %p215
    %s217 = ssub.s32 %s15, %s22
    %p218 = scmp.eq.s32.totalorder %s217, 0
    %s220 = sadd.s32 %s219, 1
    %s221 = scalar_select %p218, %s219, %s220
    %p224 = pneg %p218
    %p225 = scmp.eq.s32.totalorder %s15, 1
    %p226 = por %p224, %p225
    %p227 = scmp.ne.s32.totalorder %s219, %s222
    %p228 = scmp.eq.s32.totalorder %s15, 0
    %p229 = por %p227, %p228
    %p230 = scmp.ne.s32.totalorder %s219, %s222
    %p231 = scmp.eq.s32.totalorder %s20, 1
    %p232 = por %p230, %p231
    %p233 = scmp.ne.s32.totalorder %s222, %s223
    %p234 = scmp.eq.s32.totalorder %s20, 0
    %p235 = por %p233, %p234
    %p236 = scmp.ne.s32.totalorder %s222, %s223
    %p237 = scmp.eq.s32.totalorder %s21, 1
    %p238 = por %p236, %p237
    %p240 = scmp.ne.s32.totalorder %s223, %s239
    %p241 = scmp.eq.s32.totalorder %s21, 0
    %p242 = por %p240, %p241
    %p243 = scmp.le.s32.totalorder 1, %s15
    %p244 = scmp.lt.s32.totalorder %s15, 3
    %p245 = pnand %p243, %p244
    %p246 = pneg %p245
    // Predicated region
    $region9: #{tpu_custom_call.1} parent=5 // pred_check
      _
    $region10: #{tpu_custom_call.1} parent=5 // pred_check_branch
      %248 = sbr.rel (%p245) target = $region12
    $region11: #{tpu_custom_call.1} parent=5 // pred_region
      %s249 = ssub.s32 %s15, 1
      // Predicated region
      $region13: #{tpu_custom_call.1} parent=11 // pred_check
        %p250 = pneg %p62
      $region14: #{tpu_custom_call.1} parent=11 // pred_check_branch
        %252 = sbr.rel (%p250) target = $region16
      $region15: #{tpu_custom_call.1} parent=11 // pred_region
        _
      $region16: #{tpu_custom_call.1} parent=11 // pred_fallthru
        _
      // Predicated region
      $region17: #{tpu_custom_call.1} parent=11 // pred_check
        %p253 = pneg %p83
      $region18: #{tpu_custom_call.1} parent=11 // pred_check_branch
        %255 = sbr.rel (%p253) target = $region20
      $region19: #{tpu_custom_call.1} parent=11 // pred_region
        _
      $region20: #{tpu_custom_call.1} parent=11 // pred_fallthru
        _
      // Predicated region
      $region21: #{tpu_custom_call.1} parent=11 // pred_check
        %p256 = pneg %p104
      $region22: #{tpu_custom_call.1} parent=11 // pred_check_branch
        %258 = sbr.rel (%p256) target = $region24
      $region23: #{tpu_custom_call.1} parent=11 // pred_region
        _
      $region24: #{tpu_custom_call.1} parent=11 // pred_fallthru
        _
      // Predicated region
      $region25: #{tpu_custom_call.1} parent=11 // pred_check
        %p259 = pneg %p125
      $region26: #{tpu_custom_call.1} parent=11 // pred_check_branch
        %261 = sbr.rel (%p259) target = $region28
      $region27: #{tpu_custom_call.1} parent=11 // pred_region
        _
      $region28: #{tpu_custom_call.1} parent=11 // pred_fallthru
        _
      // Predicated region
      $region29: #{tpu_custom_call.1} parent=11 // pred_check
        %p262 = pneg %p146
      $region30: #{tpu_custom_call.1} parent=11 // pred_check_branch
        %264 = sbr.rel (%p262) target = $region32
      $region31: #{tpu_custom_call.1} parent=11 // pred_region
        _
      $region32: #{tpu_custom_call.1} parent=11 // pred_fallthru
        _
      // Predicated region
      $region33: #{tpu_custom_call.1} parent=11 // pred_check
        %p265 = pneg %p167
      $region34: #{tpu_custom_call.1} parent=11 // pred_check_branch
        %267 = sbr.rel (%p265) target = $region36
      $region35: #{tpu_custom_call.1} parent=11 // pred_region
        _
      $region36: #{tpu_custom_call.1} parent=11 // pred_fallthru
        _
      // Predicated region
      $region37: #{tpu_custom_call.1} parent=11 // pred_check
        %p268 = pneg %p188
      $region38: #{tpu_custom_call.1} parent=11 // pred_check_branch
        %270 = sbr.rel (%p268) target = $region40
      $region39: #{tpu_custom_call.1} parent=11 // pred_region
        _
      $region40: #{tpu_custom_call.1} parent=11 // pred_fallthru
        _
      // Predicated region
      $region41: #{tpu_custom_call.1} parent=11 // pred_check
        %p271 = pneg %p209
      $region42: #{tpu_custom_call.1} parent=11 // pred_check_branch
        %273 = sbr.rel (%p271) target = $region44
      $region43: #{tpu_custom_call.1} parent=11 // pred_region
        _
      $region44: #{tpu_custom_call.1} parent=11 // pred_fallthru
        _
    $region12: #{tpu_custom_call.1} parent=5 // pred_fallthru
      _
    %p274 = scmp.lt.s32.totalorder %s15, 2
    // Predicated region
    $region45: #{tpu_custom_call.1} parent=5 // pred_check
      %p275 = pneg %p274
    $region46: #{tpu_custom_call.1} parent=5 // pred_check_branch
      %277 = sbr.rel (%p275) target = $region48
    $region47: #{tpu_custom_call.1} parent=5 // pred_region
      // Predicated region
      $region49: #{tpu_custom_call.1} parent=47 // pred_check
        %p278 = pneg %p35
      $region50: #{tpu_custom_call.1} parent=47 // pred_check_branch
        %280 = sbr.rel (%p278) target = $region52
      $region51: #{tpu_custom_call.1} parent=47 // pred_region
        %p281 = scmp.lt.s32.totalorder %s15, 1
        %s282 = scalar_select %p281, %s15, 1
        %s283 = smul.addr %s282, 32
        %s284 = smul.addr %s283, 4
        %s285 = scalar_lea.vmem %s0, %s284
      $region52: #{tpu_custom_call.1} parent=47 // pred_fallthru
        _
    $region48: #{tpu_custom_call.1} parent=5 // pred_fallthru
      _
    %p286 = scmp.le.s32.totalorder 1, %s15
    %p287 = scmp.lt.s32.totalorder %s15, 3
    %p288 = pnand %p286, %p287
    %p289 = pneg %p288
    // Predicated region
    $region53: #{tpu_custom_call.1} parent=5 // pred_check
      _
    $region54: #{tpu_custom_call.1} parent=5 // pred_check_branch
      %291 = sbr.rel (%p288) target = $region56
    $region55: #{tpu_custom_call.1} parent=5 // pred_region
      %s292 = ssub.s32 %s15, 1
      %p293 = scmp.lt.s32.totalorder %s20, 1
      %s294 = scalar_select %p293, %s20, 1
      %s295 = smul.addr %s294, 32
      %s296 = smul.addr %s295, 4
      %s297 = scalar_lea.vmem %s0, %s296
      %p298 = pneg %p41
      %p299 = pneg %p38
      %p300 = pneg %p62
      %p301 = pneg %p59
      %p302 = pneg %p83
      %p303 = pneg %p80
      %p304 = pneg %p104
      %p305 = pneg %p101
      %p306 = pneg %p125
      %p307 = pneg %p122
      %p308 = pneg %p146
      %p309 = pneg %p143
      %p310 = pneg %p167
      %p311 = pneg %p164
      %p312 = pneg %p188
      %p313 = pneg %p185
      %p314 = pneg %p209
      %p315 = pneg %p206
      %p316 = pneg %p235
      %p317 = pneg %p232
      %p318 = scmp.lt.s32.totalorder %s20, 1
      %s319 = scalar_select %p318, %s20, 1
      %s320 = smul.addr %s319, 32
      %s321 = smul.addr %s320, 4
      %s322 = scalar_lea.vmem %s9, %s321
      %p323 = scmp.lt.s32.totalorder %s20, 1
      %s324 = scalar_select %p323, %s20, 1
      %s325 = smul.addr %s324, 32
      %s326 = smul.addr %s325, 4
      %s327 = scalar_lea.vmem %s0, %s326
      %p328 = scmp.lt.s32.totalorder %s20, 1
      %s329 = scalar_select %p328, %s20, 1
      %s330 = smul.addr %s329, 32
      %s331 = smul.addr %s330, 4
      %s332 = scalar_lea.vmem %s9, %s331
      %v334 = vld [vmem:[%s327] sm:$0xf]
      %v335 = vld [vmem:[%s327 + $0x4] sm:$0xf]
      %v336 = vld [vmem:[%s327 + $0x8] sm:$0xf]
      %v337 = vld [vmem:[%s327 + $0xc] sm:$0xf]
      %v338 = vld [vmem:[%s327 + $0x10] sm:$0xf]
      %v339 = vld [vmem:[%s327 + $0x14] sm:$0xf]
      %v340 = vld [vmem:[%s327 + $0x18] sm:$0xf]
      %v341 = vld [vmem:[%s327 + $0x1c] sm:$0xf]
      %v342 = vld [vmem:[%s327 + $0x20] sm:$0xf]
      %v343 = vld [vmem:[%s327 + $0x24] sm:$0xf]
      %v344 = vld [vmem:[%s327 + $0x28] sm:$0xf]
      %v345 = vld [vmem:[%s327 + $0x2c] sm:$0xf]
      %v346 = vld [vmem:[%s327 + $0x30] sm:$0xf]
      %v347 = vld [vmem:[%s327 + $0x34] sm:$0xf]
      %v348 = vld [vmem:[%s327 + $0x38] sm:$0xf]
      %v349 = vld [vmem:[%s327 + $0x3c] sm:$0xf]
      %v350 = vld [vmem:[%s327 + $0x40] sm:$0xf]
      %v351 = vld [vmem:[%s327 + $0x44] sm:$0xf]
      %v352 = vld [vmem:[%s327 + $0x48] sm:$0xf]
      %v353 = vld [vmem:[%s327 + $0x4c] sm:$0xf]
      %v354 = vld [vmem:[%s327 + $0x50] sm:$0xf]
      %v355 = vld [vmem:[%s327 + $0x54] sm:$0xf]
      %v356 = vld [vmem:[%s327 + $0x58] sm:$0xf]
      %v357 = vld [vmem:[%s327 + $0x5c] sm:$0xf]
      %v358 = vld [vmem:[%s327 + $0x60] sm:$0xf]
      %v359 = vld [vmem:[%s327 + $0x64] sm:$0xf]
      %v360 = vld [vmem:[%s327 + $0x68] sm:$0xf]
      %v361 = vld [vmem:[%s327 + $0x6c] sm:$0xf]
      %v362 = vld [vmem:[%s327 + $0x70] sm:$0xf]
      %v363 = vld [vmem:[%s327 + $0x74] sm:$0xf]
      %v364 = vld [vmem:[%s327 + $0x78] sm:$0xf]
      %v365 = vld [vmem:[%s327 + $0x7c] sm:$0xf]
      %v366 = vld [vmem:[%s1] sm:$0x3]
      %v367 = vld [vmem:[%s5] sm:$0x1]
      %v369 = vlaneseq
      %v370 = vshrl.u32 %v369, 7
      %v371 = vsub.s32 0, %v370
      %v372 = vrot.slane %v367, %v371
      %v406 = vunpack.c.l.b16 %v334
      %v407 = vunpack.c.l.b16 %v335
      %v408 = vunpack.c.l.b16 %v336
      %v409 = vunpack.c.l.b16 %v337
      %v410 = vunpack.c.l.b16 %v338
      %v411 = vunpack.c.l.b16 %v339
      %v412 = vunpack.c.l.b16 %v340
      %v413 = vunpack.c.l.b16 %v341
      %v414 = vunpack.c.l.b16 %v342
      %v415 = vunpack.c.l.b16 %v343
      %v416 = vunpack.c.l.b16 %v344
      %v417 = vunpack.c.l.b16 %v345
      %v418 = vunpack.c.l.b16 %v346
      %v419 = vunpack.c.l.b16 %v347
      %v420 = vunpack.c.l.b16 %v348
      %v421 = vunpack.c.l.b16 %v349
      %v422 = vunpack.c.l.b16 %v350
      %v423 = vunpack.c.l.b16 %v351
      %v424 = vunpack.c.l.b16 %v352
      %v425 = vunpack.c.l.b16 %v353
      %v426 = vunpack.c.l.b16 %v354
      %v427 = vunpack.c.l.b16 %v355
      %v428 = vunpack.c.l.b16 %v356
      %v429 = vunpack.c.l.b16 %v357
      %v430 = vunpack.c.l.b16 %v358
      %v431 = vunpack.c.l.b16 %v359
      %v432 = vunpack.c.l.b16 %v360
      %v433 = vunpack.c.l.b16 %v361
      %v434 = vunpack.c.l.b16 %v362
      %v435 = vunpack.c.l.b16 %v363
      %v436 = vunpack.c.l.b16 %v364
      %v437 = vunpack.c.l.b16 %v365
      %v438 = vpack.c.b16 %v407, %v406
      %v439 = vpack.c.b16 %v409, %v408
      %v440 = vpack.c.b16 %v411, %v410
      %v441 = vpack.c.b16 %v413, %v412
      %v442 = vpack.c.b16 %v415, %v414
      %v443 = vpack.c.b16 %v417, %v416
      %v444 = vpack.c.b16 %v419, %v418
      %v445 = vpack.c.b16 %v421, %v420
      %v446 = vpack.c.b16 %v423, %v422
      %v447 = vpack.c.b16 %v425, %v424
      %v448 = vpack.c.b16 %v427, %v426
      %v449 = vpack.c.b16 %v429, %v428
      %v450 = vpack.c.b16 %v431, %v430
      %v451 = vpack.c.b16 %v433, %v432
      %v452 = vpack.c.b16 %v435, %v434
      %v453 = vpack.c.b16 %v437, %v436
      %vm454 = vcmask 31744
      %v456 = vsel %vm454, %v438, 0
      %v459 = vsel %vm454, %v439, 0
      %v462 = vsel %vm454, %v440, 0
      %v465 = vsel %vm454, %v441, 0
      %v468 = vsel %vm454, %v442, 0
      %v471 = vsel %vm454, %v443, 0
      %v474 = vsel %vm454, %v444, 0
      %v477 = vsel %vm454, %v445, 0
      %v480 = vsel %vm454, %v446, 0
      %v483 = vsel %vm454, %v447, 0
      %v486 = vsel %vm454, %v448, 0
      %v489 = vsel %vm454, %v449, 0
      %v492 = vsel %vm454, %v450, 0
      %v495 = vsel %vm454, %v451, 0
      %v498 = vsel %vm454, %v452, 0
      %v501 = vsel %vm454, %v453, 0
      %vm503 = vcmask 1041408
      %v505 = vsel %vm503, %v366, 0
      %507 = vmatprep.subr.bf16.mxu0 0
      %508 = vmatpush1.bf16.msra.mxu0 %v505
      %509 = vmatprep.subr.bf16.mxu0 0
      %510 = vmatpush1.bf16.msra.mxu0 0
      %511 = vmatprep.subr.bf16.mxu0 0
      %512 = vmatpush1.bf16.msra.mxu0 0
      %513 = vmatprep.subr.bf16.mxu0 0
      %514 = vmatpush1.bf16.msra.mxu0 0
      %515 = vmatprep.subr.bf16.mxu0 0
      %516 = vmatpush1.bf16.msra.mxu0 0
      %517 = vmatprep.subr.bf16.mxu0 0
      %518 = vmatpush1.bf16.msra.mxu0 0
      %519 = vmatprep.subr.bf16.mxu0 0
      %520 = vmatpush1.bf16.msra.mxu0 0
      %521 = vmatprep.subr.bf16.mxu0 0
      %522 = vmatpush1.bf16.msra.mxu0 0
      %523 = vmatprep.subr.bf16.mxu0 0
      %524 = vmatpush1.bf16.msra.mxu0 0
      %525 = vmatprep.subr.bf16.mxu0 0
      %526 = vmatpush1.bf16.msra.mxu0 0
      %527 = vmatprep.subr.bf16.mxu0 0
      %528 = vmatpush1.bf16.msra.mxu0 0
      %529 = vmatprep.subr.bf16.mxu0 0
      %530 = vmatpush1.bf16.msra.mxu0 0
      %531 = vmatprep.subr.bf16.mxu0 0
      %532 = vmatpush1.bf16.msra.mxu0 0
      %533 = vmatprep.subr.bf16.mxu0 0
      %534 = vmatpush1.bf16.msra.mxu0 0
      %535 = vmatprep.subr.bf16.mxu0 0
      %536 = vmatpush1.bf16.msra.mxu0 0
      %537 = vmatprep.subr.bf16.mxu0 0
      %538 = vmatpush1.bf16.msra.mxu0 0
      %539 = vmatprep.mubr.bf16.mxu0 0
      %540 = vmatmul.mubr.bf16.gmra.mrb[0].mxu0 %v456
      %v541 = vpop.f32.mrb[0].mxu0
      %v542 = vadd.f32 %v372, %v541
      %v543 = vpop.f32.mrb[0].mxu0
      %v544 = vpop.f32.mrb[0].mxu0
      %v545 = vadd.f32 %v372, %v544
      %v546 = vpop.f32.mrb[0].mxu0
      %547 = vmatprep.mubr.bf16.mxu0 0
      %548 = vmatmul.mubr.bf16.gmra.mrb[0].mxu0 %v459
      %v549 = vpop.f32.mrb[0].mxu0
      %v550 = vadd.f32 %v372, %v549
      %v551 = vpop.f32.mrb[0].mxu0
      %v552 = vpop.f32.mrb[0].mxu0
      %v553 = vadd.f32 %v372, %v552
      %v554 = vpop.f32.mrb[0].mxu0
      %555 = vmatprep.mubr.bf16.mxu0 0
      %556 = vmatmul.mubr.bf16.gmra.mrb[0].mxu0 %v462
      %v557 = vpop.f32.mrb[0].mxu0
      %v558 = vadd.f32 %v372, %v557
      %v559 = vpop.f32.mrb[0].mxu0
      %v560 = vpop.f32.mrb[0].mxu0
      %v561 = vadd.f32 %v372, %v560
      %v562 = vpop.f32.mrb[0].mxu0
      %563 = vmatprep.mubr.bf16.mxu0 0
      %564 = vmatmul.mubr.bf16.gmra.mrb[0].mxu0 %v465
      %v565 = vpop.f32.mrb[0].mxu0
      %v566 = vadd.f32 %v372, %v565
      %v567 = vpop.f32.mrb[0].mxu0
      %v568 = vpop.f32.mrb[0].mxu0
      %v569 = vadd.f32 %v372, %v568
      %v570 = vpop.f32.mrb[0].mxu0
      %571 = vmatprep.mubr.bf16.mxu0 0
      %572 = vmatmul.mubr.bf16.gmra.mrb[0].mxu0 %v468
      %v573 = vpop.f32.mrb[0].mxu0
      %v574 = vadd.f32 %v372, %v573
      %v575 = vpop.f32.mrb[0].mxu0
      %v576 = vpop.f32.mrb[0].mxu0
      %v577 = vadd.f32 %v372, %v576
      %v578 = vpop.f32.mrb[0].mxu0
      %579 = vmatprep.mubr.bf16.mxu0 0
      %580 = vmatmul.mubr.bf16.gmra.mrb[0].mxu0 %v471
      %v581 = vpop.f32.mrb[0].mxu0
      %v582 = vadd.f32 %v372, %v581
      %v583 = vpop.f32.mrb[0].mxu0
      %v584 = vpop.f32.mrb[0].mxu0
      %v585 = vadd.f32 %v372, %v584
      %v586 = vpop.f32.mrb[0].mxu0
      %587 = vmatprep.mubr.bf16.mxu0 0
      %588 = vmatmul.mubr.bf16.gmra.mrb[0].mxu0 %v474
      %v589 = vpop.f32.mrb[0].mxu0
      %v590 = vadd.f32 %v372, %v589
      %v591 = vpop.f32.mrb[0].mxu0
      %v592 = vpop.f32.mrb[0].mxu0
      %v593 = vadd.f32 %v372, %v592
      %v594 = vpop.f32.mrb[0].mxu0
      %595 = vmatprep.mubr.bf16.mxu0 0
      %596 = vmatmul.mubr.bf16.gmra.mrb[0].mxu0 %v477
      %v597 = vpop.f32.mrb[0].mxu0
      %v598 = vadd.f32 %v372, %v597
      %v599 = vpop.f32.mrb[0].mxu0
      %v600 = vpop.f32.mrb[0].mxu0
      %v601 = vadd.f32 %v372, %v600
      %v602 = vpop.f32.mrb[0].mxu0
      %603 = vmatprep.mubr.bf16.mxu0 0
      %604 = vmatmul.mubr.bf16.gmra.mrb[0].mxu0 %v480
      %v605 = vpop.f32.mrb[0].mxu0
      %v606 = vadd.f32 %v372, %v605
      %v607 = vpop.f32.mrb[0].mxu0
      %v608 = vpop.f32.mrb[0].mxu0
      %v609 = vadd.f32 %v372, %v608
      %v610 = vpop.f32.mrb[0].mxu0
      %611 = vmatprep.mubr.bf16.mxu0 0
      %612 = vmatmul.mubr.bf16.gmra.mrb[0].mxu0 %v483
      %v613 = vpop.f32.mrb[0].mxu0
      %v614 = vadd.f32 %v372, %v613
      %v615 = vpop.f32.mrb[0].mxu0
      %v616 = vpop.f32.mrb[0].mxu0
      %v617 = vadd.f32 %v372, %v616
      %v618 = vpop.f32.mrb[0].mxu0
      %619 = vmatprep.mubr.bf16.mxu0 0
      %620 = vmatmul.mubr.bf16.gmra.mrb[0].mxu0 %v486
      %v621 = vpop.f32.mrb[0].mxu0
      %v622 = vadd.f32 %v372, %v621
      %v623 = vpop.f32.mrb[0].mxu0
      %v624 = vpop.f32.mrb[0].mxu0
      %v625 = vadd.f32 %v372, %v624
      %v626 = vpop.f32.mrb[0].mxu0
      %627 = vmatprep.mubr.bf16.mxu0 0
      %628 = vmatmul.mubr.bf16.gmra.mrb[0].mxu0 %v489
      %v629 = vpop.f32.mrb[0].mxu0
      %v630 = vadd.f32 %v372, %v629
      %v631 = vpop.f32.mrb[0].mxu0
      %v632 = vpop.f32.mrb[0].mxu0
      %v633 = vadd.f32 %v372, %v632
      %v634 = vpop.f32.mrb[0].mxu0
      %635 = vmatprep.mubr.bf16.mxu0 0
      %636 = vmatmul.mubr.bf16.gmra.mrb[0].mxu0 %v492
      %v637 = vpop.f32.mrb[0].mxu0
      %v638 = vadd.f32 %v372, %v637
      %v639 = vpop.f32.mrb[0].mxu0
      %v640 = vpop.f32.mrb[0].mxu0
      %v641 = vadd.f32 %v372, %v640
      %v642 = vpop.f32.mrb[0].mxu0
      %643 = vmatprep.mubr.bf16.mxu0 0
      %644 = vmatmul.mubr.bf16.gmra.mrb[0].mxu0 %v495
      %v645 = vpop.f32.mrb[0].mxu0
      %v646 = vadd.f32 %v372, %v645
      %v647 = vpop.f32.mrb[0].mxu0
      %v648 = vpop.f32.mrb[0].mxu0
      %v649 = vadd.f32 %v372, %v648
      %v650 = vpop.f32.mrb[0].mxu0
      %651 = vmatprep.mubr.bf16.mxu0 0
      %652 = vmatmul.mubr.bf16.gmra.mrb[0].mxu0 %v498
      %v653 = vpop.f32.mrb[0].mxu0
      %v654 = vadd.f32 %v372, %v653
      %v655 = vpop.f32.mrb[0].mxu0
      %v656 = vpop.f32.mrb[0].mxu0
      %v657 = vadd.f32 %v372, %v656
      %v658 = vpop.f32.mrb[0].mxu0
      %659 = vmatprep.mubr.bf16.mxu0 0
      %660 = vmatmul.mubr.bf16.gmra.mrb[0].mxu0 %v501
      %v661 = vpop.f32.mrb[0].mxu0
      %v662 = vadd.f32 %v372, %v661
      %v663 = vpop.f32.mrb[0].mxu0
      %v664 = vpop.f32.mrb[0].mxu0
      %v665 = vadd.f32 %v372, %v664
      %v666 = vpop.f32.mrb[0].mxu0
      %667 = vdwg.mxu0
      %v668 = vmax.f32 %v542, 0.0
      %v669 = vmax.f32 %v545, 0.0
      %v670 = vmax.f32 %v550, 0.0
      %v671 = vmax.f32 %v553, 0.0
      %v672 = vmax.f32 %v558, 0.0
      %v673 = vmax.f32 %v561, 0.0
      %v674 = vmax.f32 %v566, 0.0
      %v675 = vmax.f32 %v569, 0.0
      %v676 = vmax.f32 %v574, 0.0
      %v677 = vmax.f32 %v577, 0.0
      %v678 = vmax.f32 %v582, 0.0
      %v679 = vmax.f32 %v585, 0.0
      %v680 = vmax.f32 %v590, 0.0
      %v681 = vmax.f32 %v593, 0.0
      %v682 = vmax.f32 %v598, 0.0
      %v683 = vmax.f32 %v601, 0.0
      %v684 = vmax.f32 %v606, 0.0
      %v685 = vmax.f32 %v609, 0.0
      %v686 = vmax.f32 %v614, 0.0
      %v687 = vmax.f32 %v617, 0.0
      %v688 = vmax.f32 %v622, 0.0
      %v689 = vmax.f32 %v625, 0.0
      %v690 = vmax.f32 %v630, 0.0
      %v691 = vmax.f32 %v633, 0.0
      %v692 = vmax.f32 %v638, 0.0
      %v693 = vmax.f32 %v641, 0.0
      %v694 = vmax.f32 %v646, 0.0
      %v695 = vmax.f32 %v649, 0.0
      %v696 = vmax.f32 %v654, 0.0
      %v697 = vmax.f32 %v657, 0.0
      %v698 = vmax.f32 %v662, 0.0
      %v699 = vmax.f32 %v665, 0.0
      %v700 = vpack.c.bf16 %v669, %v668
      %v701 = vpack.c.bf16 %v671, %v670
      %v702 = vpack.c.bf16 %v673, %v672
      %v703 = vpack.c.bf16 %v675, %v674
      %v704 = vpack.c.bf16 %v677, %v676
      %v705 = vpack.c.bf16 %v679, %v678
      %v706 = vpack.c.bf16 %v681, %v680
      %v707 = vpack.c.bf16 %v683, %v682
      %v708 = vpack.c.bf16 %v685, %v684
      %v709 = vpack.c.bf16 %v687, %v686
      %v710 = vpack.c.bf16 %v689, %v688
      %v711 = vpack.c.bf16 %v691, %v690
      %v712 = vpack.c.bf16 %v693, %v692
      %v713 = vpack.c.bf16 %v695, %v694
      %v714 = vpack.c.bf16 %v697, %v696
      %v715 = vpack.c.bf16 %v699, %v698
      %v732 = vunpack.c.l.b16 %v700
      %v733 = vunpack.c.h.b16 %v700
      %v734 = vunpack.c.l.b16 %v701
      %v735 = vunpack.c.h.b16 %v701
      %v736 = vunpack.c.l.b16 %v702
      %v737 = vunpack.c.h.b16 %v702
      %v738 = vunpack.c.l.b16 %v703
      %v739 = vunpack.c.h.b16 %v703
      %v740 = vunpack.c.l.b16 %v704
      %v741 = vunpack.c.h.b16 %v704
      %v742 = vunpack.c.l.b16 %v705
      %v743 = vunpack.c.h.b16 %v705
      %v744 = vunpack.c.l.b16 %v706
      %v745 = vunpack.c.h.b16 %v706
      %v746 = vunpack.c.l.b16 %v707
      %v747 = vunpack.c.h.b16 %v707
      %v748 = vunpack.c.l.b16 %v708
      %v749 = vunpack.c.h.b16 %v708
      %v750 = vunpack.c.l.b16 %v709
      %v751 = vunpack.c.h.b16 %v709
      %v752 = vunpack.c.l.b16 %v710
      %v753 = vunpack.c.h.b16 %v710
      %v754 = vunpack.c.l.b16 %v711
      %v755 = vunpack.c.h.b16 %v711
      %v756 = vunpack.c.l.b16 %v712
      %v757 = vunpack.c.h.b16 %v712
      %v758 = vunpack.c.l.b16 %v713
      %v759 = vunpack.c.h.b16 %v713
      %v760 = vunpack.c.l.b16 %v714
      %v761 = vunpack.c.h.b16 %v714
      %v762 = vunpack.c.l.b16 %v715
      %v763 = vunpack.c.h.b16 %v715
      %v764 = vpack.c.b16 %v732, %v732
      %v765 = vpack.c.b16 %v733, %v733
      %v766 = vpack.c.b16 %v734, %v734
      %v767 = vpack.c.b16 %v735, %v735
      %v768 = vpack.c.b16 %v736, %v736
      %v769 = vpack.c.b16 %v737, %v737
      %v770 = vpack.c.b16 %v738, %v738
      %v771 = vpack.c.b16 %v739, %v739
      %v772 = vpack.c.b16 %v740, %v740
      %v773 = vpack.c.b16 %v741, %v741
      %v774 = vpack.c.b16 %v742, %v742
      %v775 = vpack.c.b16 %v743, %v743
      %v776 = vpack.c.b16 %v744, %v744
      %v777 = vpack.c.b16 %v745, %v745
      %v778 = vpack.c.b16 %v746, %v746
      %v779 = vpack.c.b16 %v747, %v747
      %v780 = vpack.c.b16 %v748, %v748
      %v781 = vpack.c.b16 %v749, %v749
      %v782 = vpack.c.b16 %v750, %v750
      %v783 = vpack.c.b16 %v751, %v751
      %v784 = vpack.c.b16 %v752, %v752
      %v785 = vpack.c.b16 %v753, %v753
      %v786 = vpack.c.b16 %v754, %v754
      %v787 = vpack.c.b16 %v755, %v755
      %v788 = vpack.c.b16 %v756, %v756
      %v789 = vpack.c.b16 %v757, %v757
      %v790 = vpack.c.b16 %v758, %v758
      %v791 = vpack.c.b16 %v759, %v759
      %v792 = vpack.c.b16 %v760, %v760
      %v793 = vpack.c.b16 %v761, %v761
      %v794 = vpack.c.b16 %v762, %v762
      %v795 = vpack.c.b16 %v763, %v763
      %s828 = scalar_lea.vmem [#allocation2], 20
      %vm829 = vcmask 27648
      %830 = vst.msk [vmem:[%s828 + $0x8] sm:$0xf] %vm829, %v764
      %831 = vst.msk [vmem:[%s828 + $0xc] sm:$0xf] %vm829, %v765
      %832 = vst.msk [vmem:[%s828 + $0x1c] sm:$0xf] %vm829, %v766
      %833 = vst.msk [vmem:[%s828 + $0x20] sm:$0xf] %vm829, %v767
      %834 = vst.msk [vmem:[%s828 + $0x30] sm:$0xf] %vm829, %v768
      %835 = vst.msk [vmem:[%s828 + $0x34] sm:$0xf] %vm829, %v769
      %836 = vst.msk [vmem:[%s828 + $0x44] sm:$0xf] %vm829, %v770
      %837 = vst.msk [vmem:[%s828 + $0x48] sm:$0xf] %vm829, %v771
      %838 = vst.msk [vmem:[%s828 + $0x58] sm:$0xf] %vm829, %v772
      %839 = vst.msk [vmem:[%s828 + $0x5c] sm:$0xf] %vm829, %v773
      %840 = vst.msk [vmem:[%s828 + $0x6c] sm:$0xf] %vm829, %v774
      %841 = vst.msk [vmem:[%s828 + $0x70] sm:$0xf] %vm829, %v775
      %842 = vst.msk [vmem:[%s828 + $0x80] sm:$0xf] %vm829, %v776
      %843 = vst.msk [vmem:[%s828 + $0x84] sm:$0xf] %vm829, %v777
      %844 = vst.msk [vmem:[%s828 + $0x94] sm:$0xf] %vm829, %v778
      %845 = vst.msk [vmem:[%s828 + $0x98] sm:$0xf] %vm829, %v779
      %846 = vst.msk [vmem:[%s828 + $0xa8] sm:$0xf] %vm829, %v780
      %847 = vst.msk [vmem:[%s828 + $0xac] sm:$0xf] %vm829, %v781
      %848 = vst.msk [vmem:[%s828 + $0xbc] sm:$0xf] %vm829, %v782
      %849 = vst.msk [vmem:[%s828 + $0xc0] sm:$0xf] %vm829, %v783
      %850 = vst.msk [vmem:[%s828 + $0xd0] sm:$0xf] %vm829, %v784
      %851 = vst.msk [vmem:[%s828 + $0xd4] sm:$0xf] %vm829, %v785
      %852 = vst.msk [vmem:[%s828 + $0xe4] sm:$0xf] %vm829, %v786
      %853 = vst.msk [vmem:[%s828 + $0xe8] sm:$0xf] %vm829, %v787
      %854 = vst.msk [vmem:[%s828 + $0xf8] sm:$0xf] %vm829, %v788
      %855 = vst.msk [vmem:[%s828 + $0xfc] sm:$0xf] %vm829, %v789
      %856 = vst.msk [vmem:[%s828 + $0x10c] sm:$0xf] %vm829, %v790
      %857 = vst.msk [vmem:[%s828 + $0x110] sm:$0xf] %vm829, %v791
      %858 = vst.msk [vmem:[%s828 + $0x120] sm:$0xf] %vm829, %v792
      %859 = vst.msk [vmem:[%s828 + $0x124] sm:$0xf] %vm829, %v793
      %860 = vst.msk [vmem:[%s828 + $0x134] sm:$0xf] %vm829, %v794
      %861 = vst.msk [vmem:[%s828 + $0x138] sm:$0xf] %vm829, %v795
      %862 = vst.msk [vmem:[#allocation2] sm:$0xf] %vm829, 0
      %863 = vst.msk [vmem:[#allocation2 + $0x4] sm:$0xf] %vm829, 0
      %864 = vst.msk [vmem:[#allocation2 + $0x8] sm:$0xf] %vm829, 0
      %865 = vst.msk [vmem:[#allocation2 + $0xc] sm:$0xf] %vm829, 0
      %866 = vst.msk [vmem:[#allocation2 + $0x10] sm:$0xf] %vm829, 0
      %s867 = scalar_lea.vmem [#allocation2], 340
      %868 = vst.msk [vmem:[%s867] sm:$0xf] %vm829, 0
      %869 = vst.msk [vmem:[%s867 + $0x4] sm:$0xf] %vm829, 0
      %870 = vst.msk [vmem:[%s867 + $0x8] sm:$0xf] %vm829, 0
      %871 = vst.msk [vmem:[%s867 + $0xc] sm:$0xf] %vm829, 0
      %872 = vst.msk [vmem:[%s867 + $0x10] sm:$0xf] %vm829, 0
      %873 = vst.msk [vmem:[#allocation2 + $0x4] sm:$0xf] %vm829, 0
      %874 = vst.msk [vmem:[#allocation2 + $0x18] sm:$0xf] %vm829, 0
      %875 = vst.msk [vmem:[#allocation2 + $0x2c] sm:$0xf] %vm829, 0
      %876 = vst.msk [vmem:[#allocation2 + $0x40] sm:$0xf] %vm829, 0
      %877 = vst.msk [vmem:[#allocation2 + $0x54] sm:$0xf] %vm829, 0
      %878 = vst.msk [vmem:[#allocation2 + $0x68] sm:$0xf] %vm829, 0
      %879 = vst.msk [vmem:[#allocation2 + $0x7c] sm:$0xf] %vm829, 0
      %880 = vst.msk [vmem:[#allocation2 + $0x90] sm:$0xf] %vm829, 0
      %881 = vst.msk [vmem:[#allocation2 + $0xa4] sm:$0xf] %vm829, 0
      %882 = vst.msk [vmem:[#allocation2 + $0xb8] sm:$0xf] %vm829, 0
      %883 = vst.msk [vmem:[#allocation2 + $0xcc] sm:$0xf] %vm829, 0
      %884 = vst.msk [vmem:[#allocation2 + $0xe0] sm:$0xf] %vm829, 0
      %885 = vst.msk [vmem:[#allocation2 + $0xf4] sm:$0xf] %vm829, 0
      %886 = vst.msk [vmem:[#allocation2 + $0x108] sm:$0xf] %vm829, 0
      %887 = vst.msk [vmem:[#allocation2 + $0x11c] sm:$0xf] %vm829, 0
      %888 = vst.msk [vmem:[#allocation2 + $0x130] sm:$0xf] %vm829, 0
      %889 = vst.msk [vmem:[#allocation2 + $0x144] sm:$0xf] %vm829, 0
      %890 = vst.msk [vmem:[#allocation2 + $0x158] sm:$0xf] %vm829, 0
      %891 = vst.msk [vmem:[#allocation2 + $0x10] sm:$0xf] %vm829, 0
      %892 = vst.msk [vmem:[#allocation2 + $0x24] sm:$0xf] %vm829, 0
      %893 = vst.msk [vmem:[#allocation2 + $0x38] sm:$0xf] %vm829, 0
      %894 = vst.msk [vmem:[#allocation2 + $0x4c] sm:$0xf] %vm829, 0
      %895 = vst.msk [vmem:[#allocation2 + $0x60] sm:$0xf] %vm829, 0
      %896 = vst.msk [vmem:[#allocation2 + $0x74] sm:$0xf] %vm829, 0
      %897 = vst.msk [vmem:[#allocation2 + $0x88] sm:$0xf] %vm829, 0
      %898 = vst.msk [vmem:[#allocation2 + $0x9c] sm:$0xf] %vm829, 0
      %899 = vst.msk [vmem:[#allocation2 + $0xb0] sm:$0xf] %vm829, 0
      %900 = vst.msk [vmem:[#allocation2 + $0xc4] sm:$0xf] %vm829, 0
      %901 = vst.msk [vmem:[#allocation2 + $0xd8] sm:$0xf] %vm829, 0
      %902 = vst.msk [vmem:[#allocation2 + $0xec] sm:$0xf] %vm829, 0
      %903 = vst.msk [vmem:[#allocation2 + $0x100] sm:$0xf] %vm829, 0
      %904 = vst.msk [vmem:[#allocation2 + $0x114] sm:$0xf] %vm829, 0
      %905 = vst.msk [vmem:[#allocation2 + $0x128] sm:$0xf] %vm829, 0
      %906 = vst.msk [vmem:[#allocation2 + $0x13c] sm:$0xf] %vm829, 0
      %907 = vst.msk [vmem:[#allocation2 + $0x150] sm:$0xf] %vm829, 0
      %908 = vst.msk [vmem:[#allocation2 + $0x164] sm:$0xf] %vm829, 0
      %v909 = vld [vmem:[#allocation2 + $0x4] sm:$0x8]
      %v910 = vld [vmem:[#allocation2 + $0x8] sm:$0xf]
      %v911 = vld [vmem:[#allocation2 + $0xc] sm:$0xf]
      %v912 = vld [vmem:[#allocation2 + $0x18] sm:$0x8]
      %v913 = vld [vmem:[#allocation2 + $0x1c] sm:$0xf]
      %v914 = vld [vmem:[#allocation2 + $0x20] sm:$0xf]
      %v915 = vld [vmem:[#allocation2 + $0x2c] sm:$0x8]
      %v916 = vld [vmem:[#allocation2 + $0x30] sm:$0xf]
      %v917 = vld [vmem:[#allocation2 + $0x34] sm:$0xf]
      %v918 = vld [vmem:[#allocation2 + $0x40] sm:$0x8]
      %v919 = vld [vmem:[#allocation2 + $0x44] sm:$0xf]
      %v920 = vld [vmem:[#allocation2 + $0x48] sm:$0xf]
      %v921 = vld [vmem:[#allocation2 + $0x54] sm:$0x8]
      %v922 = vld [vmem:[#allocation2 + $0x58] sm:$0xf]
      %v923 = vld [vmem:[#allocation2 + $0x5c] sm:$0xf]
      %v924 = vld [vmem:[#allocation2 + $0x68] sm:$0x8]
      %v925 = vld [vmem:[#allocation2 + $0x6c] sm:$0xf]
      %v926 = vld [vmem:[#allocation2 + $0x70] sm:$0xf]
      %v927 = vld [vmem:[#allocation2 + $0x7c] sm:$0x8]
      %v928 = vld [vmem:[#allocation2 + $0x80] sm:$0xf]
      %v929 = vld [vmem:[#allocation2 + $0x84] sm:$0xf]
      %v930 = vld [vmem:[#allocation2 + $0x90] sm:$0x8]
      %v931 = vld [vmem:[#allocation2 + $0x94] sm:$0xf]
      %v932 = vld [vmem:[#allocation2 + $0x98] sm:$0xf]
      %v933 = vld [vmem:[#allocation2 + $0xa4] sm:$0x8]
      %v934 = vld [vmem:[#allocation2 + $0xa8] sm:$0xf]
      %v935 = vld [vmem:[#allocation2 + $0xac] sm:$0xf]
      %v936 = vld [vmem:[#allocation2 + $0xb8] sm:$0x8]
      %v937 = vld [vmem:[#allocation2 + $0xbc] sm:$0xf]
      %v938 = vld [vmem:[#allocation2 + $0xc0] sm:$0xf]
      %v939 = vld [vmem:[#allocation2 + $0xcc] sm:$0x8]
      %v940 = vld [vmem:[#allocation2 + $0xd0] sm:$0xf]
      %v941 = vld [vmem:[#allocation2 + $0xd4] sm:$0xf]
      %v942 = vld [vmem:[#allocation2 + $0xe0] sm:$0x8]
      %v943 = vld [vmem:[#allocation2 + $0xe4] sm:$0xf]
      %v944 = vld [vmem:[#allocation2 + $0xe8] sm:$0xf]
      %v945 = vld [vmem:[#allocation2 + $0xf4] sm:$0x8]
      %v946 = vld [vmem:[#allocation2 + $0xf8] sm:$0xf]
      %v947 = vld [vmem:[#allocation2 + $0xfc] sm:$0xf]
      %v948 = vld [vmem:[#allocation2 + $0x108] sm:$0x8]
      %v949 = vld [vmem:[#allocation2 + $0x10c] sm:$0xf]
      %v950 = vld [vmem:[#allocation2 + $0x110] sm:$0xf]
      %v951 = vld [vmem:[#allocation2 + $0x11c] sm:$0x8]
      %v952 = vld [vmem:[#allocation2 + $0x120] sm:$0xf]
      %v953 = vld [vmem:[#allocation2 + $0x124] sm:$0xf]
      %v954 = vld [vmem:[#allocation2 + $0x130] sm:$0x8]
      %v955 = vld [vmem:[#allocation2 + $0x134] sm:$0xf]
      %v956 = vld [vmem:[#allocation2 + $0x138] sm:$0xf]
      %vm957 = vsmask.f32 256
      %vm958 = vsmask.f32 4368
      %vm959 = vmor %vm957, %vm958
      %v961 = vshrl.u32 %v909, 16
      %v963 = vrot.slane %v961, 7
      %v964 = vrot.slane %v963, 4
      %v966 = vshrl.u32 %v910, 16
      %v968 = vrot.slane %v966, 7
      %v969 = vshll.u32 %v910, 16
      %v971 = vor.u32 %v968, %v969
      %v972 = vsel %vm959, %v964, %v971
      %v973 = vrot.slane %v968, 4
      %v975 = vshrl.u32 %v911, 16
      %v977 = vrot.slane %v975, 7
      %v978 = vshll.u32 %v911, 16
      %v980 = vor.u32 %v977, %v978
      %v981 = vsel %vm959, %v973, %v980
      %v983 = vshrl.u32 %v912, 16
      %v985 = vrot.slane %v983, 7
      %v986 = vrot.slane %v985, 4
      %v988 = vshrl.u32 %v913, 16
      %v990 = vrot.slane %v988, 7
      %v991 = vshll.u32 %v913, 16
      %v993 = vor.u32 %v990, %v991
      %v994 = vsel %vm959, %v986, %v993
      %v995 = vrot.slane %v990, 4
      %v997 = vshrl.u32 %v914, 16
      %v999 = vrot.slane %v997, 7
      %v1000 = vshll.u32 %v914, 16
      %v1002 = vor.u32 %v999, %v1000
      %v1003 = vsel %vm959, %v995, %v1002
      %v1005 = vshrl.u32 %v915, 16
      %v1007 = vrot.slane %v1005, 7
      %v1008 = vrot.slane %v1007, 4
      %v1010 = vshrl.u32 %v916, 16
      %v1012 = vrot.slane %v1010, 7
      %v1013 = vshll.u32 %v916, 16
      %v1015 = vor.u32 %v1012, %v1013
      %v1016 = vsel %vm959, %v1008, %v1015
      %v1017 = vrot.slane %v1012, 4
      %v1019 = vshrl.u32 %v917, 16
      %v1021 = vrot.slane %v1019, 7
      %v1022 = vshll.u32 %v917, 16
      %v1024 = vor.u32 %v1021, %v1022
      %v1025 = vsel %vm959, %v1017, %v1024
      %v1027 = vshrl.u32 %v918, 16
      %v1029 = vrot.slane %v1027, 7
      %v1030 = vrot.slane %v1029, 4
      %v1032 = vshrl.u32 %v919, 16
      %v1034 = vrot.slane %v1032, 7
      %v1035 = vshll.u32 %v919, 16
      %v1037 = vor.u32 %v1034, %v1035
      %v1038 = vsel %vm959, %v1030, %v1037
      %v1039 = vrot.slane %v1034, 4
      %v1041 = vshrl.u32 %v920, 16
      %v1043 = vrot.slane %v1041, 7
      %v1044 = vshll.u32 %v920, 16
      %v1046 = vor.u32 %v1043, %v1044
      %v1047 = vsel %vm959, %v1039, %v1046
      %v1049 = vshrl.u32 %v921, 16
      %v1051 = vrot.slane %v1049, 7
      %v1052 = vrot.slane %v1051, 4
      %v1054 = vshrl.u32 %v922, 16
      %v1056 = vrot.slane %v1054, 7
      %v1057 = vshll.u32 %v922, 16
      %v1059 = vor.u32 %v1056, %v1057
      %v1060 = vsel %vm959, %v1052, %v1059
      %v1061 = vrot.slane %v1056, 4
      %v1063 = vshrl.u32 %v923, 16
      %v1065 = vrot.slane %v1063, 7
      %v1066 = vshll.u32 %v923, 16
      %v1068 = vor.u32 %v1065, %v1066
      %v1069 = vsel %vm959, %v1061, %v1068
      %v1071 = vshrl.u32 %v924, 16
      %v1073 = vrot.slane %v1071, 7
      %v1074 = vrot.slane %v1073, 4
      %v1076 = vshrl.u32 %v925, 16
      %v1078 = vrot.slane %v1076, 7
      %v1079 = vshll.u32 %v925, 16
      %v1081 = vor.u32 %v1078, %v1079
      %v1082 = vsel %vm959, %v1074, %v1081
      %v1083 = vrot.slane %v1078, 4
      %v1085 = vshrl.u32 %v926, 16
      %v1087 = vrot.slane %v1085, 7
      %v1088 = vshll.u32 %v926, 16
      %v1090 = vor.u32 %v1087, %v1088
      %v1091 = vsel %vm959, %v1083, %v1090
      %v1093 = vshrl.u32 %v927, 16
      %v1095 = vrot.slane %v1093, 7
      %v1096 = vrot.slane %v1095, 4
      %v1098 = vshrl.u32 %v928, 16
      %v1100 = vrot.slane %v1098, 7
      %v1101 = vshll.u32 %v928, 16
      %v1103 = vor.u32 %v1100, %v1101
      %v1104 = vsel %vm959, %v1096, %v1103
      %v1105 = vrot.slane %v1100, 4
      %v1107 = vshrl.u32 %v929, 16
      %v1109 = vrot.slane %v1107, 7
      %v1110 = vshll.u32 %v929, 16
      %v1112 = vor.u32 %v1109, %v1110
      %v1113 = vsel %vm959, %v1105, %v1112
      %v1115 = vshrl.u32 %v930, 16
      %v1117 = vrot.slane %v1115, 7
      %v1118 = vrot.slane %v1117, 4
      %v1120 = vshrl.u32 %v931, 16
      %v1122 = vrot.slane %v1120, 7
      %v1123 = vshll.u32 %v931, 16
      %v1125 = vor.u32 %v1122, %v1123
      %v1126 = vsel %vm959, %v1118, %v1125
      %v1127 = vrot.slane %v1122, 4
      %v1129 = vshrl.u32 %v932, 16
      %v1131 = vrot.slane %v1129, 7
      %v1132 = vshll.u32 %v932, 16
      %v1134 = vor.u32 %v1131, %v1132
      %v1135 = vsel %vm959, %v1127, %v1134
      %v1137 = vshrl.u32 %v933, 16
      %v1139 = vrot.slane %v1137, 7
      %v1140 = vrot.slane %v1139, 4
      %v1142 = vshrl.u32 %v934, 16
      %v1144 = vrot.slane %v1142, 7
      %v1145 = vshll.u32 %v934, 16
      %v1147 = vor.u32 %v1144, %v1145
      %v1148 = vsel %vm959, %v1140, %v1147
      %v1149 = vrot.slane %v1144, 4
      %v1151 = vshrl.u32 %v935, 16
      %v1153 = vrot.slane %v1151, 7
      %v1154 = vshll.u32 %v935, 16
      %v1156 = vor.u32 %v1153, %v1154
      %v1157 = vsel %vm959, %v1149, %v1156
      %v1159 = vshrl.u32 %v936, 16
      %v1161 = vrot.slane %v1159, 7
      %v1162 = vrot.slane %v1161, 4
      %v1164 = vshrl.u32 %v937, 16
      %v1166 = vrot.slane %v1164, 7
      %v1167 = vshll.u32 %v937, 16
      %v1169 = vor.u32 %v1166, %v1167
      %v1170 = vsel %vm959, %v1162, %v1169
      %v1171 = vrot.slane %v1166, 4
      %v1173 = vshrl.u32 %v938, 16
      %v1175 = vrot.slane %v1173, 7
      %v1176 = vshll.u32 %v938, 16
      %v1178 = vor.u32 %v1175, %v1176
      %v1179 = vsel %vm959, %v1171, %v1178
      %v1181 = vshrl.u32 %v939, 16
      %v1183 = vrot.slane %v1181, 7
      %v1184 = vrot.slane %v1183, 4
      %v1186 = vshrl.u32 %v940, 16
      %v1188 = vrot.slane %v1186, 7
      %v1189 = vshll.u32 %v940, 16
      %v1191 = vor.u32 %v1188, %v1189
      %v1192 = vsel %vm959, %v1184, %v1191
      %v1193 = vrot.slane %v1188, 4
      %v1195 = vshrl.u32 %v941, 16
      %v1197 = vrot.slane %v1195, 7
      %v1198 = vshll.u32 %v941, 16
      %v1200 = vor.u32 %v1197, %v1198
      %v1201 = vsel %vm959, %v1193, %v1200
      %v1203 = vshrl.u32 %v942, 16
      %v1205 = vrot.slane %v1203, 7
      %v1206 = vrot.slane %v1205, 4
      %v1208 = vshrl.u32 %v943, 16
      %v1210 = vrot.slane %v1208, 7
      %v1211 = vshll.u32 %v943, 16
      %v1213 = vor.u32 %v1210, %v1211
      %v1214 = vsel %vm959, %v1206, %v1213
      %v1215 = vrot.slane %v1210, 4
      %v1217 = vshrl.u32 %v944, 16
      %v1219 = vrot.slane %v1217, 7
      %v1220 = vshll.u32 %v944, 16
      %v1222 = vor.u32 %v1219, %v1220
      %v1223 = vsel %vm959, %v1215, %v1222
      %v1225 = vshrl.u32 %v945, 16
      %v1227 = vrot.slane %v1225, 7
      %v1228 = vrot.slane %v1227, 4
      %v1230 = vshrl.u32 %v946, 16
      %v1232 = vrot.slane %v1230, 7
      %v1233 = vshll.u32 %v946, 16
      %v1235 = vor.u32 %v1232, %v1233
      %v1236 = vsel %vm959, %v1228, %v1235
      %v1237 = vrot.slane %v1232, 4
      %v1239 = vshrl.u32 %v947, 16
      %v1241 = vrot.slane %v1239, 7
      %v1242 = vshll.u32 %v947, 16
      %v1244 = vor.u32 %v1241, %v1242
      %v1245 = vsel %vm959, %v1237, %v1244
      %v1247 = vshrl.u32 %v948, 16
      %v1249 = vrot.slane %v1247, 7
      %v1250 = vrot.slane %v1249, 4
      %v1252 = vshrl.u32 %v949, 16
      %v1254 = vrot.slane %v1252, 7
      %v1255 = vshll.u32 %v949, 16
      %v1257 = vor.u32 %v1254, %v1255
      %v1258 = vsel %vm959, %v1250, %v1257
      %v1259 = vrot.slane %v1254, 4
      %v1261 = vshrl.u32 %v950, 16
      %v1263 = vrot.slane %v1261, 7
      %v1264 = vshll.u32 %v950, 16
      %v1266 = vor.u32 %v1263, %v1264
      %v1267 = vsel %vm959, %v1259, %v1266
      %v1269 = vshrl.u32 %v951, 16
      %v1271 = vrot.slane %v1269, 7
      %v1272 = vrot.slane %v1271, 4
      %v1274 = vshrl.u32 %v952, 16
      %v1276 = vrot.slane %v1274, 7
      %v1277 = vshll.u32 %v952, 16
      %v1279 = vor.u32 %v1276, %v1277
      %v1280 = vsel %vm959, %v1272, %v1279
      %v1281 = vrot.slane %v1276, 4
      %v1283 = vshrl.u32 %v953, 16
      %v1285 = vrot.slane %v1283, 7
      %v1286 = vshll.u32 %v953, 16
      %v1288 = vor.u32 %v1285, %v1286
      %v1289 = vsel %vm959, %v1281, %v1288
      %v1291 = vshrl.u32 %v954, 16
      %v1293 = vrot.slane %v1291, 7
      %v1294 = vrot.slane %v1293, 4
      %v1296 = vshrl.u32 %v955, 16
      %v1298 = vrot.slane %v1296, 7
      %v1299 = vshll.u32 %v955, 16
      %v1301 = vor.u32 %v1298, %v1299
      %v1302 = vsel %vm959, %v1294, %v1301
      %v1303 = vrot.slane %v1298, 4
      %v1305 = vshrl.u32 %v956, 16
      %v1307 = vrot.slane %v1305, 7
      %v1308 = vshll.u32 %v956, 16
      %v1310 = vor.u32 %v1307, %v1308
      %v1311 = vsel %vm959, %v1303, %v1310
      %v1312 = vld [vmem:[#allocation2 + $0x10] sm:$0x1]
      %v1313 = vld [vmem:[#allocation2 + $0x24] sm:$0x1]
      %v1314 = vld [vmem:[#allocation2 + $0x38] sm:$0x1]
      %v1315 = vld [vmem:[#allocation2 + $0x4c] sm:$0x1]
      %v1316 = vld [vmem:[#allocation2 + $0x60] sm:$0x1]
      %v1317 = vld [vmem:[#allocation2 + $0x74] sm:$0x1]
      %v1318 = vld [vmem:[#allocation2 + $0x88] sm:$0x1]
      %v1319 = vld [vmem:[#allocation2 + $0x9c] sm:$0x1]
      %v1320 = vld [vmem:[#allocation2 + $0xb0] sm:$0x1]
      %v1321 = vld [vmem:[#allocation2 + $0xc4] sm:$0x1]
      %v1322 = vld [vmem:[#allocation2 + $0xd8] sm:$0x1]
      %v1323 = vld [vmem:[#allocation2 + $0xec] sm:$0x1]
      %v1324 = vld [vmem:[#allocation2 + $0x100] sm:$0x1]
      %v1325 = vld [vmem:[#allocation2 + $0x114] sm:$0x1]
      %v1326 = vld [vmem:[#allocation2 + $0x128] sm:$0x1]
      %v1327 = vld [vmem:[#allocation2 + $0x13c] sm:$0x1]
      %vm1328 = vsmask.f32 3328
      %vm1329 = vsmask.f32 7440
      %vm1330 = vmor %vm1328, %vm1329
      %v1331 = vrot.slane %v966, 4
      %v1332 = vrot.slane %v969, 5
      %v1333 = vor.u32 %v1331, %v1332
      %v1334 = vrot.slane %v1333, 4
      %v1335 = vrot.slane %v978, 5
      %v1336 = vsel %vm1330, %v1334, %v1335
      %v1337 = vrot.slane %v975, 4
      %v1338 = vor.u32 %v1337, %v1335
      %v1339 = vrot.slane %v1338, 4
      %v1341 = vshll.u32 %v1312, 16
      %v1343 = vrot.slane %v1341, 5
      %v1344 = vsel %vm1330, %v1339, %v1343
      %v1345 = vrot.slane %v988, 4
      %v1346 = vrot.slane %v991, 5
      %v1347 = vor.u32 %v1345, %v1346
      %v1348 = vrot.slane %v1347, 4
      %v1349 = vrot.slane %v1000, 5
      %v1350 = vsel %vm1330, %v1348, %v1349
      %v1351 = vrot.slane %v997, 4
      %v1352 = vor.u32 %v1351, %v1349
      %v1353 = vrot.slane %v1352, 4
      %v1355 = vshll.u32 %v1313, 16
      %v1357 = vrot.slane %v1355, 5
      %v1358 = vsel %vm1330, %v1353, %v1357
      %v1359 = vrot.slane %v1010, 4
      %v1360 = vrot.slane %v1013, 5
      %v1361 = vor.u32 %v1359, %v1360
      %v1362 = vrot.slane %v1361, 4
      %v1363 = vrot.slane %v1022, 5
      %v1364 = vsel %vm1330, %v1362, %v1363
      %v1365 = vrot.slane %v1019, 4
      %v1366 = vor.u32 %v1365, %v1363
      %v1367 = vrot.slane %v1366, 4
      %v1369 = vshll.u32 %v1314, 16
      %v1371 = vrot.slane %v1369, 5
      %v1372 = vsel %vm1330, %v1367, %v1371
      %v1373 = vrot.slane %v1032, 4
      %v1374 = vrot.slane %v1035, 5
      %v1375 = vor.u32 %v1373, %v1374
      %v1376 = vrot.slane %v1375, 4
      %v1377 = vrot.slane %v1044, 5
      %v1378 = vsel %vm1330, %v1376, %v1377
      %v1379 = vrot.slane %v1041, 4
      %v1380 = vor.u32 %v1379, %v1377
      %v1381 = vrot.slane %v1380, 4
      %v1383 = vshll.u32 %v1315, 16
      %v1385 = vrot.slane %v1383, 5
      %v1386 = vsel %vm1330, %v1381, %v1385
      %v1387 = vrot.slane %v1054, 4
      %v1388 = vrot.slane %v1057, 5
      %v1389 = vor.u32 %v1387, %v1388
      %v1390 = vrot.slane %v1389, 4
      %v1391 = vrot.slane %v1066, 5
      %v1392 = vsel %vm1330, %v1390, %v1391
      %v1393 = vrot.slane %v1063, 4
      %v1394 = vor.u32 %v1393, %v1391
      %v1395 = vrot.slane %v1394, 4
      %v1397 = vshll.u32 %v1316, 16
      %v1399 = vrot.slane %v1397, 5
      %v1400 = vsel %vm1330, %v1395, %v1399
      %v1401 = vrot.slane %v1076, 4
      %v1402 = vrot.slane %v1079, 5
      %v1403 = vor.u32 %v1401, %v1402
      %v1404 = vrot.slane %v1403, 4
      %v1405 = vrot.slane %v1088, 5
      %v1406 = vsel %vm1330, %v1404, %v1405
      %v1407 = vrot.slane %v1085, 4
      %v1408 = vor.u32 %v1407, %v1405
      %v1409 = vrot.slane %v1408, 4
      %v1411 = vshll.u32 %v1317, 16
      %v1413 = vrot.slane %v1411, 5
      %v1414 = vsel %vm1330, %v1409, %v1413
      %v1415 = vrot.slane %v1098, 4
      %v1416 = vrot.slane %v1101, 5
      %v1417 = vor.u32 %v1415, %v1416
      %v1418 = vrot.slane %v1417, 4
      %v1419 = vrot.slane %v1110, 5
      %v1420 = vsel %vm1330, %v1418, %v1419
      %v1421 = vrot.slane %v1107, 4
      %v1422 = vor.u32 %v1421, %v1419
      %v1423 = vrot.slane %v1422, 4
      %v1425 = vshll.u32 %v1318, 16
      %v1427 = vrot.slane %v1425, 5
      %v1428 = vsel %vm1330, %v1423, %v1427
      %v1429 = vrot.slane %v1120, 4
      %v1430 = vrot.slane %v1123, 5
      %v1431 = vor.u32 %v1429, %v1430
      %v1432 = vrot.slane %v1431, 4
      %v1433 = vrot.slane %v1132, 5
      %v1434 = vsel %vm1330, %v1432, %v1433
      %v1435 = vrot.slane %v1129, 4
      %v1436 = vor.u32 %v1435, %v1433
      %v1437 = vrot.slane %v1436, 4
      %v1439 = vshll.u32 %v1319, 16
      %v1441 = vrot.slane %v1439, 5
      %v1442 = vsel %vm1330, %v1437, %v1441
      %v1443 = vrot.slane %v1142, 4
      %v1444 = vrot.slane %v1145, 5
      %v1445 = vor.u32 %v1443, %v1444
      %v1446 = vrot.slane %v1445, 4
      %v1447 = vrot.slane %v1154, 5
      %v1448 = vsel %vm1330, %v1446, %v1447
      %v1449 = vrot.slane %v1151, 4
      %v1450 = vor.u32 %v1449, %v1447
      %v1451 = vrot.slane %v1450, 4
      %v1453 = vshll.u32 %v1320, 16
      %v1455 = vrot.slane %v1453, 5
      %v1456 = vsel %vm1330, %v1451, %v1455
      %v1457 = vrot.slane %v1164, 4
      %v1458 = vrot.slane %v1167, 5
      %v1459 = vor.u32 %v1457, %v1458
      %v1460 = vrot.slane %v1459, 4
      %v1461 = vrot.slane %v1176, 5
      %v1462 = vsel %vm1330, %v1460, %v1461
      %v1463 = vrot.slane %v1173, 4
      %v1464 = vor.u32 %v1463, %v1461
      %v1465 = vrot.slane %v1464, 4
      %v1467 = vshll.u32 %v1321, 16
      %v1469 = vrot.slane %v1467, 5
      %v1470 = vsel %vm1330, %v1465, %v1469
      %v1471 = vrot.slane %v1186, 4
      %v1472 = vrot.slane %v1189, 5
      %v1473 = vor.u32 %v1471, %v1472
      %v1474 = vrot.slane %v1473, 4
      %v1475 = vrot.slane %v1198, 5
      %v1476 = vsel %vm1330, %v1474, %v1475
      %v1477 = vrot.slane %v1195, 4
      %v1478 = vor.u32 %v1477, %v1475
      %v1479 = vrot.slane %v1478, 4
      %v1481 = vshll.u32 %v1322, 16
      %v1483 = vrot.slane %v1481, 5
      %v1484 = vsel %vm1330, %v1479, %v1483
      %v1485 = vrot.slane %v1208, 4
      %v1486 = vrot.slane %v1211, 5
      %v1487 = vor.u32 %v1485, %v1486
      %v1488 = vrot.slane %v1487, 4
      %v1489 = vrot.slane %v1220, 5
      %v1490 = vsel %vm1330, %v1488, %v1489
      %v1491 = vrot.slane %v1217, 4
      %v1492 = vor.u32 %v1491, %v1489
      %v1493 = vrot.slane %v1492, 4
      %v1495 = vshll.u32 %v1323, 16
      %v1497 = vrot.slane %v1495, 5
      %v1498 = vsel %vm1330, %v1493, %v1497
      %v1499 = vrot.slane %v1230, 4
      %v1500 = vrot.slane %v1233, 5
      %v1501 = vor.u32 %v1499, %v1500
      %v1502 = vrot.slane %v1501, 4
      %v1503 = vrot.slane %v1242, 5
      %v1504 = vsel %vm1330, %v1502, %v1503
      %v1505 = vrot.slane %v1239, 4
      %v1506 = vor.u32 %v1505, %v1503
      %v1507 = vrot.slane %v1506, 4
      %v1509 = vshll.u32 %v1324, 16
      %v1511 = vrot.slane %v1509, 5
      %v1512 = vsel %vm1330, %v1507, %v1511
      %v1513 = vrot.slane %v1252, 4
      %v1514 = vrot.slane %v1255, 5
      %v1515 = vor.u32 %v1513, %v1514
      %v1516 = vrot.slane %v1515, 4
      %v1517 = vrot.slane %v1264, 5
      %v1518 = vsel %vm1330, %v1516, %v1517
      %v1519 = vrot.slane %v1261, 4
      %v1520 = vor.u32 %v1519, %v1517
      %v1521 = vrot.slane %v1520, 4
      %v1523 = vshll.u32 %v1325, 16
      %v1525 = vrot.slane %v1523, 5
      %v1526 = vsel %vm1330, %v1521, %v1525
      %v1527 = vrot.slane %v1274, 4
      %v1528 = vrot.slane %v1277, 5
      %v1529 = vor.u32 %v1527, %v1528
      %v1530 = vrot.slane %v1529, 4
      %v1531 = vrot.slane %v1286, 5
      %v1532 = vsel %vm1330, %v1530, %v1531
      %v1533 = vrot.slane %v1283, 4
      %v1534 = vor.u32 %v1533, %v1531
      %v1535 = vrot.slane %v1534, 4
      %v1537 = vshll.u32 %v1326, 16
      %v1539 = vrot.slane %v1537, 5
      %v1540 = vsel %vm1330, %v1535, %v1539
      %v1541 = vrot.slane %v1296, 4
      %v1542 = vrot.slane %v1299, 5
      %v1543 = vor.u32 %v1541, %v1542
      %v1544 = vrot.slane %v1543, 4
      %v1545 = vrot.slane %v1308, 5
      %v1546 = vsel %vm1330, %v1544, %v1545
      %v1547 = vrot.slane %v1305, 4
      %v1548 = vor.u32 %v1547, %v1545
      %v1549 = vrot.slane %v1548, 4
      %v1551 = vshll.u32 %v1327, 16
      %v1553 = vrot.slane %v1551, 5
      %v1554 = vsel %vm1330, %v1549, %v1553
      %v1555 = vld [vmem:[%s828 + $0x4] sm:$0x8]
      %v1556 = vld [vmem:[%s828 + $0x8] sm:$0xf]
      %v1557 = vld [vmem:[%s828 + $0xc] sm:$0xf]
      %v1558 = vld [vmem:[%s828 + $0x18] sm:$0x8]
      %v1559 = vld [vmem:[%s828 + $0x1c] sm:$0xf]
      %v1560 = vld [vmem:[%s828 + $0x20] sm:$0xf]
      %v1561 = vld [vmem:[%s828 + $0x2c] sm:$0x8]
      %v1562 = vld [vmem:[%s828 + $0x30] sm:$0xf]
      %v1563 = vld [vmem:[%s828 + $0x34] sm:$0xf]
      %v1564 = vld [vmem:[%s828 + $0x40] sm:$0x8]
      %v1565 = vld [vmem:[%s828 + $0x44] sm:$0xf]
      %v1566 = vld [vmem:[%s828 + $0x48] sm:$0xf]
      %v1567 = vld [vmem:[%s828 + $0x54] sm:$0x8]
      %v1568 = vld [vmem:[%s828 + $0x58] sm:$0xf]
      %v1569 = vld [vmem:[%s828 + $0x5c] sm:$0xf]
      %v1570 = vld [vmem:[%s828 + $0x68] sm:$0x8]
      %v1571 = vld [vmem:[%s828 + $0x6c] sm:$0xf]
      %v1572 = vld [vmem:[%s828 + $0x70] sm:$0xf]
      %v1573 = vld [vmem:[%s828 + $0x7c] sm:$0x8]
      %v1574 = vld [vmem:[%s828 + $0x80] sm:$0xf]
      %v1575 = vld [vmem:[%s828 + $0x84] sm:$0xf]
      %v1576 = vld [vmem:[%s828 + $0x90] sm:$0x8]
      %v1577 = vld [vmem:[%s828 + $0x94] sm:$0xf]
      %v1578 = vld [vmem:[%s828 + $0x98] sm:$0xf]
      %v1579 = vld [vmem:[%s828 + $0xa4] sm:$0x8]
      %v1580 = vld [vmem:[%s828 + $0xa8] sm:$0xf]
      %v1581 = vld [vmem:[%s828 + $0xac] sm:$0xf]
      %v1582 = vld [vmem:[%s828 + $0xb8] sm:$0x8]
      %v1583 = vld [vmem:[%s828 + $0xbc] sm:$0xf]
      %v1584 = vld [vmem:[%s828 + $0xc0] sm:$0xf]
      %v1585 = vld [vmem:[%s828 + $0xcc] sm:$0x8]
      %v1586 = vld [vmem:[%s828 + $0xd0] sm:$0xf]
      %v1587 = vld [vmem:[%s828 + $0xd4] sm:$0xf]
      %v1588 = vld [vmem:[%s828 + $0xe0] sm:$0x8]
      %v1589 = vld [vmem:[%s828 + $0xe4] sm:$0xf]
      %v1590 = vld [vmem:[%s828 + $0xe8] sm:$0xf]
      %v1591 = vld [vmem:[%s828 + $0xf4] sm:$0x8]
      %v1592 = vld [vmem:[%s828 + $0xf8] sm:$0xf]
      %v1593 = vld [vmem:[%s828 + $0xfc] sm:$0xf]
      %v1594 = vld [vmem:[%s828 + $0x108] sm:$0x8]
      %v1595 = vld [vmem:[%s828 + $0x10c] sm:$0xf]
      %v1596 = vld [vmem:[%s828 + $0x110] sm:$0xf]
      %v1597 = vld [vmem:[%s828 + $0x11c] sm:$0x8]
      %v1598 = vld [vmem:[%s828 + $0x120] sm:$0xf]
      %v1599 = vld [vmem:[%s828 + $0x124] sm:$0xf]
      %v1600 = vld [vmem:[%s828 + $0x130] sm:$0x8]
      %v1601 = vld [vmem:[%s828 + $0x134] sm:$0xf]
      %v1602 = vld [vmem:[%s828 + $0x138] sm:$0xf]
      %v1604 = vshrl.u32 %v1555, 16
      %v1606 = vrot.slane %v1604, 7
      %v1607 = vrot.slane %v1606, 4
      %v1609 = vshrl.u32 %v1556, 16
      %v1611 = vrot.slane %v1609, 7
      %v1612 = vshll.u32 %v1556, 16
      %v1614 = vor.u32 %v1611, %v1612
      %v1615 = vsel %vm959, %v1607, %v1614
      %v1616 = vrot.slane %v1611, 4
      %v1618 = vshrl.u32 %v1557, 16
      %v1620 = vrot.slane %v1618, 7
      %v1621 = vshll.u32 %v1557, 16
      %v1623 = vor.u32 %v1620, %v1621
      %v1624 = vsel %vm959, %v1616, %v1623
      %v1626 = vshrl.u32 %v1558, 16
      %v1628 = vrot.slane %v1626, 7
      %v1629 = vrot.slane %v1628, 4
      %v1631 = vshrl.u32 %v1559, 16
      %v1633 = vrot.slane %v1631, 7
      %v1634 = vshll.u32 %v1559, 16
      %v1636 = vor.u32 %v1633, %v1634
      %v1637 = vsel %vm959, %v1629, %v1636
      %v1638 = vrot.slane %v1633, 4
      %v1640 = vshrl.u32 %v1560, 16
      %v1642 = vrot.slane %v1640, 7
      %v1643 = vshll.u32 %v1560, 16
      %v1645 = vor.u32 %v1642, %v1643
      %v1646 = vsel %vm959, %v1638, %v1645
      %v1648 = vshrl.u32 %v1561, 16
      %v1650 = vrot.slane %v1648, 7
      %v1651 = vrot.slane %v1650, 4
      %v1653 = vshrl.u32 %v1562, 16
      %v1655 = vrot.slane %v1653, 7
      %v1656 = vshll.u32 %v1562, 16
      %v1658 = vor.u32 %v1655, %v1656
      %v1659 = vsel %vm959, %v1651, %v1658
      %v1660 = vrot.slane %v1655, 4
      %v1662 = vshrl.u32 %v1563, 16
      %v1664 = vrot.slane %v1662, 7
      %v1665 = vshll.u32 %v1563, 16
      %v1667 = vor.u32 %v1664, %v1665
      %v1668 = vsel %vm959, %v1660, %v1667
      %v1670 = vshrl.u32 %v1564, 16
      %v1672 = vrot.slane %v1670, 7
      %v1673 = vrot.slane %v1672, 4
      %v1675 = vshrl.u32 %v1565, 16
      %v1677 = vrot.slane %v1675, 7
      %v1678 = vshll.u32 %v1565, 16
      %v1680 = vor.u32 %v1677, %v1678
      %v1681 = vsel %vm959, %v1673, %v1680
      %v1682 = vrot.slane %v1677, 4
      %v1684 = vshrl.u32 %v1566, 16
      %v1686 = vrot.slane %v1684, 7
      %v1687 = vshll.u32 %v1566, 16
      %v1689 = vor.u32 %v1686, %v1687
      %v1690 = vsel %vm959, %v1682, %v1689
      %v1692 = vshrl.u32 %v1567, 16
      %v1694 = vrot.slane %v1692, 7
      %v1695 = vrot.slane %v1694, 4
      %v1697 = vshrl.u32 %v1568, 16
      %v1699 = vrot.slane %v1697, 7
      %v1700 = vshll.u32 %v1568, 16
      %v1702 = vor.u32 %v1699, %v1700
      %v1703 = vsel %vm959, %v1695, %v1702
      %v1704 = vrot.slane %v1699, 4
      %v1706 = vshrl.u32 %v1569, 16
      %v1708 = vrot.slane %v1706, 7
      %v1709 = vshll.u32 %v1569, 16
      %v1711 = vor.u32 %v1708, %v1709
      %v1712 = vsel %vm959, %v1704, %v1711
      %v1714 = vshrl.u32 %v1570, 16
      %v1716 = vrot.slane %v1714, 7
      %v1717 = vrot.slane %v1716, 4
      %v1719 = vshrl.u32 %v1571, 16
      %v1721 = vrot.slane %v1719, 7
      %v1722 = vshll.u32 %v1571, 16
      %v1724 = vor.u32 %v1721, %v1722
      %v1725 = vsel %vm959, %v1717, %v1724
      %v1726 = vrot.slane %v1721, 4
      %v1728 = vshrl.u32 %v1572, 16
      %v1730 = vrot.slane %v1728, 7
      %v1731 = vshll.u32 %v1572, 16
      %v1733 = vor.u32 %v1730, %v1731
      %v1734 = vsel %vm959, %v1726, %v1733
      %v1736 = vshrl.u32 %v1573, 16
      %v1738 = vrot.slane %v1736, 7
      %v1739 = vrot.slane %v1738, 4
      %v1741 = vshrl.u32 %v1574, 16
      %v1743 = vrot.slane %v1741, 7
      %v1744 = vshll.u32 %v1574, 16
      %v1746 = vor.u32 %v1743, %v1744
      %v1747 = vsel %vm959, %v1739, %v1746
      %v1748 = vrot.slane %v1743, 4
      %v1750 = vshrl.u32 %v1575, 16
      %v1752 = vrot.slane %v1750, 7
      %v1753 = vshll.u32 %v1575, 16
      %v1755 = vor.u32 %v1752, %v1753
      %v1756 = vsel %vm959, %v1748, %v1755
      %v1758 = vshrl.u32 %v1576, 16
      %v1760 = vrot.slane %v1758, 7
      %v1761 = vrot.slane %v1760, 4
      %v1763 = vshrl.u32 %v1577, 16
      %v1765 = vrot.slane %v1763, 7
      %v1766 = vshll.u32 %v1577, 16
      %v1768 = vor.u32 %v1765, %v1766
      %v1769 = vsel %vm959, %v1761, %v1768
      %v1770 = vrot.slane %v1765, 4
      %v1772 = vshrl.u32 %v1578, 16
      %v1774 = vrot.slane %v1772, 7
      %v1775 = vshll.u32 %v1578, 16
      %v1777 = vor.u32 %v1774, %v1775
      %v1778 = vsel %vm959, %v1770, %v1777
      %v1780 = vshrl.u32 %v1579, 16
      %v1782 = vrot.slane %v1780, 7
      %v1783 = vrot.slane %v1782, 4
      %v1785 = vshrl.u32 %v1580, 16
      %v1787 = vrot.slane %v1785, 7
      %v1788 = vshll.u32 %v1580, 16
      %v1790 = vor.u32 %v1787, %v1788
      %v1791 = vsel %vm959, %v1783, %v1790
      %v1792 = vrot.slane %v1787, 4
      %v1794 = vshrl.u32 %v1581, 16
      %v1796 = vrot.slane %v1794, 7
      %v1797 = vshll.u32 %v1581, 16
      %v1799 = vor.u32 %v1796, %v1797
      %v1800 = vsel %vm959, %v1792, %v1799
      %v1802 = vshrl.u32 %v1582, 16
      %v1804 = vrot.slane %v1802, 7
      %v1805 = vrot.slane %v1804, 4
      %v1807 = vshrl.u32 %v1583, 16
      %v1809 = vrot.slane %v1807, 7
      %v1810 = vshll.u32 %v1583, 16
      %v1812 = vor.u32 %v1809, %v1810
      %v1813 = vsel %vm959, %v1805, %v1812
      %v1814 = vrot.slane %v1809, 4
      %v1816 = vshrl.u32 %v1584, 16
      %v1818 = vrot.slane %v1816, 7
      %v1819 = vshll.u32 %v1584, 16
      %v1821 = vor.u32 %v1818, %v1819
      %v1822 = vsel %vm959, %v1814, %v1821
      %v1824 = vshrl.u32 %v1585, 16
      %v1826 = vrot.slane %v1824, 7
      %v1827 = vrot.slane %v1826, 4
      %v1829 = vshrl.u32 %v1586, 16
      %v1831 = vrot.slane %v1829, 7
      %v1832 = vshll.u32 %v1586, 16
      %v1834 = vor.u32 %v1831, %v1832
      %v1835 = vsel %vm959, %v1827, %v1834
      %v1836 = vrot.slane %v1831, 4
      %v1838 = vshrl.u32 %v1587, 16
      %v1840 = vrot.slane %v1838, 7
      %v1841 = vshll.u32 %v1587, 16
      %v1843 = vor.u32 %v1840, %v1841
      %v1844 = vsel %vm959, %v1836, %v1843
      %v1846 = vshrl.u32 %v1588, 16
      %v1848 = vrot.slane %v1846, 7
      %v1849 = vrot.slane %v1848, 4
      %v1851 = vshrl.u32 %v1589, 16
      %v1853 = vrot.slane %v1851, 7
      %v1854 = vshll.u32 %v1589, 16
      %v1856 = vor.u32 %v1853, %v1854
      %v1857 = vsel %vm959, %v1849, %v1856
      %v1858 = vrot.slane %v1853, 4
      %v1860 = vshrl.u32 %v1590, 16
      %v1862 = vrot.slane %v1860, 7
      %v1863 = vshll.u32 %v1590, 16
      %v1865 = vor.u32 %v1862, %v1863
      %v1866 = vsel %vm959, %v1858, %v1865
      %v1868 = vshrl.u32 %v1591, 16
      %v1870 = vrot.slane %v1868, 7
      %v1871 = vrot.slane %v1870, 4
      %v1873 = vshrl.u32 %v1592, 16
      %v1875 = vrot.slane %v1873, 7
      %v1876 = vshll.u32 %v1592, 16
      %v1878 = vor.u32 %v1875, %v1876
      %v1879 = vsel %vm959, %v1871, %v1878
      %v1880 = vrot.slane %v1875, 4
      %v1882 = vshrl.u32 %v1593, 16
      %v1884 = vrot.slane %v1882, 7
      %v1885 = vshll.u32 %v1593, 16
      %v1887 = vor.u32 %v1884, %v1885
      %v1888 = vsel %vm959, %v1880, %v1887
      %v1890 = vshrl.u32 %v1594, 16
      %v1892 = vrot.slane %v1890, 7
      %v1893 = vrot.slane %v1892, 4
      %v1895 = vshrl.u32 %v1595, 16
      %v1897 = vrot.slane %v1895, 7
      %v1898 = vshll.u32 %v1595, 16
      %v1900 = vor.u32 %v1897, %v1898
      %v1901 = vsel %vm959, %v1893, %v1900
      %v1902 = vrot.slane %v1897, 4
      %v1904 = vshrl.u32 %v1596, 16
      %v1906 = vrot.slane %v1904, 7
      %v1907 = vshll.u32 %v1596, 16
      %v1909 = vor.u32 %v1906, %v1907
      %v1910 = vsel %vm959, %v1902, %v1909
      %v1912 = vshrl.u32 %v1597, 16
      %v1914 = vrot.slane %v1912, 7
      %v1915 = vrot.slane %v1914, 4
      %v1917 = vshrl.u32 %v1598, 16
      %v1919 = vrot.slane %v1917, 7
      %v1920 = vshll.u32 %v1598, 16
      %v1922 = vor.u32 %v1919, %v1920
      %v1923 = vsel %vm959, %v1915, %v1922
      %v1924 = vrot.slane %v1919, 4
      %v1926 = vshrl.u32 %v1599, 16
      %v1928 = vrot.slane %v1926, 7
      %v1929 = vshll.u32 %v1599, 16
      %v1931 = vor.u32 %v1928, %v1929
      %v1932 = vsel %vm959, %v1924, %v1931
      %v1934 = vshrl.u32 %v1600, 16
      %v1936 = vrot.slane %v1934, 7
      %v1937 = vrot.slane %v1936, 4
      %v1939 = vshrl.u32 %v1601, 16
      %v1941 = vrot.slane %v1939, 7
      %v1942 = vshll.u32 %v1601, 16
      %v1944 = vor.u32 %v1941, %v1942
      %v1945 = vsel %vm959, %v1937, %v1944
      %v1946 = vrot.slane %v1941, 4
      %v1948 = vshrl.u32 %v1602, 16
      %v1950 = vrot.slane %v1948, 7
      %v1951 = vshll.u32 %v1602, 16
      %v1953 = vor.u32 %v1950, %v1951
      %v1954 = vsel %vm959, %v1946, %v1953
      %v1955 = vld [vmem:[%s828 + $0x10] sm:$0x1]
      %v1956 = vld [vmem:[%s828 + $0x24] sm:$0x1]
      %v1957 = vld [vmem:[%s828 + $0x38] sm:$0x1]
      %v1958 = vld [vmem:[%s828 + $0x4c] sm:$0x1]
      %v1959 = vld [vmem:[%s828 + $0x60] sm:$0x1]
      %v1960 = vld [vmem:[%s828 + $0x74] sm:$0x1]
      %v1961 = vld [vmem:[%s828 + $0x88] sm:$0x1]
      %v1962 = vld [vmem:[%s828 + $0x9c] sm:$0x1]
      %v1963 = vld [vmem:[%s828 + $0xb0] sm:$0x1]
      %v1964 = vld [vmem:[%s828 + $0xc4] sm:$0x1]
      %v1965 = vld [vmem:[%s828 + $0xd8] sm:$0x1]
      %v1966 = vld [vmem:[%s828 + $0xec] sm:$0x1]
      %v1967 = vld [vmem:[%s828 + $0x100] sm:$0x1]
      %v1968 = vld [vmem:[%s828 + $0x114] sm:$0x1]
      %v1969 = vld [vmem:[%s828 + $0x128] sm:$0x1]
      %v1970 = vld [vmem:[%s828 + $0x13c] sm:$0x1]
      %v1971 = vrot.slane %v1609, 4
      %v1972 = vrot.slane %v1612, 5
      %v1973 = vor.u32 %v1971, %v1972
      %v1974 = vrot.slane %v1973, 4
      %v1975 = vrot.slane %v1621, 5
      %v1976 = vsel %vm1330, %v1974, %v1975
      %v1977 = vrot.slane %v1618, 4
      %v1978 = vor.u32 %v1977, %v1975
      %v1979 = vrot.slane %v1978, 4
      %v1981 = vshll.u32 %v1955, 16
      %v1983 = vrot.slane %v1981, 5
      %v1984 = vsel %vm1330, %v1979, %v1983
      %v1985 = vrot.slane %v1631, 4
      %v1986 = vrot.slane %v1634, 5
      %v1987 = vor.u32 %v1985, %v1986
      %v1988 = vrot.slane %v1987, 4
      %v1989 = vrot.slane %v1643, 5
      %v1990 = vsel %vm1330, %v1988, %v1989
      %v1991 = vrot.slane %v1640, 4
      %v1992 = vor.u32 %v1991, %v1989
      %v1993 = vrot.slane %v1992, 4
      %v1995 = vshll.u32 %v1956, 16
      %v1997 = vrot.slane %v1995, 5
      %v1998 = vsel %vm1330, %v1993, %v1997
      %v1999 = vrot.slane %v1653, 4
      %v2000 = vrot.slane %v1656, 5
      %v2001 = vor.u32 %v1999, %v2000
      %v2002 = vrot.slane %v2001, 4
      %v2003 = vrot.slane %v1665, 5
      %v2004 = vsel %vm1330, %v2002, %v2003
      %v2005 = vrot.slane %v1662, 4
      %v2006 = vor.u32 %v2005, %v2003
      %v2007 = vrot.slane %v2006, 4
      %v2009 = vshll.u32 %v1957, 16
      %v2011 = vrot.slane %v2009, 5
      %v2012 = vsel %vm1330, %v2007, %v2011
      %v2013 = vrot.slane %v1675, 4
      %v2014 = vrot.slane %v1678, 5
      %v2015 = vor.u32 %v2013, %v2014
      %v2016 = vrot.slane %v2015, 4
      %v2017 = vrot.slane %v1687, 5
      %v2018 = vsel %vm1330, %v2016, %v2017
      %v2019 = vrot.slane %v1684, 4
      %v2020 = vor.u32 %v2019, %v2017
      %v2021 = vrot.slane %v2020, 4
      %v2023 = vshll.u32 %v1958, 16
      %v2025 = vrot.slane %v2023, 5
      %v2026 = vsel %vm1330, %v2021, %v2025
      %v2027 = vrot.slane %v1697, 4
      %v2028 = vrot.slane %v1700, 5
      %v2029 = vor.u32 %v2027, %v2028
      %v2030 = vrot.slane %v2029, 4
      %v2031 = vrot.slane %v1709, 5
      %v2032 = vsel %vm1330, %v2030, %v2031
      %v2033 = vrot.slane %v1706, 4
      %v2034 = vor.u32 %v2033, %v2031
      %v2035 = vrot.slane %v2034, 4
      %v2037 = vshll.u32 %v1959, 16
      %v2039 = vrot.slane %v2037, 5
      %v2040 = vsel %vm1330, %v2035, %v2039
      %v2041 = vrot.slane %v1719, 4
      %v2042 = vrot.slane %v1722, 5
      %v2043 = vor.u32 %v2041, %v2042
      %v2044 = vrot.slane %v2043, 4
      %v2045 = vrot.slane %v1731, 5
      %v2046 = vsel %vm1330, %v2044, %v2045
      %v2047 = vrot.slane %v1728, 4
      %v2048 = vor.u32 %v2047, %v2045
      %v2049 = vrot.slane %v2048, 4
      %v2051 = vshll.u32 %v1960, 16
      %v2053 = vrot.slane %v2051, 5
      %v2054 = vsel %vm1330, %v2049, %v2053
      %v2055 = vrot.slane %v1741, 4
      %v2056 = vrot.slane %v1744, 5
      %v2057 = vor.u32 %v2055, %v2056
      %v2058 = vrot.slane %v2057, 4
      %v2059 = vrot.slane %v1753, 5
      %v2060 = vsel %vm1330, %v2058, %v2059
      %v2061 = vrot.slane %v1750, 4
      %v2062 = vor.u32 %v2061, %v2059
      %v2063 = vrot.slane %v2062, 4
      %v2065 = vshll.u32 %v1961, 16
      %v2067 = vrot.slane %v2065, 5
      %v2068 = vsel %vm1330, %v2063, %v2067
      %v2069 = vrot.slane %v1763, 4
      %v2070 = vrot.slane %v1766, 5
      %v2071 = vor.u32 %v2069, %v2070
      %v2072 = vrot.slane %v2071, 4
      %v2073 = vrot.slane %v1775, 5
      %v2074 = vsel %vm1330, %v2072, %v2073
      %v2075 = vrot.slane %v1772, 4
      %v2076 = vor.u32 %v2075, %v2073
      %v2077 = vrot.slane %v2076, 4
      %v2079 = vshll.u32 %v1962, 16
      %v2081 = vrot.slane %v2079, 5
      %v2082 = vsel %vm1330, %v2077, %v2081
      %v2083 = vrot.slane %v1785, 4
      %v2084 = vrot.slane %v1788, 5
      %v2085 = vor.u32 %v2083, %v2084
      %v2086 = vrot.slane %v2085, 4
      %v2087 = vrot.slane %v1797, 5
      %v2088 = vsel %vm1330, %v2086, %v2087
      %v2089 = vrot.slane %v1794, 4
      %v2090 = vor.u32 %v2089, %v2087
      %v2091 = vrot.slane %v2090, 4
      %v2093 = vshll.u32 %v1963, 16
      %v2095 = vrot.slane %v2093, 5
      %v2096 = vsel %vm1330, %v2091, %v2095
      %v2097 = vrot.slane %v1807, 4
      %v2098 = vrot.slane %v1810, 5
      %v2099 = vor.u32 %v2097, %v2098
      %v2100 = vrot.slane %v2099, 4
      %v2101 = vrot.slane %v1819, 5
      %v2102 = vsel %vm1330, %v2100, %v2101
      %v2103 = vrot.slane %v1816, 4
      %v2104 = vor.u32 %v2103, %v2101
      %v2105 = vrot.slane %v2104, 4
      %v2107 = vshll.u32 %v1964, 16
      %v2109 = vrot.slane %v2107, 5
      %v2110 = vsel %vm1330, %v2105, %v2109
      %v2111 = vrot.slane %v1829, 4
      %v2112 = vrot.slane %v1832, 5
      %v2113 = vor.u32 %v2111, %v2112
      %v2114 = vrot.slane %v2113, 4
      %v2115 = vrot.slane %v1841, 5
      %v2116 = vsel %vm1330, %v2114, %v2115
      %v2117 = vrot.slane %v1838, 4
      %v2118 = vor.u32 %v2117, %v2115
      %v2119 = vrot.slane %v2118, 4
      %v2121 = vshll.u32 %v1965, 16
      %v2123 = vrot.slane %v2121, 5
      %v2124 = vsel %vm1330, %v2119, %v2123
      %v2125 = vrot.slane %v1851, 4
      %v2126 = vrot.slane %v1854, 5
      %v2127 = vor.u32 %v2125, %v2126
      %v2128 = vrot.slane %v2127, 4
      %v2129 = vrot.slane %v1863, 5
      %v2130 = vsel %vm1330, %v2128, %v2129
      %v2131 = vrot.slane %v1860, 4
      %v2132 = vor.u32 %v2131, %v2129
      %v2133 = vrot.slane %v2132, 4
      %v2135 = vshll.u32 %v1966, 16
      %v2137 = vrot.slane %v2135, 5
      %v2138 = vsel %vm1330, %v2133, %v2137
      %v2139 = vrot.slane %v1873, 4
      %v2140 = vrot.slane %v1876, 5
      %v2141 = vor.u32 %v2139, %v2140
      %v2142 = vrot.slane %v2141, 4
      %v2143 = vrot.slane %v1885, 5
      %v2144 = vsel %vm1330, %v2142, %v2143
      %v2145 = vrot.slane %v1882, 4
      %v2146 = vor.u32 %v2145, %v2143
      %v2147 = vrot.slane %v2146, 4
      %v2149 = vshll.u32 %v1967, 16
      %v2151 = vrot.slane %v2149, 5
      %v2152 = vsel %vm1330, %v2147, %v2151
      %v2153 = vrot.slane %v1895, 4
      %v2154 = vrot.slane %v1898, 5
      %v2155 = vor.u32 %v2153, %v2154
      %v2156 = vrot.slane %v2155, 4
      %v2157 = vrot.slane %v1907, 5
      %v2158 = vsel %vm1330, %v2156, %v2157
      %v2159 = vrot.slane %v1904, 4
      %v2160 = vor.u32 %v2159, %v2157
      %v2161 = vrot.slane %v2160, 4
      %v2163 = vshll.u32 %v1968, 16
      %v2165 = vrot.slane %v2163, 5
      %v2166 = vsel %vm1330, %v2161, %v2165
      %v2167 = vrot.slane %v1917, 4
      %v2168 = vrot.slane %v1920, 5
      %v2169 = vor.u32 %v2167, %v2168
      %v2170 = vrot.slane %v2169, 4
      %v2171 = vrot.slane %v1929, 5
      %v2172 = vsel %vm1330, %v2170, %v2171
      %v2173 = vrot.slane %v1926, 4
      %v2174 = vor.u32 %v2173, %v2171
      %v2175 = vrot.slane %v2174, 4
      %v2177 = vshll.u32 %v1969, 16
      %v2179 = vrot.slane %v2177, 5
      %v2180 = vsel %vm1330, %v2175, %v2179
      %v2181 = vrot.slane %v1939, 4
      %v2182 = vrot.slane %v1942, 5
      %v2183 = vor.u32 %v2181, %v2182
      %v2184 = vrot.slane %v2183, 4
      %v2185 = vrot.slane %v1951, 5
      %v2186 = vsel %vm1330, %v2184, %v2185
      %v2187 = vrot.slane %v1948, 4
      %v2188 = vor.u32 %v2187, %v2185
      %v2189 = vrot.slane %v2188, 4
      %v2191 = vshll.u32 %v1970, 16
      %v2193 = vrot.slane %v2191, 5
      %v2194 = vsel %vm1330, %v2189, %v2193
      %s2195 = scalar_lea.vmem [#allocation2], 40
      %v2196 = vld [vmem:[%s2195 + $0x4] sm:$0x8]
      %v2197 = vld [vmem:[%s2195 + $0x8] sm:$0xf]
      %v2198 = vld [vmem:[%s2195 + $0xc] sm:$0xf]
      %v2199 = vld [vmem:[%s2195 + $0x18] sm:$0x8]
      %v2200 = vld [vmem:[%s2195 + $0x1c] sm:$0xf]
      %v2201 = vld [vmem:[%s2195 + $0x20] sm:$0xf]
      %v2202 = vld [vmem:[%s2195 + $0x2c] sm:$0x8]
      %v2203 = vld [vmem:[%s2195 + $0x30] sm:$0xf]
      %v2204 = vld [vmem:[%s2195 + $0x34] sm:$0xf]
      %v2205 = vld [vmem:[%s2195 + $0x40] sm:$0x8]
      %v2206 = vld [vmem:[%s2195 + $0x44] sm:$0xf]
      %v2207 = vld [vmem:[%s2195 + $0x48] sm:$0xf]
      %v2208 = vld [vmem:[%s2195 + $0x54] sm:$0x8]
      %v2209 = vld [vmem:[%s2195 + $0x58] sm:$0xf]
      %v2210 = vld [vmem:[%s2195 + $0x5c] sm:$0xf]
      %v2211 = vld [vmem:[%s2195 + $0x68] sm:$0x8]
      %v2212 = vld [vmem:[%s2195 + $0x6c] sm:$0xf]
      %v2213 = vld [vmem:[%s2195 + $0x70] sm:$0xf]
      %v2214 = vld [vmem:[%s2195 + $0x7c] sm:$0x8]
      %v2215 = vld [vmem:[%s2195 + $0x80] sm:$0xf]
      %v2216 = vld [vmem:[%s2195 + $0x84] sm:$0xf]
      %v2217 = vld [vmem:[%s2195 + $0x90] sm:$0x8]
      %v2218 = vld [vmem:[%s2195 + $0x94] sm:$0xf]
      %v2219 = vld [vmem:[%s2195 + $0x98] sm:$0xf]
      %v2220 = vld [vmem:[%s2195 + $0xa4] sm:$0x8]
      %v2221 = vld [vmem:[%s2195 + $0xa8] sm:$0xf]
      %v2222 = vld [vmem:[%s2195 + $0xac] sm:$0xf]
      %v2223 = vld [vmem:[%s2195 + $0xb8] sm:$0x8]
      %v2224 = vld [vmem:[%s2195 + $0xbc] sm:$0xf]
      %v2225 = vld [vmem:[%s2195 + $0xc0] sm:$0xf]
      %v2226 = vld [vmem:[%s2195 + $0xcc] sm:$0x8]
      %v2227 = vld [vmem:[%s2195 + $0xd0] sm:$0xf]
      %v2228 = vld [vmem:[%s2195 + $0xd4] sm:$0xf]
      %v2229 = vld [vmem:[%s2195 + $0xe0] sm:$0x8]
      %v2230 = vld [vmem:[%s2195 + $0xe4] sm:$0xf]
      %v2231 = vld [vmem:[%s2195 + $0xe8] sm:$0xf]
      %v2232 = vld [vmem:[%s2195 + $0xf4] sm:$0x8]
      %v2233 = vld [vmem:[%s2195 + $0xf8] sm:$0xf]
      %v2234 = vld [vmem:[%s2195 + $0xfc] sm:$0xf]
      %v2235 = vld [vmem:[%s2195 + $0x108] sm:$0x8]
      %v2236 = vld [vmem:[%s2195 + $0x10c] sm:$0xf]
      %v2237 = vld [vmem:[%s2195 + $0x110] sm:$0xf]
      %v2238 = vld [vmem:[%s2195 + $0x11c] sm:$0x8]
      %v2239 = vld [vmem:[%s2195 + $0x120] sm:$0xf]
      %v2240 = vld [vmem:[%s2195 + $0x124] sm:$0xf]
      %v2241 = vld [vmem:[%s2195 + $0x130] sm:$0x8]
      %v2242 = vld [vmem:[%s2195 + $0x134] sm:$0xf]
      %v2243 = vld [vmem:[%s2195 + $0x138] sm:$0xf]
      %v2245 = vshrl.u32 %v2196, 16
      %v2247 = vrot.slane %v2245, 7
      %v2248 = vrot.slane %v2247, 4
      %v2250 = vshrl.u32 %v2197, 16
      %v2252 = vrot.slane %v2250, 7
      %v2253 = vshll.u32 %v2197, 16
      %v2255 = vor.u32 %v2252, %v2253
      %v2256 = vsel %vm959, %v2248, %v2255
      %v2257 = vrot.slane %v2252, 4
      %v2259 = vshrl.u32 %v2198, 16
      %v2261 = vrot.slane %v2259, 7
      %v2262 = vshll.u32 %v2198, 16
      %v2264 = vor.u32 %v2261, %v2262
      %v2265 = vsel %vm959, %v2257, %v2264
      %v2267 = vshrl.u32 %v2199, 16
      %v2269 = vrot.slane %v2267, 7
      %v2270 = vrot.slane %v2269, 4
      %v2272 = vshrl.u32 %v2200, 16
      %v2274 = vrot.slane %v2272, 7
      %v2275 = vshll.u32 %v2200, 16
      %v2277 = vor.u32 %v2274, %v2275
      %v2278 = vsel %vm959, %v2270, %v2277
      %v2279 = vrot.slane %v2274, 4
      %v2281 = vshrl.u32 %v2201, 16
      %v2283 = vrot.slane %v2281, 7
      %v2284 = vshll.u32 %v2201, 16
      %v2286 = vor.u32 %v2283, %v2284
      %v2287 = vsel %vm959, %v2279, %v2286
      %v2289 = vshrl.u32 %v2202, 16
      %v2291 = vrot.slane %v2289, 7
      %v2292 = vrot.slane %v2291, 4
      %v2294 = vshrl.u32 %v2203, 16
      %v2296 = vrot.slane %v2294, 7
      %v2297 = vshll.u32 %v2203, 16
      %v2299 = vor.u32 %v2296, %v2297
      %v2300 = vsel %vm959, %v2292, %v2299
      %v2301 = vrot.slane %v2296, 4
      %v2303 = vshrl.u32 %v2204, 16
      %v2305 = vrot.slane %v2303, 7
      %v2306 = vshll.u32 %v2204, 16
      %v2308 = vor.u32 %v2305, %v2306
      %v2309 = vsel %vm959, %v2301, %v2308
      %v2311 = vshrl.u32 %v2205, 16
      %v2313 = vrot.slane %v2311, 7
      %v2314 = vrot.slane %v2313, 4
      %v2316 = vshrl.u32 %v2206, 16
      %v2318 = vrot.slane %v2316, 7
      %v2319 = vshll.u32 %v2206, 16
      %v2321 = vor.u32 %v2318, %v2319
      %v2322 = vsel %vm959, %v2314, %v2321
      %v2323 = vrot.slane %v2318, 4
      %v2325 = vshrl.u32 %v2207, 16
      %v2327 = vrot.slane %v2325, 7
      %v2328 = vshll.u32 %v2207, 16
      %v2330 = vor.u32 %v2327, %v2328
      %v2331 = vsel %vm959, %v2323, %v2330
      %v2333 = vshrl.u32 %v2208, 16
      %v2335 = vrot.slane %v2333, 7
      %v2336 = vrot.slane %v2335, 4
      %v2338 = vshrl.u32 %v2209, 16
      %v2340 = vrot.slane %v2338, 7
      %v2341 = vshll.u32 %v2209, 16
      %v2343 = vor.u32 %v2340, %v2341
      %v2344 = vsel %vm959, %v2336, %v2343
      %v2345 = vrot.slane %v2340, 4
      %v2347 = vshrl.u32 %v2210, 16
      %v2349 = vrot.slane %v2347, 7
      %v2350 = vshll.u32 %v2210, 16
      %v2352 = vor.u32 %v2349, %v2350
      %v2353 = vsel %vm959, %v2345, %v2352
      %v2355 = vshrl.u32 %v2211, 16
      %v2357 = vrot.slane %v2355, 7
      %v2358 = vrot.slane %v2357, 4
      %v2360 = vshrl.u32 %v2212, 16
      %v2362 = vrot.slane %v2360, 7
      %v2363 = vshll.u32 %v2212, 16
      %v2365 = vor.u32 %v2362, %v2363
      %v2366 = vsel %vm959, %v2358, %v2365
      %v2367 = vrot.slane %v2362, 4
      %v2369 = vshrl.u32 %v2213, 16
      %v2371 = vrot.slane %v2369, 7
      %v2372 = vshll.u32 %v2213, 16
      %v2374 = vor.u32 %v2371, %v2372
      %v2375 = vsel %vm959, %v2367, %v2374
      %v2377 = vshrl.u32 %v2214, 16
      %v2379 = vrot.slane %v2377, 7
      %v2380 = vrot.slane %v2379, 4
      %v2382 = vshrl.u32 %v2215, 16
      %v2384 = vrot.slane %v2382, 7
      %v2385 = vshll.u32 %v2215, 16
      %v2387 = vor.u32 %v2384, %v2385
      %v2388 = vsel %vm959, %v2380, %v2387
      %v2389 = vrot.slane %v2384, 4
      %v2391 = vshrl.u32 %v2216, 16
      %v2393 = vrot.slane %v2391, 7
      %v2394 = vshll.u32 %v2216, 16
      %v2396 = vor.u32 %v2393, %v2394
      %v2397 = vsel %vm959, %v2389, %v2396
      %v2399 = vshrl.u32 %v2217, 16
      %v2401 = vrot.slane %v2399, 7
      %v2402 = vrot.slane %v2401, 4
      %v2404 = vshrl.u32 %v2218, 16
      %v2406 = vrot.slane %v2404, 7
      %v2407 = vshll.u32 %v2218, 16
      %v2409 = vor.u32 %v2406, %v2407
      %v2410 = vsel %vm959, %v2402, %v2409
      %v2411 = vrot.slane %v2406, 4
      %v2413 = vshrl.u32 %v2219, 16
      %v2415 = vrot.slane %v2413, 7
      %v2416 = vshll.u32 %v2219, 16
      %v2418 = vor.u32 %v2415, %v2416
      %v2419 = vsel %vm959, %v2411, %v2418
      %v2421 = vshrl.u32 %v2220, 16
      %v2423 = vrot.slane %v2421, 7
      %v2424 = vrot.slane %v2423, 4
      %v2426 = vshrl.u32 %v2221, 16
      %v2428 = vrot.slane %v2426, 7
      %v2429 = vshll.u32 %v2221, 16
      %v2431 = vor.u32 %v2428, %v2429
      %v2432 = vsel %vm959, %v2424, %v2431
      %v2433 = vrot.slane %v2428, 4
      %v2435 = vshrl.u32 %v2222, 16
      %v2437 = vrot.slane %v2435, 7
      %v2438 = vshll.u32 %v2222, 16
      %v2440 = vor.u32 %v2437, %v2438
      %v2441 = vsel %vm959, %v2433, %v2440
      %v2443 = vshrl.u32 %v2223, 16
      %v2445 = vrot.slane %v2443, 7
      %v2446 = vrot.slane %v2445, 4
      %v2448 = vshrl.u32 %v2224, 16
      %v2450 = vrot.slane %v2448, 7
      %v2451 = vshll.u32 %v2224, 16
      %v2453 = vor.u32 %v2450, %v2451
      %v2454 = vsel %vm959, %v2446, %v2453
      %v2455 = vrot.slane %v2450, 4
      %v2457 = vshrl.u32 %v2225, 16
      %v2459 = vrot.slane %v2457, 7
      %v2460 = vshll.u32 %v2225, 16
      %v2462 = vor.u32 %v2459, %v2460
      %v2463 = vsel %vm959, %v2455, %v2462
      %v2465 = vshrl.u32 %v2226, 16
      %v2467 = vrot.slane %v2465, 7
      %v2468 = vrot.slane %v2467, 4
      %v2470 = vshrl.u32 %v2227, 16
      %v2472 = vrot.slane %v2470, 7
      %v2473 = vshll.u32 %v2227, 16
      %v2475 = vor.u32 %v2472, %v2473
      %v2476 = vsel %vm959, %v2468, %v2475
      %v2477 = vrot.slane %v2472, 4
      %v2479 = vshrl.u32 %v2228, 16
      %v2481 = vrot.slane %v2479, 7
      %v2482 = vshll.u32 %v2228, 16
      %v2484 = vor.u32 %v2481, %v2482
      %v2485 = vsel %vm959, %v2477, %v2484
      %v2487 = vshrl.u32 %v2229, 16
      %v2489 = vrot.slane %v2487, 7
      %v2490 = vrot.slane %v2489, 4
      %v2492 = vshrl.u32 %v2230, 16
      %v2494 = vrot.slane %v2492, 7
      %v2495 = vshll.u32 %v2230, 16
      %v2497 = vor.u32 %v2494, %v2495
      %v2498 = vsel %vm959, %v2490, %v2497
      %v2499 = vrot.slane %v2494, 4
      %v2501 = vshrl.u32 %v2231, 16
      %v2503 = vrot.slane %v2501, 7
      %v2504 = vshll.u32 %v2231, 16
      %v2506 = vor.u32 %v2503, %v2504
      %v2507 = vsel %vm959, %v2499, %v2506
      %v2509 = vshrl.u32 %v2232, 16
      %v2511 = vrot.slane %v2509, 7
      %v2512 = vrot.slane %v2511, 4
      %v2514 = vshrl.u32 %v2233, 16
      %v2516 = vrot.slane %v2514, 7
      %v2517 = vshll.u32 %v2233, 16
      %v2519 = vor.u32 %v2516, %v2517
      %v2520 = vsel %vm959, %v2512, %v2519
      %v2521 = vrot.slane %v2516, 4
      %v2523 = vshrl.u32 %v2234, 16
      %v2525 = vrot.slane %v2523, 7
      %v2526 = vshll.u32 %v2234, 16
      %v2528 = vor.u32 %v2525, %v2526
      %v2529 = vsel %vm959, %v2521, %v2528
      %v2531 = vshrl.u32 %v2235, 16
      %v2533 = vrot.slane %v2531, 7
      %v2534 = vrot.slane %v2533, 4
      %v2536 = vshrl.u32 %v2236, 16
      %v2538 = vrot.slane %v2536, 7
      %v2539 = vshll.u32 %v2236, 16
      %v2541 = vor.u32 %v2538, %v2539
      %v2542 = vsel %vm959, %v2534, %v2541
      %v2543 = vrot.slane %v2538, 4
      %v2545 = vshrl.u32 %v2237, 16
      %v2547 = vrot.slane %v2545, 7
      %v2548 = vshll.u32 %v2237, 16
      %v2550 = vor.u32 %v2547, %v2548
      %v2551 = vsel %vm959, %v2543, %v2550
      %v2553 = vshrl.u32 %v2238, 16
      %v2555 = vrot.slane %v2553, 7
      %v2556 = vrot.slane %v2555, 4
      %v2558 = vshrl.u32 %v2239, 16
      %v2560 = vrot.slane %v2558, 7
      %v2561 = vshll.u32 %v2239, 16
      %v2563 = vor.u32 %v2560, %v2561
      %v2564 = vsel %vm959, %v2556, %v2563
      %v2565 = vrot.slane %v2560, 4
      %v2567 = vshrl.u32 %v2240, 16
      %v2569 = vrot.slane %v2567, 7
      %v2570 = vshll.u32 %v2240, 16
      %v2572 = vor.u32 %v2569, %v2570
      %v2573 = vsel %vm959, %v2565, %v2572
      %v2575 = vshrl.u32 %v2241, 16
      %v2577 = vrot.slane %v2575, 7
      %v2578 = vrot.slane %v2577, 4
      %v2580 = vshrl.u32 %v2242, 16
      %v2582 = vrot.slane %v2580, 7
      %v2583 = vshll.u32 %v2242, 16
      %v2585 = vor.u32 %v2582, %v2583
      %v2586 = vsel %vm959, %v2578, %v2585
      %v2587 = vrot.slane %v2582, 4
      %v2589 = vshrl.u32 %v2243, 16
      %v2591 = vrot.slane %v2589, 7
      %v2592 = vshll.u32 %v2243, 16
      %v2594 = vor.u32 %v2591, %v2592
      %v2595 = vsel %vm959, %v2587, %v2594
      %v2596 = vld [vmem:[%s2195 + $0x10] sm:$0x1]
      %v2597 = vld [vmem:[%s2195 + $0x24] sm:$0x1]
      %v2598 = vld [vmem:[%s2195 + $0x38] sm:$0x1]
      %v2599 = vld [vmem:[%s2195 + $0x4c] sm:$0x1]
      %v2600 = vld [vmem:[%s2195 + $0x60] sm:$0x1]
      %v2601 = vld [vmem:[%s2195 + $0x74] sm:$0x1]
      %v2602 = vld [vmem:[%s2195 + $0x88] sm:$0x1]
      %v2603 = vld [vmem:[%s2195 + $0x9c] sm:$0x1]
      %v2604 = vld [vmem:[%s2195 + $0xb0] sm:$0x1]
      %v2605 = vld [vmem:[%s2195 + $0xc4] sm:$0x1]
      %v2606 = vld [vmem:[%s2195 + $0xd8] sm:$0x1]
      %v2607 = vld [vmem:[%s2195 + $0xec] sm:$0x1]
      %v2608 = vld [vmem:[%s2195 + $0x100] sm:$0x1]
      %v2609 = vld [vmem:[%s2195 + $0x114] sm:$0x1]
      %v2610 = vld [vmem:[%s2195 + $0x128] sm:$0x1]
      %v2611 = vld [vmem:[%s2195 + $0x13c] sm:$0x1]
      %v2612 = vrot.slane %v2250, 4
      %v2613 = vrot.slane %v2253, 5
      %v2614 = vor.u32 %v2612, %v2613
      %v2615 = vrot.slane %v2614, 4
      %v2616 = vrot.slane %v2262, 5
      %v2617 = vsel %vm1330, %v2615, %v2616
      %v2618 = vrot.slane %v2259, 4
      %v2619 = vor.u32 %v2618, %v2616
      %v2620 = vrot.slane %v2619, 4
      %v2622 = vshll.u32 %v2596, 16
      %v2624 = vrot.slane %v2622, 5
      %v2625 = vsel %vm1330, %v2620, %v2624
      %v2626 = vrot.slane %v2272, 4
      %v2627 = vrot.slane %v2275, 5
      %v2628 = vor.u32 %v2626, %v2627
      %v2629 = vrot.slane %v2628, 4
      %v2630 = vrot.slane %v2284, 5
      %v2631 = vsel %vm1330, %v2629, %v2630
      %v2632 = vrot.slane %v2281, 4
      %v2633 = vor.u32 %v2632, %v2630
      %v2634 = vrot.slane %v2633, 4
      %v2636 = vshll.u32 %v2597, 16
      %v2638 = vrot.slane %v2636, 5
      %v2639 = vsel %vm1330, %v2634, %v2638
      %v2640 = vrot.slane %v2294, 4
      %v2641 = vrot.slane %v2297, 5
      %v2642 = vor.u32 %v2640, %v2641
      %v2643 = vrot.slane %v2642, 4
      %v2644 = vrot.slane %v2306, 5
      %v2645 = vsel %vm1330, %v2643, %v2644
      %v2646 = vrot.slane %v2303, 4
      %v2647 = vor.u32 %v2646, %v2644
      %v2648 = vrot.slane %v2647, 4
      %v2650 = vshll.u32 %v2598, 16
      %v2652 = vrot.slane %v2650, 5
      %v2653 = vsel %vm1330, %v2648, %v2652
      %v2654 = vrot.slane %v2316, 4
      %v2655 = vrot.slane %v2319, 5
      %v2656 = vor.u32 %v2654, %v2655
      %v2657 = vrot.slane %v2656, 4
      %v2658 = vrot.slane %v2328, 5
      %v2659 = vsel %vm1330, %v2657, %v2658
      %v2660 = vrot.slane %v2325, 4
      %v2661 = vor.u32 %v2660, %v2658
      %v2662 = vrot.slane %v2661, 4
      %v2664 = vshll.u32 %v2599, 16
      %v2666 = vrot.slane %v2664, 5
      %v2667 = vsel %vm1330, %v2662, %v2666
      %v2668 = vrot.slane %v2338, 4
      %v2669 = vrot.slane %v2341, 5
      %v2670 = vor.u32 %v2668, %v2669
      %v2671 = vrot.slane %v2670, 4
      %v2672 = vrot.slane %v2350, 5
      %v2673 = vsel %vm1330, %v2671, %v2672
      %v2674 = vrot.slane %v2347, 4
      %v2675 = vor.u32 %v2674, %v2672
      %v2676 = vrot.slane %v2675, 4
      %v2678 = vshll.u32 %v2600, 16
      %v2680 = vrot.slane %v2678, 5
      %v2681 = vsel %vm1330, %v2676, %v2680
      %v2682 = vrot.slane %v2360, 4
      %v2683 = vrot.slane %v2363, 5
      %v2684 = vor.u32 %v2682, %v2683
      %v2685 = vrot.slane %v2684, 4
      %v2686 = vrot.slane %v2372, 5
      %v2687 = vsel %vm1330, %v2685, %v2686
      %v2688 = vrot.slane %v2369, 4
      %v2689 = vor.u32 %v2688, %v2686
      %v2690 = vrot.slane %v2689, 4
      %v2692 = vshll.u32 %v2601, 16
      %v2694 = vrot.slane %v2692, 5
      %v2695 = vsel %vm1330, %v2690, %v2694
      %v2696 = vrot.slane %v2382, 4
      %v2697 = vrot.slane %v2385, 5
      %v2698 = vor.u32 %v2696, %v2697
      %v2699 = vrot.slane %v2698, 4
      %v2700 = vrot.slane %v2394, 5
      %v2701 = vsel %vm1330, %v2699, %v2700
      %v2702 = vrot.slane %v2391, 4
      %v2703 = vor.u32 %v2702, %v2700
      %v2704 = vrot.slane %v2703, 4
      %v2706 = vshll.u32 %v2602, 16
      %v2708 = vrot.slane %v2706, 5
      %v2709 = vsel %vm1330, %v2704, %v2708
      %v2710 = vrot.slane %v2404, 4
      %v2711 = vrot.slane %v2407, 5
      %v2712 = vor.u32 %v2710, %v2711
      %v2713 = vrot.slane %v2712, 4
      %v2714 = vrot.slane %v2416, 5
      %v2715 = vsel %vm1330, %v2713, %v2714
      %v2716 = vrot.slane %v2413, 4
      %v2717 = vor.u32 %v2716, %v2714
      %v2718 = vrot.slane %v2717, 4
      %v2720 = vshll.u32 %v2603, 16
      %v2722 = vrot.slane %v2720, 5
      %v2723 = vsel %vm1330, %v2718, %v2722
      %v2724 = vrot.slane %v2426, 4
      %v2725 = vrot.slane %v2429, 5
      %v2726 = vor.u32 %v2724, %v2725
      %v2727 = vrot.slane %v2726, 4
      %v2728 = vrot.slane %v2438, 5
      %v2729 = vsel %vm1330, %v2727, %v2728
      %v2730 = vrot.slane %v2435, 4
      %v2731 = vor.u32 %v2730, %v2728
      %v2732 = vrot.slane %v2731, 4
      %v2734 = vshll.u32 %v2604, 16
      %v2736 = vrot.slane %v2734, 5
      %v2737 = vsel %vm1330, %v2732, %v2736
      %v2738 = vrot.slane %v2448, 4
      %v2739 = vrot.slane %v2451, 5
      %v2740 = vor.u32 %v2738, %v2739
      %v2741 = vrot.slane %v2740, 4
      %v2742 = vrot.slane %v2460, 5
      %v2743 = vsel %vm1330, %v2741, %v2742
      %v2744 = vrot.slane %v2457, 4
      %v2745 = vor.u32 %v2744, %v2742
      %v2746 = vrot.slane %v2745, 4
      %v2748 = vshll.u32 %v2605, 16
      %v2750 = vrot.slane %v2748, 5
      %v2751 = vsel %vm1330, %v2746, %v2750
      %v2752 = vrot.slane %v2470, 4
      %v2753 = vrot.slane %v2473, 5
      %v2754 = vor.u32 %v2752, %v2753
      %v2755 = vrot.slane %v2754, 4
      %v2756 = vrot.slane %v2482, 5
      %v2757 = vsel %vm1330, %v2755, %v2756
      %v2758 = vrot.slane %v2479, 4
      %v2759 = vor.u32 %v2758, %v2756
      %v2760 = vrot.slane %v2759, 4
      %v2762 = vshll.u32 %v2606, 16
      %v2764 = vrot.slane %v2762, 5
      %v2765 = vsel %vm1330, %v2760, %v2764
      %v2766 = vrot.slane %v2492, 4
      %v2767 = vrot.slane %v2495, 5
      %v2768 = vor.u32 %v2766, %v2767
      %v2769 = vrot.slane %v2768, 4
      %v2770 = vrot.slane %v2504, 5
      %v2771 = vsel %vm1330, %v2769, %v2770
      %v2772 = vrot.slane %v2501, 4
      %v2773 = vor.u32 %v2772, %v2770
      %v2774 = vrot.slane %v2773, 4
      %v2776 = vshll.u32 %v2607, 16
      %v2778 = vrot.slane %v2776, 5
      %v2779 = vsel %vm1330, %v2774, %v2778
      %v2780 = vrot.slane %v2514, 4
      %v2781 = vrot.slane %v2517, 5
      %v2782 = vor.u32 %v2780, %v2781
      %v2783 = vrot.slane %v2782, 4
      %v2784 = vrot.slane %v2526, 5
      %v2785 = vsel %vm1330, %v2783, %v2784
      %v2786 = vrot.slane %v2523, 4
      %v2787 = vor.u32 %v2786, %v2784
      %v2788 = vrot.slane %v2787, 4
      %v2790 = vshll.u32 %v2608, 16
      %v2792 = vrot.slane %v2790, 5
      %v2793 = vsel %vm1330, %v2788, %v2792
      %v2794 = vrot.slane %v2536, 4
      %v2795 = vrot.slane %v2539, 5
      %v2796 = vor.u32 %v2794, %v2795
      %v2797 = vrot.slane %v2796, 4
      %v2798 = vrot.slane %v2548, 5
      %v2799 = vsel %vm1330, %v2797, %v2798
      %v2800 = vrot.slane %v2545, 4
      %v2801 = vor.u32 %v2800, %v2798
      %v2802 = vrot.slane %v2801, 4
      %v2804 = vshll.u32 %v2609, 16
      %v2806 = vrot.slane %v2804, 5
      %v2807 = vsel %vm1330, %v2802, %v2806
      %v2808 = vrot.slane %v2558, 4
      %v2809 = vrot.slane %v2561, 5
      %v2810 = vor.u32 %v2808, %v2809
      %v2811 = vrot.slane %v2810, 4
      %v2812 = vrot.slane %v2570, 5
      %v2813 = vsel %vm1330, %v2811, %v2812
      %v2814 = vrot.slane %v2567, 4
      %v2815 = vor.u32 %v2814, %v2812
      %v2816 = vrot.slane %v2815, 4
      %v2818 = vshll.u32 %v2610, 16
      %v2820 = vrot.slane %v2818, 5
      %v2821 = vsel %vm1330, %v2816, %v2820
      %v2822 = vrot.slane %v2580, 4
      %v2823 = vrot.slane %v2583, 5
      %v2824 = vor.u32 %v2822, %v2823
      %v2825 = vrot.slane %v2824, 4
      %v2826 = vrot.slane %v2592, 5
      %v2827 = vsel %vm1330, %v2825, %v2826
      %v2828 = vrot.slane %v2589, 4
      %v2829 = vor.u32 %v2828, %v2826
      %v2830 = vrot.slane %v2829, 4
      %v2832 = vshll.u32 %v2611, 16
      %v2834 = vrot.slane %v2832, 5
      %v2835 = vsel %vm1330, %v2830, %v2834
      %v2836 = vunpack.c.l.b16 %v972
      %v2837 = vunpack.c.l.b16 %v981
      %v2838 = vunpack.c.l.b16 %v994
      %v2839 = vunpack.c.l.b16 %v1003
      %v2840 = vunpack.c.l.b16 %v1016
      %v2841 = vunpack.c.l.b16 %v1025
      %v2842 = vunpack.c.l.b16 %v1038
      %v2843 = vunpack.c.l.b16 %v1047
      %v2844 = vunpack.c.l.b16 %v1060
      %v2845 = vunpack.c.l.b16 %v1069
      %v2846 = vunpack.c.l.b16 %v1082
      %v2847 = vunpack.c.l.b16 %v1091
      %v2848 = vunpack.c.l.b16 %v1104
      %v2849 = vunpack.c.l.b16 %v1113
      %v2850 = vunpack.c.l.b16 %v1126
      %v2851 = vunpack.c.l.b16 %v1135
      %v2852 = vunpack.c.l.b16 %v1148
      %v2853 = vunpack.c.l.b16 %v1157
      %v2854 = vunpack.c.l.b16 %v1170
      %v2855 = vunpack.c.l.b16 %v1179
      %v2856 = vunpack.c.l.b16 %v1192
      %v2857 = vunpack.c.l.b16 %v1201
      %v2858 = vunpack.c.l.b16 %v1214
      %v2859 = vunpack.c.l.b16 %v1223
      %v2860 = vunpack.c.l.b16 %v1236
      %v2861 = vunpack.c.l.b16 %v1245
      %v2862 = vunpack.c.l.b16 %v1258
      %v2863 = vunpack.c.l.b16 %v1267
      %v2864 = vunpack.c.l.b16 %v1280
      %v2865 = vunpack.c.l.b16 %v1289
      %v2866 = vunpack.c.l.b16 %v1302
      %v2867 = vunpack.c.l.b16 %v1311
      %v2868 = vpack.c.b16 %v2837, %v2836
      %v2869 = vpack.c.b16 %v2839, %v2838
      %v2870 = vpack.c.b16 %v2841, %v2840
      %v2871 = vpack.c.b16 %v2843, %v2842
      %v2872 = vpack.c.b16 %v2845, %v2844
      %v2873 = vpack.c.b16 %v2847, %v2846
      %v2874 = vpack.c.b16 %v2849, %v2848
      %v2875 = vpack.c.b16 %v2851, %v2850
      %v2876 = vpack.c.b16 %v2853, %v2852
      %v2877 = vpack.c.b16 %v2855, %v2854
      %v2878 = vpack.c.b16 %v2857, %v2856
      %v2879 = vpack.c.b16 %v2859, %v2858
      %v2880 = vpack.c.b16 %v2861, %v2860
      %v2881 = vpack.c.b16 %v2863, %v2862
      %v2882 = vpack.c.b16 %v2865, %v2864
      %v2883 = vpack.c.b16 %v2867, %v2866
      %v2916 = vunpack.c.l.b16 %v910
      %v2917 = vunpack.c.l.b16 %v911
      %v2918 = vunpack.c.l.b16 %v913
      %v2919 = vunpack.c.l.b16 %v914
      %v2920 = vunpack.c.l.b16 %v916
      %v2921 = vunpack.c.l.b16 %v917
      %v2922 = vunpack.c.l.b16 %v919
      %v2923 = vunpack.c.l.b16 %v920
      %v2924 = vunpack.c.l.b16 %v922
      %v2925 = vunpack.c.l.b16 %v923
      %v2926 = vunpack.c.l.b16 %v925
      %v2927 = vunpack.c.l.b16 %v926
      %v2928 = vunpack.c.l.b16 %v928
      %v2929 = vunpack.c.l.b16 %v929
      %v2930 = vunpack.c.l.b16 %v931
      %v2931 = vunpack.c.l.b16 %v932
      %v2932 = vunpack.c.l.b16 %v934
      %v2933 = vunpack.c.l.b16 %v935
      %v2934 = vunpack.c.l.b16 %v937
      %v2935 = vunpack.c.l.b16 %v938
      %v2936 = vunpack.c.l.b16 %v940
      %v2937 = vunpack.c.l.b16 %v941
      %v2938 = vunpack.c.l.b16 %v943
      %v2939 = vunpack.c.l.b16 %v944
      %v2940 = vunpack.c.l.b16 %v946
      %v2941 = vunpack.c.l.b16 %v947
      %v2942 = vunpack.c.l.b16 %v949
      %v2943 = vunpack.c.l.b16 %v950
      %v2944 = vunpack.c.l.b16 %v952
      %v2945 = vunpack.c.l.b16 %v953
      %v2946 = vunpack.c.l.b16 %v955
      %v2947 = vunpack.c.l.b16 %v956
      %v2948 = vpack.c.b16 %v2917, %v2916
      %v2949 = vpack.c.b16 %v2919, %v2918
      %v2950 = vpack.c.b16 %v2921, %v2920
      %v2951 = vpack.c.b16 %v2923, %v2922
      %v2952 = vpack.c.b16 %v2925, %v2924
      %v2953 = vpack.c.b16 %v2927, %v2926
      %v2954 = vpack.c.b16 %v2929, %v2928
      %v2955 = vpack.c.b16 %v2931, %v2930
      %v2956 = vpack.c.b16 %v2933, %v2932
      %v2957 = vpack.c.b16 %v2935, %v2934
      %v2958 = vpack.c.b16 %v2937, %v2936
      %v2959 = vpack.c.b16 %v2939, %v2938
      %v2960 = vpack.c.b16 %v2941, %v2940
      %v2961 = vpack.c.b16 %v2943, %v2942
      %v2962 = vpack.c.b16 %v2945, %v2944
      %v2963 = vpack.c.b16 %v2947, %v2946
      %2964 = vrot.lane.b32.xlu0 %v2948, 4
      %v2965 = vpop.permute.xlu0 %2964
      %2966 = vrot.lane.b32.xlu0 %v2949, 4
      %v2967 = vpop.permute.xlu0 %2966
      %2968 = vrot.lane.b32.xlu0 %v2950, 4
      %v2969 = vpop.permute.xlu0 %2968
      %2970 = vrot.lane.b32.xlu0 %v2951, 4
      %v2971 = vpop.permute.xlu0 %2970
      %2972 = vrot.lane.b32.xlu0 %v2952, 4
      %v2973 = vpop.permute.xlu0 %2972
      %2974 = vrot.lane.b32.xlu0 %v2953, 4
      %v2975 = vpop.permute.xlu0 %2974
      %2976 = vrot.lane.b32.xlu0 %v2954, 4
      %v2977 = vpop.permute.xlu0 %2976
      %2978 = vrot.lane.b32.xlu0 %v2955, 4
      %v2979 = vpop.permute.xlu0 %2978
      %2980 = vrot.lane.b32.xlu0 %v2956, 4
      %v2981 = vpop.permute.xlu0 %2980
      %2982 = vrot.lane.b32.xlu0 %v2957, 4
      %v2983 = vpop.permute.xlu0 %2982
      %2984 = vrot.lane.b32.xlu0 %v2958, 4
      %v2985 = vpop.permute.xlu0 %2984
      %2986 = vrot.lane.b32.xlu0 %v2959, 4
      %v2987 = vpop.permute.xlu0 %2986
      %2988 = vrot.lane.b32.xlu0 %v2960, 4
      %v2989 = vpop.permute.xlu0 %2988
      %2990 = vrot.lane.b32.xlu0 %v2961, 4
      %v2991 = vpop.permute.xlu0 %2990
      %2992 = vrot.lane.b32.xlu0 %v2962, 4
      %v2993 = vpop.permute.xlu0 %2992
      %2994 = vrot.lane.b32.xlu0 %v2963, 4
      %v2995 = vpop.permute.xlu0 %2994
      %v2996 = vunpack.c.l.b16 %v1336
      %v2997 = vunpack.c.l.b16 %v1344
      %v2998 = vunpack.c.l.b16 %v1350
      %v2999 = vunpack.c.l.b16 %v1358
      %v3000 = vunpack.c.l.b16 %v1364
      %v3001 = vunpack.c.l.b16 %v1372
      %v3002 = vunpack.c.l.b16 %v1378
      %v3003 = vunpack.c.l.b16 %v1386
      %v3004 = vunpack.c.l.b16 %v1392
      %v3005 = vunpack.c.l.b16 %v1400
      %v3006 = vunpack.c.l.b16 %v1406
      %v3007 = vunpack.c.l.b16 %v1414
      %v3008 = vunpack.c.l.b16 %v1420
      %v3009 = vunpack.c.l.b16 %v1428
      %v3010 = vunpack.c.l.b16 %v1434
      %v3011 = vunpack.c.l.b16 %v1442
      %v3012 = vunpack.c.l.b16 %v1448
      %v3013 = vunpack.c.l.b16 %v1456
      %v3014 = vunpack.c.l.b16 %v1462
      %v3015 = vunpack.c.l.b16 %v1470
      %v3016 = vunpack.c.l.b16 %v1476
      %v3017 = vunpack.c.l.b16 %v1484
      %v3018 = vunpack.c.l.b16 %v1490
      %v3019 = vunpack.c.l.b16 %v1498
      %v3020 = vunpack.c.l.b16 %v1504
      %v3021 = vunpack.c.l.b16 %v1512
      %v3022 = vunpack.c.l.b16 %v1518
      %v3023 = vunpack.c.l.b16 %v1526
      %v3024 = vunpack.c.l.b16 %v1532
      %v3025 = vunpack.c.l.b16 %v1540
      %v3026 = vunpack.c.l.b16 %v1546
      %v3027 = vunpack.c.l.b16 %v1554
      %v3028 = vpack.c.b16 %v2997, %v2996
      %v3029 = vpack.c.b16 %v2999, %v2998
      %v3030 = vpack.c.b16 %v3001, %v3000
      %v3031 = vpack.c.b16 %v3003, %v3002
      %v3032 = vpack.c.b16 %v3005, %v3004
      %v3033 = vpack.c.b16 %v3007, %v3006
      %v3034 = vpack.c.b16 %v3009, %v3008
      %v3035 = vpack.c.b16 %v3011, %v3010
      %v3036 = vpack.c.b16 %v3013, %v3012
      %v3037 = vpack.c.b16 %v3015, %v3014
      %v3038 = vpack.c.b16 %v3017, %v3016
      %v3039 = vpack.c.b16 %v3019, %v3018
      %v3040 = vpack.c.b16 %v3021, %v3020
      %v3041 = vpack.c.b16 %v3023, %v3022
      %v3042 = vpack.c.b16 %v3025, %v3024
      %v3043 = vpack.c.b16 %v3027, %v3026
      %3044 = vrot.lane.b32.xlu0 %v3028, 8
      %v3045 = vpop.permute.xlu0 %3044
      %3046 = vrot.lane.b32.xlu0 %v3029, 8
      %v3047 = vpop.permute.xlu0 %3046
      %3048 = vrot.lane.b32.xlu0 %v3030, 8
      %v3049 = vpop.permute.xlu0 %3048
      %3050 = vrot.lane.b32.xlu0 %v3031, 8
      %v3051 = vpop.permute.xlu0 %3050
      %3052 = vrot.lane.b32.xlu0 %v3032, 8
      %v3053 = vpop.permute.xlu0 %3052
      %3054 = vrot.lane.b32.xlu0 %v3033, 8
      %v3055 = vpop.permute.xlu0 %3054
      %3056 = vrot.lane.b32.xlu0 %v3034, 8
      %v3057 = vpop.permute.xlu0 %3056
      %3058 = vrot.lane.b32.xlu0 %v3035, 8
      %v3059 = vpop.permute.xlu0 %3058
      %3060 = vrot.lane.b32.xlu0 %v3036, 8
      %v3061 = vpop.permute.xlu0 %3060
      %3062 = vrot.lane.b32.xlu0 %v3037, 8
      %v3063 = vpop.permute.xlu0 %3062
      %3064 = vrot.lane.b32.xlu0 %v3038, 8
      %v3065 = vpop.permute.xlu0 %3064
      %3066 = vrot.lane.b32.xlu0 %v3039, 8
      %v3067 = vpop.permute.xlu0 %3066
      %3068 = vrot.lane.b32.xlu0 %v3040, 8
      %v3069 = vpop.permute.xlu0 %3068
      %3070 = vrot.lane.b32.xlu0 %v3041, 8
      %v3071 = vpop.permute.xlu0 %3070
      %3072 = vrot.lane.b32.xlu0 %v3042, 8
      %v3073 = vpop.permute.xlu0 %3072
      %3074 = vrot.lane.b32.xlu0 %v3043, 8
      %v3075 = vpop.permute.xlu0 %3074
      %v3076 = vunpack.c.l.b16 %v1615
      %v3077 = vunpack.c.l.b16 %v1624
      %v3078 = vunpack.c.l.b16 %v1637
      %v3079 = vunpack.c.l.b16 %v1646
      %v3080 = vunpack.c.l.b16 %v1659
      %v3081 = vunpack.c.l.b16 %v1668
      %v3082 = vunpack.c.l.b16 %v1681
      %v3083 = vunpack.c.l.b16 %v1690
      %v3084 = vunpack.c.l.b16 %v1703
      %v3085 = vunpack.c.l.b16 %v1712
      %v3086 = vunpack.c.l.b16 %v1725
      %v3087 = vunpack.c.l.b16 %v1734
      %v3088 = vunpack.c.l.b16 %v1747
      %v3089 = vunpack.c.l.b16 %v1756
      %v3090 = vunpack.c.l.b16 %v1769
      %v3091 = vunpack.c.l.b16 %v1778
      %v3092 = vunpack.c.l.b16 %v1791
      %v3093 = vunpack.c.l.b16 %v1800
      %v3094 = vunpack.c.l.b16 %v1813
      %v3095 = vunpack.c.l.b16 %v1822
      %v3096 = vunpack.c.l.b16 %v1835
      %v3097 = vunpack.c.l.b16 %v1844
      %v3098 = vunpack.c.l.b16 %v1857
      %v3099 = vunpack.c.l.b16 %v1866
      %v3100 = vunpack.c.l.b16 %v1879
      %v3101 = vunpack.c.l.b16 %v1888
      %v3102 = vunpack.c.l.b16 %v1901
      %v3103 = vunpack.c.l.b16 %v1910
      %v3104 = vunpack.c.l.b16 %v1923
      %v3105 = vunpack.c.l.b16 %v1932
      %v3106 = vunpack.c.l.b16 %v1945
      %v3107 = vunpack.c.l.b16 %v1954
      %v3108 = vpack.c.b16 %v3077, %v3076
      %v3109 = vpack.c.b16 %v3079, %v3078
      %v3110 = vpack.c.b16 %v3081, %v3080
      %v3111 = vpack.c.b16 %v3083, %v3082
      %v3112 = vpack.c.b16 %v3085, %v3084
      %v3113 = vpack.c.b16 %v3087, %v3086
      %v3114 = vpack.c.b16 %v3089, %v3088
      %v3115 = vpack.c.b16 %v3091, %v3090
      %v3116 = vpack.c.b16 %v3093, %v3092
      %v3117 = vpack.c.b16 %v3095, %v3094
      %v3118 = vpack.c.b16 %v3097, %v3096
      %v3119 = vpack.c.b16 %v3099, %v3098
      %v3120 = vpack.c.b16 %v3101, %v3100
      %v3121 = vpack.c.b16 %v3103, %v3102
      %v3122 = vpack.c.b16 %v3105, %v3104
      %v3123 = vpack.c.b16 %v3107, %v3106
      %3124 = vrot.lane.b32.xlu0 %v3108, 12
      %v3125 = vpop.permute.xlu0 %3124
      %3126 = vrot.lane.b32.xlu0 %v3109, 12
      %v3127 = vpop.permute.xlu0 %3126
      %3128 = vrot.lane.b32.xlu0 %v3110, 12
      %v3129 = vpop.permute.xlu0 %3128
      %3130 = vrot.lane.b32.xlu0 %v3111, 12
      %v3131 = vpop.permute.xlu0 %3130
      %3132 = vrot.lane.b32.xlu0 %v3112, 12
      %v3133 = vpop.permute.xlu0 %3132
      %3134 = vrot.lane.b32.xlu0 %v3113, 12
      %v3135 = vpop.permute.xlu0 %3134
      %3136 = vrot.lane.b32.xlu0 %v3114, 12
      %v3137 = vpop.permute.xlu0 %3136
      %3138 = vrot.lane.b32.xlu0 %v3115, 12
      %v3139 = vpop.permute.xlu0 %3138
      %3140 = vrot.lane.b32.xlu0 %v3116, 12
      %v3141 = vpop.permute.xlu0 %3140
      %3142 = vrot.lane.b32.xlu0 %v3117, 12
      %v3143 = vpop.permute.xlu0 %3142
      %3144 = vrot.lane.b32.xlu0 %v3118, 12
      %v3145 = vpop.permute.xlu0 %3144
      %3146 = vrot.lane.b32.xlu0 %v3119, 12
      %v3147 = vpop.permute.xlu0 %3146
      %3148 = vrot.lane.b32.xlu0 %v3120, 12
      %v3149 = vpop.permute.xlu0 %3148
      %3150 = vrot.lane.b32.xlu0 %v3121, 12
      %v3151 = vpop.permute.xlu0 %3150
      %3152 = vrot.lane.b32.xlu0 %v3122, 12
      %v3153 = vpop.permute.xlu0 %3152
      %3154 = vrot.lane.b32.xlu0 %v3123, 12
      %v3155 = vpop.permute.xlu0 %3154
      %v3188 = vunpack.c.l.b16 %v1556
      %v3189 = vunpack.c.l.b16 %v1557
      %v3190 = vunpack.c.l.b16 %v1559
      %v3191 = vunpack.c.l.b16 %v1560
      %v3192 = vunpack.c.l.b16 %v1562
      %v3193 = vunpack.c.l.b16 %v1563
      %v3194 = vunpack.c.l.b16 %v1565
      %v3195 = vunpack.c.l.b16 %v1566
      %v3196 = vunpack.c.l.b16 %v1568
      %v3197 = vunpack.c.l.b16 %v1569
      %v3198 = vunpack.c.l.b16 %v1571
      %v3199 = vunpack.c.l.b16 %v1572
      %v3200 = vunpack.c.l.b16 %v1574
      %v3201 = vunpack.c.l.b16 %v1575
      %v3202 = vunpack.c.l.b16 %v1577
      %v3203 = vunpack.c.l.b16 %v1578
      %v3204 = vunpack.c.l.b16 %v1580
      %v3205 = vunpack.c.l.b16 %v1581
      %v3206 = vunpack.c.l.b16 %v1583
      %v3207 = vunpack.c.l.b16 %v1584
      %v3208 = vunpack.c.l.b16 %v1586
      %v3209 = vunpack.c.l.b16 %v1587
      %v3210 = vunpack.c.l.b16 %v1589
      %v3211 = vunpack.c.l.b16 %v1590
      %v3212 = vunpack.c.l.b16 %v1592
      %v3213 = vunpack.c.l.b16 %v1593
      %v3214 = vunpack.c.l.b16 %v1595
      %v3215 = vunpack.c.l.b16 %v1596
      %v3216 = vunpack.c.l.b16 %v1598
      %v3217 = vunpack.c.l.b16 %v1599
      %v3218 = vunpack.c.l.b16 %v1601
      %v3219 = vunpack.c.l.b16 %v1602
      %v3220 = vpack.c.b16 %v3189, %v3188
      %v3221 = vpack.c.b16 %v3191, %v3190
      %v3222 = vpack.c.b16 %v3193, %v3192
      %v3223 = vpack.c.b16 %v3195, %v3194
      %v3224 = vpack.c.b16 %v3197, %v3196
      %v3225 = vpack.c.b16 %v3199, %v3198
      %v3226 = vpack.c.b16 %v3201, %v3200
      %v3227 = vpack.c.b16 %v3203, %v3202
      %v3228 = vpack.c.b16 %v3205, %v3204
      %v3229 = vpack.c.b16 %v3207, %v3206
      %v3230 = vpack.c.b16 %v3209, %v3208
      %v3231 = vpack.c.b16 %v3211, %v3210
      %v3232 = vpack.c.b16 %v3213, %v3212
      %v3233 = vpack.c.b16 %v3215, %v3214
      %v3234 = vpack.c.b16 %v3217, %v3216
      %v3235 = vpack.c.b16 %v3219, %v3218
      %3236 = vrot.lane.b32.xlu0 %v3220, 16
      %v3237 = vpop.permute.xlu0 %3236
      %3238 = vrot.lane.b32.xlu0 %v3221, 16
      %v3239 = vpop.permute.xlu0 %3238
      %3240 = vrot.lane.b32.xlu0 %v3222, 16
      %v3241 = vpop.permute.xlu0 %3240
      %3242 = vrot.lane.b32.xlu0 %v3223, 16
      %v3243 = vpop.permute.xlu0 %3242
      %3244 = vrot.lane.b32.xlu0 %v3224, 16
      %v3245 = vpop.permute.xlu0 %3244
      %3246 = vrot.lane.b32.xlu0 %v3225, 16
      %v3247 = vpop.permute.xlu0 %3246
      %3248 = vrot.lane.b32.xlu0 %v3226, 16
      %v3249 = vpop.permute.xlu0 %3248
      %3250 = vrot.lane.b32.xlu0 %v3227, 16
      %v3251 = vpop.permute.xlu0 %3250
      %3252 = vrot.lane.b32.xlu0 %v3228, 16
      %v3253 = vpop.permute.xlu0 %3252
      %3254 = vrot.lane.b32.xlu0 %v3229, 16
      %v3255 = vpop.permute.xlu0 %3254
      %3256 = vrot.lane.b32.xlu0 %v3230, 16
      %v3257 = vpop.permute.xlu0 %3256
      %3258 = vrot.lane.b32.xlu0 %v3231, 16
      %v3259 = vpop.permute.xlu0 %3258
      %3260 = vrot.lane.b32.xlu0 %v3232, 16
      %v3261 = vpop.permute.xlu0 %3260
      %3262 = vrot.lane.b32.xlu0 %v3233, 16
      %v3263 = vpop.permute.xlu0 %3262
      %3264 = vrot.lane.b32.xlu0 %v3234, 16
      %v3265 = vpop.permute.xlu0 %3264
      %3266 = vrot.lane.b32.xlu0 %v3235, 16
      %v3267 = vpop.permute.xlu0 %3266
      %v3268 = vunpack.c.l.b16 %v1976
      %v3269 = vunpack.c.l.b16 %v1984
      %v3270 = vunpack.c.l.b16 %v1990
      %v3271 = vunpack.c.l.b16 %v1998
      %v3272 = vunpack.c.l.b16 %v2004
      %v3273 = vunpack.c.l.b16 %v2012
      %v3274 = vunpack.c.l.b16 %v2018
      %v3275 = vunpack.c.l.b16 %v2026
      %v3276 = vunpack.c.l.b16 %v2032
      %v3277 = vunpack.c.l.b16 %v2040
      %v3278 = vunpack.c.l.b16 %v2046
      %v3279 = vunpack.c.l.b16 %v2054
      %v3280 = vunpack.c.l.b16 %v2060
      %v3281 = vunpack.c.l.b16 %v2068
      %v3282 = vunpack.c.l.b16 %v2074
      %v3283 = vunpack.c.l.b16 %v2082
      %v3284 = vunpack.c.l.b16 %v2088
      %v3285 = vunpack.c.l.b16 %v2096
      %v3286 = vunpack.c.l.b16 %v2102
      %v3287 = vunpack.c.l.b16 %v2110
      %v3288 = vunpack.c.l.b16 %v2116
      %v3289 = vunpack.c.l.b16 %v2124
      %v3290 = vunpack.c.l.b16 %v2130
      %v3291 = vunpack.c.l.b16 %v2138
      %v3292 = vunpack.c.l.b16 %v2144
      %v3293 = vunpack.c.l.b16 %v2152
      %v3294 = vunpack.c.l.b16 %v2158
      %v3295 = vunpack.c.l.b16 %v2166
      %v3296 = vunpack.c.l.b16 %v2172
      %v3297 = vunpack.c.l.b16 %v2180
      %v3298 = vunpack.c.l.b16 %v2186
      %v3299 = vunpack.c.l.b16 %v2194
      %v3300 = vpack.c.b16 %v3269, %v3268
      %v3301 = vpack.c.b16 %v3271, %v3270
      %v3302 = vpack.c.b16 %v3273, %v3272
      %v3303 = vpack.c.b16 %v3275, %v3274
      %v3304 = vpack.c.b16 %v3277, %v3276
      %v3305 = vpack.c.b16 %v3279, %v3278
      %v3306 = vpack.c.b16 %v3281, %v3280
      %v3307 = vpack.c.b16 %v3283, %v3282
      %v3308 = vpack.c.b16 %v3285, %v3284
      %v3309 = vpack.c.b16 %v3287, %v3286
      %v3310 = vpack.c.b16 %v3289, %v3288
      %v3311 = vpack.c.b16 %v3291, %v3290
      %v3312 = vpack.c.b16 %v3293, %v3292
      %v3313 = vpack.c.b16 %v3295, %v3294
      %v3314 = vpack.c.b16 %v3297, %v3296
      %v3315 = vpack.c.b16 %v3299, %v3298
      %3316 = vrot.lane.b32.xlu0 %v3300, 20
      %v3317 = vpop.permute.xlu0 %3316
      %3318 = vrot.lane.b32.xlu0 %v3301, 20
      %v3319 = vpop.permute.xlu0 %3318
      %3320 = vrot.lane.b32.xlu0 %v3302, 20
      %v3321 = vpop.permute.xlu0 %3320
      %3322 = vrot.lane.b32.xlu0 %v3303, 20
      %v3323 = vpop.permute.xlu0 %3322
      %3324 = vrot.lane.b32.xlu0 %v3304, 20
      %v3325 = vpop.permute.xlu0 %3324
      %3326 = vrot.lane.b32.xlu0 %v3305, 20
      %v3327 = vpop.permute.xlu0 %3326
      %3328 = vrot.lane.b32.xlu0 %v3306, 20
      %v3329 = vpop.permute.xlu0 %3328
      %3330 = vrot.lane.b32.xlu0 %v3307, 20
      %v3331 = vpop.permute.xlu0 %3330
      %3332 = vrot.lane.b32.xlu0 %v3308, 20
      %v3333 = vpop.permute.xlu0 %3332
      %3334 = vrot.lane.b32.xlu0 %v3309, 20
      %v3335 = vpop.permute.xlu0 %3334
      %3336 = vrot.lane.b32.xlu0 %v3310, 20
      %v3337 = vpop.permute.xlu0 %3336
      %3338 = vrot.lane.b32.xlu0 %v3311, 20
      %v3339 = vpop.permute.xlu0 %3338
      %3340 = vrot.lane.b32.xlu0 %v3312, 20
      %v3341 = vpop.permute.xlu0 %3340
      %3342 = vrot.lane.b32.xlu0 %v3313, 20
      %v3343 = vpop.permute.xlu0 %3342
      %3344 = vrot.lane.b32.xlu0 %v3314, 20
      %v3345 = vpop.permute.xlu0 %3344
      %3346 = vrot.lane.b32.xlu0 %v3315, 20
      %v3347 = vpop.permute.xlu0 %3346
      %v3348 = vunpack.c.l.b16 %v2256
      %v3349 = vunpack.c.l.b16 %v2265
      %v3350 = vunpack.c.l.b16 %v2278
      %v3351 = vunpack.c.l.b16 %v2287
      %v3352 = vunpack.c.l.b16 %v2300
      %v3353 = vunpack.c.l.b16 %v2309
      %v3354 = vunpack.c.l.b16 %v2322
      %v3355 = vunpack.c.l.b16 %v2331
      %v3356 = vunpack.c.l.b16 %v2344
      %v3357 = vunpack.c.l.b16 %v2353
      %v3358 = vunpack.c.l.b16 %v2366
      %v3359 = vunpack.c.l.b16 %v2375
      %v3360 = vunpack.c.l.b16 %v2388
      %v3361 = vunpack.c.l.b16 %v2397
      %v3362 = vunpack.c.l.b16 %v2410
      %v3363 = vunpack.c.l.b16 %v2419
      %v3364 = vunpack.c.l.b16 %v2432
      %v3365 = vunpack.c.l.b16 %v2441
      %v3366 = vunpack.c.l.b16 %v2454
      %v3367 = vunpack.c.l.b16 %v2463
      %v3368 = vunpack.c.l.b16 %v2476
      %v3369 = vunpack.c.l.b16 %v2485
      %v3370 = vunpack.c.l.b16 %v2498
      %v3371 = vunpack.c.l.b16 %v2507
      %v3372 = vunpack.c.l.b16 %v2520
      %v3373 = vunpack.c.l.b16 %v2529
      %v3374 = vunpack.c.l.b16 %v2542
      %v3375 = vunpack.c.l.b16 %v2551
      %v3376 = vunpack.c.l.b16 %v2564
      %v3377 = vunpack.c.l.b16 %v2573
      %v3378 = vunpack.c.l.b16 %v2586
      %v3379 = vunpack.c.l.b16 %v2595
      %v3380 = vpack.c.b16 %v3349, %v3348
      %v3381 = vpack.c.b16 %v3351, %v3350
      %v3382 = vpack.c.b16 %v3353, %v3352
      %v3383 = vpack.c.b16 %v3355, %v3354
      %v3384 = vpack.c.b16 %v3357, %v3356
      %v3385 = vpack.c.b16 %v3359, %v3358
      %v3386 = vpack.c.b16 %v3361, %v3360
      %v3387 = vpack.c.b16 %v3363, %v3362
      %v3388 = vpack.c.b16 %v3365, %v3364
      %v3389 = vpack.c.b16 %v3367, %v3366
      %v3390 = vpack.c.b16 %v3369, %v3368
      %v3391 = vpack.c.b16 %v3371, %v3370
      %v3392 = vpack.c.b16 %v3373, %v3372
      %v3393 = vpack.c.b16 %v3375, %v3374
      %v3394 = vpack.c.b16 %v3377, %v3376
      %v3395 = vpack.c.b16 %v3379, %v3378
      %3396 = vrot.lane.b32.xlu0 %v3380, 24
      %v3397 = vpop.permute.xlu0 %3396
      %3398 = vrot.lane.b32.xlu0 %v3381, 24
      %v3399 = vpop.permute.xlu0 %3398
      %3400 = vrot.lane.b32.xlu0 %v3382, 24
      %v3401 = vpop.permute.xlu0 %3400
      %3402 = vrot.lane.b32.xlu0 %v3383, 24
      %v3403 = vpop.permute.xlu0 %3402
      %3404 = vrot.lane.b32.xlu0 %v3384, 24
      %v3405 = vpop.permute.xlu0 %3404
      %3406 = vrot.lane.b32.xlu0 %v3385, 24
      %v3407 = vpop.permute.xlu0 %3406
      %3408 = vrot.lane.b32.xlu0 %v3386, 24
      %v3409 = vpop.permute.xlu0 %3408
      %3410 = vrot.lane.b32.xlu0 %v3387, 24
      %v3411 = vpop.permute.xlu0 %3410
      %3412 = vrot.lane.b32.xlu0 %v3388, 24
      %v3413 = vpop.permute.xlu0 %3412
      %3414 = vrot.lane.b32.xlu0 %v3389, 24
      %v3415 = vpop.permute.xlu0 %3414
      %3416 = vrot.lane.b32.xlu0 %v3390, 24
      %v3417 = vpop.permute.xlu0 %3416
      %3418 = vrot.lane.b32.xlu0 %v3391, 24
      %v3419 = vpop.permute.xlu0 %3418
      %3420 = vrot.lane.b32.xlu0 %v3392, 24
      %v3421 = vpop.permute.xlu0 %3420
      %3422 = vrot.lane.b32.xlu0 %v3393, 24
      %v3423 = vpop.permute.xlu0 %3422
      %3424 = vrot.lane.b32.xlu0 %v3394, 24
      %v3425 = vpop.permute.xlu0 %3424
      %3426 = vrot.lane.b32.xlu0 %v3395, 24
      %v3427 = vpop.permute.xlu0 %3426
      %v3460 = vunpack.c.l.b16 %v2197
      %v3461 = vunpack.c.l.b16 %v2198
      %v3462 = vunpack.c.l.b16 %v2200
      %v3463 = vunpack.c.l.b16 %v2201
      %v3464 = vunpack.c.l.b16 %v2203
      %v3465 = vunpack.c.l.b16 %v2204
      %v3466 = vunpack.c.l.b16 %v2206
      %v3467 = vunpack.c.l.b16 %v2207
      %v3468 = vunpack.c.l.b16 %v2209
      %v3469 = vunpack.c.l.b16 %v2210
      %v3470 = vunpack.c.l.b16 %v2212
      %v3471 = vunpack.c.l.b16 %v2213
      %v3472 = vunpack.c.l.b16 %v2215
      %v3473 = vunpack.c.l.b16 %v2216
      %v3474 = vunpack.c.l.b16 %v2218
      %v3475 = vunpack.c.l.b16 %v2219
      %v3476 = vunpack.c.l.b16 %v2221
      %v3477 = vunpack.c.l.b16 %v2222
      %v3478 = vunpack.c.l.b16 %v2224
      %v3479 = vunpack.c.l.b16 %v2225
      %v3480 = vunpack.c.l.b16 %v2227
      %v3481 = vunpack.c.l.b16 %v2228
      %v3482 = vunpack.c.l.b16 %v2230
      %v3483 = vunpack.c.l.b16 %v2231
      %v3484 = vunpack.c.l.b16 %v2233
      %v3485 = vunpack.c.l.b16 %v2234
      %v3486 = vunpack.c.l.b16 %v2236
      %v3487 = vunpack.c.l.b16 %v2237
      %v3488 = vunpack.c.l.b16 %v2239
      %v3489 = vunpack.c.l.b16 %v2240
      %v3490 = vunpack.c.l.b16 %v2242
      %v3491 = vunpack.c.l.b16 %v2243
      %v3492 = vpack.c.b16 %v3461, %v3460
      %v3493 = vpack.c.b16 %v3463, %v3462
      %v3494 = vpack.c.b16 %v3465, %v3464
      %v3495 = vpack.c.b16 %v3467, %v3466
      %v3496 = vpack.c.b16 %v3469, %v3468
      %v3497 = vpack.c.b16 %v3471, %v3470
      %v3498 = vpack.c.b16 %v3473, %v3472
      %v3499 = vpack.c.b16 %v3475, %v3474
      %v3500 = vpack.c.b16 %v3477, %v3476
      %v3501 = vpack.c.b16 %v3479, %v3478
      %v3502 = vpack.c.b16 %v3481, %v3480
      %v3503 = vpack.c.b16 %v3483, %v3482
      %v3504 = vpack.c.b16 %v3485, %v3484
      %v3505 = vpack.c.b16 %v3487, %v3486
      %v3506 = vpack.c.b16 %v3489, %v3488
      %v3507 = vpack.c.b16 %v3491, %v3490
      %3508 = vrot.lane.b32.xlu0 %v3492, 28
      %v3509 = vpop.permute.xlu0 %3508
      %3510 = vrot.lane.b32.xlu0 %v3493, 28
      %v3511 = vpop.permute.xlu0 %3510
      %3512 = vrot.lane.b32.xlu0 %v3494, 28
      %v3513 = vpop.permute.xlu0 %3512
      %3514 = vrot.lane.b32.xlu0 %v3495, 28
      %v3515 = vpop.permute.xlu0 %3514
      %3516 = vrot.lane.b32.xlu0 %v3496, 28
      %v3517 = vpop.permute.xlu0 %3516
      %3518 = vrot.lane.b32.xlu0 %v3497, 28
      %v3519 = vpop.permute.xlu0 %3518
      %3520 = vrot.lane.b32.xlu0 %v3498, 28
      %v3521 = vpop.permute.xlu0 %3520
      %3522 = vrot.lane.b32.xlu0 %v3499, 28
      %v3523 = vpop.permute.xlu0 %3522
      %3524 = vrot.lane.b32.xlu0 %v3500, 28
      %v3525 = vpop.permute.xlu0 %3524
      %3526 = vrot.lane.b32.xlu0 %v3501, 28
      %v3527 = vpop.permute.xlu0 %3526
      %3528 = vrot.lane.b32.xlu0 %v3502, 28
      %v3529 = vpop.permute.xlu0 %3528
      %3530 = vrot.lane.b32.xlu0 %v3503, 28
      %v3531 = vpop.permute.xlu0 %3530
      %3532 = vrot.lane.b32.xlu0 %v3504, 28
      %v3533 = vpop.permute.xlu0 %3532
      %3534 = vrot.lane.b32.xlu0 %v3505, 28
      %v3535 = vpop.permute.xlu0 %3534
      %3536 = vrot.lane.b32.xlu0 %v3506, 28
      %v3537 = vpop.permute.xlu0 %3536
      %3538 = vrot.lane.b32.xlu0 %v3507, 28
      %v3539 = vpop.permute.xlu0 %3538
      %v3540 = vunpack.c.l.b16 %v2617
      %v3541 = vunpack.c.l.b16 %v2625
      %v3542 = vunpack.c.l.b16 %v2631
      %v3543 = vunpack.c.l.b16 %v2639
      %v3544 = vunpack.c.l.b16 %v2645
      %v3545 = vunpack.c.l.b16 %v2653
      %v3546 = vunpack.c.l.b16 %v2659
      %v3547 = vunpack.c.l.b16 %v2667
      %v3548 = vunpack.c.l.b16 %v2673
      %v3549 = vunpack.c.l.b16 %v2681
      %v3550 = vunpack.c.l.b16 %v2687
      %v3551 = vunpack.c.l.b16 %v2695
      %v3552 = vunpack.c.l.b16 %v2701
      %v3553 = vunpack.c.l.b16 %v2709
      %v3554 = vunpack.c.l.b16 %v2715
      %v3555 = vunpack.c.l.b16 %v2723
      %v3556 = vunpack.c.l.b16 %v2729
      %v3557 = vunpack.c.l.b16 %v2737
      %v3558 = vunpack.c.l.b16 %v2743
      %v3559 = vunpack.c.l.b16 %v2751
      %v3560 = vunpack.c.l.b16 %v2757
      %v3561 = vunpack.c.l.b16 %v2765
      %v3562 = vunpack.c.l.b16 %v2771
      %v3563 = vunpack.c.l.b16 %v2779
      %v3564 = vunpack.c.l.b16 %v2785
      %v3565 = vunpack.c.l.b16 %v2793
      %v3566 = vunpack.c.l.b16 %v2799
      %v3567 = vunpack.c.l.b16 %v2807
      %v3568 = vunpack.c.l.b16 %v2813
      %v3569 = vunpack.c.l.b16 %v2821
      %v3570 = vunpack.c.l.b16 %v2827
      %v3571 = vunpack.c.l.b16 %v2835
      %v3572 = vpack.c.b16 %v3541, %v3540
      %v3573 = vpack.c.b16 %v3543, %v3542
      %v3574 = vpack.c.b16 %v3545, %v3544
      %v3575 = vpack.c.b16 %v3547, %v3546
      %v3576 = vpack.c.b16 %v3549, %v3548
      %v3577 = vpack.c.b16 %v3551, %v3550
      %v3578 = vpack.c.b16 %v3553, %v3552
      %v3579 = vpack.c.b16 %v3555, %v3554
      %v3580 = vpack.c.b16 %v3557, %v3556
      %v3581 = vpack.c.b16 %v3559, %v3558
      %v3582 = vpack.c.b16 %v3561, %v3560
      %v3583 = vpack.c.b16 %v3563, %v3562
      %v3584 = vpack.c.b16 %v3565, %v3564
      %v3585 = vpack.c.b16 %v3567, %v3566
      %v3586 = vpack.c.b16 %v3569, %v3568
      %v3587 = vpack.c.b16 %v3571, %v3570
      %3588 = vrot.lane.b32.xlu0 %v3572, 32
      %v3589 = vpop.permute.xlu0 %3588
      %3590 = vrot.lane.b32.xlu0 %v3573, 32
      %v3591 = vpop.permute.xlu0 %3590
      %3592 = vrot.lane.b32.xlu0 %v3574, 32
      %v3593 = vpop.permute.xlu0 %3592
      %3594 = vrot.lane.b32.xlu0 %v3575, 32
      %v3595 = vpop.permute.xlu0 %3594
      %3596 = vrot.lane.b32.xlu0 %v3576, 32
      %v3597 = vpop.permute.xlu0 %3596
      %3598 = vrot.lane.b32.xlu0 %v3577, 32
      %v3599 = vpop.permute.xlu0 %3598
      %3600 = vrot.lane.b32.xlu0 %v3578, 32
      %v3601 = vpop.permute.xlu0 %3600
      %3602 = vrot.lane.b32.xlu0 %v3579, 32
      %v3603 = vpop.permute.xlu0 %3602
      %3604 = vrot.lane.b32.xlu0 %v3580, 32
      %v3605 = vpop.permute.xlu0 %3604
      %3606 = vrot.lane.b32.xlu0 %v3581, 32
      %v3607 = vpop.permute.xlu0 %3606
      %3608 = vrot.lane.b32.xlu0 %v3582, 32
      %v3609 = vpop.permute.xlu0 %3608
      %3610 = vrot.lane.b32.xlu0 %v3583, 32
      %v3611 = vpop.permute.xlu0 %3610
      %3612 = vrot.lane.b32.xlu0 %v3584, 32
      %v3613 = vpop.permute.xlu0 %3612
      %3614 = vrot.lane.b32.xlu0 %v3585, 32
      %v3615 = vpop.permute.xlu0 %3614
      %3616 = vrot.lane.b32.xlu0 %v3586, 32
      %v3617 = vpop.permute.xlu0 %3616
      %3618 = vrot.lane.b32.xlu0 %v3587, 32
      %v3619 = vpop.permute.xlu0 %3618
      %v3622 = vsel %vm454, %v2868, %v2965
      %v3625 = vsel %vm454, %v2869, %v2967
      %v3628 = vsel %vm454, %v2870, %v2969
      %v3631 = vsel %vm454, %v2871, %v2971
      %v3634 = vsel %vm454, %v2872, %v2973
      %v3637 = vsel %vm454, %v2873, %v2975
      %v3640 = vsel %vm454, %v2874, %v2977
      %v3643 = vsel %vm454, %v2875, %v2979
      %v3646 = vsel %vm454, %v2876, %v2981
      %v3649 = vsel %vm454, %v2877, %v2983
      %v3652 = vsel %vm454, %v2878, %v2985
      %v3655 = vsel %vm454, %v2879, %v2987
      %v3658 = vsel %vm454, %v2880, %v2989
      %v3661 = vsel %vm454, %v2881, %v2991
      %v3664 = vsel %vm454, %v2882, %v2993
      %v3667 = vsel %vm454, %v2883, %v2995
      %vm3668 = vcmask 64512
      %v3670 = vsel %vm3668, %v3622, %v3045
      %v3672 = vsel %vm3668, %v3625, %v3047
      %v3674 = vsel %vm3668, %v3628, %v3049
      %v3676 = vsel %vm3668, %v3631, %v3051
      %v3678 = vsel %vm3668, %v3634, %v3053
      %v3680 = vsel %vm3668, %v3637, %v3055
      %v3682 = vsel %vm3668, %v3640, %v3057
      %v3684 = vsel %vm3668, %v3643, %v3059
      %v3686 = vsel %vm3668, %v3646, %v3061
      %v3688 = vsel %vm3668, %v3649, %v3063
      %v3690 = vsel %vm3668, %v3652, %v3065
      %v3692 = vsel %vm3668, %v3655, %v3067
      %v3694 = vsel %vm3668, %v3658, %v3069
      %v3696 = vsel %vm3668, %v3661, %v3071
      %v3698 = vsel %vm3668, %v3664, %v3073
      %v3700 = vsel %vm3668, %v3667, %v3075
      %vm3701 = vcmask 97280
      %v3703 = vsel %vm3701, %v3670, %v3125
      %v3705 = vsel %vm3701, %v3672, %v3127
      %v3707 = vsel %vm3701, %v3674, %v3129
      %v3709 = vsel %vm3701, %v3676, %v3131
      %v3711 = vsel %vm3701, %v3678, %v3133
      %v3713 = vsel %vm3701, %v3680, %v3135
      %v3715 = vsel %vm3701, %v3682, %v3137
      %v3717 = vsel %vm3701, %v3684, %v3139
      %v3719 = vsel %vm3701, %v3686, %v3141
      %v3721 = vsel %vm3701, %v3688, %v3143
      %v3723 = vsel %vm3701, %v3690, %v3145
      %v3725 = vsel %vm3701, %v3692, %v3147
      %v3727 = vsel %vm3701, %v3694, %v3149
      %v3729 = vsel %vm3701, %v3696, %v3151
      %v3731 = vsel %vm3701, %v3698, %v3153
      %v3733 = vsel %vm3701, %v3700, %v3155
      %vm3734 = vcmask 130048
      %v3736 = vsel %vm3734, %v3703, %v3237
      %v3738 = vsel %vm3734, %v3705, %v3239
      %v3740 = vsel %vm3734, %v3707, %v3241
      %v3742 = vsel %vm3734, %v3709, %v3243
      %v3744 = vsel %vm3734, %v3711, %v3245
      %v3746 = vsel %vm3734, %v3713, %v3247
      %v3748 = vsel %vm3734, %v3715, %v3249
      %v3750 = vsel %vm3734, %v3717, %v3251
      %v3752 = vsel %vm3734, %v3719, %v3253
      %v3754 = vsel %vm3734, %v3721, %v3255
      %v3756 = vsel %vm3734, %v3723, %v3257
      %v3758 = vsel %vm3734, %v3725, %v3259
      %v3760 = vsel %vm3734, %v3727, %v3261
      %v3762 = vsel %vm3734, %v3729, %v3263
      %v3764 = vsel %vm3734, %v3731, %v3265
      %v3766 = vsel %vm3734, %v3733, %v3267
      %vm3767 = vcmask 162816
      %v3769 = vsel %vm3767, %v3736, %v3317
      %v3771 = vsel %vm3767, %v3738, %v3319
      %v3773 = vsel %vm3767, %v3740, %v3321
      %v3775 = vsel %vm3767, %v3742, %v3323
      %v3777 = vsel %vm3767, %v3744, %v3325
      %v3779 = vsel %vm3767, %v3746, %v3327
      %v3781 = vsel %vm3767, %v3748, %v3329
      %v3783 = vsel %vm3767, %v3750, %v3331
      %v3785 = vsel %vm3767, %v3752, %v3333
      %v3787 = vsel %vm3767, %v3754, %v3335
      %v3789 = vsel %vm3767, %v3756, %v3337
      %v3791 = vsel %vm3767, %v3758, %v3339
      %v3793 = vsel %vm3767, %v3760, %v3341
      %v3795 = vsel %vm3767, %v3762, %v3343
      %v3797 = vsel %vm3767, %v3764, %v3345
      %v3799 = vsel %vm3767, %v3766, %v3347
      %vm3800 = vcmask 195584
      %v3802 = vsel %vm3800, %v3769, %v3397
      %v3804 = vsel %vm3800, %v3771, %v3399
      %v3806 = vsel %vm3800, %v3773, %v3401
      %v3808 = vsel %vm3800, %v3775, %v3403
      %v3810 = vsel %vm3800, %v3777, %v3405
      %v3812 = vsel %vm3800, %v3779, %v3407
      %v3814 = vsel %vm3800, %v3781, %v3409
      %v3816 = vsel %vm3800, %v3783, %v3411
      %v3818 = vsel %vm3800, %v3785, %v3413
      %v3820 = vsel %vm3800, %v3787, %v3415
      %v3822 = vsel %vm3800, %v3789, %v3417
      %v3824 = vsel %vm3800, %v3791, %v3419
      %v3826 = vsel %vm3800, %v3793, %v3421
      %v3828 = vsel %vm3800, %v3795, %v3423
      %v3830 = vsel %vm3800, %v3797, %v3425
      %v3832 = vsel %vm3800, %v3799, %v3427
      %vm3833 = vcmask 228352
      %v3835 = vsel %vm3833, %v3802, %v3509
      %v3837 = vsel %vm3833, %v3804, %v3511
      %v3839 = vsel %vm3833, %v3806, %v3513
      %v3841 = vsel %vm3833, %v3808, %v3515
      %v3843 = vsel %vm3833, %v3810, %v3517
      %v3845 = vsel %vm3833, %v3812, %v3519
      %v3847 = vsel %vm3833, %v3814, %v3521
      %v3849 = vsel %vm3833, %v3816, %v3523
      %v3851 = vsel %vm3833, %v3818, %v3525
      %v3853 = vsel %vm3833, %v3820, %v3527
      %v3855 = vsel %vm3833, %v3822, %v3529
      %v3857 = vsel %vm3833, %v3824, %v3531
      %v3859 = vsel %vm3833, %v3826, %v3533
      %v3861 = vsel %vm3833, %v3828, %v3535
      %v3863 = vsel %vm3833, %v3830, %v3537
      %v3865 = vsel %vm3833, %v3832, %v3539
      %vm3866 = vcmask 261120
      %v3868 = vsel %vm3866, %v3835, %v3589
      %v3870 = vsel %vm3866, %v3837, %v3591
      %v3872 = vsel %vm3866, %v3839, %v3593
      %v3874 = vsel %vm3866, %v3841, %v3595
      %v3876 = vsel %vm3866, %v3843, %v3597
      %v3878 = vsel %vm3866, %v3845, %v3599
      %v3880 = vsel %vm3866, %v3847, %v3601
      %v3882 = vsel %vm3866, %v3849, %v3603
      %v3884 = vsel %vm3866, %v3851, %v3605
      %v3886 = vsel %vm3866, %v3853, %v3607
      %v3888 = vsel %vm3866, %v3855, %v3609
      %v3890 = vsel %vm3866, %v3857, %v3611
      %v3892 = vsel %vm3866, %v3859, %v3613
      %v3894 = vsel %vm3866, %v3861, %v3615
      %v3896 = vsel %vm3866, %v3863, %v3617
      %v3898 = vsel %vm3866, %v3865, %v3619
      %v3899 = vld [vmem:[%s2] sm:$0xf]
      %v3900 = vld [vmem:[%s2 + $0x4] sm:$0xf]
      %v3901 = vld [vmem:[%s2 + $0x8] sm:$0xf]
      %v3902 = vld [vmem:[%s2 + $0xc] sm:$0xf]
      %v3903 = vld [vmem:[%s2 + $0x10] sm:$0x3]
      %v3904 = vld [vmem:[%s6] sm:$0x1]
      %v3906 = vlaneseq
      %v3907 = vshrl.u32 %v3906, 7
      %v3908 = vsub.s32 0, %v3907
      %v3909 = vrot.slane %v3904, %v3908
      %v3916 = vunpack.c.l.b16 %v3899
      %v3917 = vunpack.c.l.b16 %v3900
      %v3918 = vunpack.c.l.b16 %v3901
      %v3919 = vunpack.c.l.b16 %v3902
      %v3920 = vunpack.c.l.b16 %v3903
      %v3921 = vpack.c.b16 %v3917, %v3916
      %v3922 = vpack.c.b16 %v3919, %v3918
      %v3923 = vpack.c.b16 %v3920, %v3920
      %vm3926 = vcmask 293888
      %v3927 = vsel %vm3926, %v3868, 0
      %v3929 = vsel %vm3926, %v3870, 0
      %v3931 = vsel %vm3926, %v3872, 0
      %v3933 = vsel %vm3926, %v3874, 0
      %v3935 = vsel %vm3926, %v3876, 0
      %v3937 = vsel %vm3926, %v3878, 0
      %v3939 = vsel %vm3926, %v3880, 0
      %v3941 = vsel %vm3926, %v3882, 0
      %v3943 = vsel %vm3926, %v3884, 0
      %v3945 = vsel %vm3926, %v3886, 0
      %v3947 = vsel %vm3926, %v3888, 0
      %v3949 = vsel %vm3926, %v3890, 0
      %v3951 = vsel %vm3926, %v3892, 0
      %v3953 = vsel %vm3926, %v3894, 0
      %v3955 = vsel %vm3926, %v3896, 0
      %v3957 = vsel %vm3926, %v3898, 0
      %v3960 = vsel %vm503, %v3923, 0
      %3962 = vmatprep.subr.bf16.mxu0 0
      %3963 = vmatpush1.bf16.msra.mxu0 %v3921
      %3964 = vmatprep.subr.bf16.mxu0 0
      %3965 = vmatpush1.bf16.msra.mxu0 %v3922
      %3966 = vmatprep.subr.bf16.mxu0 0
      %3967 = vmatpush1.bf16.msra.mxu0 %v3960
      %3968 = vmatprep.subr.bf16.mxu0 0
      %3969 = vmatpush1.bf16.msra.mxu0 0
      %3970 = vmatprep.subr.bf16.mxu0 0
      %3971 = vmatpush1.bf16.msra.mxu0 0
      %3972 = vmatprep.subr.bf16.mxu0 0
      %3973 = vmatpush1.bf16.msra.mxu0 0
      %3974 = vmatprep.subr.bf16.mxu0 0
      %3975 = vmatpush1.bf16.msra.mxu0 0
      %3976 = vmatprep.subr.bf16.mxu0 0
      %3977 = vmatpush1.bf16.msra.mxu0 0
      %3978 = vmatprep.subr.bf16.mxu0 0
      %3979 = vmatpush1.bf16.msra.mxu0 0
      %3980 = vmatprep.subr.bf16.mxu0 0
      %3981 = vmatpush1.bf16.msra.mxu0 0
      %3982 = vmatprep.subr.bf16.mxu0 0
      %3983 = vmatpush1.bf16.msra.mxu0 0
      %3984 = vmatprep.subr.bf16.mxu0 0
      %3985 = vmatpush1.bf16.msra.mxu0 0
      %3986 = vmatprep.subr.bf16.mxu0 0
      %3987 = vmatpush1.bf16.msra.mxu0 0
      %3988 = vmatprep.subr.bf16.mxu0 0
      %3989 = vmatpush1.bf16.msra.mxu0 0
      %3990 = vmatprep.subr.bf16.mxu0 0
      %3991 = vmatpush1.bf16.msra.mxu0 0
      %3992 = vmatprep.subr.bf16.mxu0 0
      %3993 = vmatpush1.bf16.msra.mxu0 0
      %3994 = vmatprep.mubr.bf16.mxu0 0
      %3995 = vmatmul.mubr.bf16.gmra.mrb[0].mxu0 %v3927
      %v3996 = vpop.f32.mrb[0].mxu0
      %v3997 = vadd.f32 %v3909, %v3996
      %v3998 = vpop.f32.mrb[0].mxu0
      %v3999 = vpop.f32.mrb[0].mxu0
      %v4000 = vadd.f32 %v3909, %v3999
      %v4001 = vpop.f32.mrb[0].mxu0
      %4002 = vmatprep.mubr.bf16.mxu0 0
      %4003 = vmatmul.mubr.bf16.gmra.mrb[0].mxu0 %v3929
      %v4004 = vpop.f32.mrb[0].mxu0
      %v4005 = vadd.f32 %v3909, %v4004
      %v4006 = vpop.f32.mrb[0].mxu0
      %v4007 = vpop.f32.mrb[0].mxu0
      %v4008 = vadd.f32 %v3909, %v4007
      %v4009 = vpop.f32.mrb[0].mxu0
      %4010 = vmatprep.mubr.bf16.mxu0 0
      %4011 = vmatmul.mubr.bf16.gmra.mrb[0].mxu0 %v3931
      %v4012 = vpop.f32.mrb[0].mxu0
      %v4013 = vadd.f32 %v3909, %v4012
      %v4014 = vpop.f32.mrb[0].mxu0
      %v4015 = vpop.f32.mrb[0].mxu0
      %v4016 = vadd.f32 %v3909, %v4015
      %v4017 = vpop.f32.mrb[0].mxu0
      %4018 = vmatprep.mubr.bf16.mxu0 0
      %4019 = vmatmul.mubr.bf16.gmra.mrb[0].mxu0 %v3933
      %v4020 = vpop.f32.mrb[0].mxu0
      %v4021 = vadd.f32 %v3909, %v4020
      %v4022 = vpop.f32.mrb[0].mxu0
      %v4023 = vpop.f32.mrb[0].mxu0
      %v4024 = vadd.f32 %v3909, %v4023
      %v4025 = vpop.f32.mrb[0].mxu0
      %4026 = vmatprep.mubr.bf16.mxu0 0
      %4027 = vmatmul.mubr.bf16.gmra.mrb[0].mxu0 %v3935
      %v4028 = vpop.f32.mrb[0].mxu0
      %v4029 = vadd.f32 %v3909, %v4028
      %v4030 = vpop.f32.mrb[0].mxu0
      %v4031 = vpop.f32.mrb[0].mxu0
      %v4032 = vadd.f32 %v3909, %v4031
      %v4033 = vpop.f32.mrb[0].mxu0
      %4034 = vmatprep.mubr.bf16.mxu0 0
      %4035 = vmatmul.mubr.bf16.gmra.mrb[0].mxu0 %v3937
      %v4036 = vpop.f32.mrb[0].mxu0
      %v4037 = vadd.f32 %v3909, %v4036
      %v4038 = vpop.f32.mrb[0].mxu0
      %v4039 = vpop.f32.mrb[0].mxu0
      %v4040 = vadd.f32 %v3909, %v4039
      %v4041 = vpop.f32.mrb[0].mxu0
      %4042 = vmatprep.mubr.bf16.mxu0 0
      %4043 = vmatmul.mubr.bf16.gmra.mrb[0].mxu0 %v3939
      %v4044 = vpop.f32.mrb[0].mxu0
      %v4045 = vadd.f32 %v3909, %v4044
      %v4046 = vpop.f32.mrb[0].mxu0
      %v4047 = vpop.f32.mrb[0].mxu0
      %v4048 = vadd.f32 %v3909, %v4047
      %v4049 = vpop.f32.mrb[0].mxu0
      %4050 = vmatprep.mubr.bf16.mxu0 0
      %4051 = vmatmul.mubr.bf16.gmra.mrb[0].mxu0 %v3941
      %v4052 = vpop.f32.mrb[0].mxu0
      %v4053 = vadd.f32 %v3909, %v4052
      %v4054 = vpop.f32.mrb[0].mxu0
      %v4055 = vpop.f32.mrb[0].mxu0
      %v4056 = vadd.f32 %v3909, %v4055
      %v4057 = vpop.f32.mrb[0].mxu0
      %4058 = vmatprep.mubr.bf16.mxu0 0
      %4059 = vmatmul.mubr.bf16.gmra.mrb[0].mxu0 %v3943
      %v4060 = vpop.f32.mrb[0].mxu0
      %v4061 = vadd.f32 %v3909, %v4060
      %v4062 = vpop.f32.mrb[0].mxu0
      %v4063 = vpop.f32.mrb[0].mxu0
      %v4064 = vadd.f32 %v3909, %v4063
      %v4065 = vpop.f32.mrb[0].mxu0
      %4066 = vmatprep.mubr.bf16.mxu0 0
      %4067 = vmatmul.mubr.bf16.gmra.mrb[0].mxu0 %v3945
      %v4068 = vpop.f32.mrb[0].mxu0
      %v4069 = vadd.f32 %v3909, %v4068
      %v4070 = vpop.f32.mrb[0].mxu0
      %v4071 = vpop.f32.mrb[0].mxu0
      %v4072 = vadd.f32 %v3909, %v4071
      %v4073 = vpop.f32.mrb[0].mxu0
      %4074 = vmatprep.mubr.bf16.mxu0 0
      %4075 = vmatmul.mubr.bf16.gmra.mrb[0].mxu0 %v3947
      %v4076 = vpop.f32.mrb[0].mxu0
      %v4077 = vadd.f32 %v3909, %v4076
      %v4078 = vpop.f32.mrb[0].mxu0
      %v4079 = vpop.f32.mrb[0].mxu0
      %v4080 = vadd.f32 %v3909, %v4079
      %v4081 = vpop.f32.mrb[0].mxu0
      %4082 = vmatprep.mubr.bf16.mxu0 0
      %4083 = vmatmul.mubr.bf16.gmra.mrb[0].mxu0 %v3949
      %v4084 = vpop.f32.mrb[0].mxu0
      %v4085 = vadd.f32 %v3909, %v4084
      %v4086 = vpop.f32.mrb[0].mxu0
      %v4087 = vpop.f32.mrb[0].mxu0
      %v4088 = vadd.f32 %v3909, %v4087
      %v4089 = vpop.f32.mrb[0].mxu0
      %4090 = vmatprep.mubr.bf16.mxu0 0
      %4091 = vmatmul.mubr.bf16.gmra.mrb[0].mxu0 %v3951
      %v4092 = vpop.f32.mrb[0].mxu0
      %v4093 = vadd.f32 %v3909, %v4092
      %v4094 = vpop.f32.mrb[0].mxu0
      %v4095 = vpop.f32.mrb[0].mxu0
      %v4096 = vadd.f32 %v3909, %v4095
      %v4097 = vpop.f32.mrb[0].mxu0
      %4098 = vmatprep.mubr.bf16.mxu0 0
      %4099 = vmatmul.mubr.bf16.gmra.mrb[0].mxu0 %v3953
      %v4100 = vpop.f32.mrb[0].mxu0
      %v4101 = vadd.f32 %v3909, %v4100
      %v4102 = vpop.f32.mrb[0].mxu0
      %v4103 = vpop.f32.mrb[0].mxu0
      %v4104 = vadd.f32 %v3909, %v4103
      %v4105 = vpop.f32.mrb[0].mxu0
      %4106 = vmatprep.mubr.bf16.mxu0 0
      %4107 = vmatmul.mubr.bf16.gmra.mrb[0].mxu0 %v3955
      %v4108 = vpop.f32.mrb[0].mxu0
      %v4109 = vadd.f32 %v3909, %v4108
      %v4110 = vpop.f32.mrb[0].mxu0
      %v4111 = vpop.f32.mrb[0].mxu0
      %v4112 = vadd.f32 %v3909, %v4111
      %v4113 = vpop.f32.mrb[0].mxu0
      %4114 = vmatprep.mubr.bf16.mxu0 0
      %4115 = vmatmul.mubr.bf16.gmra.mrb[0].mxu0 %v3957
      %v4116 = vpop.f32.mrb[0].mxu0
      %v4117 = vadd.f32 %v3909, %v4116
      %v4118 = vpop.f32.mrb[0].mxu0
      %v4119 = vpop.f32.mrb[0].mxu0
      %v4120 = vadd.f32 %v3909, %v4119
      %v4121 = vpop.f32.mrb[0].mxu0
      %4122 = vdwg.mxu0
      %v4123 = vmax.f32 %v3997, 0.0
      %v4124 = vmax.f32 %v4000, 0.0
      %v4125 = vmax.f32 %v4005, 0.0
      %v4126 = vmax.f32 %v4008, 0.0
      %v4127 = vmax.f32 %v4013, 0.0
      %v4128 = vmax.f32 %v4016, 0.0
      %v4129 = vmax.f32 %v4021, 0.0
      %v4130 = vmax.f32 %v4024, 0.0
      %v4131 = vmax.f32 %v4029, 0.0
      %v4132 = vmax.f32 %v4032, 0.0
      %v4133 = vmax.f32 %v4037, 0.0
      %v4134 = vmax.f32 %v4040, 0.0
      %v4135 = vmax.f32 %v4045, 0.0
      %v4136 = vmax.f32 %v4048, 0.0
      %v4137 = vmax.f32 %v4053, 0.0
      %v4138 = vmax.f32 %v4056, 0.0
      %v4139 = vmax.f32 %v4061, 0.0
      %v4140 = vmax.f32 %v4064, 0.0
      %v4141 = vmax.f32 %v4069, 0.0
      %v4142 = vmax.f32 %v4072, 0.0
      %v4143 = vmax.f32 %v4077, 0.0
      %v4144 = vmax.f32 %v4080, 0.0
      %v4145 = vmax.f32 %v4085, 0.0
      %v4146 = vmax.f32 %v4088, 0.0
      %v4147 = vmax.f32 %v4093, 0.0
      %v4148 = vmax.f32 %v4096, 0.0
      %v4149 = vmax.f32 %v4101, 0.0
      %v4150 = vmax.f32 %v4104, 0.0
      %v4151 = vmax.f32 %v4109, 0.0
      %v4152 = vmax.f32 %v4112, 0.0
      %v4153 = vmax.f32 %v4117, 0.0
      %v4154 = vmax.f32 %v4120, 0.0
      %v4155 = vpack.c.bf16 %v4124, %v4123
      %v4156 = vpack.c.bf16 %v4126, %v4125
      %v4157 = vpack.c.bf16 %v4128, %v4127
      %v4158 = vpack.c.bf16 %v4130, %v4129
      %v4159 = vpack.c.bf16 %v4132, %v4131
      %v4160 = vpack.c.bf16 %v4134, %v4133
      %v4161 = vpack.c.bf16 %v4136, %v4135
      %v4162 = vpack.c.bf16 %v4138, %v4137
      %v4163 = vpack.c.bf16 %v4140, %v4139
      %v4164 = vpack.c.bf16 %v4142, %v4141
      %v4165 = vpack.c.bf16 %v4144, %v4143
      %v4166 = vpack.c.bf16 %v4146, %v4145
      %v4167 = vpack.c.bf16 %v4148, %v4147
      %v4168 = vpack.c.bf16 %v4150, %v4149
      %v4169 = vpack.c.bf16 %v4152, %v4151
      %v4170 = vpack.c.bf16 %v4154, %v4153
      %v4171 = vld [vmem:[%s3] sm:$0x3]
      %v4172 = vld [vmem:[%s7] sm:$0x1]
      %v4174 = vlaneseq
      %v4175 = vshrl.u32 %v4174, 7
      %v4176 = vsub.s32 0, %v4175
      %v4177 = vrot.slane %v4172, %v4176
      %v4180 = vsel %vm454, %v4155, 0
      %v4183 = vsel %vm454, %v4156, 0
      %v4186 = vsel %vm454, %v4157, 0
      %v4189 = vsel %vm454, %v4158, 0
      %v4192 = vsel %vm454, %v4159, 0
      %v4195 = vsel %vm454, %v4160, 0
      %v4198 = vsel %vm454, %v4161, 0
      %v4201 = vsel %vm454, %v4162, 0
      %v4204 = vsel %vm454, %v4163, 0
      %v4207 = vsel %vm454, %v4164, 0
      %v4210 = vsel %vm454, %v4165, 0
      %v4213 = vsel %vm454, %v4166, 0
      %v4216 = vsel %vm454, %v4167, 0
      %v4219 = vsel %vm454, %v4168, 0
      %v4222 = vsel %vm454, %v4169, 0
      %v4225 = vsel %vm454, %v4170, 0
      %v4228 = vsel %vm503, %v4171, 0
      %4230 = vmatprep.subr.bf16.mxu0 0
      %4231 = vmatpush1.bf16.msra.mxu0 %v4228
      %4232 = vmatprep.subr.bf16.mxu0 0
      %4233 = vmatpush1.bf16.msra.mxu0 0
      %4234 = vmatprep.subr.bf16.mxu0 0
      %4235 = vmatpush1.bf16.msra.mxu0 0
      %4236 = vmatprep.subr.bf16.mxu0 0
      %4237 = vmatpush1.bf16.msra.mxu0 0
      %4238 = vmatprep.subr.bf16.mxu0 0
      %4239 = vmatpush1.bf16.msra.mxu0 0
      %4240 = vmatprep.subr.bf16.mxu0 0
      %4241 = vmatpush1.bf16.msra.mxu0 0
      %4242 = vmatprep.subr.bf16.mxu0 0
      %4243 = vmatpush1.bf16.msra.mxu0 0
      %4244 = vmatprep.subr.bf16.mxu0 0
      %4245 = vmatpush1.bf16.msra.mxu0 0
      %4246 = vmatprep.subr.bf16.mxu0 0
      %4247 = vmatpush1.bf16.msra.mxu0 0
      %4248 = vmatprep.subr.bf16.mxu0 0
      %4249 = vmatpush1.bf16.msra.mxu0 0
      %4250 = vmatprep.subr.bf16.mxu0 0
      %4251 = vmatpush1.bf16.msra.mxu0 0
      %4252 = vmatprep.subr.bf16.mxu0 0
      %4253 = vmatpush1.bf16.msra.mxu0 0
      %4254 = vmatprep.subr.bf16.mxu0 0
      %4255 = vmatpush1.bf16.msra.mxu0 0
      %4256 = vmatprep.subr.bf16.mxu0 0
      %4257 = vmatpush1.bf16.msra.mxu0 0
      %4258 = vmatprep.subr.bf16.mxu0 0
      %4259 = vmatpush1.bf16.msra.mxu0 0
      %4260 = vmatprep.subr.bf16.mxu0 0
      %4261 = vmatpush1.bf16.msra.mxu0 0
      %4262 = vmatprep.mubr.bf16.mxu0 0
      %4263 = vmatmul.mubr.bf16.gmra.mrb[0].mxu0 %v4180
      %v4264 = vpop.f32.mrb[0].mxu0
      %v4265 = vadd.f32 %v4177, %v4264
      %v4266 = vpop.f32.mrb[0].mxu0
      %v4267 = vpop.f32.mrb[0].mxu0
      %v4268 = vadd.f32 %v4177, %v4267
      %v4269 = vpop.f32.mrb[0].mxu0
      %4270 = vmatprep.mubr.bf16.mxu0 0
      %4271 = vmatmul.mubr.bf16.gmra.mrb[0].mxu0 %v4183
      %v4272 = vpop.f32.mrb[0].mxu0
      %v4273 = vadd.f32 %v4177, %v4272
      %v4274 = vpop.f32.mrb[0].mxu0
      %v4275 = vpop.f32.mrb[0].mxu0
      %v4276 = vadd.f32 %v4177, %v4275
      %v4277 = vpop.f32.mrb[0].mxu0
      %4278 = vmatprep.mubr.bf16.mxu0 0
      %4279 = vmatmul.mubr.bf16.gmra.mrb[0].mxu0 %v4186
      %v4280 = vpop.f32.mrb[0].mxu0
      %v4281 = vadd.f32 %v4177, %v4280
      %v4282 = vpop.f32.mrb[0].mxu0
      %v4283 = vpop.f32.mrb[0].mxu0
      %v4284 = vadd.f32 %v4177, %v4283
      %v4285 = vpop.f32.mrb[0].mxu0
      %4286 = vmatprep.mubr.bf16.mxu0 0
      %4287 = vmatmul.mubr.bf16.gmra.mrb[0].mxu0 %v4189
      %v4288 = vpop.f32.mrb[0].mxu0
      %v4289 = vadd.f32 %v4177, %v4288
      %v4290 = vpop.f32.mrb[0].mxu0
      %v4291 = vpop.f32.mrb[0].mxu0
      %v4292 = vadd.f32 %v4177, %v4291
      %v4293 = vpop.f32.mrb[0].mxu0
      %4294 = vmatprep.mubr.bf16.mxu0 0
      %4295 = vmatmul.mubr.bf16.gmra.mrb[0].mxu0 %v4192
      %v4296 = vpop.f32.mrb[0].mxu0
      %v4297 = vadd.f32 %v4177, %v4296
      %v4298 = vpop.f32.mrb[0].mxu0
      %v4299 = vpop.f32.mrb[0].mxu0
      %v4300 = vadd.f32 %v4177, %v4299
      %v4301 = vpop.f32.mrb[0].mxu0
      %4302 = vmatprep.mubr.bf16.mxu0 0
      %4303 = vmatmul.mubr.bf16.gmra.mrb[0].mxu0 %v4195
      %v4304 = vpop.f32.mrb[0].mxu0
      %v4305 = vadd.f32 %v4177, %v4304
      %v4306 = vpop.f32.mrb[0].mxu0
      %v4307 = vpop.f32.mrb[0].mxu0
      %v4308 = vadd.f32 %v4177, %v4307
      %v4309 = vpop.f32.mrb[0].mxu0
      %4310 = vmatprep.mubr.bf16.mxu0 0
      %4311 = vmatmul.mubr.bf16.gmra.mrb[0].mxu0 %v4198
      %v4312 = vpop.f32.mrb[0].mxu0
      %v4313 = vadd.f32 %v4177, %v4312
      %v4314 = vpop.f32.mrb[0].mxu0
      %v4315 = vpop.f32.mrb[0].mxu0
      %v4316 = vadd.f32 %v4177, %v4315
      %v4317 = vpop.f32.mrb[0].mxu0
      %4318 = vmatprep.mubr.bf16.mxu0 0
      %4319 = vmatmul.mubr.bf16.gmra.mrb[0].mxu0 %v4201
      %v4320 = vpop.f32.mrb[0].mxu0
      %v4321 = vadd.f32 %v4177, %v4320
      %v4322 = vpop.f32.mrb[0].mxu0
      %v4323 = vpop.f32.mrb[0].mxu0
      %v4324 = vadd.f32 %v4177, %v4323
      %v4325 = vpop.f32.mrb[0].mxu0
      %4326 = vmatprep.mubr.bf16.mxu0 0
      %4327 = vmatmul.mubr.bf16.gmra.mrb[0].mxu0 %v4204
      %v4328 = vpop.f32.mrb[0].mxu0
      %v4329 = vadd.f32 %v4177, %v4328
      %v4330 = vpop.f32.mrb[0].mxu0
      %v4331 = vpop.f32.mrb[0].mxu0
      %v4332 = vadd.f32 %v4177, %v4331
      %v4333 = vpop.f32.mrb[0].mxu0
      %4334 = vmatprep.mubr.bf16.mxu0 0
      %4335 = vmatmul.mubr.bf16.gmra.mrb[0].mxu0 %v4207
      %v4336 = vpop.f32.mrb[0].mxu0
      %v4337 = vadd.f32 %v4177, %v4336
      %v4338 = vpop.f32.mrb[0].mxu0
      %v4339 = vpop.f32.mrb[0].mxu0
      %v4340 = vadd.f32 %v4177, %v4339
      %v4341 = vpop.f32.mrb[0].mxu0
      %4342 = vmatprep.mubr.bf16.mxu0 0
      %4343 = vmatmul.mubr.bf16.gmra.mrb[0].mxu0 %v4210
      %v4344 = vpop.f32.mrb[0].mxu0
      %v4345 = vadd.f32 %v4177, %v4344
      %v4346 = vpop.f32.mrb[0].mxu0
      %v4347 = vpop.f32.mrb[0].mxu0
      %v4348 = vadd.f32 %v4177, %v4347
      %v4349 = vpop.f32.mrb[0].mxu0
      %4350 = vmatprep.mubr.bf16.mxu0 0
      %4351 = vmatmul.mubr.bf16.gmra.mrb[0].mxu0 %v4213
      %v4352 = vpop.f32.mrb[0].mxu0
      %v4353 = vadd.f32 %v4177, %v4352
      %v4354 = vpop.f32.mrb[0].mxu0
      %v4355 = vpop.f32.mrb[0].mxu0
      %v4356 = vadd.f32 %v4177, %v4355
      %v4357 = vpop.f32.mrb[0].mxu0
      %4358 = vmatprep.mubr.bf16.mxu0 0
      %4359 = vmatmul.mubr.bf16.gmra.mrb[0].mxu0 %v4216
      %v4360 = vpop.f32.mrb[0].mxu0
      %v4361 = vadd.f32 %v4177, %v4360
      %v4362 = vpop.f32.mrb[0].mxu0
      %v4363 = vpop.f32.mrb[0].mxu0
      %v4364 = vadd.f32 %v4177, %v4363
      %v4365 = vpop.f32.mrb[0].mxu0
      %4366 = vmatprep.mubr.bf16.mxu0 0
      %4367 = vmatmul.mubr.bf16.gmra.mrb[0].mxu0 %v4219
      %v4368 = vpop.f32.mrb[0].mxu0
      %v4369 = vadd.f32 %v4177, %v4368
      %v4370 = vpop.f32.mrb[0].mxu0
      %v4371 = vpop.f32.mrb[0].mxu0
      %v4372 = vadd.f32 %v4177, %v4371
      %v4373 = vpop.f32.mrb[0].mxu0
      %4374 = vmatprep.mubr.bf16.mxu0 0
      %4375 = vmatmul.mubr.bf16.gmra.mrb[0].mxu0 %v4222
      %v4376 = vpop.f32.mrb[0].mxu0
      %v4377 = vadd.f32 %v4177, %v4376
      %v4378 = vpop.f32.mrb[0].mxu0
      %v4379 = vpop.f32.mrb[0].mxu0
      %v4380 = vadd.f32 %v4177, %v4379
      %v4381 = vpop.f32.mrb[0].mxu0
      %4382 = vmatprep.mubr.bf16.mxu0 0
      %4383 = vmatmul.mubr.bf16.gmra.mrb[0].mxu0 %v4225
      %v4384 = vpop.f32.mrb[0].mxu0
      %v4385 = vadd.f32 %v4177, %v4384
      %v4386 = vpop.f32.mrb[0].mxu0
      %v4387 = vpop.f32.mrb[0].mxu0
      %v4388 = vadd.f32 %v4177, %v4387
      %v4389 = vpop.f32.mrb[0].mxu0
      %4390 = vdwg.mxu0
      %v4391 = vld [vmem:[%s4] sm:$0x3]
      %v4392 = vld [vmem:[%s8] sm:$0x1]
      %v4394 = vlaneseq
      %v4395 = vshrl.u32 %v4394, 7
      %v4396 = vsub.s32 0, %v4395
      %v4397 = vrot.slane %v4392, %v4396
      %v4400 = vsel %vm503, %v4391, 0
      %4402 = vmatprep.subr.bf16.mxu0 0
      %4403 = vmatpush1.bf16.msra.mxu0 %v4400
      %4404 = vmatprep.subr.bf16.mxu0 0
      %4405 = vmatpush1.bf16.msra.mxu0 0
      %4406 = vmatprep.subr.bf16.mxu0 0
      %4407 = vmatpush1.bf16.msra.mxu0 0
      %4408 = vmatprep.subr.bf16.mxu0 0
      %4409 = vmatpush1.bf16.msra.mxu0 0
      %4410 = vmatprep.subr.bf16.mxu0 0
      %4411 = vmatpush1.bf16.msra.mxu0 0
      %4412 = vmatprep.subr.bf16.mxu0 0
      %4413 = vmatpush1.bf16.msra.mxu0 0
      %4414 = vmatprep.subr.bf16.mxu0 0
      %4415 = vmatpush1.bf16.msra.mxu0 0
      %4416 = vmatprep.subr.bf16.mxu0 0
      %4417 = vmatpush1.bf16.msra.mxu0 0
      %4418 = vmatprep.subr.bf16.mxu0 0
      %4419 = vmatpush1.bf16.msra.mxu0 0
      %4420 = vmatprep.subr.bf16.mxu0 0
      %4421 = vmatpush1.bf16.msra.mxu0 0
      %4422 = vmatprep.subr.bf16.mxu0 0
      %4423 = vmatpush1.bf16.msra.mxu0 0
      %4424 = vmatprep.subr.bf16.mxu0 0
      %4425 = vmatpush1.bf16.msra.mxu0 0
      %4426 = vmatprep.subr.bf16.mxu0 0
      %4427 = vmatpush1.bf16.msra.mxu0 0
      %4428 = vmatprep.subr.bf16.mxu0 0
      %4429 = vmatpush1.bf16.msra.mxu0 0
      %4430 = vmatprep.subr.bf16.mxu0 0
      %4431 = vmatpush1.bf16.msra.mxu0 0
      %4432 = vmatprep.subr.bf16.mxu0 0
      %4433 = vmatpush1.bf16.msra.mxu0 0
      %4434 = vmatprep.mubr.bf16.mxu0 0
      %4435 = vmatmul.mubr.bf16.gmra.mrb[0].mxu0 %v456
      %v4436 = vpop.f32.mrb[0].mxu0
      %v4437 = vadd.f32 %v4397, %v4436
      %v4438 = vpop.f32.mrb[0].mxu0
      %v4439 = vpop.f32.mrb[0].mxu0
      %v4440 = vadd.f32 %v4397, %v4439
      %v4441 = vpop.f32.mrb[0].mxu0
      %4442 = vmatprep.mubr.bf16.mxu0 0
      %4443 = vmatmul.mubr.bf16.gmra.mrb[0].mxu0 %v459
      %v4444 = vpop.f32.mrb[0].mxu0
      %v4445 = vadd.f32 %v4397, %v4444
      %v4446 = vpop.f32.mrb[0].mxu0
      %v4447 = vpop.f32.mrb[0].mxu0
      %v4448 = vadd.f32 %v4397, %v4447
      %v4449 = vpop.f32.mrb[0].mxu0
      %4450 = vmatprep.mubr.bf16.mxu0 0
      %4451 = vmatmul.mubr.bf16.gmra.mrb[0].mxu0 %v462
      %v4452 = vpop.f32.mrb[0].mxu0
      %v4453 = vadd.f32 %v4397, %v4452
      %v4454 = vpop.f32.mrb[0].mxu0
      %v4455 = vpop.f32.mrb[0].mxu0
      %v4456 = vadd.f32 %v4397, %v4455
      %v4457 = vpop.f32.mrb[0].mxu0
      %4458 = vmatprep.mubr.bf16.mxu0 0
      %4459 = vmatmul.mubr.bf16.gmra.mrb[0].mxu0 %v465
      %v4460 = vpop.f32.mrb[0].mxu0
      %v4461 = vadd.f32 %v4397, %v4460
      %v4462 = vpop.f32.mrb[0].mxu0
      %v4463 = vpop.f32.mrb[0].mxu0
      %v4464 = vadd.f32 %v4397, %v4463
      %v4465 = vpop.f32.mrb[0].mxu0
      %4466 = vmatprep.mubr.bf16.mxu0 0
      %4467 = vmatmul.mubr.bf16.gmra.mrb[0].mxu0 %v468
      %v4468 = vpop.f32.mrb[0].mxu0
      %v4469 = vadd.f32 %v4397, %v4468
      %v4470 = vpop.f32.mrb[0].mxu0
      %v4471 = vpop.f32.mrb[0].mxu0
      %v4472 = vadd.f32 %v4397, %v4471
      %v4473 = vpop.f32.mrb[0].mxu0
      %4474 = vmatprep.mubr.bf16.mxu0 0
      %4475 = vmatmul.mubr.bf16.gmra.mrb[0].mxu0 %v471
      %v4476 = vpop.f32.mrb[0].mxu0
      %v4477 = vadd.f32 %v4397, %v4476
      %v4478 = vpop.f32.mrb[0].mxu0
      %v4479 = vpop.f32.mrb[0].mxu0
      %v4480 = vadd.f32 %v4397, %v4479
      %v4481 = vpop.f32.mrb[0].mxu0
      %4482 = vmatprep.mubr.bf16.mxu0 0
      %4483 = vmatmul.mubr.bf16.gmra.mrb[0].mxu0 %v474
      %v4484 = vpop.f32.mrb[0].mxu0
      %v4485 = vadd.f32 %v4397, %v4484
      %v4486 = vpop.f32.mrb[0].mxu0
      %v4487 = vpop.f32.mrb[0].mxu0
      %v4488 = vadd.f32 %v4397, %v4487
      %v4489 = vpop.f32.mrb[0].mxu0
      %4490 = vmatprep.mubr.bf16.mxu0 0
      %4491 = vmatmul.mubr.bf16.gmra.mrb[0].mxu0 %v477
      %v4492 = vpop.f32.mrb[0].mxu0
      %v4493 = vadd.f32 %v4397, %v4492
      %v4494 = vpop.f32.mrb[0].mxu0
      %v4495 = vpop.f32.mrb[0].mxu0
      %v4496 = vadd.f32 %v4397, %v4495
      %v4497 = vpop.f32.mrb[0].mxu0
      %4498 = vmatprep.mubr.bf16.mxu0 0
      %4499 = vmatmul.mubr.bf16.gmra.mrb[0].mxu0 %v480
      %v4500 = vpop.f32.mrb[0].mxu0
      %v4501 = vadd.f32 %v4397, %v4500
      %v4502 = vpop.f32.mrb[0].mxu0
      %v4503 = vpop.f32.mrb[0].mxu0
      %v4504 = vadd.f32 %v4397, %v4503
      %v4505 = vpop.f32.mrb[0].mxu0
      %4506 = vmatprep.mubr.bf16.mxu0 0
      %4507 = vmatmul.mubr.bf16.gmra.mrb[0].mxu0 %v483
      %v4508 = vpop.f32.mrb[0].mxu0
      %v4509 = vadd.f32 %v4397, %v4508
      %v4510 = vpop.f32.mrb[0].mxu0
      %v4511 = vpop.f32.mrb[0].mxu0
      %v4512 = vadd.f32 %v4397, %v4511
      %v4513 = vpop.f32.mrb[0].mxu0
      %4514 = vmatprep.mubr.bf16.mxu0 0
      %4515 = vmatmul.mubr.bf16.gmra.mrb[0].mxu0 %v486
      %v4516 = vpop.f32.mrb[0].mxu0
      %v4517 = vadd.f32 %v4397, %v4516
      %v4518 = vpop.f32.mrb[0].mxu0
      %v4519 = vpop.f32.mrb[0].mxu0
      %v4520 = vadd.f32 %v4397, %v4519
      %v4521 = vpop.f32.mrb[0].mxu0
      %4522 = vmatprep.mubr.bf16.mxu0 0
      %4523 = vmatmul.mubr.bf16.gmra.mrb[0].mxu0 %v489
      %v4524 = vpop.f32.mrb[0].mxu0
      %v4525 = vadd.f32 %v4397, %v4524
      %v4526 = vpop.f32.mrb[0].mxu0
      %v4527 = vpop.f32.mrb[0].mxu0
      %v4528 = vadd.f32 %v4397, %v4527
      %v4529 = vpop.f32.mrb[0].mxu0
      %4530 = vmatprep.mubr.bf16.mxu0 0
      %4531 = vmatmul.mubr.bf16.gmra.mrb[0].mxu0 %v492
      %v4532 = vpop.f32.mrb[0].mxu0
      %v4533 = vadd.f32 %v4397, %v4532
      %v4534 = vpop.f32.mrb[0].mxu0
      %v4535 = vpop.f32.mrb[0].mxu0
      %v4536 = vadd.f32 %v4397, %v4535
      %v4537 = vpop.f32.mrb[0].mxu0
      %4538 = vmatprep.mubr.bf16.mxu0 0
      %4539 = vmatmul.mubr.bf16.gmra.mrb[0].mxu0 %v495
      %v4540 = vpop.f32.mrb[0].mxu0
      %v4541 = vadd.f32 %v4397, %v4540
      %v4542 = vpop.f32.mrb[0].mxu0
      %v4543 = vpop.f32.mrb[0].mxu0
      %v4544 = vadd.f32 %v4397, %v4543
      %v4545 = vpop.f32.mrb[0].mxu0
      %4546 = vmatprep.mubr.bf16.mxu0 0
      %4547 = vmatmul.mubr.bf16.gmra.mrb[0].mxu0 %v498
      %v4548 = vpop.f32.mrb[0].mxu0
      %v4549 = vadd.f32 %v4397, %v4548
      %v4550 = vpop.f32.mrb[0].mxu0
      %v4551 = vpop.f32.mrb[0].mxu0
      %v4552 = vadd.f32 %v4397, %v4551
      %v4553 = vpop.f32.mrb[0].mxu0
      %4554 = vmatprep.mubr.bf16.mxu0 0
      %4555 = vmatmul.mubr.bf16.gmra.mrb[0].mxu0 %v501
      %v4556 = vpop.f32.mrb[0].mxu0
      %v4557 = vadd.f32 %v4397, %v4556
      %v4558 = vpop.f32.mrb[0].mxu0
      %v4559 = vpop.f32.mrb[0].mxu0
      %v4560 = vadd.f32 %v4397, %v4559
      %v4561 = vpop.f32.mrb[0].mxu0
      %4562 = vdwg.mxu0
      %v4563 = vadd.f32 %v4265, %v4437
      %v4564 = vadd.f32 %v4268, %v4440
      %v4565 = vadd.f32 %v4273, %v4445
      %v4566 = vadd.f32 %v4276, %v4448
      %v4567 = vadd.f32 %v4281, %v4453
      %v4568 = vadd.f32 %v4284, %v4456
      %v4569 = vadd.f32 %v4289, %v4461
      %v4570 = vadd.f32 %v4292, %v4464
      %v4571 = vadd.f32 %v4297, %v4469
      %v4572 = vadd.f32 %v4300, %v4472
      %v4573 = vadd.f32 %v4305, %v4477
      %v4574 = vadd.f32 %v4308, %v4480
      %v4575 = vadd.f32 %v4313, %v4485
      %v4576 = vadd.f32 %v4316, %v4488
      %v4577 = vadd.f32 %v4321, %v4493
      %v4578 = vadd.f32 %v4324, %v4496
      %v4579 = vadd.f32 %v4329, %v4501
      %v4580 = vadd.f32 %v4332, %v4504
      %v4581 = vadd.f32 %v4337, %v4509
      %v4582 = vadd.f32 %v4340, %v4512
      %v4583 = vadd.f32 %v4345, %v4517
      %v4584 = vadd.f32 %v4348, %v4520
      %v4585 = vadd.f32 %v4353, %v4525
      %v4586 = vadd.f32 %v4356, %v4528
      %v4587 = vadd.f32 %v4361, %v4533
      %v4588 = vadd.f32 %v4364, %v4536
      %v4589 = vadd.f32 %v4369, %v4541
      %v4590 = vadd.f32 %v4372, %v4544
      %v4591 = vadd.f32 %v4377, %v4549
      %v4592 = vadd.f32 %v4380, %v4552
      %v4593 = vadd.f32 %v4385, %v4557
      %v4594 = vadd.f32 %v4388, %v4560
      %v4595 = vmax.f32 %v4563, 0.0
      %v4596 = vmax.f32 %v4564, 0.0
      %v4597 = vmax.f32 %v4565, 0.0
      %v4598 = vmax.f32 %v4566, 0.0
      %v4599 = vmax.f32 %v4567, 0.0
      %v4600 = vmax.f32 %v4568, 0.0
      %v4601 = vmax.f32 %v4569, 0.0
      %v4602 = vmax.f32 %v4570, 0.0
      %v4603 = vmax.f32 %v4571, 0.0
      %v4604 = vmax.f32 %v4572, 0.0
      %v4605 = vmax.f32 %v4573, 0.0
      %v4606 = vmax.f32 %v4574, 0.0
      %v4607 = vmax.f32 %v4575, 0.0
      %v4608 = vmax.f32 %v4576, 0.0
      %v4609 = vmax.f32 %v4577, 0.0
      %v4610 = vmax.f32 %v4578, 0.0
      %v4611 = vmax.f32 %v4579, 0.0
      %v4612 = vmax.f32 %v4580, 0.0
      %v4613 = vmax.f32 %v4581, 0.0
      %v4614 = vmax.f32 %v4582, 0.0
      %v4615 = vmax.f32 %v4583, 0.0
      %v4616 = vmax.f32 %v4584, 0.0
      %v4617 = vmax.f32 %v4585, 0.0
      %v4618 = vmax.f32 %v4586, 0.0
      %v4619 = vmax.f32 %v4587, 0.0
      %v4620 = vmax.f32 %v4588, 0.0
      %v4621 = vmax.f32 %v4589, 0.0
      %v4622 = vmax.f32 %v4590, 0.0
      %v4623 = vmax.f32 %v4591, 0.0
      %v4624 = vmax.f32 %v4592, 0.0
      %v4625 = vmax.f32 %v4593, 0.0
      %v4626 = vmax.f32 %v4594, 0.0
      %v4627 = vpack.c.bf16 %v4596, %v4595
      %v4628 = vpack.c.bf16 %v4598, %v4597
      %v4629 = vpack.c.bf16 %v4600, %v4599
      %v4630 = vpack.c.bf16 %v4602, %v4601
      %v4631 = vpack.c.bf16 %v4604, %v4603
      %v4632 = vpack.c.bf16 %v4606, %v4605
      %v4633 = vpack.c.bf16 %v4608, %v4607
      %v4634 = vpack.c.bf16 %v4610, %v4609
      %v4635 = vpack.c.bf16 %v4612, %v4611
      %v4636 = vpack.c.bf16 %v4614, %v4613
      %v4637 = vpack.c.bf16 %v4616, %v4615
      %v4638 = vpack.c.bf16 %v4618, %v4617
      %v4639 = vpack.c.bf16 %v4620, %v4619
      %v4640 = vpack.c.bf16 %v4622, %v4621
      %v4641 = vpack.c.bf16 %v4624, %v4623
      %v4642 = vpack.c.bf16 %v4626, %v4625
      %v4659 = vunpack.c.l.b16 %v4627
      %v4660 = vunpack.c.h.b16 %v4627
      %v4661 = vunpack.c.l.b16 %v4628
      %v4662 = vunpack.c.h.b16 %v4628
      %v4663 = vunpack.c.l.b16 %v4629
      %v4664 = vunpack.c.h.b16 %v4629
      %v4665 = vunpack.c.l.b16 %v4630
      %v4666 = vunpack.c.h.b16 %v4630
      %v4667 = vunpack.c.l.b16 %v4631
      %v4668 = vunpack.c.h.b16 %v4631
      %v4669 = vunpack.c.l.b16 %v4632
      %v4670 = vunpack.c.h.b16 %v4632
      %v4671 = vunpack.c.l.b16 %v4633
      %v4672 = vunpack.c.h.b16 %v4633
      %v4673 = vunpack.c.l.b16 %v4634
      %v4674 = vunpack.c.h.b16 %v4634
      %v4675 = vunpack.c.l.b16 %v4635
      %v4676 = vunpack.c.h.b16 %v4635
      %v4677 = vunpack.c.l.b16 %v4636
      %v4678 = vunpack.c.h.b16 %v4636
      %v4679 = vunpack.c.l.b16 %v4637
      %v4680 = vunpack.c.h.b16 %v4637
      %v4681 = vunpack.c.l.b16 %v4638
      %v4682 = vunpack.c.h.b16 %v4638
      %v4683 = vunpack.c.l.b16 %v4639
      %v4684 = vunpack.c.h.b16 %v4639
      %v4685 = vunpack.c.l.b16 %v4640
      %v4686 = vunpack.c.h.b16 %v4640
      %v4687 = vunpack.c.l.b16 %v4641
      %v4688 = vunpack.c.h.b16 %v4641
      %v4689 = vunpack.c.l.b16 %v4642
      %v4690 = vunpack.c.h.b16 %v4642
      %v4691 = vpack.c.b16 %v4659, %v4659
      %v4692 = vpack.c.b16 %v4660, %v4660
      %v4693 = vpack.c.b16 %v4661, %v4661
      %v4694 = vpack.c.b16 %v4662, %v4662
      %v4695 = vpack.c.b16 %v4663, %v4663
      %v4696 = vpack.c.b16 %v4664, %v4664
      %v4697 = vpack.c.b16 %v4665, %v4665
      %v4698 = vpack.c.b16 %v4666, %v4666
      %v4699 = vpack.c.b16 %v4667, %v4667
      %v4700 = vpack.c.b16 %v4668, %v4668
      %v4701 = vpack.c.b16 %v4669, %v4669
      %v4702 = vpack.c.b16 %v4670, %v4670
      %v4703 = vpack.c.b16 %v4671, %v4671
      %v4704 = vpack.c.b16 %v4672, %v4672
      %v4705 = vpack.c.b16 %v4673, %v4673
      %v4706 = vpack.c.b16 %v4674, %v4674
      %v4707 = vpack.c.b16 %v4675, %v4675
      %v4708 = vpack.c.b16 %v4676, %v4676
      %v4709 = vpack.c.b16 %v4677, %v4677
      %v4710 = vpack.c.b16 %v4678, %v4678
      %v4711 = vpack.c.b16 %v4679, %v4679
      %v4712 = vpack.c.b16 %v4680, %v4680
      %v4713 = vpack.c.b16 %v4681, %v4681
      %v4714 = vpack.c.b16 %v4682, %v4682
      %v4715 = vpack.c.b16 %v4683, %v4683
      %v4716 = vpack.c.b16 %v4684, %v4684
      %v4717 = vpack.c.b16 %v4685, %v4685
      %v4718 = vpack.c.b16 %v4686, %v4686
      %v4719 = vpack.c.b16 %v4687, %v4687
      %v4720 = vpack.c.b16 %v4688, %v4688
      %v4721 = vpack.c.b16 %v4689, %v4689
      %v4722 = vpack.c.b16 %v4690, %v4690
      %vm4755 = vcmask 125952
      %4756 = vst.msk [vmem:[%s332] sm:$0xf] %vm4755, %v4691
      %4757 = vst.msk [vmem:[%s332 + $0x4] sm:$0xf] %vm4755, %v4692
      %4758 = vst.msk [vmem:[%s332 + $0x8] sm:$0xf] %vm4755, %v4693
      %4759 = vst.msk [vmem:[%s332 + $0xc] sm:$0xf] %vm4755, %v4694
      %4760 = vst.msk [vmem:[%s332 + $0x10] sm:$0xf] %vm4755, %v4695
      %4761 = vst.msk [vmem:[%s332 + $0x14] sm:$0xf] %vm4755, %v4696
      %4762 = vst.msk [vmem:[%s332 + $0x18] sm:$0xf] %vm4755, %v4697
      %4763 = vst.msk [vmem:[%s332 + $0x1c] sm:$0xf] %vm4755, %v4698
      %4764 = vst.msk [vmem:[%s332 + $0x20] sm:$0xf] %vm4755, %v4699
      %4765 = vst.msk [vmem:[%s332 + $0x24] sm:$0xf] %vm4755, %v4700
      %4766 = vst.msk [vmem:[%s332 + $0x28] sm:$0xf] %vm4755, %v4701
      %4767 = vst.msk [vmem:[%s332 + $0x2c] sm:$0xf] %vm4755, %v4702
      %4768 = vst.msk [vmem:[%s332 + $0x30] sm:$0xf] %vm4755, %v4703
      %4769 = vst.msk [vmem:[%s332 + $0x34] sm:$0xf] %vm4755, %v4704
      %4770 = vst.msk [vmem:[%s332 + $0x38] sm:$0xf] %vm4755, %v4705
      %4771 = vst.msk [vmem:[%s332 + $0x3c] sm:$0xf] %vm4755, %v4706
      %4772 = vst.msk [vmem:[%s332 + $0x40] sm:$0xf] %vm4755, %v4707
      %4773 = vst.msk [vmem:[%s332 + $0x44] sm:$0xf] %vm4755, %v4708
      %4774 = vst.msk [vmem:[%s332 + $0x48] sm:$0xf] %vm4755, %v4709
      %4775 = vst.msk [vmem:[%s332 + $0x4c] sm:$0xf] %vm4755, %v4710
      %4776 = vst.msk [vmem:[%s332 + $0x50] sm:$0xf] %vm4755, %v4711
      %4777 = vst.msk [vmem:[%s332 + $0x54] sm:$0xf] %vm4755, %v4712
      %4778 = vst.msk [vmem:[%s332 + $0x58] sm:$0xf] %vm4755, %v4713
      %4779 = vst.msk [vmem:[%s332 + $0x5c] sm:$0xf] %vm4755, %v4714
      %4780 = vst.msk [vmem:[%s332 + $0x60] sm:$0xf] %vm4755, %v4715
      %4781 = vst.msk [vmem:[%s332 + $0x64] sm:$0xf] %vm4755, %v4716
      %4782 = vst.msk [vmem:[%s332 + $0x68] sm:$0xf] %vm4755, %v4717
      %4783 = vst.msk [vmem:[%s332 + $0x6c] sm:$0xf] %vm4755, %v4718
      %4784 = vst.msk [vmem:[%s332 + $0x70] sm:$0xf] %vm4755, %v4719
      %4785 = vst.msk [vmem:[%s332 + $0x74] sm:$0xf] %vm4755, %v4720
      %4786 = vst.msk [vmem:[%s332 + $0x78] sm:$0xf] %vm4755, %v4721
      %4787 = vst.msk [vmem:[%s332 + $0x7c] sm:$0xf] %vm4755, %v4722
      %p4788 = scmp.lt.s32.totalorder %s20, 1
      %s4789 = scalar_select %p4788, %s20, 1
      %s4790 = smul.addr %s4789, 32
      %s4791 = smul.addr %s4790, 4
      %s4792 = scalar_lea.vmem %s9, %s4791
      // Predicated region
      $region57: #{tpu_custom_call.1} parent=55 // pred_check
        %p4793 = pneg %p232
      $region58: #{tpu_custom_call.1} parent=55 // pred_check_branch
        %4795 = sbr.rel (%p4793) target = $region60
      $region59: #{tpu_custom_call.1} parent=55 // pred_region
        _
      $region60: #{tpu_custom_call.1} parent=55 // pred_fallthru
        _
    $region56: #{tpu_custom_call.1} parent=5 // pred_fallthru
      _
    %p4796 = scmp.le.s32.totalorder 2, %s15
    // Predicated region
    $region61: #{tpu_custom_call.1} parent=5 // pred_check
      %p4797 = pneg %p4796
    $region62: #{tpu_custom_call.1} parent=5 // pred_check_branch
      %4799 = sbr.rel (%p4797) target = $region64
    $region63: #{tpu_custom_call.1} parent=5 // pred_region
      %s4800 = ssub.s32 %s15, 2
      // Predicated region
      $region65: #{tpu_custom_call.1} parent=63 // pred_check
        %p4801 = pneg %p238
      $region66: #{tpu_custom_call.1} parent=63 // pred_check_branch
        %4803 = sbr.rel (%p4801) target = $region68
      $region67: #{tpu_custom_call.1} parent=63 // pred_region
        %p4804 = scmp.lt.s32.totalorder %s21, 1
        %s4805 = scalar_select %p4804, %s21, 1
        %s4806 = smul.addr %s4805, 32
        %s4807 = smul.addr %s4806, 4
        %s4808 = scalar_lea.vmem %s9, %s4807
      $region68: #{tpu_custom_call.1} parent=63 // pred_fallthru
        _
    $region64: #{tpu_custom_call.1} parent=5 // pred_fallthru
      _
  $region6: #{tpu_custom_call.1} parent=0 // loop_footer
    %s19 = sadd.s32 1, %s15
  $region7: #{tpu_custom_call.1} parent=0 // loop_footer_branch
    %14 = sbr.rel target = $region3
  $region8: #{tpu_custom_call.1} parent=0 // loop_exit
    _

// kernel: tpu_custom_call.1
$region0: #{tpu_custom_call.1}
  #allocation0 [shape = 'u32[]', space=smem, size = 0x4, offset = 0x4, fixed_abs, tag = 'smem constant byte address 0x4 - core index']
  #allocation1 [shape = 'u32[144,128]{1,0:T(1,128)}', space=vmem, size = 0x12000, scoped, tag = 'internal scratch']
  #allocation2 [shape = 'bf16[18,40,4]{2,1,0:T(8,128)(2,1)}', space=vmem, size = 0x2d000, scoped, tag = 'scratch operand']
  %s0 = inlined_call_operand.vmem [shape: bf16[2,16,16,4], index: 0, kind: input, shape index: {}]
  %s1 = inlined_call_operand.vmem [shape: bf16[4,4], index: 1, kind: input, shape index: {}]
  %s2 = inlined_call_operand.vmem [shape: bf16[36,4], index: 2, kind: input, shape index: {}]
  %s3 = inlined_call_operand.vmem [shape: bf16[4,16], index: 3, kind: input, shape index: {}]
  %s4 = inlined_call_operand.vmem [shape: bf16[4,16], index: 4, kind: input, shape index: {}]
  %s5 = inlined_call_operand.vmem [shape: f32[1,4], index: 5, kind: input, shape index: {}]
  %s6 = inlined_call_operand.vmem [shape: f32[1,4], index: 6, kind: input, shape index: {}]
  %s7 = inlined_call_operand.vmem [shape: f32[1,16], index: 7, kind: input, shape index: {}]
  %s8 = inlined_call_operand.vmem [shape: f32[1,16], index: 8, kind: input, shape index: {}]
  %s9 = inlined_call_operand.vmem [shape: bf16[2,256,16], index: 9, kind: output, shape index: {}]
  %s10 = sld [smem:[#allocation0]]
  $region69: #{tpu_custom_call.1} parent=0
    _
  %s12 = ssub.s32 1, %s10
  %s13 = scalar_select 0, %s12, %s10
  loop: start=0, step=1, limit=4
  $region2: #{tpu_custom_call.1} parent=0 // loop_pre_header
    _
  $region3: #{tpu_custom_call.1} parent=0 // loop_header
    %s15 = sphi 0, %s19
    %p16 = scmp.ge.s32.totalorder %s15, 4
    %s25 = sphi 0, %s27
    %s28 = sphi 0, %s25
    %s29 = sphi 0, %s28
    %s45 = sphi 0, %s29
    %s49 = sphi 0, %s49
    %s51 = sphi 0, %s49
    %s52 = sphi 0, %s51
    %s66 = sphi 0, %s52
    %s70 = sphi 0, %s70
    %s72 = sphi 0, %s70
    %s73 = sphi 0, %s72
    %s87 = sphi 0, %s73
    %s91 = sphi 0, %s91
    %s93 = sphi 0, %s91
    %s94 = sphi 0, %s93
    %s108 = sphi 0, %s94
    %s112 = sphi 0, %s112
    %s114 = sphi 0, %s112
    %s115 = sphi 0, %s114
    %s129 = sphi 0, %s115
    %s133 = sphi 0, %s133
    %s135 = sphi 0, %s133
    %s136 = sphi 0, %s135
    %s150 = sphi 0, %s136
    %s154 = sphi 0, %s154
    %s156 = sphi 0, %s154
    %s157 = sphi 0, %s156
    %s171 = sphi 0, %s157
    %s175 = sphi 0, %s175
    %s177 = sphi 0, %s175
    %s178 = sphi 0, %s177
    %s192 = sphi 0, %s178
    %s196 = sphi 0, %s196
    %s198 = sphi 0, %s196
    %s199 = sphi 0, %s198
    %s213 = sphi 0, %s199
    %s219 = sphi 0, %s221
    %s222 = sphi 0, %s219
    %s223 = sphi 0, %s222
    %s239 = sphi 0, %s223
  $region4: #{tpu_custom_call.1} parent=0 // loop_header_branch
    %18 = sbr.rel (%p16) target = $region8
  $region5: #{tpu_custom_call.1} parent=0 // loop_body
    %s20 = ssub.s32 %s15, 1
    %s21 = ssub.s32 %s15, 2
    %s22 = sadd.s32 %s15, 1
    %s23 = ssub.s32 %s15, %s22
    %p24 = scmp.eq.s32.totalorder %s23, 0
    %s26 = sadd.s32 %s25, 1
    %s27 = scalar_select %p24, %s25, %s26
    %p30 = pneg %p24
    %p31 = scmp.eq.s32.totalorder %s15, 1
    %p32 = por %p30, %p31
    %p33 = scmp.ne.s32.totalorder %s25, %s28
    %p34 = scmp.eq.s32.totalorder %s15, 0
    %p35 = por %p33, %p34
    %p36 = scmp.ne.s32.totalorder %s25, %s28
    %p37 = scmp.eq.s32.totalorder %s20, 1
    %p38 = por %p36, %p37
    %p39 = scmp.ne.s32.totalorder %s28, %s29
    %p40 = scmp.eq.s32.totalorder %s20, 0
    %p41 = por %p39, %p40
    %p42 = scmp.ne.s32.totalorder %s28, %s29
    %p43 = scmp.eq.s32.totalorder %s21, 1
    %p44 = por %p42, %p43
    %p46 = scmp.ne.s32.totalorder %s29, %s45
    %p47 = scmp.eq.s32.totalorder %s21, 0
    %p48 = por %p46, %p47
    %s50 = sadd.s32 %s49, 1
    %p53 = scmp.eq.s32.totalorder %s15, 1
    %p54 = scmp.ne.s32.totalorder %s49, %s51
    %p55 = scmp.eq.s32.totalorder %s15, 0
    %p56 = por %p54, %p55
    %p57 = scmp.ne.s32.totalorder %s49, %s51
    %p58 = scmp.eq.s32.totalorder %s20, 1
    %p59 = por %p57, %p58
    %p60 = scmp.ne.s32.totalorder %s51, %s52
    %p61 = scmp.eq.s32.totalorder %s20, 0
    %p62 = por %p60, %p61
    %p63 = scmp.ne.s32.totalorder %s51, %s52
    %p64 = scmp.eq.s32.totalorder %s21, 1
    %p65 = por %p63, %p64
    %p67 = scmp.ne.s32.totalorder %s52, %s66
    %p68 = scmp.eq.s32.totalorder %s21, 0
    %p69 = por %p67, %p68
    %s71 = sadd.s32 %s70, 1
    %p74 = scmp.eq.s32.totalorder %s15, 1
    %p75 = scmp.ne.s32.totalorder %s70, %s72
    %p76 = scmp.eq.s32.totalorder %s15, 0
    %p77 = por %p75, %p76
    %p78 = scmp.ne.s32.totalorder %s70, %s72
    %p79 = scmp.eq.s32.totalorder %s20, 1
    %p80 = por %p78, %p79
    %p81 = scmp.ne.s32.totalorder %s72, %s73
    %p82 = scmp.eq.s32.totalorder %s20, 0
    %p83 = por %p81, %p82
    %p84 = scmp.ne.s32.totalorder %s72, %s73
    %p85 = scmp.eq.s32.totalorder %s21, 1
    %p86 = por %p84, %p85
    %p88 = scmp.ne.s32.totalorder %s73, %s87
    %p89 = scmp.eq.s32.totalorder %s21, 0
    %p90 = por %p88, %p89
    %s92 = sadd.s32 %s91, 1
    %p95 = scmp.eq.s32.totalorder %s15, 1
    %p96 = scmp.ne.s32.totalorder %s91, %s93
    %p97 = scmp.eq.s32.totalorder %s15, 0
    %p98 = por %p96, %p97
    %p99 = scmp.ne.s32.totalorder %s91, %s93
    %p100 = scmp.eq.s32.totalorder %s20, 1
    %p101 = por %p99, %p100
    %p102 = scmp.ne.s32.totalorder %s93, %s94
    %p103 = scmp.eq.s32.totalorder %s20, 0
    %p104 = por %p102, %p103
    %p105 = scmp.ne.s32.totalorder %s93, %s94
    %p106 = scmp.eq.s32.totalorder %s21, 1
    %p107 = por %p105, %p106
    %p109 = scmp.ne.s32.totalorder %s94, %s108
    %p110 = scmp.eq.s32.totalorder %s21, 0
    %p111 = por %p109, %p110
    %s113 = sadd.s32 %s112, 1
    %p116 = scmp.eq.s32.totalorder %s15, 1
    %p117 = scmp.ne.s32.totalorder %s112, %s114
    %p118 = scmp.eq.s32.totalorder %s15, 0
    %p119 = por %p117, %p118
    %p120 = scmp.ne.s32.totalorder %s112, %s114
    %p121 = scmp.eq.s32.totalorder %s20, 1
    %p122 = por %p120, %p121
    %p123 = scmp.ne.s32.totalorder %s114, %s115
    %p124 = scmp.eq.s32.totalorder %s20, 0
    %p125 = por %p123, %p124
    %p126 = scmp.ne.s32.totalorder %s114, %s115
    %p127 = scmp.eq.s32.totalorder %s21, 1
    %p128 = por %p126, %p127
    %p130 = scmp.ne.s32.totalorder %s115, %s129
    %p131 = scmp.eq.s32.totalorder %s21, 0
    %p132 = por %p130, %p131
    %s134 = sadd.s32 %s133, 1
    %p137 = scmp.eq.s32.totalorder %s15, 1
    %p138 = scmp.ne.s32.totalorder %s133, %s135
    %p139 = scmp.eq.s32.totalorder %s15, 0
    %p140 = por %p138, %p139
    %p141 = scmp.ne.s32.totalorder %s133, %s135
    %p142 = scmp.eq.s32.totalorder %s20, 1
    %p143 = por %p141, %p142
    %p144 = scmp.ne.s32.totalorder %s135, %s136
    %p145 = scmp.eq.s32.totalorder %s20, 0
    %p146 = por %p144, %p145
    %p147 = scmp.ne.s32.totalorder %s135, %s136
    %p148 = scmp.eq.s32.totalorder %s21, 1
    %p149 = por %p147, %p148
    %p151 = scmp.ne.s32.totalorder %s136, %s150
    %p152 = scmp.eq.s32.totalorder %s21, 0
    %p153 = por %p151, %p152
    %s155 = sadd.s32 %s154, 1
    %p158 = scmp.eq.s32.totalorder %s15, 1
    %p159 = scmp.ne.s32.totalorder %s154, %s156
    %p160 = scmp.eq.s32.totalorder %s15, 0
    %p161 = por %p159, %p160
    %p162 = scmp.ne.s32.totalorder %s154, %s156
    %p163 = scmp.eq.s32.totalorder %s20, 1
    %p164 = por %p162, %p163
    %p165 = scmp.ne.s32.totalorder %s156, %s157
    %p166 = scmp.eq.s32.totalorder %s20, 0
    %p167 = por %p165, %p166
    %p168 = scmp.ne.s32.totalorder %s156, %s157
    %p169 = scmp.eq.s32.totalorder %s21, 1
    %p170 = por %p168, %p169
    %p172 = scmp.ne.s32.totalorder %s157, %s171
    %p173 = scmp.eq.s32.totalorder %s21, 0
    %p174 = por %p172, %p173
    %s176 = sadd.s32 %s175, 1
    %p179 = scmp.eq.s32.totalorder %s15, 1
    %p180 = scmp.ne.s32.totalorder %s175, %s177
    %p181 = scmp.eq.s32.totalorder %s15, 0
    %p182 = por %p180, %p181
    %p183 = scmp.ne.s32.totalorder %s175, %s177
    %p184 = scmp.eq.s32.totalorder %s20, 1
    %p185 = por %p183, %p184
    %p186 = scmp.ne.s32.totalorder %s177, %s178
    %p187 = scmp.eq.s32.totalorder %s20, 0
    %p188 = por %p186, %p187
    %p189 = scmp.ne.s32.totalorder %s177, %s178
    %p190 = scmp.eq.s32.totalorder %s21, 1
    %p191 = por %p189, %p190
    %p193 = scmp.ne.s32.totalorder %s178, %s192
    %p194 = scmp.eq.s32.totalorder %s21, 0
    %p195 = por %p193, %p194
    %s197 = sadd.s32 %s196, 1
    %p200 = scmp.eq.s32.totalorder %s15, 1
    %p201 = scmp.ne.s32.totalorder %s196, %s198
    %p202 = scmp.eq.s32.totalorder %s15, 0
    %p203 = por %p201, %p202
    %p204 = scmp.ne.s32.totalorder %s196, %s198
    %p205 = scmp.eq.s32.totalorder %s20, 1
    %p206 = por %p204, %p205
    %p207 = scmp.ne.s32.totalorder %s198, %s199
    %p208 = scmp.eq.s32.totalorder %s20, 0
    %p209 = por %p207, %p208
    %p210 = scmp.ne.s32.totalorder %s198, %s199
    %p211 = scmp.eq.s32.totalorder %s21, 1
    %p212 = por %p210, %p211
    %p214 = scmp.ne.s32.totalorder %s199, %s213
    %p215 = scmp.eq.s32.totalorder %s21, 0
    %p216 = por %p214, %p215
    %s217 = ssub.s32 %s15, %s22
    %p218 = scmp.eq.s32.totalorder %s217, 0
    %s220 = sadd.s32 %s219, 1
    %s221 = scalar_select %p218, %s219, %s220
    %p224 = pneg %p218
    %p225 = scmp.eq.s32.totalorder %s15, 1
    %p226 = por %p224, %p225
    %p227 = scmp.ne.s32.totalorder %s219, %s222
    %p228 = scmp.eq.s32.totalorder %s15, 0
    %p229 = por %p227, %p228
    %p230 = scmp.ne.s32.totalorder %s219, %s222
    %p231 = scmp.eq.s32.totalorder %s20, 1
    %p232 = por %p230, %p231
    %p233 = scmp.ne.s32.totalorder %s222, %s223
    %p234 = scmp.eq.s32.totalorder %s20, 0
    %p235 = por %p233, %p234
    %p236 = scmp.ne.s32.totalorder %s222, %s223
    %p237 = scmp.eq.s32.totalorder %s21, 1
    %p238 = por %p236, %p237
    %p240 = scmp.ne.s32.totalorder %s223, %s239
    %p241 = scmp.eq.s32.totalorder %s21, 0
    %p242 = por %p240, %p241
    %p243 = scmp.le.s32.totalorder 1, %s15
    %p244 = scmp.lt.s32.totalorder %s15, 3
    %p245 = pnand %p243, %p244
    %p246 = pneg %p245
    // Predicated region
    $region9: #{tpu_custom_call.1} parent=5 // pred_check
      _
    $region10: #{tpu_custom_call.1} parent=5 // pred_check_branch
      %248 = sbr.rel (%p245) target = $region12
    $region11: #{tpu_custom_call.1} parent=5 // pred_region
      %s249 = ssub.s32 %s15, 1
      // Predicated region
      $region13: #{tpu_custom_call.1} parent=11 // pred_check
        %p250 = pneg %p62
      $region14: #{tpu_custom_call.1} parent=11 // pred_check_branch
        %252 = sbr.rel (%p250) target = $region16
      $region15: #{tpu_custom_call.1} parent=11 // pred_region
        _
      $region16: #{tpu_custom_call.1} parent=11 // pred_fallthru
        _
      // Predicated region
      $region17: #{tpu_custom_call.1} parent=11 // pred_check
        %p253 = pneg %p83
      $region18: #{tpu_custom_call.1} parent=11 // pred_check_branch
        %255 = sbr.rel (%p253) target = $region20
      $region19: #{tpu_custom_call.1} parent=11 // pred_region
        _
      $region20: #{tpu_custom_call.1} parent=11 // pred_fallthru
        _
      // Predicated region
      $region21: #{tpu_custom_call.1} parent=11 // pred_check
        %p256 = pneg %p104
      $region22: #{tpu_custom_call.1} parent=11 // pred_check_branch
        %258 = sbr.rel (%p256) target = $region24
      $region23: #{tpu_custom_call.1} parent=11 // pred_region
        _
      $region24: #{tpu_custom_call.1} parent=11 // pred_fallthru
        _
      // Predicated region
      $region25: #{tpu_custom_call.1} parent=11 // pred_check
        %p259 = pneg %p125
      $region26: #{tpu_custom_call.1} parent=11 // pred_check_branch
        %261 = sbr.rel (%p259) target = $region28
      $region27: #{tpu_custom_call.1} parent=11 // pred_region
        _
      $region28: #{tpu_custom_call.1} parent=11 // pred_fallthru
        _
      // Predicated region
      $region29: #{tpu_custom_call.1} parent=11 // pred_check
        %p262 = pneg %p146
      $region30: #{tpu_custom_call.1} parent=11 // pred_check_branch
        %264 = sbr.rel (%p262) target = $region32
      $region31: #{tpu_custom_call.1} parent=11 // pred_region
        _
      $region32: #{tpu_custom_call.1} parent=11 // pred_fallthru
        _
      // Predicated region
      $region33: #{tpu_custom_call.1} parent=11 // pred_check
        %p265 = pneg %p167
      $region34: #{tpu_custom_call.1} parent=11 // pred_check_branch
        %267 = sbr.rel (%p265) target = $region36
      $region35: #{tpu_custom_call.1} parent=11 // pred_region
        _
      $region36: #{tpu_custom_call.1} parent=11 // pred_fallthru
        _
      // Predicated region
      $region37: #{tpu_custom_call.1} parent=11 // pred_check
        %p268 = pneg %p188
      $region38: #{tpu_custom_call.1} parent=11 // pred_check_branch
        %270 = sbr.rel (%p268) target = $region40
      $region39: #{tpu_custom_call.1} parent=11 // pred_region
        _
      $region40: #{tpu_custom_call.1} parent=11 // pred_fallthru
        _
      // Predicated region
      $region41: #{tpu_custom_call.1} parent=11 // pred_check
        %p271 = pneg %p209
      $region42: #{tpu_custom_call.1} parent=11 // pred_check_branch
        %273 = sbr.rel (%p271) target = $region44
      $region43: #{tpu_custom_call.1} parent=11 // pred_region
        _
      $region44: #{tpu_custom_call.1} parent=11 // pred_fallthru
        _
    $region12: #{tpu_custom_call.1} parent=5 // pred_fallthru
      _
    %p274 = scmp.lt.s32.totalorder %s15, 2
    // Predicated region
    $region45: #{tpu_custom_call.1} parent=5 // pred_check
      %p275 = pneg %p274
    $region46: #{tpu_custom_call.1} parent=5 // pred_check_branch
      %277 = sbr.rel (%p275) target = $region48
    $region47: #{tpu_custom_call.1} parent=5 // pred_region
      // Predicated region
      $region49: #{tpu_custom_call.1} parent=47 // pred_check
        %p278 = pneg %p35
      $region50: #{tpu_custom_call.1} parent=47 // pred_check_branch
        %280 = sbr.rel (%p278) target = $region52
      $region51: #{tpu_custom_call.1} parent=47 // pred_region
        %p281 = scmp.lt.s32.totalorder %s15, 1
        %s282 = scalar_select %p281, %s15, 1
        %s283 = smul.addr %s282, 32
        %s284 = smul.addr %s283, 4
        %s285 = scalar_lea.vmem %s0, %s284
      $region52: #{tpu_custom_call.1} parent=47 // pred_fallthru
        _
    $region48: #{tpu_custom_call.1} parent=5 // pred_fallthru
      _
    %p286 = scmp.le.s32.totalorder 1, %s15
    %p287 = scmp.lt.s32.totalorder %s15, 3
    %p288 = pnand %p286, %p287
    %p289 = pneg %p288
    // Predicated region
    $region53: #{tpu_custom_call.1} parent=5 // pred_check
      _
    $region54: #{tpu_custom_call.1} parent=5 // pred_check_branch
      %291 = sbr.rel (%p288) target = $region56
    $region55: #{tpu_custom_call.1} parent=5 // pred_region
      %s292 = ssub.s32 %s15, 1
      %p293 = scmp.lt.s32.totalorder %s20, 1
      %s294 = scalar_select %p293, %s20, 1
      %s295 = smul.addr %s294, 32
      %s296 = smul.addr %s295, 4
      %s297 = scalar_lea.vmem %s0, %s296
      %p298 = pneg %p41
      %p299 = pneg %p38
      %p300 = pneg %p62
      %p301 = pneg %p59
      %p302 = pneg %p83
      %p303 = pneg %p80
      %p304 = pneg %p104
      %p305 = pneg %p101
      %p306 = pneg %p125
      %p307 = pneg %p122
      %p308 = pneg %p146
      %p309 = pneg %p143
      %p310 = pneg %p167
      %p311 = pneg %p164
      %p312 = pneg %p188
      %p313 = pneg %p185
      %p314 = pneg %p209
      %p315 = pneg %p206
      %p316 = pneg %p235
      %p317 = pneg %p232
      %p318 = scmp.lt.s32.totalorder %s20, 1
      %s319 = scalar_select %p318, %s20, 1
      %s320 = smul.addr %s319, 32
      %s321 = smul.addr %s320, 4
      %s322 = scalar_lea.vmem %s9, %s321
      %p323 = scmp.lt.s32.totalorder %s20, 1
      %s324 = scalar_select %p323, %s20, 1
      %s325 = smul.addr %s324, 32
      %s326 = smul.addr %s325, 4
      %s327 = scalar_lea.vmem %s0, %s326
      %p328 = scmp.lt.s32.totalorder %s20, 1
      %s329 = scalar_select %p328, %s20, 1
      %s330 = smul.addr %s329, 32
      %s331 = smul.addr %s330, 4
      %s332 = scalar_lea.vmem %s9, %s331
      %v334 = vld [vmem:[%s327] sm:$0xf]
      %v335 = vld [vmem:[%s327 + $0x4] sm:$0xf]
      %v336 = vld [vmem:[%s327 + $0x8] sm:$0xf]
      %v337 = vld [vmem:[%s327 + $0xc] sm:$0xf]
      %v338 = vld [vmem:[%s327 + $0x10] sm:$0xf]
      %v339 = vld [vmem:[%s327 + $0x14] sm:$0xf]
      %v340 = vld [vmem:[%s327 + $0x18] sm:$0xf]
      %v341 = vld [vmem:[%s327 + $0x1c] sm:$0xf]
      %v342 = vld [vmem:[%s327 + $0x20] sm:$0xf]
      %v343 = vld [vmem:[%s327 + $0x24] sm:$0xf]
      %v344 = vld [vmem:[%s327 + $0x28] sm:$0xf]
      %v345 = vld [vmem:[%s327 + $0x2c] sm:$0xf]
      %v346 = vld [vmem:[%s327 + $0x30] sm:$0xf]
      %v347 = vld [vmem:[%s327 + $0x34] sm:$0xf]
      %v348 = vld [vmem:[%s327 + $0x38] sm:$0xf]
      %v349 = vld [vmem:[%s327 + $0x3c] sm:$0xf]
      %v350 = vld [vmem:[%s327 + $0x40] sm:$0xf]
      %v351 = vld [vmem:[%s327 + $0x44] sm:$0xf]
      %v352 = vld [vmem:[%s327 + $0x48] sm:$0xf]
      %v353 = vld [vmem:[%s327 + $0x4c] sm:$0xf]
      %v354 = vld [vmem:[%s327 + $0x50] sm:$0xf]
      %v355 = vld [vmem:[%s327 + $0x54] sm:$0xf]
      %v356 = vld [vmem:[%s327 + $0x58] sm:$0xf]
      %v357 = vld [vmem:[%s327 + $0x5c] sm:$0xf]
      %v358 = vld [vmem:[%s327 + $0x60] sm:$0xf]
      %v359 = vld [vmem:[%s327 + $0x64] sm:$0xf]
      %v360 = vld [vmem:[%s327 + $0x68] sm:$0xf]
      %v361 = vld [vmem:[%s327 + $0x6c] sm:$0xf]
      %v362 = vld [vmem:[%s327 + $0x70] sm:$0xf]
      %v363 = vld [vmem:[%s327 + $0x74] sm:$0xf]
      %v364 = vld [vmem:[%s327 + $0x78] sm:$0xf]
      %v365 = vld [vmem:[%s327 + $0x7c] sm:$0xf]
      %v366 = vld [vmem:[%s1] sm:$0x3]
      %v367 = vld [vmem:[%s5] sm:$0x1]
      %v369 = vlaneseq
      %v370 = vshrl.u32 %v369, 7
      %v371 = vsub.s32 0, %v370
      %v372 = vrot.slane %v367, %v371
      %v406 = vunpack.c.l.b16 %v334
      %v407 = vunpack.c.l.b16 %v335
      %v408 = vunpack.c.l.b16 %v336
      %v409 = vunpack.c.l.b16 %v337
      %v410 = vunpack.c.l.b16 %v338
      %v411 = vunpack.c.l.b16 %v339
      %v412 = vunpack.c.l.b16 %v340
      %v413 = vunpack.c.l.b16 %v341
      %v414 = vunpack.c.l.b16 %v342
      %v415 = vunpack.c.l.b16 %v343
      %v416 = vunpack.c.l.b16 %v344
      %v417 = vunpack.c.l.b16 %v345
      %v418 = vunpack.c.l.b16 %v346
      %v419 = vunpack.c.l.b16 %v347
      %v420 = vunpack.c.l.b16 %v348
      %v421 = vunpack.c.l.b16 %v349
      %v422 = vunpack.c.l.b16 %v350
      %v423 = vunpack.c.l.b16 %v351
      %v424 = vunpack.c.l.b16 %v352
      %v425 = vunpack.c.l.b16 %v353
      %v426 = vunpack.c.l.b16 %v354
      %v427 = vunpack.c.l.b16 %v355
      %v428 = vunpack.c.l.b16 %v356
      %v429 = vunpack.c.l.b16 %v357
      %v430 = vunpack.c.l.b16 %v358
      %v431 = vunpack.c.l.b16 %v359
      %v432 = vunpack.c.l.b16 %v360
      %v433 = vunpack.c.l.b16 %v361
      %v434 = vunpack.c.l.b16 %v362
      %v435 = vunpack.c.l.b16 %v363
      %v436 = vunpack.c.l.b16 %v364
      %v437 = vunpack.c.l.b16 %v365
      %v438 = vpack.c.b16 %v407, %v406
      %v439 = vpack.c.b16 %v409, %v408
      %v440 = vpack.c.b16 %v411, %v410
      %v441 = vpack.c.b16 %v413, %v412
      %v442 = vpack.c.b16 %v415, %v414
      %v443 = vpack.c.b16 %v417, %v416
      %v444 = vpack.c.b16 %v419, %v418
      %v445 = vpack.c.b16 %v421, %v420
      %v446 = vpack.c.b16 %v423, %v422
      %v447 = vpack.c.b16 %v425, %v424
      %v448 = vpack.c.b16 %v427, %v426
      %v449 = vpack.c.b16 %v429, %v428
      %v450 = vpack.c.b16 %v431, %v430
      %v451 = vpack.c.b16 %v433, %v432
      %v452 = vpack.c.b16 %v435, %v434
      %v453 = vpack.c.b16 %v437, %v436
      %vm454 = vcmask 31744
      %v456 = vsel %vm454, %v438, 0
      %v459 = vsel %vm454, %v439, 0
      %v462 = vsel %vm454, %v440, 0
      %v465 = vsel %vm454, %v441, 0
      %v468 = vsel %vm454, %v442, 0
      %v471 = vsel %vm454, %v443, 0
      %v474 = vsel %vm454, %v444, 0
      %v477 = vsel %vm454, %v445, 0
      %v480 = vsel %vm454, %v446, 0
      %v483 = vsel %vm454, %v447, 0
      %v486 = vsel %vm454, %v448, 0
      %v489 = vsel %vm454, %v449, 0
      %v492 = vsel %vm454, %v450, 0
      %v495 = vsel %vm454, %v451, 0
      %v498 = vsel %vm454, %v452, 0
      %v501 = vsel %vm454, %v453, 0
      %vm503 = vcmask 1041408
      %v505 = vsel %vm503, %v366, 0
      %507 = vmatprep.subr.bf16.mxu0 0
      %508 = vmatpush1.bf16.msra.mxu0 %v505
      %509 = vmatprep.subr.bf16.mxu0 0
      %510 = vmatpush1.bf16.msra.mxu0 0
      %511 = vmatprep.subr.bf16.mxu0 0
      %512 = vmatpush1.bf16.msra.mxu0 0
      %513 = vmatprep.subr.bf16.mxu0 0
      %514 = vmatpush1.bf16.msra.mxu0 0
      %515 = vmatprep.subr.bf16.mxu0 0
      %516 = vmatpush1.bf16.msra.mxu0 0
      %517 = vmatprep.subr.bf16.mxu0 0
      %518 = vmatpush1.bf16.msra.mxu0 0
      %519 = vmatprep.subr.bf16.mxu0 0
      %520 = vmatpush1.bf16.msra.mxu0 0
      %521 = vmatprep.subr.bf16.mxu0 0
      %522 = vmatpush1.bf16.msra.mxu0 0
      %523 = vmatprep.subr.bf16.mxu0 0
      %524 = vmatpush1.bf16.msra.mxu0 0
      %525 = vmatprep.subr.bf16.mxu0 0
      %526 = vmatpush1.bf16.msra.mxu0 0
      %527 = vmatprep.subr.bf16.mxu0 0
      %528 = vmatpush1.bf16.msra.mxu0 0
      %529 = vmatprep.subr.bf16.mxu0 0
      %530 = vmatpush1.bf16.msra.mxu0 0
      %531 = vmatprep.subr.bf16.mxu0 0
      %532 = vmatpush1.bf16.msra.mxu0 0
      %533 = vmatprep.subr.bf16.mxu0 0
      %534 = vmatpush1.bf16.msra.mxu0 0
      %535 = vmatprep.subr.bf16.mxu0 0
      %536 = vmatpush1.bf16.msra.mxu0 0
      %537 = vmatprep.subr.bf16.mxu0 0
      %538 = vmatpush1.bf16.msra.mxu0 0
      %539 = vmatprep.mubr.bf16.mxu0 0
      %540 = vmatmul.mubr.bf16.gmra.mrb[0].mxu0 %v456
      %v541 = vpop.f32.mrb[0].mxu0
      %v542 = vadd.f32 %v372, %v541
      %v543 = vpop.f32.mrb[0].mxu0
      %v544 = vpop.f32.mrb[0].mxu0
      %v545 = vadd.f32 %v372, %v544
      %v546 = vpop.f32.mrb[0].mxu0
      %547 = vmatprep.mubr.bf16.mxu0 0
      %548 = vmatmul.mubr.bf16.gmra.mrb[0].mxu0 %v459
      %v549 = vpop.f32.mrb[0].mxu0
      %v550 = vadd.f32 %v372, %v549
      %v551 = vpop.f32.mrb[0].mxu0
      %v552 = vpop.f32.mrb[0].mxu0
      %v553 = vadd.f32 %v372, %v552
      %v554 = vpop.f32.mrb[0].mxu0
      %555 = vmatprep.mubr.bf16.mxu0 0
      %556 = vmatmul.mubr.bf16.gmra.mrb[0].mxu0 %v462
      %v557 = vpop.f32.mrb[0].mxu0
      %v558 = vadd.f32 %v372, %v557
      %v559 = vpop.f32.mrb[0].mxu0
      %v560 = vpop.f32.mrb[0].mxu0
      %v561 = vadd.f32 %v372, %v560
      %v562 = vpop.f32.mrb[0].mxu0
      %563 = vmatprep.mubr.bf16.mxu0 0
      %564 = vmatmul.mubr.bf16.gmra.mrb[0].mxu0 %v465
      %v565 = vpop.f32.mrb[0].mxu0
      %v566 = vadd.f32 %v372, %v565
      %v567 = vpop.f32.mrb[0].mxu0
      %v568 = vpop.f32.mrb[0].mxu0
      %v569 = vadd.f32 %v372, %v568
      %v570 = vpop.f32.mrb[0].mxu0
      %571 = vmatprep.mubr.bf16.mxu0 0
      %572 = vmatmul.mubr.bf16.gmra.mrb[0].mxu0 %v468
      %v573 = vpop.f32.mrb[0].mxu0
      %v574 = vadd.f32 %v372, %v573
      %v575 = vpop.f32.mrb[0].mxu0
      %v576 = vpop.f32.mrb[0].mxu0
      %v577 = vadd.f32 %v372, %v576
      %v578 = vpop.f32.mrb[0].mxu0
      %579 = vmatprep.mubr.bf16.mxu0 0
      %580 = vmatmul.mubr.bf16.gmra.mrb[0].mxu0 %v471
      %v581 = vpop.f32.mrb[0].mxu0
      %v582 = vadd.f32 %v372, %v581
      %v583 = vpop.f32.mrb[0].mxu0
      %v584 = vpop.f32.mrb[0].mxu0
      %v585 = vadd.f32 %v372, %v584
      %v586 = vpop.f32.mrb[0].mxu0
      %587 = vmatprep.mubr.bf16.mxu0 0
      %588 = vmatmul.mubr.bf16.gmra.mrb[0].mxu0 %v474
      %v589 = vpop.f32.mrb[0].mxu0
      %v590 = vadd.f32 %v372, %v589
      %v591 = vpop.f32.mrb[0].mxu0
      %v592 = vpop.f32.mrb[0].mxu0
      %v593 = vadd.f32 %v372, %v592
      %v594 = vpop.f32.mrb[0].mxu0
      %595 = vmatprep.mubr.bf16.mxu0 0
      %596 = vmatmul.mubr.bf16.gmra.mrb[0].mxu0 %v477
      %v597 = vpop.f32.mrb[0].mxu0
      %v598 = vadd.f32 %v372, %v597
      %v599 = vpop.f32.mrb[0].mxu0
      %v600 = vpop.f32.mrb[0].mxu0
      %v601 = vadd.f32 %v372, %v600
      %v602 = vpop.f32.mrb[0].mxu0
      %603 = vmatprep.mubr.bf16.mxu0 0
      %604 = vmatmul.mubr.bf16.gmra.mrb[0].mxu0 %v480
      %v605 = vpop.f32.mrb[0].mxu0
      %v606 = vadd.f32 %v372, %v605
      %v607 = vpop.f32.mrb[0].mxu0
      %v608 = vpop.f32.mrb[0].mxu0
      %v609 = vadd.f32 %v372, %v608
      %v610 = vpop.f32.mrb[0].mxu0
      %611 = vmatprep.mubr.bf16.mxu0 0
      %612 = vmatmul.mubr.bf16.gmra.mrb[0].mxu0 %v483
      %v613 = vpop.f32.mrb[0].mxu0
      %v614 = vadd.f32 %v372, %v613
      %v615 = vpop.f32.mrb[0].mxu0
      %v616 = vpop.f32.mrb[0].mxu0
      %v617 = vadd.f32 %v372, %v616
      %v618 = vpop.f32.mrb[0].mxu0
      %619 = vmatprep.mubr.bf16.mxu0 0
      %620 = vmatmul.mubr.bf16.gmra.mrb[0].mxu0 %v486
      %v621 = vpop.f32.mrb[0].mxu0
      %v622 = vadd.f32 %v372, %v621
      %v623 = vpop.f32.mrb[0].mxu0
      %v624 = vpop.f32.mrb[0].mxu0
      %v625 = vadd.f32 %v372, %v624
      %v626 = vpop.f32.mrb[0].mxu0
      %627 = vmatprep.mubr.bf16.mxu0 0
      %628 = vmatmul.mubr.bf16.gmra.mrb[0].mxu0 %v489
      %v629 = vpop.f32.mrb[0].mxu0
      %v630 = vadd.f32 %v372, %v629
      %v631 = vpop.f32.mrb[0].mxu0
      %v632 = vpop.f32.mrb[0].mxu0
      %v633 = vadd.f32 %v372, %v632
      %v634 = vpop.f32.mrb[0].mxu0
      %635 = vmatprep.mubr.bf16.mxu0 0
      %636 = vmatmul.mubr.bf16.gmra.mrb[0].mxu0 %v492
      %v637 = vpop.f32.mrb[0].mxu0
      %v638 = vadd.f32 %v372, %v637
      %v639 = vpop.f32.mrb[0].mxu0
      %v640 = vpop.f32.mrb[0].mxu0
      %v641 = vadd.f32 %v372, %v640
      %v642 = vpop.f32.mrb[0].mxu0
      %643 = vmatprep.mubr.bf16.mxu0 0
      %644 = vmatmul.mubr.bf16.gmra.mrb[0].mxu0 %v495
      %v645 = vpop.f32.mrb[0].mxu0
      %v646 = vadd.f32 %v372, %v645
      %v647 = vpop.f32.mrb[0].mxu0
      %v648 = vpop.f32.mrb[0].mxu0
      %v649 = vadd.f32 %v372, %v648
      %v650 = vpop.f32.mrb[0].mxu0
      %651 = vmatprep.mubr.bf16.mxu0 0
      %652 = vmatmul.mubr.bf16.gmra.mrb[0].mxu0 %v498
      %v653 = vpop.f32.mrb[0].mxu0
      %v654 = vadd.f32 %v372, %v653
      %v655 = vpop.f32.mrb[0].mxu0
      %v656 = vpop.f32.mrb[0].mxu0
      %v657 = vadd.f32 %v372, %v656
      %v658 = vpop.f32.mrb[0].mxu0
      %659 = vmatprep.mubr.bf16.mxu0 0
      %660 = vmatmul.mubr.bf16.gmra.mrb[0].mxu0 %v501
      %v661 = vpop.f32.mrb[0].mxu0
      %v662 = vadd.f32 %v372, %v661
      %v663 = vpop.f32.mrb[0].mxu0
      %v664 = vpop.f32.mrb[0].mxu0
      %v665 = vadd.f32 %v372, %v664
      %v666 = vpop.f32.mrb[0].mxu0
      %667 = vdwg.mxu0
      %v668 = vmax.f32 %v542, 0.0
      %v669 = vmax.f32 %v545, 0.0
      %v670 = vmax.f32 %v550, 0.0
      %v671 = vmax.f32 %v553, 0.0
      %v672 = vmax.f32 %v558, 0.0
      %v673 = vmax.f32 %v561, 0.0
      %v674 = vmax.f32 %v566, 0.0
      %v675 = vmax.f32 %v569, 0.0
      %v676 = vmax.f32 %v574, 0.0
      %v677 = vmax.f32 %v577, 0.0
      %v678 = vmax.f32 %v582, 0.0
      %v679 = vmax.f32 %v585, 0.0
      %v680 = vmax.f32 %v590, 0.0
      %v681 = vmax.f32 %v593, 0.0
      %v682 = vmax.f32 %v598, 0.0
      %v683 = vmax.f32 %v601, 0.0
      %v684 = vmax.f32 %v606, 0.0
      %v685 = vmax.f32 %v609, 0.0
      %v686 = vmax.f32 %v614, 0.0
      %v687 = vmax.f32 %v617, 0.0
      %v688 = vmax.f32 %v622, 0.0
      %v689 = vmax.f32 %v625, 0.0
      %v690 = vmax.f32 %v630, 0.0
      %v691 = vmax.f32 %v633, 0.0
      %v692 = vmax.f32 %v638, 0.0
      %v693 = vmax.f32 %v641, 0.0
      %v694 = vmax.f32 %v646, 0.0
      %v695 = vmax.f32 %v649, 0.0
      %v696 = vmax.f32 %v654, 0.0
      %v697 = vmax.f32 %v657, 0.0
      %v698 = vmax.f32 %v662, 0.0
      %v699 = vmax.f32 %v665, 0.0
      %v700 = vpack.c.bf16 %v669, %v668
      %v701 = vpack.c.bf16 %v671, %v670
      %v702 = vpack.c.bf16 %v673, %v672
      %v703 = vpack.c.bf16 %v675, %v674
      %v704 = vpack.c.bf16 %v677, %v676
      %v705 = vpack.c.bf16 %v679, %v678
      %v706 = vpack.c.bf16 %v681, %v680
      %v707 = vpack.c.bf16 %v683, %v682
      %v708 = vpack.c.bf16 %v685, %v684
      %v709 = vpack.c.bf16 %v687, %v686
      %v710 = vpack.c.bf16 %v689, %v688
      %v711 = vpack.c.bf16 %v691, %v690
      %v712 = vpack.c.bf16 %v693, %v692
      %v713 = vpack.c.bf16 %v695, %v694
      %v714 = vpack.c.bf16 %v697, %v696
      %v715 = vpack.c.bf16 %v699, %v698
      %v732 = vunpack.c.l.b16 %v700
      %v733 = vunpack.c.h.b16 %v700
      %v734 = vunpack.c.l.b16 %v701
      %v735 = vunpack.c.h.b16 %v701
      %v736 = vunpack.c.l.b16 %v702
      %v737 = vunpack.c.h.b16 %v702
      %v738 = vunpack.c.l.b16 %v703
      %v739 = vunpack.c.h.b16 %v703
      %v740 = vunpack.c.l.b16 %v704
      %v741 = vunpack.c.h.b16 %v704
      %v742 = vunpack.c.l.b16 %v705
      %v743 = vunpack.c.h.b16 %v705
      %v744 = vunpack.c.l.b16 %v706
      %v745 = vunpack.c.h.b16 %v706
      %v746 = vunpack.c.l.b16 %v707
      %v747 = vunpack.c.h.b16 %v707
      %v748 = vunpack.c.l.b16 %v708
      %v749 = vunpack.c.h.b16 %v708
      %v750 = vunpack.c.l.b16 %v709
      %v751 = vunpack.c.h.b16 %v709
      %v752 = vunpack.c.l.b16 %v710
      %v753 = vunpack.c.h.b16 %v710
      %v754 = vunpack.c.l.b16 %v711
      %v755 = vunpack.c.h.b16 %v711
      %v756 = vunpack.c.l.b16 %v712
      %v757 = vunpack.c.h.b16 %v712
      %v758 = vunpack.c.l.b16 %v713
      %v759 = vunpack.c.h.b16 %v713
      %v760 = vunpack.c.l.b16 %v714
      %v761 = vunpack.c.h.b16 %v714
      %v762 = vunpack.c.l.b16 %v715
      %v763 = vunpack.c.h.b16 %v715
      %v764 = vpack.c.b16 %v732, %v732
      %v765 = vpack.c.b16 %v733, %v733
      %v766 = vpack.c.b16 %v734, %v734
      %v767 = vpack.c.b16 %v735, %v735
      %v768 = vpack.c.b16 %v736, %v736
      %v769 = vpack.c.b16 %v737, %v737
      %v770 = vpack.c.b16 %v738, %v738
      %v771 = vpack.c.b16 %v739, %v739
      %v772 = vpack.c.b16 %v740, %v740
      %v773 = vpack.c.b16 %v741, %v741
      %v774 = vpack.c.b16 %v742, %v742
      %v775 = vpack.c.b16 %v743, %v743
      %v776 = vpack.c.b16 %v744, %v744
      %v777 = vpack.c.b16 %v745, %v745
      %v778 = vpack.c.b16 %v746, %v746
      %v779 = vpack.c.b16 %v747, %v747
      %v780 = vpack.c.b16 %v748, %v748
      %v781 = vpack.c.b16 %v749, %v749
      %v782 = vpack.c.b16 %v750, %v750
      %v783 = vpack.c.b16 %v751, %v751
      %v784 = vpack.c.b16 %v752, %v752
      %v785 = vpack.c.b16 %v753, %v753
      %v786 = vpack.c.b16 %v754, %v754
      %v787 = vpack.c.b16 %v755, %v755
      %v788 = vpack.c.b16 %v756, %v756
      %v789 = vpack.c.b16 %v757, %v757
      %v790 = vpack.c.b16 %v758, %v758
      %v791 = vpack.c.b16 %v759, %v759
      %v792 = vpack.c.b16 %v760, %v760
      %v793 = vpack.c.b16 %v761, %v761
      %v794 = vpack.c.b16 %v762, %v762
      %v795 = vpack.c.b16 %v763, %v763
      %s828 = scalar_lea.vmem [#allocation2], 20
      %vm829 = vcmask 27648
      %830 = vst.msk [vmem:[%s828 + $0x8] sm:$0xf] %vm829, %v764
      %831 = vst.msk [vmem:[%s828 + $0xc] sm:$0xf] %vm829, %v765
      %832 = vst.msk [vmem:[%s828 + $0x1c] sm:$0xf] %vm829, %v766
      %833 = vst.msk [vmem:[%s828 + $0x20] sm:$0xf] %vm829, %v767
      %834 = vst.msk [vmem:[%s828 + $0x30] sm:$0xf] %vm829, %v768
      %835 = vst.msk [vmem:[%s828 + $0x34] sm:$0xf] %vm829, %v769
      %836 = vst.msk [vmem:[%s828 + $0x44] sm:$0xf] %vm829, %v770
      %837 = vst.msk [vmem:[%s828 + $0x48] sm:$0xf] %vm829, %v771
      %838 = vst.msk [vmem:[%s828 + $0x58] sm:$0xf] %vm829, %v772
      %839 = vst.msk [vmem:[%s828 + $0x5c] sm:$0xf] %vm829, %v773
      %840 = vst.msk [vmem:[%s828 + $0x6c] sm:$0xf] %vm829, %v774
      %841 = vst.msk [vmem:[%s828 + $0x70] sm:$0xf] %vm829, %v775
      %842 = vst.msk [vmem:[%s828 + $0x80] sm:$0xf] %vm829, %v776
      %843 = vst.msk [vmem:[%s828 + $0x84] sm:$0xf] %vm829, %v777
      %844 = vst.msk [vmem:[%s828 + $0x94] sm:$0xf] %vm829, %v778
      %845 = vst.msk [vmem:[%s828 + $0x98] sm:$0xf] %vm829, %v779
      %846 = vst.msk [vmem:[%s828 + $0xa8] sm:$0xf] %vm829, %v780
      %847 = vst.msk [vmem:[%s828 + $0xac] sm:$0xf] %vm829, %v781
      %848 = vst.msk [vmem:[%s828 + $0xbc] sm:$0xf] %vm829, %v782
      %849 = vst.msk [vmem:[%s828 + $0xc0] sm:$0xf] %vm829, %v783
      %850 = vst.msk [vmem:[%s828 + $0xd0] sm:$0xf] %vm829, %v784
      %851 = vst.msk [vmem:[%s828 + $0xd4] sm:$0xf] %vm829, %v785
      %852 = vst.msk [vmem:[%s828 + $0xe4] sm:$0xf] %vm829, %v786
      %853 = vst.msk [vmem:[%s828 + $0xe8] sm:$0xf] %vm829, %v787
      %854 = vst.msk [vmem:[%s828 + $0xf8] sm:$0xf] %vm829, %v788
      %855 = vst.msk [vmem:[%s828 + $0xfc] sm:$0xf] %vm829, %v789
      %856 = vst.msk [vmem:[%s828 + $0x10c] sm:$0xf] %vm829, %v790
      %857 = vst.msk [vmem:[%s828 + $0x110] sm:$0xf] %vm829, %v791
      %858 = vst.msk [vmem:[%s828 + $0x120] sm:$0xf] %vm829, %v792
      %859 = vst.msk [vmem:[%s828 + $0x124] sm:$0xf] %vm829, %v793
      %860 = vst.msk [vmem:[%s828 + $0x134] sm:$0xf] %vm829, %v794
      %861 = vst.msk [vmem:[%s828 + $0x138] sm:$0xf] %vm829, %v795
      %862 = vst.msk [vmem:[#allocation2] sm:$0xf] %vm829, 0
      %863 = vst.msk [vmem:[#allocation2 + $0x4] sm:$0xf] %vm829, 0
      %864 = vst.msk [vmem:[#allocation2 + $0x8] sm:$0xf] %vm829, 0
      %865 = vst.msk [vmem:[#allocation2 + $0xc] sm:$0xf] %vm829, 0
      %866 = vst.msk [vmem:[#allocation2 + $0x10] sm:$0xf] %vm829, 0
      %s867 = scalar_lea.vmem [#allocation2], 340
      %868 = vst.msk [vmem:[%s867] sm:$0xf] %vm829, 0
      %869 = vst.msk [vmem:[%s867 + $0x4] sm:$0xf] %vm829, 0
      %870 = vst.msk [vmem:[%s867 + $0x8] sm:$0xf] %vm829, 0
      %871 = vst.msk [vmem:[%s867 + $0xc] sm:$0xf] %vm829, 0
      %872 = vst.msk [vmem:[%s867 + $0x10] sm:$0xf] %vm829, 0
      %873 = vst.msk [vmem:[#allocation2 + $0x4] sm:$0xf] %vm829, 0
      %874 = vst.msk [vmem:[#allocation2 + $0x18] sm:$0xf] %vm829, 0
      %875 = vst.msk [vmem:[#allocation2 + $0x2c] sm:$0xf] %vm829, 0
      %876 = vst.msk [vmem:[#allocation2 + $0x40] sm:$0xf] %vm829, 0
      %877 = vst.msk [vmem:[#allocation2 + $0x54] sm:$0xf] %vm829, 0
      %878 = vst.msk [vmem:[#allocation2 + $0x68] sm:$0xf] %vm829, 0
      %879 = vst.msk [vmem:[#allocation2 + $0x7c] sm:$0xf] %vm829, 0
      %880 = vst.msk [vmem:[#allocation2 + $0x90] sm:$0xf] %vm829, 0
      %881 = vst.msk [vmem:[#allocation2 + $0xa4] sm:$0xf] %vm829, 0
      %882 = vst.msk [vmem:[#allocation2 + $0xb8] sm:$0xf] %vm829, 0
      %883 = vst.msk [vmem:[#allocation2 + $0xcc] sm:$0xf] %vm829, 0
      %884 = vst.msk [vmem:[#allocation2 + $0xe0] sm:$0xf] %vm829, 0
      %885 = vst.msk [vmem:[#allocation2 + $0xf4] sm:$0xf] %vm829, 0
      %886 = vst.msk [vmem:[#allocation2 + $0x108] sm:$0xf] %vm829, 0
      %887 = vst.msk [vmem:[#allocation2 + $0x11c] sm:$0xf] %vm829, 0
      %888 = vst.msk [vmem:[#allocation2 + $0x130] sm:$0xf] %vm829, 0
      %889 = vst.msk [vmem:[#allocation2 + $0x144] sm:$0xf] %vm829, 0
      %890 = vst.msk [vmem:[#allocation2 + $0x158] sm:$0xf] %vm829, 0
      %891 = vst.msk [vmem:[#allocation2 + $0x10] sm:$0xf] %vm829, 0
      %892 = vst.msk [vmem:[#allocation2 + $0x24] sm:$0xf] %vm829, 0
      %893 = vst.msk [vmem:[#allocation2 + $0x38] sm:$0xf] %vm829, 0
      %894 = vst.msk [vmem:[#allocation2 + $0x4c] sm:$0xf] %vm829, 0
      %895 = vst.msk [vmem:[#allocation2 + $0x60] sm:$0xf] %vm829, 0
      %896 = vst.msk [vmem:[#allocation2 + $0x74] sm:$0xf] %vm829, 0
      %897 = vst.msk [vmem:[#allocation2 + $0x88] sm:$0xf] %vm829, 0
      %898 = vst.msk [vmem:[#allocation2 + $0x9c] sm:$0xf] %vm829, 0
      %899 = vst.msk [vmem:[#allocation2 + $0xb0] sm:$0xf] %vm829, 0
      %900 = vst.msk [vmem:[#allocation2 + $0xc4] sm:$0xf] %vm829, 0
      %901 = vst.msk [vmem:[#allocation2 + $0xd8] sm:$0xf] %vm829, 0
      %902 = vst.msk [vmem:[#allocation2 + $0xec] sm:$0xf] %vm829, 0
      %903 = vst.msk [vmem:[#allocation2 + $0x100] sm:$0xf] %vm829, 0
      %904 = vst.msk [vmem:[#allocation2 + $0x114] sm:$0xf] %vm829, 0
      %905 = vst.msk [vmem:[#allocation2 + $0x128] sm:$0xf] %vm829, 0
      %906 = vst.msk [vmem:[#allocation2 + $0x13c] sm:$0xf] %vm829, 0
      %907 = vst.msk [vmem:[#allocation2 + $0x150] sm:$0xf] %vm829, 0
      %908 = vst.msk [vmem:[#allocation2 + $0x164] sm:$0xf] %vm829, 0
      %v909 = vld [vmem:[#allocation2 + $0x4] sm:$0x8]
      %v910 = vld [vmem:[#allocation2 + $0x8] sm:$0xf]
      %v911 = vld [vmem:[#allocation2 + $0xc] sm:$0xf]
      %v912 = vld [vmem:[#allocation2 + $0x18] sm:$0x8]
      %v913 = vld [vmem:[#allocation2 + $0x1c] sm:$0xf]
      %v914 = vld [vmem:[#allocation2 + $0x20] sm:$0xf]
      %v915 = vld [vmem:[#allocation2 + $0x2c] sm:$0x8]
      %v916 = vld [vmem:[#allocation2 + $0x30] sm:$0xf]
      %v917 = vld [vmem:[#allocation2 + $0x34] sm:$0xf]
      %v918 = vld [vmem:[#allocation2 + $0x40] sm:$0x8]
      %v919 = vld [vmem:[#allocation2 + $0x44] sm:$0xf]
      %v920 = vld [vmem:[#allocation2 + $0x48] sm:$0xf]
      %v921 = vld [vmem:[#allocation2 + $0x54] sm:$0x8]
      %v922 = vld [vmem:[#allocation2 + $0x58] sm:$0xf]
      %v923 = vld [vmem:[#allocation2 + $0x5c] sm:$0xf]
      %v924 = vld [vmem:[#allocation2 + $0x68] sm:$0x8]
      %v925 = vld [vmem:[#allocation2 + $0x6c] sm:$0xf]
      %v926 = vld [vmem:[#allocation2 + $0x70] sm:$0xf]
      %v927 = vld [vmem:[#allocation2 + $0x7c] sm:$0x8]
      %v928 = vld [vmem:[#allocation2 + $0x80] sm:$0xf]
      %v929 = vld [vmem:[#allocation2 + $0x84] sm:$0xf]
      %v930 = vld [vmem:[#allocation2 + $0x90] sm:$0x8]
      %v931 = vld [vmem:[#allocation2 + $0x94] sm:$0xf]
      %v932 = vld [vmem:[#allocation2 + $0x98] sm:$0xf]
      %v933 = vld [vmem:[#allocation2 + $0xa4] sm:$0x8]
      %v934 = vld [vmem:[#allocation2 + $0xa8] sm:$0xf]
      %v935 = vld [vmem:[#allocation2 + $0xac] sm:$0xf]
      %v936 = vld [vmem:[#allocation2 + $0xb8] sm:$0x8]
      %v937 = vld [vmem:[#allocation2 + $0xbc] sm:$0xf]
      %v938 = vld [vmem:[#allocation2 + $0xc0] sm:$0xf]
      %v939 = vld [vmem:[#allocation2 + $0xcc] sm:$0x8]
      %v940 = vld [vmem:[#allocation2 + $0xd0] sm:$0xf]
      %v941 = vld [vmem:[#allocation2 + $0xd4] sm:$0xf]
      %v942 = vld [vmem:[#allocation2 + $0xe0] sm:$0x8]
      %v943 = vld [vmem:[#allocation2 + $0xe4] sm:$0xf]
      %v944 = vld [vmem:[#allocation2 + $0xe8] sm:$0xf]
      %v945 = vld [vmem:[#allocation2 + $0xf4] sm:$0x8]
      %v946 = vld [vmem:[#allocation2 + $0xf8] sm:$0xf]
      %v947 = vld [vmem:[#allocation2 + $0xfc] sm:$0xf]
      %v948 = vld [vmem:[#allocation2 + $0x108] sm:$0x8]
      %v949 = vld [vmem:[#allocation2 + $0x10c] sm:$0xf]
      %v950 = vld [vmem:[#allocation2 + $0x110] sm:$0xf]
      %v951 = vld [vmem:[#allocation2 + $0x11c] sm:$0x8]
      %v952 = vld [vmem:[#allocation2 + $0x120] sm:$0xf]
      %v953 = vld [vmem:[#allocation2 + $0x124] sm:$0xf]
      %v954 = vld [vmem:[#allocation2 + $0x130] sm:$0x8]
      %v955 = vld [vmem:[#allocation2 + $0x134] sm:$0xf]
      %v956 = vld [vmem:[#allocation2 + $0x138] sm:$0xf]
      %vm957 = vsmask.f32 256
      %vm958 = vsmask.f32 4368
      %vm959 = vmor %vm957, %vm958
      %v961 = vshrl.u32 %v909, 16
      %v963 = vrot.slane %v961, 7
      %v964 = vrot.slane %v963, 4
      %v966 = vshrl.u32 %v910, 16
      %v968 = vrot.slane %v966, 7
      %v969 = vshll.u32 %v910, 16
      %v971 = vor.u32 %v968, %v969
      %v972 = vsel %vm959, %v964, %v971
      %v973 = vrot.slane %v968, 4
      %v975 = vshrl.u32 %v911, 16
      %v977 = vrot.slane %v975, 7
      %v978 = vshll.u32 %v911, 16
      %v980 = vor.u32 %v977, %v978
      %v981 = vsel %vm959, %v973, %v980
      %v983 = vshrl.u32 %v912, 16
      %v985 = vrot.slane %v983, 7
      %v986 = vrot.slane %v985, 4
      %v988 = vshrl.u32 %v913, 16
      %v990 = vrot.slane %v988, 7
      %v991 = vshll.u32 %v913, 16
      %v993 = vor.u32 %v990, %v991
      %v994 = vsel %vm959, %v986, %v993
      %v995 = vrot.slane %v990, 4
      %v997 = vshrl.u32 %v914, 16
      %v999 = vrot.slane %v997, 7
      %v1000 = vshll.u32 %v914, 16
      %v1002 = vor.u32 %v999, %v1000
      %v1003 = vsel %vm959, %v995, %v1002
      %v1005 = vshrl.u32 %v915, 16
      %v1007 = vrot.slane %v1005, 7
      %v1008 = vrot.slane %v1007, 4
      %v1010 = vshrl.u32 %v916, 16
      %v1012 = vrot.slane %v1010, 7
      %v1013 = vshll.u32 %v916, 16
      %v1015 = vor.u32 %v1012, %v1013
      %v1016 = vsel %vm959, %v1008, %v1015
      %v1017 = vrot.slane %v1012, 4
      %v1019 = vshrl.u32 %v917, 16
      %v1021 = vrot.slane %v1019, 7
      %v1022 = vshll.u32 %v917, 16
      %v1024 = vor.u32 %v1021, %v1022
      %v1025 = vsel %vm959, %v1017, %v1024
      %v1027 = vshrl.u32 %v918, 16
      %v1029 = vrot.slane %v1027, 7
      %v1030 = vrot.slane %v1029, 4
      %v1032 = vshrl.u32 %v919, 16
      %v1034 = vrot.slane %v1032, 7
      %v1035 = vshll.u32 %v919, 16
      %v1037 = vor.u32 %v1034, %v1035
      %v1038 = vsel %vm959, %v1030, %v1037
      %v1039 = vrot.slane %v1034, 4
      %v1041 = vshrl.u32 %v920, 16
      %v1043 = vrot.slane %v1041, 7
      %v1044 = vshll.u32 %v920, 16
      %v1046 = vor.u32 %v1043, %v1044
      %v1047 = vsel %vm959, %v1039, %v1046
      %v1049 = vshrl.u32 %v921, 16
      %v1051 = vrot.slane %v1049, 7
      %v1052 = vrot.slane %v1051, 4
      %v1054 = vshrl.u32 %v922, 16
      %v1056 = vrot.slane %v1054, 7
      %v1057 = vshll.u32 %v922, 16
      %v1059 = vor.u32 %v1056, %v1057
      %v1060 = vsel %vm959, %v1052, %v1059
      %v1061 = vrot.slane %v1056, 4
      %v1063 = vshrl.u32 %v923, 16
      %v1065 = vrot.slane %v1063, 7
      %v1066 = vshll.u32 %v923, 16
      %v1068 = vor.u32 %v1065, %v1066
      %v1069 = vsel %vm959, %v1061, %v1068
      %v1071 = vshrl.u32 %v924, 16
      %v1073 = vrot.slane %v1071, 7
      %v1074 = vrot.slane %v1073, 4
      %v1076 = vshrl.u32 %v925, 16
      %v1078 = vrot.slane %v1076, 7
      %v1079 = vshll.u32 %v925, 16
      %v1081 = vor.u32 %v1078, %v1079
      %v1082 = vsel %vm959, %v1074, %v1081
      %v1083 = vrot.slane %v1078, 4
      %v1085 = vshrl.u32 %v926, 16
      %v1087 = vrot.slane %v1085, 7
      %v1088 = vshll.u32 %v926, 16
      %v1090 = vor.u32 %v1087, %v1088
      %v1091 = vsel %vm959, %v1083, %v1090
      %v1093 = vshrl.u32 %v927, 16
      %v1095 = vrot.slane %v1093, 7
      %v1096 = vrot.slane %v1095, 4
      %v1098 = vshrl.u32 %v928, 16
      %v1100 = vrot.slane %v1098, 7
      %v1101 = vshll.u32 %v928, 16
      %v1103 = vor.u32 %v1100, %v1101
      %v1104 = vsel %vm959, %v1096, %v1103
      %v1105 = vrot.slane %v1100, 4
      %v1107 = vshrl.u32 %v929, 16
      %v1109 = vrot.slane %v1107, 7
      %v1110 = vshll.u32 %v929, 16
      %v1112 = vor.u32 %v1109, %v1110
      %v1113 = vsel %vm959, %v1105, %v1112
      %v1115 = vshrl.u32 %v930, 16
      %v1117 = vrot.slane %v1115, 7
      %v1118 = vrot.slane %v1117, 4
      %v1120 = vshrl.u32 %v931, 16
      %v1122 = vrot.slane %v1120, 7
      %v1123 = vshll.u32 %v931, 16
      %v1125 = vor.u32 %v1122, %v1123
      %v1126 = vsel %vm959, %v1118, %v1125
      %v1127 = vrot.slane %v1122, 4
      %v1129 = vshrl.u32 %v932, 16
      %v1131 = vrot.slane %v1129, 7
      %v1132 = vshll.u32 %v932, 16
      %v1134 = vor.u32 %v1131, %v1132
      %v1135 = vsel %vm959, %v1127, %v1134
      %v1137 = vshrl.u32 %v933, 16
      %v1139 = vrot.slane %v1137, 7
      %v1140 = vrot.slane %v1139, 4
      %v1142 = vshrl.u32 %v934, 16
      %v1144 = vrot.slane %v1142, 7
      %v1145 = vshll.u32 %v934, 16
      %v1147 = vor.u32 %v1144, %v1145
      %v1148 = vsel %vm959, %v1140, %v1147
      %v1149 = vrot.slane %v1144, 4
      %v1151 = vshrl.u32 %v935, 16
      %v1153 = vrot.slane %v1151, 7
      %v1154 = vshll.u32 %v935, 16
      %v1156 = vor.u32 %v1153, %v1154
      %v1157 = vsel %vm959, %v1149, %v1156
      %v1159 = vshrl.u32 %v936, 16
      %v1161 = vrot.slane %v1159, 7
      %v1162 = vrot.slane %v1161, 4
      %v1164 = vshrl.u32 %v937, 16
      %v1166 = vrot.slane %v1164, 7
      %v1167 = vshll.u32 %v937, 16
      %v1169 = vor.u32 %v1166, %v1167
      %v1170 = vsel %vm959, %v1162, %v1169
      %v1171 = vrot.slane %v1166, 4
      %v1173 = vshrl.u32 %v938, 16
      %v1175 = vrot.slane %v1173, 7
      %v1176 = vshll.u32 %v938, 16
      %v1178 = vor.u32 %v1175, %v1176
      %v1179 = vsel %vm959, %v1171, %v1178
      %v1181 = vshrl.u32 %v939, 16
      %v1183 = vrot.slane %v1181, 7
      %v1184 = vrot.slane %v1183, 4
      %v1186 = vshrl.u32 %v940, 16
      %v1188 = vrot.slane %v1186, 7
      %v1189 = vshll.u32 %v940, 16
      %v1191 = vor.u32 %v1188, %v1189
      %v1192 = vsel %vm959, %v1184, %v1191
      %v1193 = vrot.slane %v1188, 4
      %v1195 = vshrl.u32 %v941, 16
      %v1197 = vrot.slane %v1195, 7
      %v1198 = vshll.u32 %v941, 16
      %v1200 = vor.u32 %v1197, %v1198
      %v1201 = vsel %vm959, %v1193, %v1200
      %v1203 = vshrl.u32 %v942, 16
      %v1205 = vrot.slane %v1203, 7
      %v1206 = vrot.slane %v1205, 4
      %v1208 = vshrl.u32 %v943, 16
      %v1210 = vrot.slane %v1208, 7
      %v1211 = vshll.u32 %v943, 16
      %v1213 = vor.u32 %v1210, %v1211
      %v1214 = vsel %vm959, %v1206, %v1213
      %v1215 = vrot.slane %v1210, 4
      %v1217 = vshrl.u32 %v944, 16
      %v1219 = vrot.slane %v1217, 7
      %v1220 = vshll.u32 %v944, 16
      %v1222 = vor.u32 %v1219, %v1220
      %v1223 = vsel %vm959, %v1215, %v1222
      %v1225 = vshrl.u32 %v945, 16
      %v1227 = vrot.slane %v1225, 7
      %v1228 = vrot.slane %v1227, 4
      %v1230 = vshrl.u32 %v946, 16
      %v1232 = vrot.slane %v1230, 7
      %v1233 = vshll.u32 %v946, 16
      %v1235 = vor.u32 %v1232, %v1233
      %v1236 = vsel %vm959, %v1228, %v1235
      %v1237 = vrot.slane %v1232, 4
      %v1239 = vshrl.u32 %v947, 16
      %v1241 = vrot.slane %v1239, 7
      %v1242 = vshll.u32 %v947, 16
      %v1244 = vor.u32 %v1241, %v1242
      %v1245 = vsel %vm959, %v1237, %v1244
      %v1247 = vshrl.u32 %v948, 16
      %v1249 = vrot.slane %v1247, 7
      %v1250 = vrot.slane %v1249, 4
      %v1252 = vshrl.u32 %v949, 16
      %v1254 = vrot.slane %v1252, 7
      %v1255 = vshll.u32 %v949, 16
      %v1257 = vor.u32 %v1254, %v1255
      %v1258 = vsel %vm959, %v1250, %v1257
      %v1259 = vrot.slane %v1254, 4
      %v1261 = vshrl.u32 %v950, 16
      %v1263 = vrot.slane %v1261, 7
      %v1264 = vshll.u32 %v950, 16
      %v1266 = vor.u32 %v1263, %v1264
      %v1267 = vsel %vm959, %v1259, %v1266
      %v1269 = vshrl.u32 %v951, 16
      %v1271 = vrot.slane %v1269, 7
      %v1272 = vrot.slane %v1271, 4
      %v1274 = vshrl.u32 %v952, 16
      %v1276 = vrot.slane %v1274, 7
      %v1277 = vshll.u32 %v952, 16
      %v1279 = vor.u32 %v1276, %v1277
      %v1280 = vsel %vm959, %v1272, %v1279
      %v1281 = vrot.slane %v1276, 4
      %v1283 = vshrl.u32 %v953, 16
      %v1285 = vrot.slane %v1283, 7
      %v1286 = vshll.u32 %v953, 16
      %v1288 = vor.u32 %v1285, %v1286
      %v1289 = vsel %vm959, %v1281, %v1288
      %v1291 = vshrl.u32 %v954, 16
      %v1293 = vrot.slane %v1291, 7
      %v1294 = vrot.slane %v1293, 4
      %v1296 = vshrl.u32 %v955, 16
      %v1298 = vrot.slane %v1296, 7
      %v1299 = vshll.u32 %v955, 16
      %v1301 = vor.u32 %v1298, %v1299
      %v1302 = vsel %vm959, %v1294, %v1301
      %v1303 = vrot.slane %v1298, 4
      %v1305 = vshrl.u32 %v956, 16
      %v1307 = vrot.slane %v1305, 7
      %v1308 = vshll.u32 %v956, 16
      %v1310 = vor.u32 %v1307, %v1308
      %v1311 = vsel %vm959, %v1303, %v1310
      %v1312 = vld [vmem:[#allocation2 + $0x10] sm:$0x1]
      %v1313 = vld [vmem:[#allocation2 + $0x24] sm:$0x1]
      %v1314 = vld [vmem:[#allocation2 + $0x38] sm:$0x1]
      %v1315 = vld [vmem:[#allocation2 + $0x4c] sm:$0x1]
      %v1316 = vld [vmem:[#allocation2 + $0x60] sm:$0x1]
      %v1317 = vld [vmem:[#allocation2 + $0x74] sm:$0x1]
      %v1318 = vld [vmem:[#allocation2 + $0x88] sm:$0x1]
      %v1319 = vld [vmem:[#allocation2 + $0x9c] sm:$0x1]
      %v1320 = vld [vmem:[#allocation2 + $0xb0] sm:$0x1]
      %v1321 = vld [vmem:[#allocation2 + $0xc4] sm:$0x1]
      %v1322 = vld [vmem:[#allocation2 + $0xd8] sm:$0x1]
      %v1323 = vld [vmem:[#allocation2 + $0xec] sm:$0x1]
      %v1324 = vld [vmem:[#allocation2 + $0x100] sm:$0x1]
      %v1325 = vld [vmem:[#allocation2 + $0x114] sm:$0x1]
      %v1326 = vld [vmem:[#allocation2 + $0x128] sm:$0x1]
      %v1327 = vld [vmem:[#allocation2 + $0x13c] sm:$0x1]
      %vm1328 = vsmask.f32 3328
      %vm1329 = vsmask.f32 7440
      %vm1330 = vmor %vm1328, %vm1329
      %v1331 = vrot.slane %v966, 4
      %v1332 = vrot.slane %v969, 5
      %v1333 = vor.u32 %v1331, %v1332
      %v1334 = vrot.slane %v1333, 4
      %v1335 = vrot.slane %v978, 5
      %v1336 = vsel %vm1330, %v1334, %v1335
      %v1337 = vrot.slane %v975, 4
      %v1338 = vor.u32 %v1337, %v1335
      %v1339 = vrot.slane %v1338, 4
      %v1341 = vshll.u32 %v1312, 16
      %v1343 = vrot.slane %v1341, 5
      %v1344 = vsel %vm1330, %v1339, %v1343
      %v1345 = vrot.slane %v988, 4
      %v1346 = vrot.slane %v991, 5
      %v1347 = vor.u32 %v1345, %v1346
      %v1348 = vrot.slane %v1347, 4
      %v1349 = vrot.slane %v1000, 5
      %v1350 = vsel %vm1330, %v1348, %v1349
      %v1351 = vrot.slane %v997, 4
      %v1352 = vor.u32 %v1351, %v1349
      %v1353 = vrot.slane %v1352, 4
      %v1355 = vshll.u32 %v1313, 16
      %v1357 = vrot.slane %v1355, 5
      %v1358 = vsel %vm1330, %v1353, %v1357
      %v1359 = vrot.slane %v1010, 4
      %v1360 = vrot.slane %v1013, 5
      %v1361 = vor.u32 %v1359, %v1360
      %v1362 = vrot.slane %v1361, 4
      %v1363 = vrot.slane %v1022, 5
      %v1364 = vsel %vm1330, %v1362, %v1363
      %v1365 = vrot.slane %v1019, 4
      %v1366 = vor.u32 %v1365, %v1363
      %v1367 = vrot.slane %v1366, 4
      %v1369 = vshll.u32 %v1314, 16
      %v1371 = vrot.slane %v1369, 5
      %v1372 = vsel %vm1330, %v1367, %v1371
      %v1373 = vrot.slane %v1032, 4
      %v1374 = vrot.slane %v1035, 5
      %v1375 = vor.u32 %v1373, %v1374
      %v1376 = vrot.slane %v1375, 4
      %v1377 = vrot.slane %v1044, 5
      %v1378 = vsel %vm1330, %v1376, %v1377
      %v1379 = vrot.slane %v1041, 4
      %v1380 = vor.u32 %v1379, %v1377
      %v1381 = vrot.slane %v1380, 4
      %v1383 = vshll.u32 %v1315, 16
      %v1385 = vrot.slane %v1383, 5
      %v1386 = vsel %vm1330, %v1381, %v1385
      %v1387 = vrot.slane %v1054, 4
      %v1388 = vrot.slane %v1057, 5
      %v1389 = vor.u32 %v1387, %v1388
      %v1390 = vrot.slane %v1389, 4
      %v1391 = vrot.slane %v1066, 5
      %v1392 = vsel %vm1330, %v1390, %v1391
      %v1393 = vrot.slane %v1063, 4
      %v1394 = vor.u32 %v1393, %v1391
      %v1395 = vrot.slane %v1394, 4
      %v1397 = vshll.u32 %v1316, 16
      %v1399 = vrot.slane %v1397, 5
      %v1400 = vsel %vm1330, %v1395, %v1399
      %v1401 = vrot.slane %v1076, 4
      %v1402 = vrot.slane %v1079, 5
      %v1403 = vor.u32 %v1401, %v1402
      %v1404 = vrot.slane %v1403, 4
      %v1405 = vrot.slane %v1088, 5
      %v1406 = vsel %vm1330, %v1404, %v1405
      %v1407 = vrot.slane %v1085, 4
      %v1408 = vor.u32 %v1407, %v1405
      %v1409 = vrot.slane %v1408, 4
      %v1411 = vshll.u32 %v1317, 16
      %v1413 = vrot.slane %v1411, 5
      %v1414 = vsel %vm1330, %v1409, %v1413
      %v1415 = vrot.slane %v1098, 4
      %v1416 = vrot.slane %v1101, 5
      %v1417 = vor.u32 %v1415, %v1416
      %v1418 = vrot.slane %v1417, 4
      %v1419 = vrot.slane %v1110, 5
      %v1420 = vsel %vm1330, %v1418, %v1419
      %v1421 = vrot.slane %v1107, 4
      %v1422 = vor.u32 %v1421, %v1419
      %v1423 = vrot.slane %v1422, 4
      %v1425 = vshll.u32 %v1318, 16
      %v1427 = vrot.slane %v1425, 5
      %v1428 = vsel %vm1330, %v1423, %v1427
      %v1429 = vrot.slane %v1120, 4
      %v1430 = vrot.slane %v1123, 5
      %v1431 = vor.u32 %v1429, %v1430
      %v1432 = vrot.slane %v1431, 4
      %v1433 = vrot.slane %v1132, 5
      %v1434 = vsel %vm1330, %v1432, %v1433
      %v1435 = vrot.slane %v1129, 4
      %v1436 = vor.u32 %v1435, %v1433
      %v1437 = vrot.slane %v1436, 4
      %v1439 = vshll.u32 %v1319, 16
      %v1441 = vrot.slane %v1439, 5
      %v1442 = vsel %vm1330, %v1437, %v1441
      %v1443 = vrot.slane %v1142, 4
      %v1444 = vrot.slane %v1145, 5
      %v1445 = vor.u32 %v1443, %v1444
      %v1446 = vrot.slane %v1445, 4
      %v1447 = vrot.slane %v1154, 5
      %v1448 = vsel %vm1330, %v1446, %v1447
      %v1449 = vrot.slane %v1151, 4
      %v1450 = vor.u32 %v1449, %v1447
      %v1451 = vrot.slane %v1450, 4
      %v1453 = vshll.u32 %v1320, 16
      %v1455 = vrot.slane %v1453, 5
      %v1456 = vsel %vm1330, %v1451, %v1455
      %v1457 = vrot.slane %v1164, 4
      %v1458 = vrot.slane %v1167, 5
      %v1459 = vor.u32 %v1457, %v1458
      %v1460 = vrot.slane %v1459, 4
      %v1461 = vrot.slane %v1176, 5
      %v1462 = vsel %vm1330, %v1460, %v1461
      %v1463 = vrot.slane %v1173, 4
      %v1464 = vor.u32 %v1463, %v1461
      %v1465 = vrot.slane %v1464, 4
      %v1467 = vshll.u32 %v1321, 16
      %v1469 = vrot.slane %v1467, 5
      %v1470 = vsel %vm1330, %v1465, %v1469
      %v1471 = vrot.slane %v1186, 4
      %v1472 = vrot.slane %v1189, 5
      %v1473 = vor.u32 %v1471, %v1472
      %v1474 = vrot.slane %v1473, 4
      %v1475 = vrot.slane %v1198, 5
      %v1476 = vsel %vm1330, %v1474, %v1475
      %v1477 = vrot.slane %v1195, 4
      %v1478 = vor.u32 %v1477, %v1475
      %v1479 = vrot.slane %v1478, 4
      %v1481 = vshll.u32 %v1322, 16
      %v1483 = vrot.slane %v1481, 5
      %v1484 = vsel %vm1330, %v1479, %v1483
      %v1485 = vrot.slane %v1208, 4
      %v1486 = vrot.slane %v1211, 5
      %v1487 = vor.u32 %v1485, %v1486
      %v1488 = vrot.slane %v1487, 4
      %v1489 = vrot.slane %v1220, 5
      %v1490 = vsel %vm1330, %v1488, %v1489
      %v1491 = vrot.slane %v1217, 4
      %v1492 = vor.u32 %v1491, %v1489
      %v1493 = vrot.slane %v1492, 4
      %v1495 = vshll.u32 %v1323, 16
      %v1497 = vrot.slane %v1495, 5
      %v1498 = vsel %vm1330, %v1493, %v1497
      %v1499 = vrot.slane %v1230, 4
      %v1500 = vrot.slane %v1233, 5
      %v1501 = vor.u32 %v1499, %v1500
      %v1502 = vrot.slane %v1501, 4
      %v1503 = vrot.slane %v1242, 5
      %v1504 = vsel %vm1330, %v1502, %v1503
      %v1505 = vrot.slane %v1239, 4
      %v1506 = vor.u32 %v1505, %v1503
      %v1507 = vrot.slane %v1506, 4
      %v1509 = vshll.u32 %v1324, 16
      %v1511 = vrot.slane %v1509, 5
      %v1512 = vsel %vm1330, %v1507, %v1511
      %v1513 = vrot.slane %v1252, 4
      %v1514 = vrot.slane %v1255, 5
      %v1515 = vor.u32 %v1513, %v1514
      %v1516 = vrot.slane %v1515, 4
      %v1517 = vrot.slane %v1264, 5
      %v1518 = vsel %vm1330, %v1516, %v1517
      %v1519 = vrot.slane %v1261, 4
      %v1520 = vor.u32 %v1519, %v1517
      %v1521 = vrot.slane %v1520, 4
      %v1523 = vshll.u32 %v1325, 16
      %v1525 = vrot.slane %v1523, 5
      %v1526 = vsel %vm1330, %v1521, %v1525
      %v1527 = vrot.slane %v1274, 4
      %v1528 = vrot.slane %v1277, 5
      %v1529 = vor.u32 %v1527, %v1528
      %v1530 = vrot.slane %v1529, 4
      %v1531 = vrot.slane %v1286, 5
      %v1532 = vsel %vm1330, %v1530, %v1531
      %v1533 = vrot.slane %v1283, 4
      %v1534 = vor.u32 %v1533, %v1531
      %v1535 = vrot.slane %v1534, 4
      %v1537 = vshll.u32 %v1326, 16
      %v1539 = vrot.slane %v1537, 5
      %v1540 = vsel %vm1330, %v1535, %v1539
      %v1541 = vrot.slane %v1296, 4
      %v1542 = vrot.slane %v1299, 5
      %v1543 = vor.u32 %v1541, %v1542
      %v1544 = vrot.slane %v1543, 4
      %v1545 = vrot.slane %v1308, 5
      %v1546 = vsel %vm1330, %v1544, %v1545
      %v1547 = vrot.slane %v1305, 4
      %v1548 = vor.u32 %v1547, %v1545
      %v1549 = vrot.slane %v1548, 4
      %v1551 = vshll.u32 %v1327, 16
      %v1553 = vrot.slane %v1551, 5
      %v1554 = vsel %vm1330, %v1549, %v1553
      %v1555 = vld [vmem:[%s828 + $0x4] sm:$0x8]
      %v1556 = vld [vmem:[%s828 + $0x8] sm:$0xf]
      %v1557 = vld [vmem:[%s828 + $0xc] sm:$0xf]
      %v1558 = vld [vmem:[%s828 + $0x18] sm:$0x8]
      %v1559 = vld [vmem:[%s828 + $0x1c] sm:$0xf]
      %v1560 = vld [vmem:[%s828 + $0x20] sm:$0xf]
      %v1561 = vld [vmem:[%s828 + $0x2c] sm:$0x8]
      %v1562 = vld [vmem:[%s828 + $0x30] sm:$0xf]
      %v1563 = vld [vmem:[%s828 + $0x34] sm:$0xf]
      %v1564 = vld [vmem:[%s828 + $0x40] sm:$0x8]
      %v1565 = vld [vmem:[%s828 + $0x44] sm:$0xf]
      %v1566 = vld [vmem:[%s828 + $0x48] sm:$0xf]
      %v1567 = vld [vmem:[%s828 + $0x54] sm:$0x8]
      %v1568 = vld [vmem:[%s828 + $0x58] sm:$0xf]
      %v1569 = vld [vmem:[%s828 + $0x5c] sm:$0xf]
      %v1570 = vld [vmem:[%s828 + $0x68] sm:$0x8]
      %v1571 = vld [vmem:[%s828 + $0x6c] sm:$0xf]
      %v1572 = vld [vmem:[%s828 + $0x70] sm:$0xf]
      %v1573 = vld [vmem:[%s828 + $0x7c] sm:$0x8]
      %v1574 = vld [vmem:[%s828 + $0x80] sm:$0xf]
      %v1575 = vld [vmem:[%s828 + $0x84] sm:$0xf]
      %v1576 = vld [vmem:[%s828 + $0x90] sm:$0x8]
      %v1577 = vld [vmem:[%s828 + $0x94] sm:$0xf]
      %v1578 = vld [vmem:[%s828 + $0x98] sm:$0xf]
      %v1579 = vld [vmem:[%s828 + $0xa4] sm:$0x8]
      %v1580 = vld [vmem:[%s828 + $0xa8] sm:$0xf]
      %v1581 = vld [vmem:[%s828 + $0xac] sm:$0xf]
      %v1582 = vld [vmem:[%s828 + $0xb8] sm:$0x8]
      %v1583 = vld [vmem:[%s828 + $0xbc] sm:$0xf]
      %v1584 = vld [vmem:[%s828 + $0xc0] sm:$0xf]
      %v1585 = vld [vmem:[%s828 + $0xcc] sm:$0x8]
      %v1586 = vld [vmem:[%s828 + $0xd0] sm:$0xf]
      %v1587 = vld [vmem:[%s828 + $0xd4] sm:$0xf]
      %v1588 = vld [vmem:[%s828 + $0xe0] sm:$0x8]
      %v1589 = vld [vmem:[%s828 + $0xe4] sm:$0xf]
      %v1590 = vld [vmem:[%s828 + $0xe8] sm:$0xf]
      %v1591 = vld [vmem:[%s828 + $0xf4] sm:$0x8]
      %v1592 = vld [vmem:[%s828 + $0xf8] sm:$0xf]
      %v1593 = vld [vmem:[%s828 + $0xfc] sm:$0xf]
      %v1594 = vld [vmem:[%s828 + $0x108] sm:$0x8]
      %v1595 = vld [vmem:[%s828 + $0x10c] sm:$0xf]
      %v1596 = vld [vmem:[%s828 + $0x110] sm:$0xf]
      %v1597 = vld [vmem:[%s828 + $0x11c] sm:$0x8]
      %v1598 = vld [vmem:[%s828 + $0x120] sm:$0xf]
      %v1599 = vld [vmem:[%s828 + $0x124] sm:$0xf]
      %v1600 = vld [vmem:[%s828 + $0x130] sm:$0x8]
      %v1601 = vld [vmem:[%s828 + $0x134] sm:$0xf]
      %v1602 = vld [vmem:[%s828 + $0x138] sm:$0xf]
      %v1604 = vshrl.u32 %v1555, 16
      %v1606 = vrot.slane %v1604, 7
      %v1607 = vrot.slane %v1606, 4
      %v1609 = vshrl.u32 %v1556, 16
      %v1611 = vrot.slane %v1609, 7
      %v1612 = vshll.u32 %v1556, 16
      %v1614 = vor.u32 %v1611, %v1612
      %v1615 = vsel %vm959, %v1607, %v1614
      %v1616 = vrot.slane %v1611, 4
      %v1618 = vshrl.u32 %v1557, 16
      %v1620 = vrot.slane %v1618, 7
      %v1621 = vshll.u32 %v1557, 16
      %v1623 = vor.u32 %v1620, %v1621
      %v1624 = vsel %vm959, %v1616, %v1623
      %v1626 = vshrl.u32 %v1558, 16
      %v1628 = vrot.slane %v1626, 7
      %v1629 = vrot.slane %v1628, 4
      %v1631 = vshrl.u32 %v1559, 16
      %v1633 = vrot.slane %v1631, 7
      %v1634 = vshll.u32 %v1559, 16
      %v1636 = vor.u32 %v1633, %v1634
      %v1637 = vsel %vm959, %v1629, %v1636
      %v1638 = vrot.slane %v1633, 4
      %v1640 = vshrl.u32 %v1560, 16
      %v1642 = vrot.slane %v1640, 7
      %v1643 = vshll.u32 %v1560, 16
      %v1645 = vor.u32 %v1642, %v1643
      %v1646 = vsel %vm959, %v1638, %v1645
      %v1648 = vshrl.u32 %v1561, 16
      %v1650 = vrot.slane %v1648, 7
      %v1651 = vrot.slane %v1650, 4
      %v1653 = vshrl.u32 %v1562, 16
      %v1655 = vrot.slane %v1653, 7
      %v1656 = vshll.u32 %v1562, 16
      %v1658 = vor.u32 %v1655, %v1656
      %v1659 = vsel %vm959, %v1651, %v1658
      %v1660 = vrot.slane %v1655, 4
      %v1662 = vshrl.u32 %v1563, 16
      %v1664 = vrot.slane %v1662, 7
      %v1665 = vshll.u32 %v1563, 16
      %v1667 = vor.u32 %v1664, %v1665
      %v1668 = vsel %vm959, %v1660, %v1667
      %v1670 = vshrl.u32 %v1564, 16
      %v1672 = vrot.slane %v1670, 7
      %v1673 = vrot.slane %v1672, 4
      %v1675 = vshrl.u32 %v1565, 16
      %v1677 = vrot.slane %v1675, 7
      %v1678 = vshll.u32 %v1565, 16
      %v1680 = vor.u32 %v1677, %v1678
      %v1681 = vsel %vm959, %v1673, %v1680
      %v1682 = vrot.slane %v1677, 4
      %v1684 = vshrl.u32 %v1566, 16
      %v1686 = vrot.slane %v1684, 7
      %v1687 = vshll.u32 %v1566, 16
      %v1689 = vor.u32 %v1686, %v1687
      %v1690 = vsel %vm959, %v1682, %v1689
      %v1692 = vshrl.u32 %v1567, 16
      %v1694 = vrot.slane %v1692, 7
      %v1695 = vrot.slane %v1694, 4
      %v1697 = vshrl.u32 %v1568, 16
      %v1699 = vrot.slane %v1697, 7
      %v1700 = vshll.u32 %v1568, 16
      %v1702 = vor.u32 %v1699, %v1700
      %v1703 = vsel %vm959, %v1695, %v1702
      %v1704 = vrot.slane %v1699, 4
      %v1706 = vshrl.u32 %v1569, 16
      %v1708 = vrot.slane %v1706, 7
      %v1709 = vshll.u32 %v1569, 16
      %v1711 = vor.u32 %v1708, %v1709
      %v1712 = vsel %vm959, %v1704, %v1711
      %v1714 = vshrl.u32 %v1570, 16
      %v1716 = vrot.slane %v1714, 7
      %v1717 = vrot.slane %v1716, 4
      %v1719 = vshrl.u32 %v1571, 16
      %v1721 = vrot.slane %v1719, 7
      %v1722 = vshll.u32 %v1571, 16
      %v1724 = vor.u32 %v1721, %v1722
      %v1725 = vsel %vm959, %v1717, %v1724
      %v1726 = vrot.slane %v1721, 4
      %v1728 = vshrl.u32 %v1572, 16
      %v1730 = vrot.slane %v1728, 7
      %v1731 = vshll.u32 %v1572, 16
      %v1733 = vor.u32 %v1730, %v1731
      %v1734 = vsel %vm959, %v1726, %v1733
      %v1736 = vshrl.u32 %v1573, 16
      %v1738 = vrot.slane %v1736, 7
      %v1739 = vrot.slane %v1738, 4
      %v1741 = vshrl.u32 %v1574, 16
      %v1743 = vrot.slane %v1741, 7
      %v1744 = vshll.u32 %v1574, 16
      %v1746 = vor.u32 %v1743, %v1744
      %v1747 = vsel %vm959, %v1739, %v1746
      %v1748 = vrot.slane %v1743, 4
      %v1750 = vshrl.u32 %v1575, 16
      %v1752 = vrot.slane %v1750, 7
      %v1753 = vshll.u32 %v1575, 16
      %v1755 = vor.u32 %v1752, %v1753
      %v1756 = vsel %vm959, %v1748, %v1755
      %v1758 = vshrl.u32 %v1576, 16
      %v1760 = vrot.slane %v1758, 7
      %v1761 = vrot.slane %v1760, 4
      %v1763 = vshrl.u32 %v1577, 16
      %v1765 = vrot.slane %v1763, 7
      %v1766 = vshll.u32 %v1577, 16
      %v1768 = vor.u32 %v1765, %v1766
      %v1769 = vsel %vm959, %v1761, %v1768
      %v1770 = vrot.slane %v1765, 4
      %v1772 = vshrl.u32 %v1578, 16
      %v1774 = vrot.slane %v1772, 7
      %v1775 = vshll.u32 %v1578, 16
      %v1777 = vor.u32 %v1774, %v1775
      %v1778 = vsel %vm959, %v1770, %v1777
      %v1780 = vshrl.u32 %v1579, 16
      %v1782 = vrot.slane %v1780, 7
      %v1783 = vrot.slane %v1782, 4
      %v1785 = vshrl.u32 %v1580, 16
      %v1787 = vrot.slane %v1785, 7
      %v1788 = vshll.u32 %v1580, 16
      %v1790 = vor.u32 %v1787, %v1788
      %v1791 = vsel %vm959, %v1783, %v1790
      %v1792 = vrot.slane %v1787, 4
      %v1794 = vshrl.u32 %v1581, 16
      %v1796 = vrot.slane %v1794, 7
      %v1797 = vshll.u32 %v1581, 16
      %v1799 = vor.u32 %v1796, %v1797
      %v1800 = vsel %vm959, %v1792, %v1799
      %v1802 = vshrl.u32 %v1582, 16
      %v1804 = vrot.slane %v1802, 7
      %v1805 = vrot.slane %v1804, 4
      %v1807 = vshrl.u32 %v1583, 16
      %v1809 = vrot.slane %v1807, 7
      %v1810 = vshll.u32 %v1583, 16
      %v1812 = vor.u32 %v1809, %v1810
      %v1813 = vsel %vm959, %v1805, %v1812
      %v1814 = vrot.slane %v1809, 4
      %v1816 = vshrl.u32 %v1584, 16
      %v1818 = vrot.slane %v1816, 7
      %v1819 = vshll.u32 %v1584, 16
      %v1821 = vor.u32 %v1818, %v1819
      %v1822 = vsel %vm959, %v1814, %v1821
      %v1824 = vshrl.u32 %v1585, 16
      %v1826 = vrot.slane %v1824, 7
      %v1827 = vrot.slane %v1826, 4
      %v1829 = vshrl.u32 %v1586, 16
      %v1831 = vrot.slane %v1829, 7
      %v1832 = vshll.u32 %v1586, 16
      %v1834 = vor.u32 %v1831, %v1832
      %v1835 = vsel %vm959, %v1827, %v1834
      %v1836 = vrot.slane %v1831, 4
      %v1838 = vshrl.u32 %v1587, 16
      %v1840 = vrot.slane %v1838, 7
      %v1841 = vshll.u32 %v1587, 16
      %v1843 = vor.u32 %v1840, %v1841
      %v1844 = vsel %vm959, %v1836, %v1843
      %v1846 = vshrl.u32 %v1588, 16
      %v1848 = vrot.slane %v1846, 7
      %v1849 = vrot.slane %v1848, 4
      %v1851 = vshrl.u32 %v1589, 16
      %v1853 = vrot.slane %v1851, 7
      %v1854 = vshll.u32 %v1589, 16
      %v1856 = vor.u32 %v1853, %v1854
      %v1857 = vsel %vm959, %v1849, %v1856
      %v1858 = vrot.slane %v1853, 4
      %v1860 = vshrl.u32 %v1590, 16
      %v1862 = vrot.slane %v1860, 7
      %v1863 = vshll.u32 %v1590, 16
      %v1865 = vor.u32 %v1862, %v1863
      %v1866 = vsel %vm959, %v1858, %v1865
      %v1868 = vshrl.u32 %v1591, 16
      %v1870 = vrot.slane %v1868, 7
      %v1871 = vrot.slane %v1870, 4
      %v1873 = vshrl.u32 %v1592, 16
      %v1875 = vrot.slane %v1873, 7
      %v1876 = vshll.u32 %v1592, 16
      %v1878 = vor.u32 %v1875, %v1876
      %v1879 = vsel %vm959, %v1871, %v1878
      %v1880 = vrot.slane %v1875, 4
      %v1882 = vshrl.u32 %v1593, 16
      %v1884 = vrot.slane %v1882, 7
      %v1885 = vshll.u32 %v1593, 16
      %v1887 = vor.u32 %v1884, %v1885
      %v1888 = vsel %vm959, %v1880, %v1887
      %v1890 = vshrl.u32 %v1594, 16
      %v1892 = vrot.slane %v1890, 7
      %v1893 = vrot.slane %v1892, 4
      %v1895 = vshrl.u32 %v1595, 16
      %v1897 = vrot.slane %v1895, 7
      %v1898 = vshll.u32 %v1595, 16
      %v1900 = vor.u32 %v1897, %v1898
      %v1901 = vsel %vm959, %v1893, %v1900
      %v1902 = vrot.slane %v1897, 4
      %v1904 = vshrl.u32 %v1596, 16
      %v1906 = vrot.slane %v1904, 7
      %v1907 = vshll.u32 %v1596, 16
      %v1909 = vor.u32 %v1906, %v1907
      %v1910 = vsel %vm959, %v1902, %v1909
      %v1912 = vshrl.u32 %v1597, 16
      %v1914 = vrot.slane %v1912, 7
      %v1915 = vrot.slane %v1914, 4
      %v1917 = vshrl.u32 %v1598, 16
      %v1919 = vrot.slane %v1917, 7
      %v1920 = vshll.u32 %v1598, 16
      %v1922 = vor.u32 %v1919, %v1920
      %v1923 = vsel %vm959, %v1915, %v1922
      %v1924 = vrot.slane %v1919, 4
      %v1926 = vshrl.u32 %v1599, 16
      %v1928 = vrot.slane %v1926, 7
      %v1929 = vshll.u32 %v1599, 16
      %v1931 = vor.u32 %v1928, %v1929
      %v1932 = vsel %vm959, %v1924, %v1931
      %v1934 = vshrl.u32 %v1600, 16
      %v1936 = vrot.slane %v1934, 7
      %v1937 = vrot.slane %v1936, 4
      %v1939 = vshrl.u32 %v1601, 16
      %v1941 = vrot.slane %v1939, 7
      %v1942 = vshll.u32 %v1601, 16
      %v1944 = vor.u32 %v1941, %v1942
      %v1945 = vsel %vm959, %v1937, %v1944
      %v1946 = vrot.slane %v1941, 4
      %v1948 = vshrl.u32 %v1602, 16
      %v1950 = vrot.slane %v1948, 7
      %v1951 = vshll.u32 %v1602, 16
      %v1953 = vor.u32 %v1950, %v1951
      %v1954 = vsel %vm959, %v1946, %v1953
      %v1955 = vld [vmem:[%s828 + $0x10] sm:$0x1]
      %v1956 = vld [vmem:[%s828 + $0x24] sm:$0x1]
      %v1957 = vld [vmem:[%s828 + $0x38] sm:$0x1]
      %v1958 = vld [vmem:[%s828 + $0x4c] sm:$0x1]
      %v1959 = vld [vmem:[%s828 + $0x60] sm:$0x1]
      %v1960 = vld [vmem:[%s828 + $0x74] sm:$0x1]
      %v1961 = vld [vmem:[%s828 + $0x88] sm:$0x1]
      %v1962 = vld [vmem:[%s828 + $0x9c] sm:$0x1]
      %v1963 = vld [vmem:[%s828 + $0xb0] sm:$0x1]
      %v1964 = vld [vmem:[%s828 + $0xc4] sm:$0x1]
      %v1965 = vld [vmem:[%s828 + $0xd8] sm:$0x1]
      %v1966 = vld [vmem:[%s828 + $0xec] sm:$0x1]
      %v1967 = vld [vmem:[%s828 + $0x100] sm:$0x1]
      %v1968 = vld [vmem:[%s828 + $0x114] sm:$0x1]
      %v1969 = vld [vmem:[%s828 + $0x128] sm:$0x1]
      %v1970 = vld [vmem:[%s828 + $0x13c] sm:$0x1]
      %v1971 = vrot.slane %v1609, 4
      %v1972 = vrot.slane %v1612, 5
      %v1973 = vor.u32 %v1971, %v1972
      %v1974 = vrot.slane %v1973, 4
      %v1975 = vrot.slane %v1621, 5
      %v1976 = vsel %vm1330, %v1974, %v1975
      %v1977 = vrot.slane %v1618, 4
      %v1978 = vor.u32 %v1977, %v1975
      %v1979 = vrot.slane %v1978, 4
      %v1981 = vshll.u32 %v1955, 16
      %v1983 = vrot.slane %v1981, 5
      %v1984 = vsel %vm1330, %v1979, %v1983
      %v1985 = vrot.slane %v1631, 4
      %v1986 = vrot.slane %v1634, 5
      %v1987 = vor.u32 %v1985, %v1986
      %v1988 = vrot.slane %v1987, 4
      %v1989 = vrot.slane %v1643, 5
      %v1990 = vsel %vm1330, %v1988, %v1989
      %v1991 = vrot.slane %v1640, 4
      %v1992 = vor.u32 %v1991, %v1989
      %v1993 = vrot.slane %v1992, 4
      %v1995 = vshll.u32 %v1956, 16
      %v1997 = vrot.slane %v1995, 5
      %v1998 = vsel %vm1330, %v1993, %v1997
      %v1999 = vrot.slane %v1653, 4
      %v2000 = vrot.slane %v1656, 5
      %v2001 = vor.u32 %v1999, %v2000
      %v2002 = vrot.slane %v2001, 4
      %v2003 = vrot.slane %v1665, 5
      %v2004 = vsel %vm1330, %v2002, %v2003
      %v2005 = vrot.slane %v1662, 4
      %v2006 = vor.u32 %v2005, %v2003
      %v2007 = vrot.slane %v2006, 4
      %v2009 = vshll.u32 %v1957, 16
      %v2011 = vrot.slane %v2009, 5
      %v2012 = vsel %vm1330, %v2007, %v2011
      %v2013 = vrot.slane %v1675, 4
      %v2014 = vrot.slane %v1678, 5
      %v2015 = vor.u32 %v2013, %v2014
      %v2016 = vrot.slane %v2015, 4
      %v2017 = vrot.slane %v1687, 5
      %v2018 = vsel %vm1330, %v2016, %v2017
      %v2019 = vrot.slane %v1684, 4
      %v2020 = vor.u32 %v2019, %v2017
      %v2021 = vrot.slane %v2020, 4
      %v2023 = vshll.u32 %v1958, 16
      %v2025 = vrot.slane %v2023, 5
      %v2026 = vsel %vm1330, %v2021, %v2025
      %v2027 = vrot.slane %v1697, 4
      %v2028 = vrot.slane %v1700, 5
      %v2029 = vor.u32 %v2027, %v2028
      %v2030 = vrot.slane %v2029, 4
      %v2031 = vrot.slane %v1709, 5
      %v2032 = vsel %vm1330, %v2030, %v2031
      %v2033 = vrot.slane %v1706, 4
      %v2034 = vor.u32 %v2033, %v2031
      %v2035 = vrot.slane %v2034, 4
      %v2037 = vshll.u32 %v1959, 16
      %v2039 = vrot.slane %v2037, 5
      %v2040 = vsel %vm1330, %v2035, %v2039
      %v2041 = vrot.slane %v1719, 4
      %v2042 = vrot.slane %v1722, 5
      %v2043 = vor.u32 %v2041, %v2042
      %v2044 = vrot.slane %v2043, 4
      %v2045 = vrot.slane %v1731, 5
      %v2046 = vsel %vm1330, %v2044, %v2045
      %v2047 = vrot.slane %v1728, 4
      %v2048 = vor.u32 %v2047, %v2045
      %v2049 = vrot.slane %v2048, 4
      %v2051 = vshll.u32 %v1960, 16
      %v2053 = vrot.slane %v2051, 5
      %v2054 = vsel %vm1330, %v2049, %v2053
      %v2055 = vrot.slane %v1741, 4
      %v2056 = vrot.slane %v1744, 5
      %v2057 = vor.u32 %v2055, %v2056
      %v2058 = vrot.slane %v2057, 4
      %v2059 = vrot.slane %v1753, 5
      %v2060 = vsel %vm1330, %v2058, %v2059
      %v2061 = vrot.slane %v1750, 4
      %v2062 = vor.u32 %v2061, %v2059
      %v2063 = vrot.slane %v2062, 4
      %v2065 = vshll.u32 %v1961, 16
      %v2067 = vrot.slane %v2065, 5
      %v2068 = vsel %vm1330, %v2063, %v2067
      %v2069 = vrot.slane %v1763, 4
      %v2070 = vrot.slane %v1766, 5
      %v2071 = vor.u32 %v2069, %v2070
      %v2072 = vrot.slane %v2071, 4
      %v2073 = vrot.slane %v1775, 5
      %v2074 = vsel %vm1330, %v2072, %v2073
      %v2075 = vrot.slane %v1772, 4
      %v2076 = vor.u32 %v2075, %v2073
      %v2077 = vrot.slane %v2076, 4
      %v2079 = vshll.u32 %v1962, 16
      %v2081 = vrot.slane %v2079, 5
      %v2082 = vsel %vm1330, %v2077, %v2081
      %v2083 = vrot.slane %v1785, 4
      %v2084 = vrot.slane %v1788, 5
      %v2085 = vor.u32 %v2083, %v2084
      %v2086 = vrot.slane %v2085, 4
      %v2087 = vrot.slane %v1797, 5
      %v2088 = vsel %vm1330, %v2086, %v2087
      %v2089 = vrot.slane %v1794, 4
      %v2090 = vor.u32 %v2089, %v2087
      %v2091 = vrot.slane %v2090, 4
      %v2093 = vshll.u32 %v1963, 16
      %v2095 = vrot.slane %v2093, 5
      %v2096 = vsel %vm1330, %v2091, %v2095
      %v2097 = vrot.slane %v1807, 4
      %v2098 = vrot.slane %v1810, 5
      %v2099 = vor.u32 %v2097, %v2098
      %v2100 = vrot.slane %v2099, 4
      %v2101 = vrot.slane %v1819, 5
      %v2102 = vsel %vm1330, %v2100, %v2101
      %v2103 = vrot.slane %v1816, 4
      %v2104 = vor.u32 %v2103, %v2101
      %v2105 = vrot.slane %v2104, 4
      %v2107 = vshll.u32 %v1964, 16
      %v2109 = vrot.slane %v2107, 5
      %v2110 = vsel %vm1330, %v2105, %v2109
      %v2111 = vrot.slane %v1829, 4
      %v2112 = vrot.slane %v1832, 5
      %v2113 = vor.u32 %v2111, %v2112
      %v2114 = vrot.slane %v2113, 4
      %v2115 = vrot.slane %v1841, 5
      %v2116 = vsel %vm1330, %v2114, %v2115
      %v2117 = vrot.slane %v1838, 4
      %v2118 = vor.u32 %v2117, %v2115
      %v2119 = vrot.slane %v2118, 4
      %v2121 = vshll.u32 %v1965, 16
      %v2123 = vrot.slane %v2121, 5
      %v2124 = vsel %vm1330, %v2119, %v2123
      %v2125 = vrot.slane %v1851, 4
      %v2126 = vrot.slane %v1854, 5
      %v2127 = vor.u32 %v2125, %v2126
      %v2128 = vrot.slane %v2127, 4
      %v2129 = vrot.slane %v1863, 5
      %v2130 = vsel %vm1330, %v2128, %v2129
      %v2131 = vrot.slane %v1860, 4
      %v2132 = vor.u32 %v2131, %v2129
      %v2133 = vrot.slane %v2132, 4
      %v2135 = vshll.u32 %v1966, 16
      %v2137 = vrot.slane %v2135, 5
      %v2138 = vsel %vm1330, %v2133, %v2137
      %v2139 = vrot.slane %v1873, 4
      %v2140 = vrot.slane %v1876, 5
      %v2141 = vor.u32 %v2139, %v2140
      %v2142 = vrot.slane %v2141, 4
      %v2143 = vrot.slane %v1885, 5
      %v2144 = vsel %vm1330, %v2142, %v2143
      %v2145 = vrot.slane %v1882, 4
      %v2146 = vor.u32 %v2145, %v2143
      %v2147 = vrot.slane %v2146, 4
      %v2149 = vshll.u32 %v1967, 16
      %v2151 = vrot.slane %v2149, 5
      %v2152 = vsel %vm1330, %v2147, %v2151
      %v2153 = vrot.slane %v1895, 4
      %v2154 = vrot.slane %v1898, 5
      %v2155 = vor.u32 %v2153, %v2154
      %v2156 = vrot.slane %v2155, 4
      %v2157 = vrot.slane %v1907, 5
      %v2158 = vsel %vm1330, %v2156, %v2157
      %v2159 = vrot.slane %v1904, 4
      %v2160 = vor.u32 %v2159, %v2157
      %v2161 = vrot.slane %v2160, 4
      %v2163 = vshll.u32 %v1968, 16
      %v2165 = vrot.slane %v2163, 5
      %v2166 = vsel %vm1330, %v2161, %v2165
      %v2167 = vrot.slane %v1917, 4
      %v2168 = vrot.slane %v1920, 5
      %v2169 = vor.u32 %v2167, %v2168
      %v2170 = vrot.slane %v2169, 4
      %v2171 = vrot.slane %v1929, 5
      %v2172 = vsel %vm1330, %v2170, %v2171
      %v2173 = vrot.slane %v1926, 4
      %v2174 = vor.u32 %v2173, %v2171
      %v2175 = vrot.slane %v2174, 4
      %v2177 = vshll.u32 %v1969, 16
      %v2179 = vrot.slane %v2177, 5
      %v2180 = vsel %vm1330, %v2175, %v2179
      %v2181 = vrot.slane %v1939, 4
      %v2182 = vrot.slane %v1942, 5
      %v2183 = vor.u32 %v2181, %v2182
      %v2184 = vrot.slane %v2183, 4
      %v2185 = vrot.slane %v1951, 5
      %v2186 = vsel %vm1330, %v2184, %v2185
      %v2187 = vrot.slane %v1948, 4
      %v2188 = vor.u32 %v2187, %v2185
      %v2189 = vrot.slane %v2188, 4
      %v2191 = vshll.u32 %v1970, 16
      %v2193 = vrot.slane %v2191, 5
      %v2194 = vsel %vm1330, %v2189, %v2193
      %s2195 = scalar_lea.vmem [#allocation2], 40
      %v2196 = vld [vmem:[%s2195 + $0x4] sm:$0x8]
      %v2197 = vld [vmem:[%s2195 + $0x8] sm:$0xf]
      %v2198 = vld [vmem:[%s2195 + $0xc] sm:$0xf]
      %v2199 = vld [vmem:[%s2195 + $0x18] sm:$0x8]
      %v2200 = vld [vmem:[%s2195 + $0x1c] sm:$0xf]
      %v2201 = vld [vmem:[%s2195 + $0x20] sm:$0xf]
      %v2202 = vld [vmem:[%s2195 + $0x2c] sm:$0x8]
      %v2203 = vld [vmem:[%s2195 + $0x30] sm:$0xf]
      %v2204 = vld [vmem:[%s2195 + $0x34] sm:$0xf]
      %v2205 = vld [vmem:[%s2195 + $0x40] sm:$0x8]
      %v2206 = vld [vmem:[%s2195 + $0x44] sm:$0xf]
      %v2207 = vld [vmem:[%s2195 + $0x48] sm:$0xf]
      %v2208 = vld [vmem:[%s2195 + $0x54] sm:$0x8]
      %v2209 = vld [vmem:[%s2195 + $0x58] sm:$0xf]
      %v2210 = vld [vmem:[%s2195 + $0x5c] sm:$0xf]
      %v2211 = vld [vmem:[%s2195 + $0x68] sm:$0x8]
      %v2212 = vld [vmem:[%s2195 + $0x6c] sm:$0xf]
      %v2213 = vld [vmem:[%s2195 + $0x70] sm:$0xf]
      %v2214 = vld [vmem:[%s2195 + $0x7c] sm:$0x8]
      %v2215 = vld [vmem:[%s2195 + $0x80] sm:$0xf]
      %v2216 = vld [vmem:[%s2195 + $0x84] sm:$0xf]
      %v2217 = vld [vmem:[%s2195 + $0x90] sm:$0x8]
      %v2218 = vld [vmem:[%s2195 + $0x94] sm:$0xf]
      %v2219 = vld [vmem:[%s2195 + $0x98] sm:$0xf]
      %v2220 = vld [vmem:[%s2195 + $0xa4] sm:$0x8]
      %v2221 = vld [vmem:[%s2195 + $0xa8] sm:$0xf]
      %v2222 = vld [vmem:[%s2195 + $0xac] sm:$0xf]
      %v2223 = vld [vmem:[%s2195 + $0xb8] sm:$0x8]
      %v2224 = vld [vmem:[%s2195 + $0xbc] sm:$0xf]
      %v2225 = vld [vmem:[%s2195 + $0xc0] sm:$0xf]
      %v2226 = vld [vmem:[%s2195 + $0xcc] sm:$0x8]
      %v2227 = vld [vmem:[%s2195 + $0xd0] sm:$0xf]
      %v2228 = vld [vmem:[%s2195 + $0xd4] sm:$0xf]
      %v2229 = vld [vmem:[%s2195 + $0xe0] sm:$0x8]
      %v2230 = vld [vmem:[%s2195 + $0xe4] sm:$0xf]
      %v2231 = vld [vmem:[%s2195 + $0xe8] sm:$0xf]
      %v2232 = vld [vmem:[%s2195 + $0xf4] sm:$0x8]
      %v2233 = vld [vmem:[%s2195 + $0xf8] sm:$0xf]
      %v2234 = vld [vmem:[%s2195 + $0xfc] sm:$0xf]
      %v2235 = vld [vmem:[%s2195 + $0x108] sm:$0x8]
      %v2236 = vld [vmem:[%s2195 + $0x10c] sm:$0xf]
      %v2237 = vld [vmem:[%s2195 + $0x110] sm:$0xf]
      %v2238 = vld [vmem:[%s2195 + $0x11c] sm:$0x8]
      %v2239 = vld [vmem:[%s2195 + $0x120] sm:$0xf]
      %v2240 = vld [vmem:[%s2195 + $0x124] sm:$0xf]
      %v2241 = vld [vmem:[%s2195 + $0x130] sm:$0x8]
      %v2242 = vld [vmem:[%s2195 + $0x134] sm:$0xf]
      %v2243 = vld [vmem:[%s2195 + $0x138] sm:$0xf]
      %v2245 = vshrl.u32 %v2196, 16
      %v2247 = vrot.slane %v2245, 7
      %v2248 = vrot.slane %v2247, 4
      %v2250 = vshrl.u32 %v2197, 16
      %v2252 = vrot.slane %v2250, 7
      %v2253 = vshll.u32 %v2197, 16
      %v2255 = vor.u32 %v2252, %v2253
      %v2256 = vsel %vm959, %v2248, %v2255
      %v2257 = vrot.slane %v2252, 4
      %v2259 = vshrl.u32 %v2198, 16
      %v2261 = vrot.slane %v2259, 7
      %v2262 = vshll.u32 %v2198, 16
      %v2264 = vor.u32 %v2261, %v2262
      %v2265 = vsel %vm959, %v2257, %v2264
      %v2267 = vshrl.u32 %v2199, 16
      %v2269 = vrot.slane %v2267, 7
      %v2270 = vrot.slane %v2269, 4
      %v2272 = vshrl.u32 %v2200, 16
      %v2274 = vrot.slane %v2272, 7
      %v2275 = vshll.u32 %v2200, 16
      %v2277 = vor.u32 %v2274, %v2275
      %v2278 = vsel %vm959, %v2270, %v2277
      %v2279 = vrot.slane %v2274, 4
      %v2281 = vshrl.u32 %v2201, 16
      %v2283 = vrot.slane %v2281, 7
      %v2284 = vshll.u32 %v2201, 16
      %v2286 = vor.u32 %v2283, %v2284
      %v2287 = vsel %vm959, %v2279, %v2286
      %v2289 = vshrl.u32 %v2202, 16
      %v2291 = vrot.slane %v2289, 7
      %v2292 = vrot.slane %v2291, 4
      %v2294 = vshrl.u32 %v2203, 16
      %v2296 = vrot.slane %v2294, 7
      %v2297 = vshll.u32 %v2203, 16
      %v2299 = vor.u32 %v2296, %v2297
      %v2300 = vsel %vm959, %v2292, %v2299
      %v2301 = vrot.slane %v2296, 4
      %v2303 = vshrl.u32 %v2204, 16
      %v2305 = vrot.slane %v2303, 7
      %v2306 = vshll.u32 %v2204, 16
      %v2308 = vor.u32 %v2305, %v2306
      %v2309 = vsel %vm959, %v2301, %v2308
      %v2311 = vshrl.u32 %v2205, 16
      %v2313 = vrot.slane %v2311, 7
      %v2314 = vrot.slane %v2313, 4
      %v2316 = vshrl.u32 %v2206, 16
      %v2318 = vrot.slane %v2316, 7
      %v2319 = vshll.u32 %v2206, 16
      %v2321 = vor.u32 %v2318, %v2319
      %v2322 = vsel %vm959, %v2314, %v2321
      %v2323 = vrot.slane %v2318, 4
      %v2325 = vshrl.u32 %v2207, 16
      %v2327 = vrot.slane %v2325, 7
      %v2328 = vshll.u32 %v2207, 16
      %v2330 = vor.u32 %v2327, %v2328
      %v2331 = vsel %vm959, %v2323, %v2330
      %v2333 = vshrl.u32 %v2208, 16
      %v2335 = vrot.slane %v2333, 7
      %v2336 = vrot.slane %v2335, 4
      %v2338 = vshrl.u32 %v2209, 16
      %v2340 = vrot.slane %v2338, 7
      %v2341 = vshll.u32 %v2209, 16
      %v2343 = vor.u32 %v2340, %v2341
      %v2344 = vsel %vm959, %v2336, %v2343
      %v2345 = vrot.slane %v2340, 4
      %v2347 = vshrl.u32 %v2210, 16
      %v2349 = vrot.slane %v2347, 7
      %v2350 = vshll.u32 %v2210, 16
      %v2352 = vor.u32 %v2349, %v2350
      %v2353 = vsel %vm959, %v2345, %v2352
      %v2355 = vshrl.u32 %v2211, 16
      %v2357 = vrot.slane %v2355, 7
      %v2358 = vrot.slane %v2357, 4
      %v2360 = vshrl.u32 %v2212, 16
      %v2362 = vrot.slane %v2360, 7
      %v2363 = vshll.u32 %v2212, 16
      %v2365 = vor.u32 %v2362, %v2363
      %v2366 = vsel %vm959, %v2358, %v2365
      %v2367 = vrot.slane %v2362, 4
      %v2369 = vshrl.u32 %v2213, 16
      %v2371 = vrot.slane %v2369, 7
      %v2372 = vshll.u32 %v2213, 16
      %v2374 = vor.u32 %v2371, %v2372
      %v2375 = vsel %vm959, %v2367, %v2374
      %v2377 = vshrl.u32 %v2214, 16
      %v2379 = vrot.slane %v2377, 7
      %v2380 = vrot.slane %v2379, 4
      %v2382 = vshrl.u32 %v2215, 16
      %v2384 = vrot.slane %v2382, 7
      %v2385 = vshll.u32 %v2215, 16
      %v2387 = vor.u32 %v2384, %v2385
      %v2388 = vsel %vm959, %v2380, %v2387
      %v2389 = vrot.slane %v2384, 4
      %v2391 = vshrl.u32 %v2216, 16
      %v2393 = vrot.slane %v2391, 7
      %v2394 = vshll.u32 %v2216, 16
      %v2396 = vor.u32 %v2393, %v2394
      %v2397 = vsel %vm959, %v2389, %v2396
      %v2399 = vshrl.u32 %v2217, 16
      %v2401 = vrot.slane %v2399, 7
      %v2402 = vrot.slane %v2401, 4
      %v2404 = vshrl.u32 %v2218, 16
      %v2406 = vrot.slane %v2404, 7
      %v2407 = vshll.u32 %v2218, 16
      %v2409 = vor.u32 %v2406, %v2407
      %v2410 = vsel %vm959, %v2402, %v2409
      %v2411 = vrot.slane %v2406, 4
      %v2413 = vshrl.u32 %v2219, 16
      %v2415 = vrot.slane %v2413, 7
      %v2416 = vshll.u32 %v2219, 16
      %v2418 = vor.u32 %v2415, %v2416
      %v2419 = vsel %vm959, %v2411, %v2418
      %v2421 = vshrl.u32 %v2220, 16
      %v2423 = vrot.slane %v2421, 7
      %v2424 = vrot.slane %v2423, 4
      %v2426 = vshrl.u32 %v2221, 16
      %v2428 = vrot.slane %v2426, 7
      %v2429 = vshll.u32 %v2221, 16
      %v2431 = vor.u32 %v2428, %v2429
      %v2432 = vsel %vm959, %v2424, %v2431
      %v2433 = vrot.slane %v2428, 4
      %v2435 = vshrl.u32 %v2222, 16
      %v2437 = vrot.slane %v2435, 7
      %v2438 = vshll.u32 %v2222, 16
      %v2440 = vor.u32 %v2437, %v2438
      %v2441 = vsel %vm959, %v2433, %v2440
      %v2443 = vshrl.u32 %v2223, 16
      %v2445 = vrot.slane %v2443, 7
      %v2446 = vrot.slane %v2445, 4
      %v2448 = vshrl.u32 %v2224, 16
      %v2450 = vrot.slane %v2448, 7
      %v2451 = vshll.u32 %v2224, 16
      %v2453 = vor.u32 %v2450, %v2451
      %v2454 = vsel %vm959, %v2446, %v2453
      %v2455 = vrot.slane %v2450, 4
      %v2457 = vshrl.u32 %v2225, 16
      %v2459 = vrot.slane %v2457, 7
      %v2460 = vshll.u32 %v2225, 16
      %v2462 = vor.u32 %v2459, %v2460
      %v2463 = vsel %vm959, %v2455, %v2462
      %v2465 = vshrl.u32 %v2226, 16
      %v2467 = vrot.slane %v2465, 7
      %v2468 = vrot.slane %v2467, 4
      %v2470 = vshrl.u32 %v2227, 16
      %v2472 = vrot.slane %v2470, 7
      %v2473 = vshll.u32 %v2227, 16
      %v2475 = vor.u32 %v2472, %v2473
      %v2476 = vsel %vm959, %v2468, %v2475
      %v2477 = vrot.slane %v2472, 4
      %v2479 = vshrl.u32 %v2228, 16
      %v2481 = vrot.slane %v2479, 7
      %v2482 = vshll.u32 %v2228, 16
      %v2484 = vor.u32 %v2481, %v2482
      %v2485 = vsel %vm959, %v2477, %v2484
      %v2487 = vshrl.u32 %v2229, 16
      %v2489 = vrot.slane %v2487, 7
      %v2490 = vrot.slane %v2489, 4
      %v2492 = vshrl.u32 %v2230, 16
      %v2494 = vrot.slane %v2492, 7
      %v2495 = vshll.u32 %v2230, 16
      %v2497 = vor.u32 %v2494, %v2495
      %v2498 = vsel %vm959, %v2490, %v2497
      %v2499 = vrot.slane %v2494, 4
      %v2501 = vshrl.u32 %v2231, 16
      %v2503 = vrot.slane %v2501, 7
      %v2504 = vshll.u32 %v2231, 16
      %v2506 = vor.u32 %v2503, %v2504
      %v2507 = vsel %vm959, %v2499, %v2506
      %v2509 = vshrl.u32 %v2232, 16
      %v2511 = vrot.slane %v2509, 7
      %v2512 = vrot.slane %v2511, 4
      %v2514 = vshrl.u32 %v2233, 16
      %v2516 = vrot.slane %v2514, 7
      %v2517 = vshll.u32 %v2233, 16
      %v2519 = vor.u32 %v2516, %v2517
      %v2520 = vsel %vm959, %v2512, %v2519
      %v2521 = vrot.slane %v2516, 4
      %v2523 = vshrl.u32 %v2234, 16
      %v2525 = vrot.slane %v2523, 7
      %v2526 = vshll.u32 %v2234, 16
      %v2528 = vor.u32 %v2525, %v2526
      %v2529 = vsel %vm959, %v2521, %v2528
      %v2531 = vshrl.u32 %v2235, 16
      %v2533 = vrot.slane %v2531, 7
      %v2534 = vrot.slane %v2533, 4
      %v2536 = vshrl.u32 %v2236, 16
      %v2538 = vrot.slane %v2536, 7
      %v2539 = vshll.u32 %v2236, 16
      %v2541 = vor.u32 %v2538, %v2539
      %v2542 = vsel %vm959, %v2534, %v2541
      %v2543 = vrot.slane %v2538, 4
      %v2545 = vshrl.u32 %v2237, 16
      %v2547 = vrot.slane %v2545, 7
      %v2548 = vshll.u32 %v2237, 16
      %v2550 = vor.u32 %v2547, %v2548
      %v2551 = vsel %vm959, %v2543, %v2550
      %v2553 = vshrl.u32 %v2238, 16
      %v2555 = vrot.slane %v2553, 7
      %v2556 = vrot.slane %v2555, 4
      %v2558 = vshrl.u32 %v2239, 16
      %v2560 = vrot.slane %v2558, 7
      %v2561 = vshll.u32 %v2239, 16
      %v2563 = vor.u32 %v2560, %v2561
      %v2564 = vsel %vm959, %v2556, %v2563
      %v2565 = vrot.slane %v2560, 4
      %v2567 = vshrl.u32 %v2240, 16
      %v2569 = vrot.slane %v2567, 7
      %v2570 = vshll.u32 %v2240, 16
      %v2572 = vor.u32 %v2569, %v2570
      %v2573 = vsel %vm959, %v2565, %v2572
      %v2575 = vshrl.u32 %v2241, 16
      %v2577 = vrot.slane %v2575, 7
      %v2578 = vrot.slane %v2577, 4
      %v2580 = vshrl.u32 %v2242, 16
      %v2582 = vrot.slane %v2580, 7
      %v2583 = vshll.u32 %v2242, 16
      %v2585 = vor.u32 %v2582, %v2583
      %v2586 = vsel %vm959, %v2578, %v2585
      %v2587 = vrot.slane %v2582, 4
      %v2589 = vshrl.u32 %v2243, 16
      %v2591 = vrot.slane %v2589, 7
      %v2592 = vshll.u32 %v2243, 16
      %v2594 = vor.u32 %v2591, %v2592
      %v2595 = vsel %vm959, %v2587, %v2594
      %v2596 = vld [vmem:[%s2195 + $0x10] sm:$0x1]
      %v2597 = vld [vmem:[%s2195 + $0x24] sm:$0x1]
      %v2598 = vld [vmem:[%s2195 + $0x38] sm:$0x1]
      %v2599 = vld [vmem:[%s2195 + $0x4c] sm:$0x1]
      %v2600 = vld [vmem:[%s2195 + $0x60] sm:$0x1]
      %v2601 = vld [vmem:[%s2195 + $0x74] sm:$0x1]
      %v2602 = vld [vmem:[%s2195 + $0x88] sm:$0x1]
      %v2603 = vld [vmem:[%s2195 + $0x9c] sm:$0x1]
      %v2604 = vld [vmem:[%s2195 + $0xb0] sm:$0x1]
      %v2605 = vld [vmem:[%s2195 + $0xc4] sm:$0x1]
      %v2606 = vld [vmem:[%s2195 + $0xd8] sm:$0x1]
      %v2607 = vld [vmem:[%s2195 + $0xec] sm:$0x1]
      %v2608 = vld [vmem:[%s2195 + $0x100] sm:$0x1]
      %v2609 = vld [vmem:[%s2195 + $0x114] sm:$0x1]
      %v2610 = vld [vmem:[%s2195 + $0x128] sm:$0x1]
      %v2611 = vld [vmem:[%s2195 + $0x13c] sm:$0x1]
      %v2612 = vrot.slane %v2250, 4
      %v2613 = vrot.slane %v2253, 5
      %v2614 = vor.u32 %v2612, %v2613
      %v2615 = vrot.slane %v2614, 4
      %v2616 = vrot.slane %v2262, 5
      %v2617 = vsel %vm1330, %v2615, %v2616
      %v2618 = vrot.slane %v2259, 4
      %v2619 = vor.u32 %v2618, %v2616
      %v2620 = vrot.slane %v2619, 4
      %v2622 = vshll.u32 %v2596, 16
      %v2624 = vrot.slane %v2622, 5
      %v2625 = vsel %vm1330, %v2620, %v2624
      %v2626 = vrot.slane %v2272, 4
      %v2627 = vrot.slane %v2275, 5
      %v2628 = vor.u32 %v2626, %v2627
      %v2629 = vrot.slane %v2628, 4
      %v2630 = vrot.slane %v2284, 5
      %v2631 = vsel %vm1330, %v2629, %v2630
      %v2632 = vrot.slane %v2281, 4
      %v2633 = vor.u32 %v2632, %v2630
      %v2634 = vrot.slane %v2633, 4
      %v2636 = vshll.u32 %v2597, 16
      %v2638 = vrot.slane %v2636, 5
      %v2639 = vsel %vm1330, %v2634, %v2638
      %v2640 = vrot.slane %v2294, 4
      %v2641 = vrot.slane %v2297, 5
      %v2642 = vor.u32 %v2640, %v2641
      %v2643 = vrot.slane %v2642, 4
      %v2644 = vrot.slane %v2306, 5
      %v2645 = vsel %vm1330, %v2643, %v2644
      %v2646 = vrot.slane %v2303, 4
      %v2647 = vor.u32 %v2646, %v2644
      %v2648 = vrot.slane %v2647, 4
      %v2650 = vshll.u32 %v2598, 16
      %v2652 = vrot.slane %v2650, 5
      %v2653 = vsel %vm1330, %v2648, %v2652
      %v2654 = vrot.slane %v2316, 4
      %v2655 = vrot.slane %v2319, 5
      %v2656 = vor.u32 %v2654, %v2655
      %v2657 = vrot.slane %v2656, 4
      %v2658 = vrot.slane %v2328, 5
      %v2659 = vsel %vm1330, %v2657, %v2658
      %v2660 = vrot.slane %v2325, 4
      %v2661 = vor.u32 %v2660, %v2658
      %v2662 = vrot.slane %v2661, 4
      %v2664 = vshll.u32 %v2599, 16
      %v2666 = vrot.slane %v2664, 5
      %v2667 = vsel %vm1330, %v2662, %v2666
      %v2668 = vrot.slane %v2338, 4
      %v2669 = vrot.slane %v2341, 5
      %v2670 = vor.u32 %v2668, %v2669
      %v2671 = vrot.slane %v2670, 4
      %v2672 = vrot.slane %v2350, 5
      %v2673 = vsel %vm1330, %v2671, %v2672
      %v2674 = vrot.slane %v2347, 4
      %v2675 = vor.u32 %v2674, %v2672
      %v2676 = vrot.slane %v2675, 4
      %v2678 = vshll.u32 %v2600, 16
      %v2680 = vrot.slane %v2678, 5
      %v2681 = vsel %vm1330, %v2676, %v2680
      %v2682 = vrot.slane %v2360, 4
      %v2683 = vrot.slane %v2363, 5
      %v2684 = vor.u32 %v2682, %v2683
      %v2685 = vrot.slane %v2684, 4
      %v2686 = vrot.slane %v2372, 5
      %v2687 = vsel %vm1330, %v2685, %v2686
      %v2688 = vrot.slane %v2369, 4
      %v2689 = vor.u32 %v2688, %v2686
      %v2690 = vrot.slane %v2689, 4
      %v2692 = vshll.u32 %v2601, 16
      %v2694 = vrot.slane %v2692, 5
      %v2695 = vsel %vm1330, %v2690, %v2694
      %v2696 = vrot.slane %v2382, 4
      %v2697 = vrot.slane %v2385, 5
      %v2698 = vor.u32 %v2696, %v2697
      %v2699 = vrot.slane %v2698, 4
      %v2700 = vrot.slane %v2394, 5
      %v2701 = vsel %vm1330, %v2699, %v2700
      %v2702 = vrot.slane %v2391, 4
      %v2703 = vor.u32 %v2702, %v2700
      %v2704 = vrot.slane %v2703, 4
      %v2706 = vshll.u32 %v2602, 16
      %v2708 = vrot.slane %v2706, 5
      %v2709 = vsel %vm1330, %v2704, %v2708
      %v2710 = vrot.slane %v2404, 4
      %v2711 = vrot.slane %v2407, 5
      %v2712 = vor.u32 %v2710, %v2711
      %v2713 = vrot.slane %v2712, 4
      %v2714 = vrot.slane %v2416, 5
      %v2715 = vsel %vm1330, %v2713, %v2714
      %v2716 = vrot.slane %v2413, 4
      %v2717 = vor.u32 %v2716, %v2714
      %v2718 = vrot.slane %v2717, 4
      %v2720 = vshll.u32 %v2603, 16
      %v2722 = vrot.slane %v2720, 5
      %v2723 = vsel %vm1330, %v2718, %v2722
      %v2724 = vrot.slane %v2426, 4
      %v2725 = vrot.slane %v2429, 5
      %v2726 = vor.u32 %v2724, %v2725
      %v2727 = vrot.slane %v2726, 4
      %v2728 = vrot.slane %v2438, 5
      %v2729 = vsel %vm1330, %v2727, %v2728
      %v2730 = vrot.slane %v2435, 4
      %v2731 = vor.u32 %v2730, %v2728
      %v2732 = vrot.slane %v2731, 4
      %v2734 = vshll.u32 %v2604, 16
      %v2736 = vrot.slane %v2734, 5
      %v2737 = vsel %vm1330, %v2732, %v2736
      %v2738 = vrot.slane %v2448, 4
      %v2739 = vrot.slane %v2451, 5
      %v2740 = vor.u32 %v2738, %v2739
      %v2741 = vrot.slane %v2740, 4
      %v2742 = vrot.slane %v2460, 5
      %v2743 = vsel %vm1330, %v2741, %v2742
      %v2744 = vrot.slane %v2457, 4
      %v2745 = vor.u32 %v2744, %v2742
      %v2746 = vrot.slane %v2745, 4
      %v2748 = vshll.u32 %v2605, 16
      %v2750 = vrot.slane %v2748, 5
      %v2751 = vsel %vm1330, %v2746, %v2750
      %v2752 = vrot.slane %v2470, 4
      %v2753 = vrot.slane %v2473, 5
      %v2754 = vor.u32 %v2752, %v2753
      %v2755 = vrot.slane %v2754, 4
      %v2756 = vrot.slane %v2482, 5
      %v2757 = vsel %vm1330, %v2755, %v2756
      %v2758 = vrot.slane %v2479, 4
      %v2759 = vor.u32 %v2758, %v2756
      %v2760 = vrot.slane %v2759, 4
      %v2762 = vshll.u32 %v2606, 16
      %v2764 = vrot.slane %v2762, 5
      %v2765 = vsel %vm1330, %v2760, %v2764
      %v2766 = vrot.slane %v2492, 4
      %v2767 = vrot.slane %v2495, 5
      %v2768 = vor.u32 %v2766, %v2767
      %v2769 = vrot.slane %v2768, 4
      %v2770 = vrot.slane %v2504, 5
      %v2771 = vsel %vm1330, %v2769, %v2770
      %v2772 = vrot.slane %v2501, 4
      %v2773 = vor.u32 %v2772, %v2770
      %v2774 = vrot.slane %v2773, 4
      %v2776 = vshll.u32 %v2607, 16
      %v2778 = vrot.slane %v2776, 5
      %v2779 = vsel %vm1330, %v2774, %v2778
      %v2780 = vrot.slane %v2514, 4
      %v2781 = vrot.slane %v2517, 5
      %v2782 = vor.u32 %v2780, %v2781
      %v2783 = vrot.slane %v2782, 4
      %v2784 = vrot.slane %v2526, 5
      %v2785 = vsel %vm1330, %v2783, %v2784
      %v2786 = vrot.slane %v2523, 4
      %v2787 = vor.u32 %v2786, %v2784
      %v2788 = vrot.slane %v2787, 4
      %v2790 = vshll.u32 %v2608, 16
      %v2792 = vrot.slane %v2790, 5
      %v2793 = vsel %vm1330, %v2788, %v2792
      %v2794 = vrot.slane %v2536, 4
      %v2795 = vrot.slane %v2539, 5
      %v2796 = vor.u32 %v2794, %v2795
      %v2797 = vrot.slane %v2796, 4
      %v2798 = vrot.slane %v2548, 5
      %v2799 = vsel %vm1330, %v2797, %v2798
      %v2800 = vrot.slane %v2545, 4
      %v2801 = vor.u32 %v2800, %v2798
      %v2802 = vrot.slane %v2801, 4
      %v2804 = vshll.u32 %v2609, 16
      %v2806 = vrot.slane %v2804, 5
      %v2807 = vsel %vm1330, %v2802, %v2806
      %v2808 = vrot.slane %v2558, 4
      %v2809 = vrot.slane %v2561, 5
      %v2810 = vor.u32 %v2808, %v2809
      %v2811 = vrot.slane %v2810, 4
      %v2812 = vrot.slane %v2570, 5
      %v2813 = vsel %vm1330, %v2811, %v2812
      %v2814 = vrot.slane %v2567, 4
      %v2815 = vor.u32 %v2814, %v2812
      %v2816 = vrot.slane %v2815, 4
      %v2818 = vshll.u32 %v2610, 16
      %v2820 = vrot.slane %v2818, 5
      %v2821 = vsel %vm1330, %v2816, %v2820
      %v2822 = vrot.slane %v2580, 4
      %v2823 = vrot.slane %v2583, 5
      %v2824 = vor.u32 %v2822, %v2823
      %v2825 = vrot.slane %v2824, 4
      %v2826 = vrot.slane %v2592, 5
      %v2827 = vsel %vm1330, %v2825, %v2826
      %v2828 = vrot.slane %v2589, 4
      %v2829 = vor.u32 %v2828, %v2826
      %v2830 = vrot.slane %v2829, 4
      %v2832 = vshll.u32 %v2611, 16
      %v2834 = vrot.slane %v2832, 5
      %v2835 = vsel %vm1330, %v2830, %v2834
      %v2836 = vunpack.c.l.b16 %v972
      %v2837 = vunpack.c.l.b16 %v981
      %v2838 = vunpack.c.l.b16 %v994
      %v2839 = vunpack.c.l.b16 %v1003
      %v2840 = vunpack.c.l.b16 %v1016
      %v2841 = vunpack.c.l.b16 %v1025
      %v2842 = vunpack.c.l.b16 %v1038
      %v2843 = vunpack.c.l.b16 %v1047
      %v2844 = vunpack.c.l.b16 %v1060
      %v2845 = vunpack.c.l.b16 %v1069
      %v2846 = vunpack.c.l.b16 %v1082
      %v2847 = vunpack.c.l.b16 %v1091
      %v2848 = vunpack.c.l.b16 %v1104
      %v2849 = vunpack.c.l.b16 %v1113
      %v2850 = vunpack.c.l.b16 %v1126
      %v2851 = vunpack.c.l.b16 %v1135
      %v2852 = vunpack.c.l.b16 %v1148
      %v2853 = vunpack.c.l.b16 %v1157
      %v2854 = vunpack.c.l.b16 %v1170
      %v2855 = vunpack.c.l.b16 %v1179
      %v2856 = vunpack.c.l.b16 %v1192
      %v2857 = vunpack.c.l.b16 %v1201
      %v2858 = vunpack.c.l.b16 %v1214
      %v2859 = vunpack.c.l.b16 %v1223
      %v2860 = vunpack.c.l.b16 %v1236
      %v2861 = vunpack.c.l.b16 %v1245
      %v2862 = vunpack.c.l.b16 %v1258
      %v2863 = vunpack.c.l.b16 %v1267
      %v2864 = vunpack.c.l.b16 %v1280
      %v2865 = vunpack.c.l.b16 %v1289
      %v2866 = vunpack.c.l.b16 %v1302
      %v2867 = vunpack.c.l.b16 %v1311
      %v2868 = vpack.c.b16 %v2837, %v2836
      %v2869 = vpack.c.b16 %v2839, %v2838
      %v2870 = vpack.c.b16 %v2841, %v2840
      %v2871 = vpack.c.b16 %v2843, %v2842
      %v2872 = vpack.c.b16 %v2845, %v2844
      %v2873 = vpack.c.b16 %v2847, %v2846
      %v2874 = vpack.c.b16 %v2849, %v2848
      %v2875 = vpack.c.b16 %v2851, %v2850
      %v2876 = vpack.c.b16 %v2853, %v2852
      %v2877 = vpack.c.b16 %v2855, %v2854
      %v2878 = vpack.c.b16 %v2857, %v2856
      %v2879 = vpack.c.b16 %v2859, %v2858
      %v2880 = vpack.c.b16 %v2861, %v2860
      %v2881 = vpack.c.b16 %v2863, %v2862
      %v2882 = vpack.c.b16 %v2865, %v2864
      %v2883 = vpack.c.b16 %v2867, %v2866
      %v2916 = vunpack.c.l.b16 %v910
      %v2917 = vunpack.c.l.b16 %v911
      %v2918 = vunpack.c.l.b16 %v913
      %v2919 = vunpack.c.l.b16 %v914
      %v2920 = vunpack.c.l.b16 %v916
      %v2921 = vunpack.c.l.b16 %v917
      %v2922 = vunpack.c.l.b16 %v919
      %v2923 = vunpack.c.l.b16 %v920
      %v2924 = vunpack.c.l.b16 %v922
      %v2925 = vunpack.c.l.b16 %v923
      %v2926 = vunpack.c.l.b16 %v925
      %v2927 = vunpack.c.l.b16 %v926
      %v2928 = vunpack.c.l.b16 %v928
      %v2929 = vunpack.c.l.b16 %v929
      %v2930 = vunpack.c.l.b16 %v931
      %v2931 = vunpack.c.l.b16 %v932
      %v2932 = vunpack.c.l.b16 %v934
      %v2933 = vunpack.c.l.b16 %v935
      %v2934 = vunpack.c.l.b16 %v937
      %v2935 = vunpack.c.l.b16 %v938
      %v2936 = vunpack.c.l.b16 %v940
      %v2937 = vunpack.c.l.b16 %v941
      %v2938 = vunpack.c.l.b16 %v943
      %v2939 = vunpack.c.l.b16 %v944
      %v2940 = vunpack.c.l.b16 %v946
      %v2941 = vunpack.c.l.b16 %v947
      %v2942 = vunpack.c.l.b16 %v949
      %v2943 = vunpack.c.l.b16 %v950
      %v2944 = vunpack.c.l.b16 %v952
      %v2945 = vunpack.c.l.b16 %v953
      %v2946 = vunpack.c.l.b16 %v955
      %v2947 = vunpack.c.l.b16 %v956
      %v2948 = vpack.c.b16 %v2917, %v2916
      %v2949 = vpack.c.b16 %v2919, %v2918
      %v2950 = vpack.c.b16 %v2921, %v2920
      %v2951 = vpack.c.b16 %v2923, %v2922
      %v2952 = vpack.c.b16 %v2925, %v2924
      %v2953 = vpack.c.b16 %v2927, %v2926
      %v2954 = vpack.c.b16 %v2929, %v2928
      %v2955 = vpack.c.b16 %v2931, %v2930
      %v2956 = vpack.c.b16 %v2933, %v2932
      %v2957 = vpack.c.b16 %v2935, %v2934
      %v2958 = vpack.c.b16 %v2937, %v2936
      %v2959 = vpack.c.b16 %v2939, %v2938
      %v2960 = vpack.c.b16 %v2941, %v2940
      %v2961 = vpack.c.b16 %v2943, %v2942
      %v2962 = vpack.c.b16 %v2945, %v2944
      %v2963 = vpack.c.b16 %v2947, %v2946
      %2964 = vrot.lane.b32.xlu0 %v2948, 4
      %v2965 = vpop.permute.xlu0 %2964
      %2966 = vrot.lane.b32.xlu0 %v2949, 4
      %v2967 = vpop.permute.xlu0 %2966
      %2968 = vrot.lane.b32.xlu0 %v2950, 4
      %v2969 = vpop.permute.xlu0 %2968
      %2970 = vrot.lane.b32.xlu0 %v2951, 4
      %v2971 = vpop.permute.xlu0 %2970
      %2972 = vrot.lane.b32.xlu0 %v2952, 4
      %v2973 = vpop.permute.xlu0 %2972
      %2974 = vrot.lane.b32.xlu0 %v2953, 4
      %v2975 = vpop.permute.xlu0 %2974
      %2976 = vrot.lane.b32.xlu0 %v2954, 4
      %v2977 = vpop.permute.xlu0 %2976
      %2978 = vrot.lane.b32.xlu0 %v2955, 4
      %v2979 = vpop.permute.xlu0 %2978
      %2980 = vrot.lane.b32.xlu0 %v2956, 4
      %v2981 = vpop.permute.xlu0 %2980
      %2982 = vrot.lane.b32.xlu0 %v2957, 4
      %v2983 = vpop.permute.xlu0 %2982
      %2984 = vrot.lane.b32.xlu0 %v2958, 4
      %v2985 = vpop.permute.xlu0 %2984
      %2986 = vrot.lane.b32.xlu0 %v2959, 4
      %v2987 = vpop.permute.xlu0 %2986
      %2988 = vrot.lane.b32.xlu0 %v2960, 4
      %v2989 = vpop.permute.xlu0 %2988
      %2990 = vrot.lane.b32.xlu0 %v2961, 4
      %v2991 = vpop.permute.xlu0 %2990
      %2992 = vrot.lane.b32.xlu0 %v2962, 4
      %v2993 = vpop.permute.xlu0 %2992
      %2994 = vrot.lane.b32.xlu0 %v2963, 4
      %v2995 = vpop.permute.xlu0 %2994
      %v2996 = vunpack.c.l.b16 %v1336
      %v2997 = vunpack.c.l.b16 %v1344
      %v2998 = vunpack.c.l.b16 %v1350
      %v2999 = vunpack.c.l.b16 %v1358
      %v3000 = vunpack.c.l.b16 %v1364
      %v3001 = vunpack.c.l.b16 %v1372
      %v3002 = vunpack.c.l.b16 %v1378
      %v3003 = vunpack.c.l.b16 %v1386
      %v3004 = vunpack.c.l.b16 %v1392
      %v3005 = vunpack.c.l.b16 %v1400
      %v3006 = vunpack.c.l.b16 %v1406
      %v3007 = vunpack.c.l.b16 %v1414
      %v3008 = vunpack.c.l.b16 %v1420
      %v3009 = vunpack.c.l.b16 %v1428
      %v3010 = vunpack.c.l.b16 %v1434
      %v3011 = vunpack.c.l.b16 %v1442
      %v3012 = vunpack.c.l.b16 %v1448
      %v3013 = vunpack.c.l.b16 %v1456
      %v3014 = vunpack.c.l.b16 %v1462
      %v3015 = vunpack.c.l.b16 %v1470
      %v3016 = vunpack.c.l.b16 %v1476
      %v3017 = vunpack.c.l.b16 %v1484
      %v3018 = vunpack.c.l.b16 %v1490
      %v3019 = vunpack.c.l.b16 %v1498
      %v3020 = vunpack.c.l.b16 %v1504
      %v3021 = vunpack.c.l.b16 %v1512
      %v3022 = vunpack.c.l.b16 %v1518
      %v3023 = vunpack.c.l.b16 %v1526
      %v3024 = vunpack.c.l.b16 %v1532
      %v3025 = vunpack.c.l.b16 %v1540
      %v3026 = vunpack.c.l.b16 %v1546
      %v3027 = vunpack.c.l.b16 %v1554
      %v3028 = vpack.c.b16 %v2997, %v2996
      %v3029 = vpack.c.b16 %v2999, %v2998
      %v3030 = vpack.c.b16 %v3001, %v3000
      %v3031 = vpack.c.b16 %v3003, %v3002
      %v3032 = vpack.c.b16 %v3005, %v3004
      %v3033 = vpack.c.b16 %v3007, %v3006
      %v3034 = vpack.c.b16 %v3009, %v3008
      %v3035 = vpack.c.b16 %v3011, %v3010
      %v3036 = vpack.c.b16 %v3013, %v3012
      %v3037 = vpack.c.b16 %v3015, %v3014
      %v3038 = vpack.c.b16 %v3017, %v3016
      %v3039 = vpack.c.b16 %v3019, %v3018
      %v3040 = vpack.c.b16 %v3021, %v3020
      %v3041 = vpack.c.b16 %v3023, %v3022
      %v3042 = vpack.c.b16 %v3025, %v3024
      %v3043 = vpack.c.b16 %v3027, %v3026
      %3044 = vrot.lane.b32.xlu0 %v3028, 8
      %v3045 = vpop.permute.xlu0 %3044
      %3046 = vrot.lane.b32.xlu0 %v3029, 8
      %v3047 = vpop.permute.xlu0 %3046
      %3048 = vrot.lane.b32.xlu0 %v3030, 8
      %v3049 = vpop.permute.xlu0 %3048
      %3050 = vrot.lane.b32.xlu0 %v3031, 8
      %v3051 = vpop.permute.xlu0 %3050
      %3052 = vrot.lane.b32.xlu0 %v3032, 8
      %v3053 = vpop.permute.xlu0 %3052
      %3054 = vrot.lane.b32.xlu0 %v3033, 8
      %v3055 = vpop.permute.xlu0 %3054
      %3056 = vrot.lane.b32.xlu0 %v3034, 8
      %v3057 = vpop.permute.xlu0 %3056
      %3058 = vrot.lane.b32.xlu0 %v3035, 8
      %v3059 = vpop.permute.xlu0 %3058
      %3060 = vrot.lane.b32.xlu0 %v3036, 8
      %v3061 = vpop.permute.xlu0 %3060
      %3062 = vrot.lane.b32.xlu0 %v3037, 8
      %v3063 = vpop.permute.xlu0 %3062
      %3064 = vrot.lane.b32.xlu0 %v3038, 8
      %v3065 = vpop.permute.xlu0 %3064
      %3066 = vrot.lane.b32.xlu0 %v3039, 8
      %v3067 = vpop.permute.xlu0 %3066
      %3068 = vrot.lane.b32.xlu0 %v3040, 8
      %v3069 = vpop.permute.xlu0 %3068
      %3070 = vrot.lane.b32.xlu0 %v3041, 8
      %v3071 = vpop.permute.xlu0 %3070
      %3072 = vrot.lane.b32.xlu0 %v3042, 8
      %v3073 = vpop.permute.xlu0 %3072
      %3074 = vrot.lane.b32.xlu0 %v3043, 8
      %v3075 = vpop.permute.xlu0 %3074
      %v3076 = vunpack.c.l.b16 %v1615
      %v3077 = vunpack.c.l.b16 %v1624
      %v3078 = vunpack.c.l.b16 %v1637
      %v3079 = vunpack.c.l.b16 %v1646
      %v3080 = vunpack.c.l.b16 %v1659
      %v3081 = vunpack.c.l.b16 %v1668
      %v3082 = vunpack.c.l.b16 %v1681
      %v3083 = vunpack.c.l.b16 %v1690
      %v3084 = vunpack.c.l.b16 %v1703
      %v3085 = vunpack.c.l.b16 %v1712
      %v3086 = vunpack.c.l.b16 %v1725
      %v3087 = vunpack.c.l.b16 %v1734
      %v3088 = vunpack.c.l.b16 %v1747
      %v3089 = vunpack.c.l.b16 %v1756
      %v3090 = vunpack.c.l.b16 %v1769
      %v3091 = vunpack.c.l.b16 %v1778
      %v3092 = vunpack.c.l.b16 %v1791
      %v3093 = vunpack.c.l.b16 %v1800
      %v3094 = vunpack.c.l.b16 %v1813
      %v3095 = vunpack.c.l.b16 %v1822
      %v3096 = vunpack.c.l.b16 %v1835
      %v3097 = vunpack.c.l.b16 %v1844
      %v3098 = vunpack.c.l.b16 %v1857
      %v3099 = vunpack.c.l.b16 %v1866
      %v3100 = vunpack.c.l.b16 %v1879
      %v3101 = vunpack.c.l.b16 %v1888
      %v3102 = vunpack.c.l.b16 %v1901
      %v3103 = vunpack.c.l.b16 %v1910
      %v3104 = vunpack.c.l.b16 %v1923
      %v3105 = vunpack.c.l.b16 %v1932
      %v3106 = vunpack.c.l.b16 %v1945
      %v3107 = vunpack.c.l.b16 %v1954
      %v3108 = vpack.c.b16 %v3077, %v3076
      %v3109 = vpack.c.b16 %v3079, %v3078
      %v3110 = vpack.c.b16 %v3081, %v3080
      %v3111 = vpack.c.b16 %v3083, %v3082
      %v3112 = vpack.c.b16 %v3085, %v3084
      %v3113 = vpack.c.b16 %v3087, %v3086
      %v3114 = vpack.c.b16 %v3089, %v3088
      %v3115 = vpack.c.b16 %v3091, %v3090
      %v3116 = vpack.c.b16 %v3093, %v3092
      %v3117 = vpack.c.b16 %v3095, %v3094
      %v3118 = vpack.c.b16 %v3097, %v3096
      %v3119 = vpack.c.b16 %v3099, %v3098
      %v3120 = vpack.c.b16 %v3101, %v3100
      %v3121 = vpack.c.b16 %v3103, %v3102
      %v3122 = vpack.c.b16 %v3105, %v3104
      %v3123 = vpack.c.b16 %v3107, %v3106
      %3124 = vrot.lane.b32.xlu0 %v3108, 12
      %v3125 = vpop.permute.xlu0 %3124
      %3126 = vrot.lane.b32.xlu0 %v3109, 12
      %v3127 = vpop.permute.xlu0 %3126
      %3128 = vrot.lane.b32.xlu0 %v3110, 12
      %v3129 = vpop.permute.xlu0 %3128
      %3130 = vrot.lane.b32.xlu0 %v3111, 12
      %v3131 = vpop.permute.xlu0 %3130
      %3132 = vrot.lane.b32.xlu0 %v3112, 12
      %v3133 = vpop.permute.xlu0 %3132
      %3134 = vrot.lane.b32.xlu0 %v3113, 12
      %v3135 = vpop.permute.xlu0 %3134
      %3136 = vrot.lane.b32.xlu0 %v3114, 12
      %v3137 = vpop.permute.xlu0 %3136
      %3138 = vrot.lane.b32.xlu0 %v3115, 12
      %v3139 = vpop.permute.xlu0 %3138
      %3140 = vrot.lane.b32.xlu0 %v3116, 12
      %v3141 = vpop.permute.xlu0 %3140
      %3142 = vrot.lane.b32.xlu0 %v3117, 12
      %v3143 = vpop.permute.xlu0 %3142
      %3144 = vrot.lane.b32.xlu0 %v3118, 12
      %v3145 = vpop.permute.xlu0 %3144
      %3146 = vrot.lane.b32.xlu0 %v3119, 12
      %v3147 = vpop.permute.xlu0 %3146
      %3148 = vrot.lane.b32.xlu0 %v3120, 12
      %v3149 = vpop.permute.xlu0 %3148
      %3150 = vrot.lane.b32.xlu0 %v3121, 12
      %v3151 = vpop.permute.xlu0 %3150
      %3152 = vrot.lane.b32.xlu0 %v3122, 12
      %v3153 = vpop.permute.xlu0 %3152
      %3154 = vrot.lane.b32.xlu0 %v3123, 12
      %v3155 = vpop.permute.xlu0 %3154
      %v3188 = vunpack.c.l.b16 %v1556
      %v3189 = vunpack.c.l.b16 %v1557
      %v3190 = vunpack.c.l.b16 %v1559
      %v3191 = vunpack.c.l.b16 %v1560
      %v3192 = vunpack.c.l.b16 %v1562
      %v3193 = vunpack.c.l.b16 %v1563
      %v3194 = vunpack.c.l.b16 %v1565
      %v3195 = vunpack.c.l.b16 %v1566
      %v3196 = vunpack.c.l.b16 %v1568
      %v3197 = vunpack.c.l.b16 %v1569
      %v3198 = vunpack.c.l.b16 %v1571
      %v3199 = vunpack.c.l.b16 %v1572
      %v3200 = vunpack.c.l.b16 %v1574
      %v3201 = vunpack.c.l.b16 %v1575
      %v3202 = vunpack.c.l.b16 %v1577
      %v3203 = vunpack.c.l.b16 %v1578
      %v3204 = vunpack.c.l.b16 %v1580
      %v3205 = vunpack.c.l.b16 %v1581
      %v3206 = vunpack.c.l.b16 %v1583
      %v3207 = vunpack.c.l.b16 %v1584
      %v3208 = vunpack.c.l.b16 %v1586
      %v3209 = vunpack.c.l.b16 %v1587
      %v3210 = vunpack.c.l.b16 %v1589
      %v3211 = vunpack.c.l.b16 %v1590
      %v3212 = vunpack.c.l.b16 %v1592
      %v3213 = vunpack.c.l.b16 %v1593
      %v3214 = vunpack.c.l.b16 %v1595
      %v3215 = vunpack.c.l.b16 %v1596
      %v3216 = vunpack.c.l.b16 %v1598
      %v3217 = vunpack.c.l.b16 %v1599
      %v3218 = vunpack.c.l.b16 %v1601
      %v3219 = vunpack.c.l.b16 %v1602
      %v3220 = vpack.c.b16 %v3189, %v3188
      %v3221 = vpack.c.b16 %v3191, %v3190
      %v3222 = vpack.c.b16 %v3193, %v3192
      %v3223 = vpack.c.b16 %v3195, %v3194
      %v3224 = vpack.c.b16 %v3197, %v3196
      %v3225 = vpack.c.b16 %v3199, %v3198
      %v3226 = vpack.c.b16 %v3201, %v3200
      %v3227 = vpack.c.b16 %v3203, %v3202
      %v3228 = vpack.c.b16 %v3205, %v3204
      %v3229 = vpack.c.b16 %v3207, %v3206
      %v3230 = vpack.c.b16 %v3209, %v3208
      %v3231 = vpack.c.b16 %v3211, %v3210
      %v3232 = vpack.c.b16 %v3213, %v3212
      %v3233 = vpack.c.b16 %v3215, %v3214
      %v3234 = vpack.c.b16 %v3217, %v3216
      %v3235 = vpack.c.b16 %v3219, %v3218
      %3236 = vrot.lane.b32.xlu0 %v3220, 16
      %v3237 = vpop.permute.xlu0 %3236
      %3238 = vrot.lane.b32.xlu0 %v3221, 16
      %v3239 = vpop.permute.xlu0 %3238
      %3240 = vrot.lane.b32.xlu0 %v3222, 16
      %v3241 = vpop.permute.xlu0 %3240
      %3242 = vrot.lane.b32.xlu0 %v3223, 16
      %v3243 = vpop.permute.xlu0 %3242
      %3244 = vrot.lane.b32.xlu0 %v3224, 16
      %v3245 = vpop.permute.xlu0 %3244
      %3246 = vrot.lane.b32.xlu0 %v3225, 16
      %v3247 = vpop.permute.xlu0 %3246
      %3248 = vrot.lane.b32.xlu0 %v3226, 16
      %v3249 = vpop.permute.xlu0 %3248
      %3250 = vrot.lane.b32.xlu0 %v3227, 16
      %v3251 = vpop.permute.xlu0 %3250
      %3252 = vrot.lane.b32.xlu0 %v3228, 16
      %v3253 = vpop.permute.xlu0 %3252
      %3254 = vrot.lane.b32.xlu0 %v3229, 16
      %v3255 = vpop.permute.xlu0 %3254
      %3256 = vrot.lane.b32.xlu0 %v3230, 16
      %v3257 = vpop.permute.xlu0 %3256
      %3258 = vrot.lane.b32.xlu0 %v3231, 16
      %v3259 = vpop.permute.xlu0 %3258
      %3260 = vrot.lane.b32.xlu0 %v3232, 16
      %v3261 = vpop.permute.xlu0 %3260
      %3262 = vrot.lane.b32.xlu0 %v3233, 16
      %v3263 = vpop.permute.xlu0 %3262
      %3264 = vrot.lane.b32.xlu0 %v3234, 16
      %v3265 = vpop.permute.xlu0 %3264
      %3266 = vrot.lane.b32.xlu0 %v3235, 16
      %v3267 = vpop.permute.xlu0 %3266
      %v3268 = vunpack.c.l.b16 %v1976
      %v3269 = vunpack.c.l.b16 %v1984
      %v3270 = vunpack.c.l.b16 %v1990
      %v3271 = vunpack.c.l.b16 %v1998
      %v3272 = vunpack.c.l.b16 %v2004
      %v3273 = vunpack.c.l.b16 %v2012
      %v3274 = vunpack.c.l.b16 %v2018
      %v3275 = vunpack.c.l.b16 %v2026
      %v3276 = vunpack.c.l.b16 %v2032
      %v3277 = vunpack.c.l.b16 %v2040
      %v3278 = vunpack.c.l.b16 %v2046
      %v3279 = vunpack.c.l.b16 %v2054
      %v3280 = vunpack.c.l.b16 %v2060
      %v3281 = vunpack.c.l.b16 %v2068
      %v3282 = vunpack.c.l.b16 %v2074
      %v3283 = vunpack.c.l.b16 %v2082
      %v3284 = vunpack.c.l.b16 %v2088
      %v3285 = vunpack.c.l.b16 %v2096
      %v3286 = vunpack.c.l.b16 %v2102
      %v3287 = vunpack.c.l.b16 %v2110
      %v3288 = vunpack.c.l.b16 %v2116
      %v3289 = vunpack.c.l.b16 %v2124
      %v3290 = vunpack.c.l.b16 %v2130
      %v3291 = vunpack.c.l.b16 %v2138
      %v3292 = vunpack.c.l.b16 %v2144
      %v3293 = vunpack.c.l.b16 %v2152
      %v3294 = vunpack.c.l.b16 %v2158
      %v3295 = vunpack.c.l.b16 %v2166
      %v3296 = vunpack.c.l.b16 %v2172
      %v3297 = vunpack.c.l.b16 %v2180
      %v3298 = vunpack.c.l.b16 %v2186
      %v3299 = vunpack.c.l.b16 %v2194
      %v3300 = vpack.c.b16 %v3269, %v3268
      %v3301 = vpack.c.b16 %v3271, %v3270
      %v3302 = vpack.c.b16 %v3273, %v3272
      %v3303 = vpack.c.b16 %v3275, %v3274
      %v3304 = vpack.c.b16 %v3277, %v3276
      %v3305 = vpack.c.b16 %v3279, %v3278
      %v3306 = vpack.c.b16 %v3281, %v3280
      %v3307 = vpack.c.b16 %v3283, %v3282
      %v3308 = vpack.c.b16 %v3285, %v3284
      %v3309 = vpack.c.b16 %v3287, %v3286
      %v3310 = vpack.c.b16 %v3289, %v3288
      %v3311 = vpack.c.b16 %v3291, %v3290
      %v3312 = vpack.c.b16 %v3293, %v3292
      %v3313 = vpack.c.b16 %v3295, %v3294
      %v3314 = vpack.c.b16 %v3297, %v3296
      %v3315 = vpack.c.b16 %v3299, %v3298
      %3316 = vrot.lane.b32.xlu0 %v3300, 20
      %v3317 = vpop.permute.xlu0 %3316
      %3318 = vrot.lane.b32.xlu0 %v3301, 20
      %v3319 = vpop.permute.xlu0 %3318
      %3320 = vrot.lane.b32.xlu0 %v3302, 20
      %v3321 = vpop.permute.xlu0 %3320
      %3322 = vrot.lane.b32.xlu0 %v3303, 20
      %v3323 = vpop.permute.xlu0 %3322
      %3324 = vrot.lane.b32.xlu0 %v3304, 20
      %v3325 = vpop.permute.xlu0 %3324
      %3326 = vrot.lane.b32.xlu0 %v3305, 20
      %v3327 = vpop.permute.xlu0 %3326
      %3328 = vrot.lane.b32.xlu0 %v3306, 20
      %v3329 = vpop.permute.xlu0 %3328
      %3330 = vrot.lane.b32.xlu0 %v3307, 20
      %v3331 = vpop.permute.xlu0 %3330
      %3332 = vrot.lane.b32.xlu0 %v3308, 20
      %v3333 = vpop.permute.xlu0 %3332
      %3334 = vrot.lane.b32.xlu0 %v3309, 20
      %v3335 = vpop.permute.xlu0 %3334
      %3336 = vrot.lane.b32.xlu0 %v3310, 20
      %v3337 = vpop.permute.xlu0 %3336
      %3338 = vrot.lane.b32.xlu0 %v3311, 20
      %v3339 = vpop.permute.xlu0 %3338
      %3340 = vrot.lane.b32.xlu0 %v3312, 20
      %v3341 = vpop.permute.xlu0 %3340
      %3342 = vrot.lane.b32.xlu0 %v3313, 20
      %v3343 = vpop.permute.xlu0 %3342
      %3344 = vrot.lane.b32.xlu0 %v3314, 20
      %v3345 = vpop.permute.xlu0 %3344
      %3346 = vrot.lane.b32.xlu0 %v3315, 20
      %v3347 = vpop.permute.xlu0 %3346
      %v3348 = vunpack.c.l.b16 %v2256
      %v3349 = vunpack.c.l.b16 %v2265
      %v3350 = vunpack.c.l.b16 %v2278
      %v3351 = vunpack.c.l.b16 %v2287
      %v3352 = vunpack.c.l.b16 %v2300
      %v3353 = vunpack.c.l.b16 %v2309
      %v3354 = vunpack.c.l.b16 %v2322
      %v3355 = vunpack.c.l.b16 %v2331
      %v3356 = vunpack.c.l.b16 %v2344
      %v3357 = vunpack.c.l.b16 %v2353
      %v3358 = vunpack.c.l.b16 %v2366
      %v3359 = vunpack.c.l.b16 %v2375
      %v3360 = vunpack.c.l.b16 %v2388
      %v3361 = vunpack.c.l.b16 %v2397
      %v3362 = vunpack.c.l.b16 %v2410
      %v3363 = vunpack.c.l.b16 %v2419
      %v3364 = vunpack.c.l.b16 %v2432
      %v3365 = vunpack.c.l.b16 %v2441
      %v3366 = vunpack.c.l.b16 %v2454
      %v3367 = vunpack.c.l.b16 %v2463
      %v3368 = vunpack.c.l.b16 %v2476
      %v3369 = vunpack.c.l.b16 %v2485
      %v3370 = vunpack.c.l.b16 %v2498
      %v3371 = vunpack.c.l.b16 %v2507
      %v3372 = vunpack.c.l.b16 %v2520
      %v3373 = vunpack.c.l.b16 %v2529
      %v3374 = vunpack.c.l.b16 %v2542
      %v3375 = vunpack.c.l.b16 %v2551
      %v3376 = vunpack.c.l.b16 %v2564
      %v3377 = vunpack.c.l.b16 %v2573
      %v3378 = vunpack.c.l.b16 %v2586
      %v3379 = vunpack.c.l.b16 %v2595
      %v3380 = vpack.c.b16 %v3349, %v3348
      %v3381 = vpack.c.b16 %v3351, %v3350
      %v3382 = vpack.c.b16 %v3353, %v3352
      %v3383 = vpack.c.b16 %v3355, %v3354
      %v3384 = vpack.c.b16 %v3357, %v3356
      %v3385 = vpack.c.b16 %v3359, %v3358
      %v3386 = vpack.c.b16 %v3361, %v3360
      %v3387 = vpack.c.b16 %v3363, %v3362
      %v3388 = vpack.c.b16 %v3365, %v3364
      %v3389 = vpack.c.b16 %v3367, %v3366
      %v3390 = vpack.c.b16 %v3369, %v3368
      %v3391 = vpack.c.b16 %v3371, %v3370
      %v3392 = vpack.c.b16 %v3373, %v3372
      %v3393 = vpack.c.b16 %v3375, %v3374
      %v3394 = vpack.c.b16 %v3377, %v3376
      %v3395 = vpack.c.b16 %v3379, %v3378
      %3396 = vrot.lane.b32.xlu0 %v3380, 24
      %v3397 = vpop.permute.xlu0 %3396
      %3398 = vrot.lane.b32.xlu0 %v3381, 24
      %v3399 = vpop.permute.xlu0 %3398
      %3400 = vrot.lane.b32.xlu0 %v3382, 24
      %v3401 = vpop.permute.xlu0 %3400
      %3402 = vrot.lane.b32.xlu0 %v3383, 24
      %v3403 = vpop.permute.xlu0 %3402
      %3404 = vrot.lane.b32.xlu0 %v3384, 24
      %v3405 = vpop.permute.xlu0 %3404
      %3406 = vrot.lane.b32.xlu0 %v3385, 24
      %v3407 = vpop.permute.xlu0 %3406
      %3408 = vrot.lane.b32.xlu0 %v3386, 24
      %v3409 = vpop.permute.xlu0 %3408
      %3410 = vrot.lane.b32.xlu0 %v3387, 24
      %v3411 = vpop.permute.xlu0 %3410
      %3412 = vrot.lane.b32.xlu0 %v3388, 24
      %v3413 = vpop.permute.xlu0 %3412
      %3414 = vrot.lane.b32.xlu0 %v3389, 24
      %v3415 = vpop.permute.xlu0 %3414
      %3416 = vrot.lane.b32.xlu0 %v3390, 24
      %v3417 = vpop.permute.xlu0 %3416
      %3418 = vrot.lane.b32.xlu0 %v3391, 24
      %v3419 = vpop.permute.xlu0 %3418
      %3420 = vrot.lane.b32.xlu0 %v3392, 24
      %v3421 = vpop.permute.xlu0 %3420
      %3422 = vrot.lane.b32.xlu0 %v3393, 24
      %v3423 = vpop.permute.xlu0 %3422
      %3424 = vrot.lane.b32.xlu0 %v3394, 24
      %v3425 = vpop.permute.xlu0 %3424
      %3426 = vrot.lane.b32.xlu0 %v3395, 24
      %v3427 = vpop.permute.xlu0 %3426
      %v3460 = vunpack.c.l.b16 %v2197
      %v3461 = vunpack.c.l.b16 %v2198
      %v3462 = vunpack.c.l.b16 %v2200
      %v3463 = vunpack.c.l.b16 %v2201
      %v3464 = vunpack.c.l.b16 %v2203
      %v3465 = vunpack.c.l.b16 %v2204
      %v3466 = vunpack.c.l.b16 %v2206
      %v3467 = vunpack.c.l.b16 %v2207
      %v3468 = vunpack.c.l.b16 %v2209
      %v3469 = vunpack.c.l.b16 %v2210
      %v3470 = vunpack.c.l.b16 %v2212
      %v3471 = vunpack.c.l.b16 %v2213
      %v3472 = vunpack.c.l.b16 %v2215
      %v3473 = vunpack.c.l.b16 %v2216
      %v3474 = vunpack.c.l.b16 %v2218
      %v3475 = vunpack.c.l.b16 %v2219
      %v3476 = vunpack.c.l.b16 %v2221
      %v3477 = vunpack.c.l.b16 %v2222
      %v3478 = vunpack.c.l.b16 %v2224
      %v3479 = vunpack.c.l.b16 %v2225
      %v3480 = vunpack.c.l.b16 %v2227
      %v3481 = vunpack.c.l.b16 %v2228
      %v3482 = vunpack.c.l.b16 %v2230
      %v3483 = vunpack.c.l.b16 %v2231
      %v3484 = vunpack.c.l.b16 %v2233
      %v3485 = vunpack.c.l.b16 %v2234
      %v3486 = vunpack.c.l.b16 %v2236
      %v3487 = vunpack.c.l.b16 %v2237
      %v3488 = vunpack.c.l.b16 %v2239
      %v3489 = vunpack.c.l.b16 %v2240
      %v3490 = vunpack.c.l.b16 %v2242
      %v3491 = vunpack.c.l.b16 %v2243
      %v3492 = vpack.c.b16 %v3461, %v3460
      %v3493 = vpack.c.b16 %v3463, %v3462
      %v3494 = vpack.c.b16 %v3465, %v3464
      %v3495 = vpack.c.b16 %v3467, %v3466
      %v3496 = vpack.c.b16 %v3469, %v3468
      %v3497 = vpack.c.b16 %v3471, %v3470
      %v3498 = vpack.c.b16 %v3473, %v3472
      %v3499 = vpack.c.b16 %v3475, %v3474
      %v3500 = vpack.c.b16 %v3477, %v3476
      %v3501 = vpack.c.b16 %v3479, %v3478
      %v3502 = vpack.c.b16 %v3481, %v3480
      %v3503 = vpack.c.b16 %v3483, %v3482
      %v3504 = vpack.c.b16 %v3485, %v3484
      %v3505 = vpack.c.b16 %v3487, %v3486
      %v3506 = vpack.c.b16 %v3489, %v3488
      %v3507 = vpack.c.b16 %v3491, %v3490
      %3508 = vrot.lane.b32.xlu0 %v3492, 28
      %v3509 = vpop.permute.xlu0 %3508
      %3510 = vrot.lane.b32.xlu0 %v3493, 28
      %v3511 = vpop.permute.xlu0 %3510
      %3512 = vrot.lane.b32.xlu0 %v3494, 28
      %v3513 = vpop.permute.xlu0 %3512
      %3514 = vrot.lane.b32.xlu0 %v3495, 28
      %v3515 = vpop.permute.xlu0 %3514
      %3516 = vrot.lane.b32.xlu0 %v3496, 28
      %v3517 = vpop.permute.xlu0 %3516
      %3518 = vrot.lane.b32.xlu0 %v3497, 28
      %v3519 = vpop.permute.xlu0 %3518
      %3520 = vrot.lane.b32.xlu0 %v3498, 28
      %v3521 = vpop.permute.xlu0 %3520
      %3522 = vrot.lane.b32.xlu0 %v3499, 28
      %v3523 = vpop.permute.xlu0 %3522
      %3524 = vrot.lane.b32.xlu0 %v3500, 28
      %v3525 = vpop.permute.xlu0 %3524
      %3526 = vrot.lane.b32.xlu0 %v3501, 28
      %v3527 = vpop.permute.xlu0 %3526
      %3528 = vrot.lane.b32.xlu0 %v3502, 28
      %v3529 = vpop.permute.xlu0 %3528
      %3530 = vrot.lane.b32.xlu0 %v3503, 28
      %v3531 = vpop.permute.xlu0 %3530
      %3532 = vrot.lane.b32.xlu0 %v3504, 28
      %v3533 = vpop.permute.xlu0 %3532
      %3534 = vrot.lane.b32.xlu0 %v3505, 28
      %v3535 = vpop.permute.xlu0 %3534
      %3536 = vrot.lane.b32.xlu0 %v3506, 28
      %v3537 = vpop.permute.xlu0 %3536
      %3538 = vrot.lane.b32.xlu0 %v3507, 28
      %v3539 = vpop.permute.xlu0 %3538
      %v3540 = vunpack.c.l.b16 %v2617
      %v3541 = vunpack.c.l.b16 %v2625
      %v3542 = vunpack.c.l.b16 %v2631
      %v3543 = vunpack.c.l.b16 %v2639
      %v3544 = vunpack.c.l.b16 %v2645
      %v3545 = vunpack.c.l.b16 %v2653
      %v3546 = vunpack.c.l.b16 %v2659
      %v3547 = vunpack.c.l.b16 %v2667
      %v3548 = vunpack.c.l.b16 %v2673
      %v3549 = vunpack.c.l.b16 %v2681
      %v3550 = vunpack.c.l.b16 %v2687
      %v3551 = vunpack.c.l.b16 %v2695
      %v3552 = vunpack.c.l.b16 %v2701
      %v3553 = vunpack.c.l.b16 %v2709
      %v3554 = vunpack.c.l.b16 %v2715
      %v3555 = vunpack.c.l.b16 %v2723
      %v3556 = vunpack.c.l.b16 %v2729
      %v3557 = vunpack.c.l.b16 %v2737
      %v3558 = vunpack.c.l.b16 %v2743
      %v3559 = vunpack.c.l.b16 %v2751
      %v3560 = vunpack.c.l.b16 %v2757
      %v3561 = vunpack.c.l.b16 %v2765
      %v3562 = vunpack.c.l.b16 %v2771
      %v3563 = vunpack.c.l.b16 %v2779
      %v3564 = vunpack.c.l.b16 %v2785
      %v3565 = vunpack.c.l.b16 %v2793
      %v3566 = vunpack.c.l.b16 %v2799
      %v3567 = vunpack.c.l.b16 %v2807
      %v3568 = vunpack.c.l.b16 %v2813
      %v3569 = vunpack.c.l.b16 %v2821
      %v3570 = vunpack.c.l.b16 %v2827
      %v3571 = vunpack.c.l.b16 %v2835
      %v3572 = vpack.c.b16 %v3541, %v3540
      %v3573 = vpack.c.b16 %v3543, %v3542
      %v3574 = vpack.c.b16 %v3545, %v3544
      %v3575 = vpack.c.b16 %v3547, %v3546
      %v3576 = vpack.c.b16 %v3549, %v3548
      %v3577 = vpack.c.b16 %v3551, %v3550
      %v3578 = vpack.c.b16 %v3553, %v3552
      %v3579 = vpack.c.b16 %v3555, %v3554
      %v3580 = vpack.c.b16 %v3557, %v3556
      %v3581 = vpack.c.b16 %v3559, %v3558
      %v3582 = vpack.c.b16 %v3561, %v3560
      %v3583 = vpack.c.b16 %v3563, %v3562
      %v3584 = vpack.c.b16 %v3565, %v3564
      %v3585 = vpack.c.b16 %v3567, %v3566
      %v3586 = vpack.c.b16 %v3569, %v3568
      %v3587 = vpack.c.b16 %v3571, %v3570
      %3588 = vrot.lane.b32.xlu0 %v3572, 32
      %v3589 = vpop.permute.xlu0 %3588
      %3590 = vrot.lane.b32.xlu0 %v3573, 32
      %v3591 = vpop.permute.xlu0 %3590
      %3592 = vrot.lane.b32.xlu0 %v3574, 32
      %v3593 = vpop.permute.xlu0 %3592
      %3594 = vrot.lane.b32.xlu0 %v3575, 32
      %v3595 = vpop.permute.xlu0 %3594
      %3596 = vrot.lane.b32.xlu0 %v3576, 32
      %v3597 = vpop.permute.xlu0 %3596
      %3598 = vrot.lane.b32.xlu0 %v3577, 32
      %v3599 = vpop.permute.xlu0 %3598
      %3600 = vrot.lane.b32.xlu0 %v3578, 32
      %v3601 = vpop.permute.xlu0 %3600
      %3602 = vrot.lane.b32.xlu0 %v3579, 32
      %v3603 = vpop.permute.xlu0 %3602
      %3604 = vrot.lane.b32.xlu0 %v3580, 32
      %v3605 = vpop.permute.xlu0 %3604
      %3606 = vrot.lane.b32.xlu0 %v3581, 32
      %v3607 = vpop.permute.xlu0 %3606
      %3608 = vrot.lane.b32.xlu0 %v3582, 32
      %v3609 = vpop.permute.xlu0 %3608
      %3610 = vrot.lane.b32.xlu0 %v3583, 32
      %v3611 = vpop.permute.xlu0 %3610
      %3612 = vrot.lane.b32.xlu0 %v3584, 32
      %v3613 = vpop.permute.xlu0 %3612
      %3614 = vrot.lane.b32.xlu0 %v3585, 32
      %v3615 = vpop.permute.xlu0 %3614
      %3616 = vrot.lane.b32.xlu0 %v3586, 32
      %v3617 = vpop.permute.xlu0 %3616
      %3618 = vrot.lane.b32.xlu0 %v3587, 32
      %v3619 = vpop.permute.xlu0 %3618
      %v3622 = vsel %vm454, %v2868, %v2965
      %v3625 = vsel %vm454, %v2869, %v2967
      %v3628 = vsel %vm454, %v2870, %v2969
      %v3631 = vsel %vm454, %v2871, %v2971
      %v3634 = vsel %vm454, %v2872, %v2973
      %v3637 = vsel %vm454, %v2873, %v2975
      %v3640 = vsel %vm454, %v2874, %v2977
      %v3643 = vsel %vm454, %v2875, %v2979
      %v3646 = vsel %vm454, %v2876, %v2981
      %v3649 = vsel %vm454, %v2877, %v2983
      %v3652 = vsel %vm454, %v2878, %v2985
      %v3655 = vsel %vm454, %v2879, %v2987
      %v3658 = vsel %vm454, %v2880, %v2989
      %v3661 = vsel %vm454, %v2881, %v2991
      %v3664 = vsel %vm454, %v2882, %v2993
      %v3667 = vsel %vm454, %v2883, %v2995
      %vm3668 = vcmask 64512
      %v3670 = vsel %vm3668, %v3622, %v3045
      %v3672 = vsel %vm3668, %v3625, %v3047
      %v3674 = vsel %vm3668, %v3628, %v3049
      %v3676 = vsel %vm3668, %v3631, %v3051
      %v3678 = vsel %vm3668, %v3634, %v3053
      %v3680 = vsel %vm3668, %v3637, %v3055
      %v3682 = vsel %vm3668, %v3640, %v3057
      %v3684 = vsel %vm3668, %v3643, %v3059
      %v3686 = vsel %vm3668, %v3646, %v3061
      %v3688 = vsel %vm3668, %v3649, %v3063
      %v3690 = vsel %vm3668, %v3652, %v3065
      %v3692 = vsel %vm3668, %v3655, %v3067
      %v3694 = vsel %vm3668, %v3658, %v3069
      %v3696 = vsel %vm3668, %v3661, %v3071
      %v3698 = vsel %vm3668, %v3664, %v3073
      %v3700 = vsel %vm3668, %v3667, %v3075
      %vm3701 = vcmask 97280
      %v3703 = vsel %vm3701, %v3670, %v3125
      %v3705 = vsel %vm3701, %v3672, %v3127
      %v3707 = vsel %vm3701, %v3674, %v3129
      %v3709 = vsel %vm3701, %v3676, %v3131
      %v3711 = vsel %vm3701, %v3678, %v3133
      %v3713 = vsel %vm3701, %v3680, %v3135
      %v3715 = vsel %vm3701, %v3682, %v3137
      %v3717 = vsel %vm3701, %v3684, %v3139
      %v3719 = vsel %vm3701, %v3686, %v3141
      %v3721 = vsel %vm3701, %v3688, %v3143
      %v3723 = vsel %vm3701, %v3690, %v3145
      %v3725 = vsel %vm3701, %v3692, %v3147
      %v3727 = vsel %vm3701, %v3694, %v3149
      %v3729 = vsel %vm3701, %v3696, %v3151
      %v3731 = vsel %vm3701, %v3698, %v3153
      %v3733 = vsel %vm3701, %v3700, %v3155
      %vm3734 = vcmask 130048
      %v3736 = vsel %vm3734, %v3703, %v3237
      %v3738 = vsel %vm3734, %v3705, %v3239
      %v3740 = vsel %vm3734, %v3707, %v3241
      %v3742 = vsel %vm3734, %v3709, %v3243
      %v3744 = vsel %vm3734, %v3711, %v3245
      %v3746 = vsel %vm3734, %v3713, %v3247
      %v3748 = vsel %vm3734, %v3715, %v3249
      %v3750 = vsel %vm3734, %v3717, %v3251
      %v3752 = vsel %vm3734, %v3719, %v3253
      %v3754 = vsel %vm3734, %v3721, %v3255
      %v3756 = vsel %vm3734, %v3723, %v3257
      %v3758 = vsel %vm3734, %v3725, %v3259
      %v3760 = vsel %vm3734, %v3727, %v3261
      %v3762 = vsel %vm3734, %v3729, %v3263
      %v3764 = vsel %vm3734, %v3731, %v3265
      %v3766 = vsel %vm3734, %v3733, %v3267
      %vm3767 = vcmask 162816
      %v3769 = vsel %vm3767, %v3736, %v3317
      %v3771 = vsel %vm3767, %v3738, %v3319
      %v3773 = vsel %vm3767, %v3740, %v3321
      %v3775 = vsel %vm3767, %v3742, %v3323
      %v3777 = vsel %vm3767, %v3744, %v3325
      %v3779 = vsel %vm3767, %v3746, %v3327
      %v3781 = vsel %vm3767, %v3748, %v3329
      %v3783 = vsel %vm3767, %v3750, %v3331
      %v3785 = vsel %vm3767, %v3752, %v3333
      %v3787 = vsel %vm3767, %v3754, %v3335
      %v3789 = vsel %vm3767, %v3756, %v3337
      %v3791 = vsel %vm3767, %v3758, %v3339
      %v3793 = vsel %vm3767, %v3760, %v3341
      %v3795 = vsel %vm3767, %v3762, %v3343
      %v3797 = vsel %vm3767, %v3764, %v3345
      %v3799 = vsel %vm3767, %v3766, %v3347
      %vm3800 = vcmask 195584
      %v3802 = vsel %vm3800, %v3769, %v3397
      %v3804 = vsel %vm3800, %v3771, %v3399
      %v3806 = vsel %vm3800, %v3773, %v3401
      %v3808 = vsel %vm3800, %v3775, %v3403
      %v3810 = vsel %vm3800, %v3777, %v3405
      %v3812 = vsel %vm3800, %v3779, %v3407
      %v3814 = vsel %vm3800, %v3781, %v3409
      %v3816 = vsel %vm3800, %v3783, %v3411
      %v3818 = vsel %vm3800, %v3785, %v3413
      %v3820 = vsel %vm3800, %v3787, %v3415
      %v3822 = vsel %vm3800, %v3789, %v3417
      %v3824 = vsel %vm3800, %v3791, %v3419
      %v3826 = vsel %vm3800, %v3793, %v3421
      %v3828 = vsel %vm3800, %v3795, %v3423
      %v3830 = vsel %vm3800, %v3797, %v3425
      %v3832 = vsel %vm3800, %v3799, %v3427
      %vm3833 = vcmask 228352
      %v3835 = vsel %vm3833, %v3802, %v3509
      %v3837 = vsel %vm3833, %v3804, %v3511
      %v3839 = vsel %vm3833, %v3806, %v3513
      %v3841 = vsel %vm3833, %v3808, %v3515
      %v3843 = vsel %vm3833, %v3810, %v3517
      %v3845 = vsel %vm3833, %v3812, %v3519
      %v3847 = vsel %vm3833, %v3814, %v3521
      %v3849 = vsel %vm3833, %v3816, %v3523
      %v3851 = vsel %vm3833, %v3818, %v3525
      %v3853 = vsel %vm3833, %v3820, %v3527
      %v3855 = vsel %vm3833, %v3822, %v3529
      %v3857 = vsel %vm3833, %v3824, %v3531
      %v3859 = vsel %vm3833, %v3826, %v3533
      %v3861 = vsel %vm3833, %v3828, %v3535
      %v3863 = vsel %vm3833, %v3830, %v3537
      %v3865 = vsel %vm3833, %v3832, %v3539
      %vm3866 = vcmask 261120
      %v3868 = vsel %vm3866, %v3835, %v3589
      %v3870 = vsel %vm3866, %v3837, %v3591
      %v3872 = vsel %vm3866, %v3839, %v3593
      %v3874 = vsel %vm3866, %v3841, %v3595
      %v3876 = vsel %vm3866, %v3843, %v3597
      %v3878 = vsel %vm3866, %v3845, %v3599
      %v3880 = vsel %vm3866, %v3847, %v3601
      %v3882 = vsel %vm3866, %v3849, %v3603
      %v3884 = vsel %vm3866, %v3851, %v3605
      %v3886 = vsel %vm3866, %v3853, %v3607
      %v3888 = vsel %vm3866, %v3855, %v3609
      %v3890 = vsel %vm3866, %v3857, %v3611
      %v3892 = vsel %vm3866, %v3859, %v3613
      %v3894 = vsel %vm3866, %v3861, %v3615
      %v3896 = vsel %vm3866, %v3863, %v3617
      %v3898 = vsel %vm3866, %v3865, %v3619
      %v3899 = vld [vmem:[%s2] sm:$0xf]
      %v3900 = vld [vmem:[%s2 + $0x4] sm:$0xf]
      %v3901 = vld [vmem:[%s2 + $0x8] sm:$0xf]
      %v3902 = vld [vmem:[%s2 + $0xc] sm:$0xf]
      %v3903 = vld [vmem:[%s2 + $0x10] sm:$0x3]
      %v3904 = vld [vmem:[%s6] sm:$0x1]
      %v3906 = vlaneseq
      %v3907 = vshrl.u32 %v3906, 7
      %v3908 = vsub.s32 0, %v3907
      %v3909 = vrot.slane %v3904, %v3908
      %v3916 = vunpack.c.l.b16 %v3899
      %v3917 = vunpack.c.l.b16 %v3900
      %v3918 = vunpack.c.l.b16 %v3901
      %v3919 = vunpack.c.l.b16 %v3902
      %v3920 = vunpack.c.l.b16 %v3903
      %v3921 = vpack.c.b16 %v3917, %v3916
      %v3922 = vpack.c.b16 %v3919, %v3918
      %v3923 = vpack.c.b16 %v3920, %v3920
      %vm3926 = vcmask 293888
      %v3927 = vsel %vm3926, %v3868, 0
      %v3929 = vsel %vm3926, %v3870, 0
      %v3931 = vsel %vm3926, %v3872, 0
      %v3933 = vsel %vm3926, %v3874, 0
      %v3935 = vsel %vm3926, %v3876, 0
      %v3937 = vsel %vm3926, %v3878, 0
      %v3939 = vsel %vm3926, %v3880, 0
      %v3941 = vsel %vm3926, %v3882, 0
      %v3943 = vsel %vm3926, %v3884, 0
      %v3945 = vsel %vm3926, %v3886, 0
      %v3947 = vsel %vm3926, %v3888, 0
      %v3949 = vsel %vm3926, %v3890, 0
      %v3951 = vsel %vm3926, %v3892, 0
      %v3953 = vsel %vm3926, %v3894, 0
      %v3955 = vsel %vm3926, %v3896, 0
      %v3957 = vsel %vm3926, %v3898, 0
      %v3960 = vsel %vm503, %v3923, 0
      %3962 = vmatprep.subr.bf16.mxu0 0
      %3963 = vmatpush1.bf16.msra.mxu0 %v3921
      %3964 = vmatprep.subr.bf16.mxu0 0
      %3965 = vmatpush1.bf16.msra.mxu0 %v3922
      %3966 = vmatprep.subr.bf16.mxu0 0
      %3967 = vmatpush1.bf16.msra.mxu0 %v3960
      %3968 = vmatprep.subr.bf16.mxu0 0
      %3969 = vmatpush1.bf16.msra.mxu0 0
      %3970 = vmatprep.subr.bf16.mxu0 0
      %3971 = vmatpush1.bf16.msra.mxu0 0
      %3972 = vmatprep.subr.bf16.mxu0 0
      %3973 = vmatpush1.bf16.msra.mxu0 0
      %3974 = vmatprep.subr.bf16.mxu0 0
      %3975 = vmatpush1.bf16.msra.mxu0 0
      %3976 = vmatprep.subr.bf16.mxu0 0
      %3977 = vmatpush1.bf16.msra.mxu0 0
      %3978 = vmatprep.subr.bf16.mxu0 0
      %3979 = vmatpush1.bf16.msra.mxu0 0
      %3980 = vmatprep.subr.bf16.mxu0 0
      %3981 = vmatpush1.bf16.msra.mxu0 0
      %3982 = vmatprep.subr.bf16.mxu0 0
      %3983 = vmatpush1.bf16.msra.mxu0 0
      %3984 = vmatprep.subr.bf16.mxu0 0
      %3985 = vmatpush1.bf16.msra.mxu0 0
      %3986 = vmatprep.subr.bf16.mxu0 0
      %3987 = vmatpush1.bf16.msra.mxu0 0
      %3988 = vmatprep.subr.bf16.mxu0 0
      %3989 = vmatpush1.bf16.msra.mxu0 0
      %3990 = vmatprep.subr.bf16.mxu0 0
      %3991 = vmatpush1.bf16.msra.mxu0 0
      %3992 = vmatprep.subr.bf16.mxu0 0
      %3993 = vmatpush1.bf16.msra.mxu0 0
      %3994 = vmatprep.mubr.bf16.mxu0 0
      %3995 = vmatmul.mubr.bf16.gmra.mrb[0].mxu0 %v3927
      %v3996 = vpop.f32.mrb[0].mxu0
      %v3997 = vadd.f32 %v3909, %v3996
      %v3998 = vpop.f32.mrb[0].mxu0
      %v3999 = vpop.f32.mrb[0].mxu0
      %v4000 = vadd.f32 %v3909, %v3999
      %v4001 = vpop.f32.mrb[0].mxu0
      %4002 = vmatprep.mubr.bf16.mxu0 0
      %4003 = vmatmul.mubr.bf16.gmra.mrb[0].mxu0 %v3929
      %v4004 = vpop.f32.mrb[0].mxu0
      %v4005 = vadd.f32 %v3909, %v4004
      %v4006 = vpop.f32.mrb[0].mxu0
      %v4007 = vpop.f32.mrb[0].mxu0
      %v4008 = vadd.f32 %v3909, %v4007
      %v4009 = vpop.f32.mrb[0].mxu0
      %4010 = vmatprep.mubr.bf16.mxu0 0
      %4011 = vmatmul.mubr.bf16.gmra.mrb[0].mxu0 %v3931
      %v4012 = vpop.f32.mrb[0].mxu0
      %v4013 = vadd.f32 %v3909, %v4012
      %v4014 = vpop.f32.mrb[0].mxu0
      %v4015 = vpop.f32.mrb[0].mxu0
      %v4016 = vadd.f32 %v3909, %v4015
      %v4017 = vpop.f32.mrb[0].mxu0
      %4018 = vmatprep.mubr.bf16.mxu0 0
      %4019 = vmatmul.mubr.bf16.gmra.mrb[0].mxu0 %v3933
      %v4020 = vpop.f32.mrb[0].mxu0
      %v4021 = vadd.f32 %v3909, %v4020
      %v4022 = vpop.f32.mrb[0].mxu0
      %v4023 = vpop.f32.mrb[0].mxu0
      %v4024 = vadd.f32 %v3909, %v4023
      %v4025 = vpop.f32.mrb[0].mxu0
      %4026 = vmatprep.mubr.bf16.mxu0 0
      %4027 = vmatmul.mubr.bf16.gmra.mrb[0].mxu0 %v3935
      %v4028 = vpop.f32.mrb[0].mxu0
      %v4029 = vadd.f32 %v3909, %v4028
      %v4030 = vpop.f32.mrb[0].mxu0
      %v4031 = vpop.f32.mrb[0].mxu0
      %v4032 = vadd.f32 %v3909, %v4031
      %v4033 = vpop.f32.mrb[0].mxu0
      %4034 = vmatprep.mubr.bf16.mxu0 0
      %4035 = vmatmul.mubr.bf16.gmra.mrb[0].mxu0 %v3937
      %v4036 = vpop.f32.mrb[0].mxu0
      %v4037 = vadd.f32 %v3909, %v4036
      %v4038 = vpop.f32.mrb[0].mxu0
      %v4039 = vpop.f32.mrb[0].mxu0
      %v4040 = vadd.f32 %v3909, %v4039
      %v4041 = vpop.f32.mrb[0].mxu0
      %4042 = vmatprep.mubr.bf16.mxu0 0
      %4043 = vmatmul.mubr.bf16.gmra.mrb[0].mxu0 %v3939
      %v4044 = vpop.f32.mrb[0].mxu0
      %v4045 = vadd.f32 %v3909, %v4044
      %v4046 = vpop.f32.mrb[0].mxu0
      %v4047 = vpop.f32.mrb[0].mxu0
      %v4048 = vadd.f32 %v3909, %v4047
      %v4049 = vpop.f32.mrb[0].mxu0
      %4050 = vmatprep.mubr.bf16.mxu0 0
      %4051 = vmatmul.mubr.bf16.gmra.mrb[0].mxu0 %v3941
      %v4052 = vpop.f32.mrb[0].mxu0
      %v4053 = vadd.f32 %v3909, %v4052
      %v4054 = vpop.f32.mrb[0].mxu0
      %v4055 = vpop.f32.mrb[0].mxu0
      %v4056 = vadd.f32 %v3909, %v4055
      %v4057 = vpop.f32.mrb[0].mxu0
      %4058 = vmatprep.mubr.bf16.mxu0 0
      %4059 = vmatmul.mubr.bf16.gmra.mrb[0].mxu0 %v3943
      %v4060 = vpop.f32.mrb[0].mxu0
      %v4061 = vadd.f32 %v3909, %v4060
      %v4062 = vpop.f32.mrb[0].mxu0
      %v4063 = vpop.f32.mrb[0].mxu0
      %v4064 = vadd.f32 %v3909, %v4063
      %v4065 = vpop.f32.mrb[0].mxu0
      %4066 = vmatprep.mubr.bf16.mxu0 0
      %4067 = vmatmul.mubr.bf16.gmra.mrb[0].mxu0 %v3945
      %v4068 = vpop.f32.mrb[0].mxu0
      %v4069 = vadd.f32 %v3909, %v4068
      %v4070 = vpop.f32.mrb[0].mxu0
      %v4071 = vpop.f32.mrb[0].mxu0
      %v4072 = vadd.f32 %v3909, %v4071
      %v4073 = vpop.f32.mrb[0].mxu0
      %4074 = vmatprep.mubr.bf16.mxu0 0
      %4075 = vmatmul.mubr.bf16.gmra.mrb[0].mxu0 %v3947
      %v4076 = vpop.f32.mrb[0].mxu0
      %v4077 = vadd.f32 %v3909, %v4076
      %v4078 = vpop.f32.mrb[0].mxu0
      %v4079 = vpop.f32.mrb[0].mxu0
      %v4080 = vadd.f32 %v3909, %v4079
      %v4081 = vpop.f32.mrb[0].mxu0
      %4082 = vmatprep.mubr.bf16.mxu0 0
      %4083 = vmatmul.mubr.bf16.gmra.mrb[0].mxu0 %v3949
      %v4084 = vpop.f32.mrb[0].mxu0
      %v4085 = vadd.f32 %v3909, %v4084
      %v4086 = vpop.f32.mrb[0].mxu0
      %v4087 = vpop.f32.mrb[0].mxu0
      %v4088 = vadd.f32 %v3909, %v4087
      %v4089 = vpop.f32.mrb[0].mxu0
      %4090 = vmatprep.mubr.bf16.mxu0 0
      %4091 = vmatmul.mubr.bf16.gmra.mrb[0].mxu0 %v3951
      %v4092 = vpop.f32.mrb[0].mxu0
      %v4093 = vadd.f32 %v3909, %v4092
      %v4094 = vpop.f32.mrb[0].mxu0
      %v4095 = vpop.f32.mrb[0].mxu0
      %v4096 = vadd.f32 %v3909, %v4095
      %v4097 = vpop.f32.mrb[0].mxu0
      %4098 = vmatprep.mubr.bf16.mxu0 0
      %4099 = vmatmul.mubr.bf16.gmra.mrb[0].mxu0 %v3953
      %v4100 = vpop.f32.mrb[0].mxu0
      %v4101 = vadd.f32 %v3909, %v4100
      %v4102 = vpop.f32.mrb[0].mxu0
      %v4103 = vpop.f32.mrb[0].mxu0
      %v4104 = vadd.f32 %v3909, %v4103
      %v4105 = vpop.f32.mrb[0].mxu0
      %4106 = vmatprep.mubr.bf16.mxu0 0
      %4107 = vmatmul.mubr.bf16.gmra.mrb[0].mxu0 %v3955
      %v4108 = vpop.f32.mrb[0].mxu0
      %v4109 = vadd.f32 %v3909, %v4108
      %v4110 = vpop.f32.mrb[0].mxu0
      %v4111 = vpop.f32.mrb[0].mxu0
      %v4112 = vadd.f32 %v3909, %v4111
      %v4113 = vpop.f32.mrb[0].mxu0
      %4114 = vmatprep.mubr.bf16.mxu0 0
      %4115 = vmatmul.mubr.bf16.gmra.mrb[0].mxu0 %v3957
      %v4116 = vpop.f32.mrb[0].mxu0
      %v4117 = vadd.f32 %v3909, %v4116
      %v4118 = vpop.f32.mrb[0].mxu0
      %v4119 = vpop.f32.mrb[0].mxu0
      %v4120 = vadd.f32 %v3909, %v4119
      %v4121 = vpop.f32.mrb[0].mxu0
      %4122 = vdwg.mxu0
      %v4123 = vmax.f32 %v3997, 0.0
      %v4124 = vmax.f32 %v4000, 0.0
      %v4125 = vmax.f32 %v4005, 0.0
      %v4126 = vmax.f32 %v4008, 0.0
      %v4127 = vmax.f32 %v4013, 0.0
      %v4128 = vmax.f32 %v4016, 0.0
      %v4129 = vmax.f32 %v4021, 0.0
      %v4130 = vmax.f32 %v4024, 0.0
      %v4131 = vmax.f32 %v4029, 0.0
      %v4132 = vmax.f32 %v4032, 0.0
      %v4133 = vmax.f32 %v4037, 0.0
      %v4134 = vmax.f32 %v4040, 0.0
      %v4135 = vmax.f32 %v4045, 0.0
      %v4136 = vmax.f32 %v4048, 0.0
      %v4137 = vmax.f32 %v4053, 0.0
      %v4138 = vmax.f32 %v4056, 0.0
      %v4139 = vmax.f32 %v4061, 0.0
      %v4140 = vmax.f32 %v4064, 0.0
      %v4141 = vmax.f32 %v4069, 0.0
      %v4142 = vmax.f32 %v4072, 0.0
      %v4143 = vmax.f32 %v4077, 0.0
      %v4144 = vmax.f32 %v4080, 0.0
      %v4145 = vmax.f32 %v4085, 0.0
      %v4146 = vmax.f32 %v4088, 0.0
      %v4147 = vmax.f32 %v4093, 0.0
      %v4148 = vmax.f32 %v4096, 0.0
      %v4149 = vmax.f32 %v4101, 0.0
      %v4150 = vmax.f32 %v4104, 0.0
      %v4151 = vmax.f32 %v4109, 0.0
      %v4152 = vmax.f32 %v4112, 0.0
      %v4153 = vmax.f32 %v4117, 0.0
      %v4154 = vmax.f32 %v4120, 0.0
      %v4155 = vpack.c.bf16 %v4124, %v4123
      %v4156 = vpack.c.bf16 %v4126, %v4125
      %v4157 = vpack.c.bf16 %v4128, %v4127
      %v4158 = vpack.c.bf16 %v4130, %v4129
      %v4159 = vpack.c.bf16 %v4132, %v4131
      %v4160 = vpack.c.bf16 %v4134, %v4133
      %v4161 = vpack.c.bf16 %v4136, %v4135
      %v4162 = vpack.c.bf16 %v4138, %v4137
      %v4163 = vpack.c.bf16 %v4140, %v4139
      %v4164 = vpack.c.bf16 %v4142, %v4141
      %v4165 = vpack.c.bf16 %v4144, %v4143
      %v4166 = vpack.c.bf16 %v4146, %v4145
      %v4167 = vpack.c.bf16 %v4148, %v4147
      %v4168 = vpack.c.bf16 %v4150, %v4149
      %v4169 = vpack.c.bf16 %v4152, %v4151
      %v4170 = vpack.c.bf16 %v4154, %v4153
      %v4171 = vld [vmem:[%s3] sm:$0x3]
      %v4172 = vld [vmem:[%s7] sm:$0x1]
      %v4174 = vlaneseq
      %v4175 = vshrl.u32 %v4174, 7
      %v4176 = vsub.s32 0, %v4175
      %v4177 = vrot.slane %v4172, %v4176
      %v4180 = vsel %vm454, %v4155, 0
      %v4183 = vsel %vm454, %v4156, 0
      %v4186 = vsel %vm454, %v4157, 0
      %v4189 = vsel %vm454, %v4158, 0
      %v4192 = vsel %vm454, %v4159, 0
      %v4195 = vsel %vm454, %v4160, 0
      %v4198 = vsel %vm454, %v4161, 0
      %v4201 = vsel %vm454, %v4162, 0
      %v4204 = vsel %vm454, %v4163, 0
      %v4207 = vsel %vm454, %v4164, 0
      %v4210 = vsel %vm454, %v4165, 0
      %v4213 = vsel %vm454, %v4166, 0
      %v4216 = vsel %vm454, %v4167, 0
      %v4219 = vsel %vm454, %v4168, 0
      %v4222 = vsel %vm454, %v4169, 0
      %v4225 = vsel %vm454, %v4170, 0
      %v4228 = vsel %vm503, %v4171, 0
      %4230 = vmatprep.subr.bf16.mxu0 0
      %4231 = vmatpush1.bf16.msra.mxu0 %v4228
      %4232 = vmatprep.subr.bf16.mxu0 0
      %4233 = vmatpush1.bf16.msra.mxu0 0
      %4234 = vmatprep.subr.bf16.mxu0 0
      %4235 = vmatpush1.bf16.msra.mxu0 0
      %4236 = vmatprep.subr.bf16.mxu0 0
      %4237 = vmatpush1.bf16.msra.mxu0 0
      %4238 = vmatprep.subr.bf16.mxu0 0
      %4239 = vmatpush1.bf16.msra.mxu0 0
      %4240 = vmatprep.subr.bf16.mxu0 0
      %4241 = vmatpush1.bf16.msra.mxu0 0
      %4242 = vmatprep.subr.bf16.mxu0 0
      %4243 = vmatpush1.bf16.msra.mxu0 0
      %4244 = vmatprep.subr.bf16.mxu0 0
      %4245 = vmatpush1.bf16.msra.mxu0 0
      %4246 = vmatprep.subr.bf16.mxu0 0
      %4247 = vmatpush1.bf16.msra.mxu0 0
      %4248 = vmatprep.subr.bf16.mxu0 0
      %4249 = vmatpush1.bf16.msra.mxu0 0
      %4250 = vmatprep.subr.bf16.mxu0 0
      %4251 = vmatpush1.bf16.msra.mxu0 0
      %4252 = vmatprep.subr.bf16.mxu0 0
      %4253 = vmatpush1.bf16.msra.mxu0 0
      %4254 = vmatprep.subr.bf16.mxu0 0
      %4255 = vmatpush1.bf16.msra.mxu0 0
      %4256 = vmatprep.subr.bf16.mxu0 0
      %4257 = vmatpush1.bf16.msra.mxu0 0
      %4258 = vmatprep.subr.bf16.mxu0 0
      %4259 = vmatpush1.bf16.msra.mxu0 0
      %4260 = vmatprep.subr.bf16.mxu0 0
      %4261 = vmatpush1.bf16.msra.mxu0 0
      %4262 = vmatprep.mubr.bf16.mxu0 0
      %4263 = vmatmul.mubr.bf16.gmra.mrb[0].mxu0 %v4180
      %v4264 = vpop.f32.mrb[0].mxu0
      %v4265 = vadd.f32 %v4177, %v4264
      %v4266 = vpop.f32.mrb[0].mxu0
      %v4267 = vpop.f32.mrb[0].mxu0
      %v4268 = vadd.f32 %v4177, %v4267
      %v4269 = vpop.f32.mrb[0].mxu0
      %4270 = vmatprep.mubr.bf16.mxu0 0
      %4271 = vmatmul.mubr.bf16.gmra.mrb[0].mxu0 %v4183
      %v4272 = vpop.f32.mrb[0].mxu0
      %v4273 = vadd.f32 %v4177, %v4272
      %v4274 = vpop.f32.mrb[0].mxu0
      %v4275 = vpop.f32.mrb[0].mxu0
      %v4276 = vadd.f32 %v4177, %v4275
      %v4277 = vpop.f32.mrb[0].mxu0
      %4278 = vmatprep.mubr.bf16.mxu0 0
      %4279 = vmatmul.mubr.bf16.gmra.mrb[0].mxu0 %v4186
      %v4280 = vpop.f32.mrb[0].mxu0
      %v4281 = vadd.f32 %v4177, %v4280
      %v4282 = vpop.f32.mrb[0].mxu0
      %v4283 = vpop.f32.mrb[0].mxu0
      %v4284 = vadd.f32 %v4177, %v4283
      %v4285 = vpop.f32.mrb[0].mxu0
      %4286 = vmatprep.mubr.bf16.mxu0 0
      %4287 = vmatmul.mubr.bf16.gmra.mrb[0].mxu0 %v4189
      %v4288 = vpop.f32.mrb[0].mxu0
      %v4289 = vadd.f32 %v4177, %v4288
      %v4290 = vpop.f32.mrb[0].mxu0
      %v4291 = vpop.f32.mrb[0].mxu0
      %v4292 = vadd.f32 %v4177, %v4291
      %v4293 = vpop.f32.mrb[0].mxu0
      %4294 = vmatprep.mubr.bf16.mxu0 0
      %4295 = vmatmul.mubr.bf16.gmra.mrb[0].mxu0 %v4192
      %v4296 = vpop.f32.mrb[0].mxu0
      %v4297 = vadd.f32 %v4177, %v4296
      %v4298 = vpop.f32.mrb[0].mxu0
      %v4299 = vpop.f32.mrb[0].mxu0
      %v4300 = vadd.f32 %v4177, %v4299
      %v4301 = vpop.f32.mrb[0].mxu0
      %4302 = vmatprep.mubr.bf16.mxu0 0
      %4303 = vmatmul.mubr.bf16.gmra.mrb[0].mxu0 %v4195
      %v4304 = vpop.f32.mrb[0].mxu0
      %v4305 = vadd.f32 %v4177, %v4304
      %v4306 = vpop.f32.mrb[0].mxu0
      %v4307 = vpop.f32.mrb[0].mxu0
      %v4308 = vadd.f32 %v4177, %v4307
      %v4309 = vpop.f32.mrb[0].mxu0
      %4310 = vmatprep.mubr.bf16.mxu0 0
      %4311 = vmatmul.mubr.bf16.gmra.mrb[0].mxu0 %v4198
      %v4312 = vpop.f32.mrb[0].mxu0
      %v4313 = vadd.f32 %v4177, %v4312
      %v4314 = vpop.f32.mrb[0].mxu0
      %v4315 = vpop.f32.mrb[0].mxu0
      %v4316 = vadd.f32 %v4177, %v4315
      %v4317 = vpop.f32.mrb[0].mxu0
      %4318 = vmatprep.mubr.bf16.mxu0 0
      %4319 = vmatmul.mubr.bf16.gmra.mrb[0].mxu0 %v4201
      %v4320 = vpop.f32.mrb[0].mxu0
      %v4321 = vadd.f32 %v4177, %v4320
      %v4322 = vpop.f32.mrb[0].mxu0
      %v4323 = vpop.f32.mrb[0].mxu0
      %v4324 = vadd.f32 %v4177, %v4323
      %v4325 = vpop.f32.mrb[0].mxu0
      %4326 = vmatprep.mubr.bf16.mxu0 0
      %4327 = vmatmul.mubr.bf16.gmra.mrb[0].mxu0 %v4204
      %v4328 = vpop.f32.mrb[0].mxu0
      %v4329 = vadd.f32 %v4177, %v4328
      %v4330 = vpop.f32.mrb[0].mxu0
      %v4331 = vpop.f32.mrb[0].mxu0
      %v4332 = vadd.f32 %v4177, %v4331
      %v4333 = vpop.f32.mrb[0].mxu0
      %4334 = vmatprep.mubr.bf16.mxu0 0
      %4335 = vmatmul.mubr.bf16.gmra.mrb[0].mxu0 %v4207
      %v4336 = vpop.f32.mrb[0].mxu0
      %v4337 = vadd.f32 %v4177, %v4336
      %v4338 = vpop.f32.mrb[0].mxu0
      %v4339 = vpop.f32.mrb[0].mxu0
      %v4340 = vadd.f32 %v4177, %v4339
      %v4341 = vpop.f32.mrb[0].mxu0
      %4342 = vmatprep.mubr.bf16.mxu0 0
      %4343 = vmatmul.mubr.bf16.gmra.mrb[0].mxu0 %v4210
      %v4344 = vpop.f32.mrb[0].mxu0
      %v4345 = vadd.f32 %v4177, %v4344
      %v4346 = vpop.f32.mrb[0].mxu0
      %v4347 = vpop.f32.mrb[0].mxu0
      %v4348 = vadd.f32 %v4177, %v4347
      %v4349 = vpop.f32.mrb[0].mxu0
      %4350 = vmatprep.mubr.bf16.mxu0 0
      %4351 = vmatmul.mubr.bf16.gmra.mrb[0].mxu0 %v4213
      %v4352 = vpop.f32.mrb[0].mxu0
      %v4353 = vadd.f32 %v4177, %v4352
      %v4354 = vpop.f32.mrb[0].mxu0
      %v4355 = vpop.f32.mrb[0].mxu0
      %v4356 = vadd.f32 %v4177, %v4355
      %v4357 = vpop.f32.mrb[0].mxu0
      %4358 = vmatprep.mubr.bf16.mxu0 0
      %4359 = vmatmul.mubr.bf16.gmra.mrb[0].mxu0 %v4216
      %v4360 = vpop.f32.mrb[0].mxu0
      %v4361 = vadd.f32 %v4177, %v4360
      %v4362 = vpop.f32.mrb[0].mxu0
      %v4363 = vpop.f32.mrb[0].mxu0
      %v4364 = vadd.f32 %v4177, %v4363
      %v4365 = vpop.f32.mrb[0].mxu0
      %4366 = vmatprep.mubr.bf16.mxu0 0
      %4367 = vmatmul.mubr.bf16.gmra.mrb[0].mxu0 %v4219
      %v4368 = vpop.f32.mrb[0].mxu0
      %v4369 = vadd.f32 %v4177, %v4368
      %v4370 = vpop.f32.mrb[0].mxu0
      %v4371 = vpop.f32.mrb[0].mxu0
      %v4372 = vadd.f32 %v4177, %v4371
      %v4373 = vpop.f32.mrb[0].mxu0
      %4374 = vmatprep.mubr.bf16.mxu0 0
      %4375 = vmatmul.mubr.bf16.gmra.mrb[0].mxu0 %v4222
      %v4376 = vpop.f32.mrb[0].mxu0
      %v4377 = vadd.f32 %v4177, %v4376
      %v4378 = vpop.f32.mrb[0].mxu0
      %v4379 = vpop.f32.mrb[0].mxu0
      %v4380 = vadd.f32 %v4177, %v4379
      %v4381 = vpop.f32.mrb[0].mxu0
      %4382 = vmatprep.mubr.bf16.mxu0 0
      %4383 = vmatmul.mubr.bf16.gmra.mrb[0].mxu0 %v4225
      %v4384 = vpop.f32.mrb[0].mxu0
      %v4385 = vadd.f32 %v4177, %v4384
      %v4386 = vpop.f32.mrb[0].mxu0
      %v4387 = vpop.f32.mrb[0].mxu0
      %v4388 = vadd.f32 %v4177, %v4387
      %v4389 = vpop.f32.mrb[0].mxu0
      %4390 = vdwg.mxu0
      %v4391 = vld [vmem:[%s4] sm:$0x3]
      %v4392 = vld [vmem:[%s8] sm:$0x1]
      %v4394 = vlaneseq
      %v4395 = vshrl.u32 %v4394, 7
      %v4396 = vsub.s32 0, %v4395
      %v4397 = vrot.slane %v4392, %v4396
      %v4400 = vsel %vm503, %v4391, 0
      %4402 = vmatprep.subr.bf16.mxu0 0
      %4403 = vmatpush1.bf16.msra.mxu0 %v4400
      %4404 = vmatprep.subr.bf16.mxu0 0
      %4405 = vmatpush1.bf16.msra.mxu0 0
      %4406 = vmatprep.subr.bf16.mxu0 0
      %4407 = vmatpush1.bf16.msra.mxu0 0
      %4408 = vmatprep.subr.bf16.mxu0 0
      %4409 = vmatpush1.bf16.msra.mxu0 0
      %4410 = vmatprep.subr.bf16.mxu0 0
      %4411 = vmatpush1.bf16.msra.mxu0 0
      %4412 = vmatprep.subr.bf16.mxu0 0
      %4413 = vmatpush1.bf16.msra.mxu0 0
      %4414 = vmatprep.subr.bf16.mxu0 0
      %4415 = vmatpush1.bf16.msra.mxu0 0
      %4416 = vmatprep.subr.bf16.mxu0 0
      %4417 = vmatpush1.bf16.msra.mxu0 0
      %4418 = vmatprep.subr.bf16.mxu0 0
      %4419 = vmatpush1.bf16.msra.mxu0 0
      %4420 = vmatprep.subr.bf16.mxu0 0
      %4421 = vmatpush1.bf16.msra.mxu0 0
      %4422 = vmatprep.subr.bf16.mxu0 0
      %4423 = vmatpush1.bf16.msra.mxu0 0
      %4424 = vmatprep.subr.bf16.mxu0 0
      %4425 = vmatpush1.bf16.msra.mxu0 0
      %4426 = vmatprep.subr.bf16.mxu0 0
      %4427 = vmatpush1.bf16.msra.mxu0 0
      %4428 = vmatprep.subr.bf16.mxu0 0
      %4429 = vmatpush1.bf16.msra.mxu0 0
      %4430 = vmatprep.subr.bf16.mxu0 0
      %4431 = vmatpush1.bf16.msra.mxu0 0
      %4432 = vmatprep.subr.bf16.mxu0 0
      %4433 = vmatpush1.bf16.msra.mxu0 0
      %4434 = vmatprep.mubr.bf16.mxu0 0
      %4435 = vmatmul.mubr.bf16.gmra.mrb[0].mxu0 %v456
      %v4436 = vpop.f32.mrb[0].mxu0
      %v4437 = vadd.f32 %v4397, %v4436
      %v4438 = vpop.f32.mrb[0].mxu0
      %v4439 = vpop.f32.mrb[0].mxu0
      %v4440 = vadd.f32 %v4397, %v4439
      %v4441 = vpop.f32.mrb[0].mxu0
      %4442 = vmatprep.mubr.bf16.mxu0 0
      %4443 = vmatmul.mubr.bf16.gmra.mrb[0].mxu0 %v459
      %v4444 = vpop.f32.mrb[0].mxu0
      %v4445 = vadd.f32 %v4397, %v4444
      %v4446 = vpop.f32.mrb[0].mxu0
      %v4447 = vpop.f32.mrb[0].mxu0
      %v4448 = vadd.f32 %v4397, %v4447
      %v4449 = vpop.f32.mrb[0].mxu0
      %4450 = vmatprep.mubr.bf16.mxu0 0
      %4451 = vmatmul.mubr.bf16.gmra.mrb[0].mxu0 %v462
      %v4452 = vpop.f32.mrb[0].mxu0
      %v4453 = vadd.f32 %v4397, %v4452
      %v4454 = vpop.f32.mrb[0].mxu0
      %v4455 = vpop.f32.mrb[0].mxu0
      %v4456 = vadd.f32 %v4397, %v4455
      %v4457 = vpop.f32.mrb[0].mxu0
      %4458 = vmatprep.mubr.bf16.mxu0 0
      %4459 = vmatmul.mubr.bf16.gmra.mrb[0].mxu0 %v465
      %v4460 = vpop.f32.mrb[0].mxu0
      %v4461 = vadd.f32 %v4397, %v4460
      %v4462 = vpop.f32.mrb[0].mxu0
      %v4463 = vpop.f32.mrb[0].mxu0
      %v4464 = vadd.f32 %v4397, %v4463
      %v4465 = vpop.f32.mrb[0].mxu0
      %4466 = vmatprep.mubr.bf16.mxu0 0
      %4467 = vmatmul.mubr.bf16.gmra.mrb[0].mxu0 %v468
      %v4468 = vpop.f32.mrb[0].mxu0
      %v4469 = vadd.f32 %v4397, %v4468
      %v4470 = vpop.f32.mrb[0].mxu0
      %v4471 = vpop.f32.mrb[0].mxu0
      %v4472 = vadd.f32 %v4397, %v4471
      %v4473 = vpop.f32.mrb[0].mxu0
      %4474 = vmatprep.mubr.bf16.mxu0 0
      %4475 = vmatmul.mubr.bf16.gmra.mrb[0].mxu0 %v471
      %v4476 = vpop.f32.mrb[0].mxu0
      %v4477 = vadd.f32 %v4397, %v4476
      %v4478 = vpop.f32.mrb[0].mxu0
      %v4479 = vpop.f32.mrb[0].mxu0
      %v4480 = vadd.f32 %v4397, %v4479
      %v4481 = vpop.f32.mrb[0].mxu0
      %4482 = vmatprep.mubr.bf16.mxu0 0
      %4483 = vmatmul.mubr.bf16.gmra.mrb[0].mxu0 %v474
      %v4484 = vpop.f32.mrb[0].mxu0
      %v4485 = vadd.f32 %v4397, %v4484
      %v4486 = vpop.f32.mrb[0].mxu0
      %v4487 = vpop.f32.mrb[0].mxu0
      %v4488 = vadd.f32 %v4397, %v4487
      %v4489 = vpop.f32.mrb[0].mxu0
      %4490 = vmatprep.mubr.bf16.mxu0 0
      %4491 = vmatmul.mubr.bf16.gmra.mrb[0].mxu0 %v477
      %v4492 = vpop.f32.mrb[0].mxu0
      %v4493 = vadd.f32 %v4397, %v4492
      %v4494 = vpop.f32.mrb[0].mxu0
      %v4495 = vpop.f32.mrb[0].mxu0
      %v4496 = vadd.f32 %v4397, %v4495
      %v4497 = vpop.f32.mrb[0].mxu0
      %4498 = vmatprep.mubr.bf16.mxu0 0
      %4499 = vmatmul.mubr.bf16.gmra.mrb[0].mxu0 %v480
      %v4500 = vpop.f32.mrb[0].mxu0
      %v4501 = vadd.f32 %v4397, %v4500
      %v4502 = vpop.f32.mrb[0].mxu0
      %v4503 = vpop.f32.mrb[0].mxu0
      %v4504 = vadd.f32 %v4397, %v4503
      %v4505 = vpop.f32.mrb[0].mxu0
      %4506 = vmatprep.mubr.bf16.mxu0 0
      %4507 = vmatmul.mubr.bf16.gmra.mrb[0].mxu0 %v483
      %v4508 = vpop.f32.mrb[0].mxu0
      %v4509 = vadd.f32 %v4397, %v4508
      %v4510 = vpop.f32.mrb[0].mxu0
      %v4511 = vpop.f32.mrb[0].mxu0
      %v4512 = vadd.f32 %v4397, %v4511
      %v4513 = vpop.f32.mrb[0].mxu0
      %4514 = vmatprep.mubr.bf16.mxu0 0
      %4515 = vmatmul.mubr.bf16.gmra.mrb[0].mxu0 %v486
      %v4516 = vpop.f32.mrb[0].mxu0
      %v4517 = vadd.f32 %v4397, %v4516
      %v4518 = vpop.f32.mrb[0].mxu0
      %v4519 = vpop.f32.mrb[0].mxu0
      %v4520 = vadd.f32 %v4397, %v4519
      %v4521 = vpop.f32.mrb[0].mxu0
      %4522 = vmatprep.mubr.bf16.mxu0 0
      %4523 = vmatmul.mubr.bf16.gmra.mrb[0].mxu0 %v489
      %v4524 = vpop.f32.mrb[0].mxu0
      %v4525 = vadd.f32 %v4397, %v4524
      %v4526 = vpop.f32.mrb[0].mxu0
      %v4527 = vpop.f32.mrb[0].mxu0
      %v4528 = vadd.f32 %v4397, %v4527
      %v4529 = vpop.f32.mrb[0].mxu0
      %4530 = vmatprep.mubr.bf16.mxu0 0
      %4531 = vmatmul.mubr.bf16.gmra.mrb[0].mxu0 %v492
      %v4532 = vpop.f32.mrb[0].mxu0
      %v4533 = vadd.f32 %v4397, %v4532
      %v4534 = vpop.f32.mrb[0].mxu0
      %v4535 = vpop.f32.mrb[0].mxu0
      %v4536 = vadd.f32 %v4397, %v4535
      %v4537 = vpop.f32.mrb[0].mxu0
      %4538 = vmatprep.mubr.bf16.mxu0 0
      %4539 = vmatmul.mubr.bf16.gmra.mrb[0].mxu0 %v495
      %v4540 = vpop.f32.mrb[0].mxu0
      %v4541 = vadd.f32 %v4397, %v4540
      %v4542 = vpop.f32.mrb[0].mxu0
      %v4543 = vpop.f32.mrb[0].mxu0
      %v4544 = vadd.f32 %v4397, %v4543
      %v4545 = vpop.f32.mrb[0].mxu0
      %4546 = vmatprep.mubr.bf16.mxu0 0
      %4547 = vmatmul.mubr.bf16.gmra.mrb[0].mxu0 %v498
      %v4548 = vpop.f32.mrb[0].mxu0
      %v4549 = vadd.f32 %v4397, %v4548
      %v4550 = vpop.f32.mrb[0].mxu0
      %v4551 = vpop.f32.mrb[0].mxu0
      %v4552 = vadd.f32 %v4397, %v4551
      %v4553 = vpop.f32.mrb[0].mxu0
      %4554 = vmatprep.mubr.bf16.mxu0 0
      %4555 = vmatmul.mubr.bf16.gmra.mrb[0].mxu0 %v501
      %v4556 = vpop.f32.mrb[0].mxu0
      %v4557 = vadd.f32 %v4397, %v4556
      %v4558 = vpop.f32.mrb[0].mxu0
      %v4559 = vpop.f32.mrb[0].mxu0
      %v4560 = vadd.f32 %v4397, %v4559
      %v4561 = vpop.f32.mrb[0].mxu0
      %4562 = vdwg.mxu0
      %v4563 = vadd.f32 %v4265, %v4437
      %v4564 = vadd.f32 %v4268, %v4440
      %v4565 = vadd.f32 %v4273, %v4445
      %v4566 = vadd.f32 %v4276, %v4448
      %v4567 = vadd.f32 %v4281, %v4453
      %v4568 = vadd.f32 %v4284, %v4456
      %v4569 = vadd.f32 %v4289, %v4461
      %v4570 = vadd.f32 %v4292, %v4464
      %v4571 = vadd.f32 %v4297, %v4469
      %v4572 = vadd.f32 %v4300, %v4472
      %v4573 = vadd.f32 %v4305, %v4477
      %v4574 = vadd.f32 %v4308, %v4480
      %v4575 = vadd.f32 %v4313, %v4485
      %v4576 = vadd.f32 %v4316, %v4488
      %v4577 = vadd.f32 %v4321, %v4493
      %v4578 = vadd.f32 %v4324, %v4496
      %v4579 = vadd.f32 %v4329, %v4501
      %v4580 = vadd.f32 %v4332, %v4504
      %v4581 = vadd.f32 %v4337, %v4509
      %v4582 = vadd.f32 %v4340, %v4512
      %v4583 = vadd.f32 %v4345, %v4517
      %v4584 = vadd.f32 %v4348, %v4520
      %v4585 = vadd.f32 %v4353, %v4525
      %v4586 = vadd.f32 %v4356, %v4528
      %v4587 = vadd.f32 %v4361, %v4533
      %v4588 = vadd.f32 %v4364, %v4536
      %v4589 = vadd.f32 %v4369, %v4541
      %v4590 = vadd.f32 %v4372, %v4544
      %v4591 = vadd.f32 %v4377, %v4549
      %v4592 = vadd.f32 %v4380, %v4552
      %v4593 = vadd.f32 %v4385, %v4557
      %v4594 = vadd.f32 %v4388, %v4560
      %v4595 = vmax.f32 %v4563, 0.0
      %v4596 = vmax.f32 %v4564, 0.0
      %v4597 = vmax.f32 %v4565, 0.0
      %v4598 = vmax.f32 %v4566, 0.0
      %v4599 = vmax.f32 %v4567, 0.0
      %v4600 = vmax.f32 %v4568, 0.0
      %v4601 = vmax.f32 %v4569, 0.0
      %v4602 = vmax.f32 %v4570, 0.0
      %v4603 = vmax.f32 %v4571, 0.0
      %v4604 = vmax.f32 %v4572, 0.0
      %v4605 = vmax.f32 %v4573, 0.0
      %v4606 = vmax.f32 %v4574, 0.0
      %v4607 = vmax.f32 %v4575, 0.0
      %v4608 = vmax.f32 %v4576, 0.0
      %v4609 = vmax.f32 %v4577, 0.0
      %v4610 = vmax.f32 %v4578, 0.0
      %v4611 = vmax.f32 %v4579, 0.0
      %v4612 = vmax.f32 %v4580, 0.0
      %v4613 = vmax.f32 %v4581, 0.0
      %v4614 = vmax.f32 %v4582, 0.0
      %v4615 = vmax.f32 %v4583, 0.0
      %v4616 = vmax.f32 %v4584, 0.0
      %v4617 = vmax.f32 %v4585, 0.0
      %v4618 = vmax.f32 %v4586, 0.0
      %v4619 = vmax.f32 %v4587, 0.0
      %v4620 = vmax.f32 %v4588, 0.0
      %v4621 = vmax.f32 %v4589, 0.0
      %v4622 = vmax.f32 %v4590, 0.0
      %v4623 = vmax.f32 %v4591, 0.0
      %v4624 = vmax.f32 %v4592, 0.0
      %v4625 = vmax.f32 %v4593, 0.0
      %v4626 = vmax.f32 %v4594, 0.0
      %v4627 = vpack.c.bf16 %v4596, %v4595
      %v4628 = vpack.c.bf16 %v4598, %v4597
      %v4629 = vpack.c.bf16 %v4600, %v4599
      %v4630 = vpack.c.bf16 %v4602, %v4601
      %v4631 = vpack.c.bf16 %v4604, %v4603
      %v4632 = vpack.c.bf16 %v4606, %v4605
      %v4633 = vpack.c.bf16 %v4608, %v4607
      %v4634 = vpack.c.bf16 %v4610, %v4609
      %v4635 = vpack.c.bf16 %v4612, %v4611
      %v4636 = vpack.c.bf16 %v4614, %v4613
      %v4637 = vpack.c.bf16 %v4616, %v4615
      %v4638 = vpack.c.bf16 %v4618, %v4617
      %v4639 = vpack.c.bf16 %v4620, %v4619
      %v4640 = vpack.c.bf16 %v4622, %v4621
      %v4641 = vpack.c.bf16 %v4624, %v4623
      %v4642 = vpack.c.bf16 %v4626, %v4625
      %v4659 = vunpack.c.l.b16 %v4627
      %v4660 = vunpack.c.h.b16 %v4627
      %v4661 = vunpack.c.l.b16 %v4628
      %v4662 = vunpack.c.h.b16 %v4628
      %v4663 = vunpack.c.l.b16 %v4629
      %v4664 = vunpack.c.h.b16 %v4629
      %v4665 = vunpack.c.l.b16 %v4630
      %v4666 = vunpack.c.h.b16 %v4630
      %v4667 = vunpack.c.l.b16 %v4631
      %v4668 = vunpack.c.h.b16 %v4631
      %v4669 = vunpack.c.l.b16 %v4632
      %v4670 = vunpack.c.h.b16 %v4632
      %v4671 = vunpack.c.l.b16 %v4633
      %v4672 = vunpack.c.h.b16 %v4633
      %v4673 = vunpack.c.l.b16 %v4634
      %v4674 = vunpack.c.h.b16 %v4634
      %v4675 = vunpack.c.l.b16 %v4635
      %v4676 = vunpack.c.h.b16 %v4635
      %v4677 = vunpack.c.l.b16 %v4636
      %v4678 = vunpack.c.h.b16 %v4636
      %v4679 = vunpack.c.l.b16 %v4637
      %v4680 = vunpack.c.h.b16 %v4637
      %v4681 = vunpack.c.l.b16 %v4638
      %v4682 = vunpack.c.h.b16 %v4638
      %v4683 = vunpack.c.l.b16 %v4639
      %v4684 = vunpack.c.h.b16 %v4639
      %v4685 = vunpack.c.l.b16 %v4640
      %v4686 = vunpack.c.h.b16 %v4640
      %v4687 = vunpack.c.l.b16 %v4641
      %v4688 = vunpack.c.h.b16 %v4641
      %v4689 = vunpack.c.l.b16 %v4642
      %v4690 = vunpack.c.h.b16 %v4642
      %v4691 = vpack.c.b16 %v4659, %v4659
      %v4692 = vpack.c.b16 %v4660, %v4660
      %v4693 = vpack.c.b16 %v4661, %v4661
      %v4694 = vpack.c.b16 %v4662, %v4662
      %v4695 = vpack.c.b16 %v4663, %v4663
      %v4696 = vpack.c.b16 %v4664, %v4664
      %v4697 = vpack.c.b16 %v4665, %v4665
      %v4698 = vpack.c.b16 %v4666, %v4666
      %v4699 = vpack.c.b16 %v4667, %v4667
      %v4700 = vpack.c.b16 %v4668, %v4668
      %v4701 = vpack.c.b16 %v4669, %v4669
      %v4702 = vpack.c.b16 %v4670, %v4670
      %v4703 = vpack.c.b16 %v4671, %v4671
      %v4704 = vpack.c.b16 %v4672, %v4672
      %v4705 = vpack.c.b16 %v4673, %v4673
      %v4706 = vpack.c.b16 %v4674, %v4674
      %v4707 = vpack.c.b16 %v4675, %v4675
      %v4708 = vpack.c.b16 %v4676, %v4676
      %v4709 = vpack.c.b16 %v4677, %v4677
      %v4710 = vpack.c.b16 %v4678, %v4678
      %v4711 = vpack.c.b16 %v4679, %v4679
      %v4712 = vpack.c.b16 %v4680, %v4680
      %v4713 = vpack.c.b16 %v4681, %v4681
      %v4714 = vpack.c.b16 %v4682, %v4682
      %v4715 = vpack.c.b16 %v4683, %v4683
      %v4716 = vpack.c.b16 %v4684, %v4684
      %v4717 = vpack.c.b16 %v4685, %v4685
      %v4718 = vpack.c.b16 %v4686, %v4686
      %v4719 = vpack.c.b16 %v4687, %v4687
      %v4720 = vpack.c.b16 %v4688, %v4688
      %v4721 = vpack.c.b16 %v4689, %v4689
      %v4722 = vpack.c.b16 %v4690, %v4690
      %vm4755 = vcmask 125952
      %4756 = vst.msk [vmem:[%s332] sm:$0xf] %vm4755, %v4691
      %4757 = vst.msk [vmem:[%s332 + $0x4] sm:$0xf] %vm4755, %v4692
      %4758 = vst.msk [vmem:[%s332 + $0x8] sm:$0xf] %vm4755, %v4693
      %4759 = vst.msk [vmem:[%s332 + $0xc] sm:$0xf] %vm4755, %v4694
      %4760 = vst.msk [vmem:[%s332 + $0x10] sm:$0xf] %vm4755, %v4695
      %4761 = vst.msk [vmem:[%s332 + $0x14] sm:$0xf] %vm4755, %v4696
      %4762 = vst.msk [vmem:[%s332 + $0x18] sm:$0xf] %vm4755, %v4697
      %4763 = vst.msk [vmem:[%s332 + $0x1c] sm:$0xf] %vm4755, %v4698
      %4764 = vst.msk [vmem:[%s332 + $0x20] sm:$0xf] %vm4755, %v4699
      %4765 = vst.msk [vmem:[%s332 + $0x24] sm:$0xf] %vm4755, %v4700
      %4766 = vst.msk [vmem:[%s332 + $0x28] sm:$0xf] %vm4755, %v4701
      %4767 = vst.msk [vmem:[%s332 + $0x2c] sm:$0xf] %vm4755, %v4702
      %4768 = vst.msk [vmem:[%s332 + $0x30] sm:$0xf] %vm4755, %v4703
      %4769 = vst.msk [vmem:[%s332 + $0x34] sm:$0xf] %vm4755, %v4704
      %4770 = vst.msk [vmem:[%s332 + $0x38] sm:$0xf] %vm4755, %v4705
      %4771 = vst.msk [vmem:[%s332 + $0x3c] sm:$0xf] %vm4755, %v4706
      %4772 = vst.msk [vmem:[%s332 + $0x40] sm:$0xf] %vm4755, %v4707
      %4773 = vst.msk [vmem:[%s332 + $0x44] sm:$0xf] %vm4755, %v4708
      %4774 = vst.msk [vmem:[%s332 + $0x48] sm:$0xf] %vm4755, %v4709
      %4775 = vst.msk [vmem:[%s332 + $0x4c] sm:$0xf] %vm4755, %v4710
      %4776 = vst.msk [vmem:[%s332 + $0x50] sm:$0xf] %vm4755, %v4711
      %4777 = vst.msk [vmem:[%s332 + $0x54] sm:$0xf] %vm4755, %v4712
      %4778 = vst.msk [vmem:[%s332 + $0x58] sm:$0xf] %vm4755, %v4713
      %4779 = vst.msk [vmem:[%s332 + $0x5c] sm:$0xf] %vm4755, %v4714
      %4780 = vst.msk [vmem:[%s332 + $0x60] sm:$0xf] %vm4755, %v4715
      %4781 = vst.msk [vmem:[%s332 + $0x64] sm:$0xf] %vm4755, %v4716
      %4782 = vst.msk [vmem:[%s332 + $0x68] sm:$0xf] %vm4755, %v4717
      %4783 = vst.msk [vmem:[%s332 + $0x6c] sm:$0xf] %vm4755, %v4718
      %4784 = vst.msk [vmem:[%s332 + $0x70] sm:$0xf] %vm4755, %v4719
      %4785 = vst.msk [vmem:[%s332 + $0x74] sm:$0xf] %vm4755, %v4720
      %4786 = vst.msk [vmem:[%s332 + $0x78] sm:$0xf] %vm4755, %v4721
      %4787 = vst.msk [vmem:[%s332 + $0x7c] sm:$0xf] %vm4755, %v4722
      %p4788 = scmp.lt.s32.totalorder %s20, 1
      %s4789 = scalar_select %p4788, %s20, 1
      %s4790 = smul.addr %s4789, 32
      %s4791 = smul.addr %s4790, 4
      %s4792 = scalar_lea.vmem %s9, %s4791
      // Predicated region
      $region57: #{tpu_custom_call.1} parent=55 // pred_check
        %p4793 = pneg %p232
      $region58: #{tpu_custom_call.1} parent=55 // pred_check_branch
        %4795 = sbr.rel (%p4793) target = $region60
      $region59: #{tpu_custom_call.1} parent=55 // pred_region
        _
      $region60: #{tpu_custom_call.1} parent=55 // pred_fallthru
        _
    $region56: #{tpu_custom_call.1} parent=5 // pred_fallthru
      _
    %p4796 = scmp.le.s32.totalorder 2, %s15
    // Predicated region
    $region61: #{tpu_custom_call.1} parent=5 // pred_check
      %p4797 = pneg %p4796
    $region62: #{tpu_custom_call.1} parent=5 // pred_check_branch
      %4799 = sbr.rel (%p4797) target = $region64
    $region63: #{tpu_custom_call.1} parent=5 // pred_region
      %s4800 = ssub.s32 %s15, 2
      // Predicated region
      $region65: #{tpu_custom_call.1} parent=63 // pred_check
        %p4801 = pneg %p238
      $region66: #{tpu_custom_call.1} parent=63 // pred_check_branch
        %4803 = sbr.rel (%p4801) target = $region68
      $region67: #{tpu_custom_call.1} parent=63 // pred_region
        %p4804 = scmp.lt.s32.totalorder %s21, 1
        %s4805 = scalar_select %p4804, %s21, 1
        %s4806 = smul.addr %s4805, 32
        %s4807 = smul.addr %s4806, 4
        %s4808 = scalar_lea.vmem %s9, %s4807
      $region68: #{tpu_custom_call.1} parent=63 // pred_fallthru
        _
    $region64: #{tpu_custom_call.1} parent=5 // pred_fallthru
      _
  $region6: #{tpu_custom_call.1} parent=0 // loop_footer
    %s19 = sadd.s32 1, %s15
  $region7: #{tpu_custom_call.1} parent=0 // loop_footer_branch
    %14 = sbr.rel target = $region3
  $region8: #{tpu_custom_call.1} parent=0 // loop_exit
    _

</llo_original>
